<compile_context>
chip_gen: v7x
topology: tpu7x:2x2x1
jax: 0.10.0
libtpu: 0.0.40
codegen_flags: <defaults>
</compile_context>

<pallas_src>
import jax
import jax.numpy as jnp
from jax.experimental import pallas as pl
from jax.experimental.pallas import tpu as pltpu


def _round_up(v, m):
    return ((v + m - 1) // m) * m


def _lstm_fc_kernel(x_ref,        # (BB, TT, D)   current time block (batch-first)
                    w_ih0_ref,    # (D, 4H)       layer-0 input weights (pre-transposed)
                    w_ihr_ref,    # (max(L-1,1), H, 4H) layers 1.. input weights
                    w_hh_ref,     # (L, H, 4H)    recurrent weights (pre-transposed)
                    b_ref,        # (L, 1, 4H)    b_ih + b_hh (pre-summed, f32)
                    fc1_w_ref,    # (H, Fp)
                    fc1_b_ref,    # (1, Fp)
                    fc2_w_ref,    # (Fp, Cp)
                    fc2_b_ref,    # (1, Cp)
                    out_ref,      # (BB, Cp)
                    h_state,      # VMEM scratch (L, BB, H) f32
                    c_state):     # VMEM scratch (L, BB, H) f32
    f32 = jnp.float32
    BB, TT, D = x_ref.shape
    L, H, _ = w_hh_ref.shape
    nt = pl.program_id(1)

    @pl.when(nt == 0)
    def _init():
        h_state[...] = jnp.zeros_like(h_state)
        c_state[...] = jnp.zeros_like(c_state)

    # ---- Hoisted layer-0 input projection over the whole time block --------
    # One big MXU matmul (M = BB*TT) instead of TT tiny M=BB matmuls on the
    # serial path; layer-0 bias folded in here.
    xb = x_ref[...]                                              # (BB, TT, D)
    gx = jnp.dot(xb.reshape(BB * TT, D).astype(w_ih0_ref.dtype),
                 w_ih0_ref[...],
                 preferred_element_type=f32)                     # (BB*TT, 4H)
    gx = (gx + b_ref[0].astype(f32)).reshape(BB, TT, 4 * H)

    # Hoist weight reads and bias broadcasts out of the unrolled time loop.
    w_hh = [w_hh_ref[l] for l in range(L)]
    w_ih_upper = [w_ihr_ref[l - 1] for l in range(1, L)]
    b_upper = [jnp.broadcast_to(b_ref[l].astype(f32), (BB, 4 * H))
               for l in range(1, L)]

    def cell(gates, c_prev):
        # PyTorch LSTM gate order: i, f, g, o.  Gate math stays in f32
        # (no bf16 VPU/EUP on v5e).
        i_g = jax.nn.sigmoid(gates[:, 0 * H:1 * H])
        f_g = jax.nn.sigmoid(gates[:, 1 * H:2 * H])
        g_g = jnp.tanh(gates[:, 2 * H:3 * H])
        o_g = jax.nn.sigmoid(gates[:, 3 * H:4 * H])
        c_new = f_g * c_prev + i_g * g_g
        h_new = o_g * jnp.tanh(c_new)
        return h_new, c_new

    # Short, static trip count -> fully unrolled (visible to the scheduler).
    for s in range(TT):
        # Layer 0: input projection already done, only the recurrent matmul.
        gates0 = gx[:, s, :] + jnp.dot(h_state[0].astype(w_hh[0].dtype),
                                       w_hh[0], preferred_element_type=f32)
        h_new, c_new = cell(gates0, c_state[0])
        h_state[0] = h_new
        c_state[0] = c_new
        inp = h_new
        for l in range(1, L):
            gates = (jnp.dot(inp.astype(w_ih_upper[l - 1].dtype),
                             w_ih_upper[l - 1], preferred_element_type=f32)
                     + jnp.dot(h_state[l].astype(w_hh[l].dtype), w_hh[l],
                               preferred_element_type=f32)
                     + b_upper[l - 1])
            h_new, c_new = cell(gates, c_state[l])
            h_state[l] = h_new
            c_state[l] = c_new
            inp = h_new

    # ---- Fused classifier head, only on the final time block ---------------
    @pl.when(nt == pl.num_programs(1) - 1)
    def _head():
        h_top = h_state[L - 1]                                    # (BB, H) f32
        z1 = jnp.dot(h_top.astype(fc1_w_ref.dtype), fc1_w_ref[...],
                     preferred_element_type=f32) + fc1_b_ref[...].astype(f32)
        z1 = jnp.maximum(z1, 0.0)
        # TODO(synk): training-mode F.dropout(p=drop_p) would need pltpu.prng_*;
        # implemented as inference-mode identity here.
        logits = jnp.dot(z1.astype(fc2_w_ref.dtype), fc2_w_ref[...],
                         preferred_element_type=f32) + fc2_b_ref[...].astype(f32)
        out_ref[...] = logits.astype(out_ref.dtype)


def decoder_rnn_forward(x, params, *, time_block=None, batch_block=None):
    """JAX/Pallas equivalent of DecoderRNN.forward(x_RNN) (eval mode).

    x:      (B, T, D) input features (batch_first)
    params: dict with PyTorch-layout tensors:
            w_ih / w_hh / b_ih / b_hh : per-layer lists (LSTM weights)
            fc1_w (F, H), fc1_b (F,), fc2_w (C, F), fc2_b (C,)
    Returns logits (B, num_classes) in x.dtype.
    """
    B, T, D = x.shape
    L = len(params["w_ih"])
    H = params["w_hh"][0].shape[1]
    F_dim = params["fc1_w"].shape[0]
    C = params["fc2_w"].shape[0]
    f32 = jnp.float32

    TT = T if time_block is None else time_block
    BB = B if batch_block is None else batch_block
    assert T % TT == 0, "time_block must divide T"
    assert TT == T or TT % 8 == 0, "time_block must be T or a multiple of 8"
    assert B % BB == 0, "batch_block must divide B"
    assert BB == B or BB % 8 == 0, "batch_block must be B or a multiple of 8"
    NT = T // TT
    NB = B // BB
    Lr = max(L - 1, 1)

    # Pre-transpose LSTM weights / pre-sum biases.  NOTE: no dtype widening —
    # weights keep their native dtype (bf16 stays bf16), matmuls accumulate
    # in f32 inside the kernel.
    w_ih0_T = params["w_ih"][0].T                                    # (D, 4H)
    if L > 1:
        w_ihr_T = jnp.stack([w.T for w in params["w_ih"][1:]])       # (L-1, H, 4H)
    else:
        w_ihr_T = jnp.zeros((1, H, 4 * H), params["w_hh"][0].dtype)  # unused
    w_hh_T = jnp.stack([w.T for w in params["w_hh"]])                # (L, H, 4H)
    b = jnp.stack([(params["b_ih"][l] + params["b_hh"][l]).reshape(1, 4 * H)
                   for l in range(L)]).astype(f32)                   # (L, 1, 4H)

    # Lane-dense classifier head: pad F and C to multiples of 128 with zeros
    # (padded rows/cols contribute exactly zero); slice the logits afterwards.
    Fp = _round_up(F_dim, 128)
    Cp = _round_up(C, 128)
    fc1_wT = jnp.pad(params["fc1_w"].T, ((0, 0), (0, Fp - F_dim)))   # (H, Fp)
    fc1_b = jnp.pad(params["fc1_b"], (0, Fp - F_dim)).reshape(1, Fp).astype(f32)
    fc2_wT = jnp.pad(params["fc2_w"].T, ((0, Fp - F_dim), (0, Cp - C)))  # (Fp, Cp)
    fc2_b = jnp.pad(params["fc2_b"], (0, Cp - C)).reshape(1, Cp).astype(f32)

    # Advisory cost hint for XLA scheduling around this (recurrence-bound) call.
    flops = (2 * T * B * 4 * H * (D + H)
             + 2 * T * B * (L - 1) * 4 * H * (2 * H)
             + 2 * B * (H * Fp + Fp * Cp))
    transcendentals = T * B * L * 5 * H
    bytes_accessed = int(
        x.size * x.dtype.itemsize
        + sum(a.size * a.dtype.itemsize for a in
              (w_ih0_T, w_ihr_T, w_hh_T, b, fc1_wT, fc1_b, fc2_wT, fc2_b))
        + B * Cp * x.dtype.itemsize)

    out_padded = pl.pallas_call(
        _lstm_fc_kernel,
        out_shape=jax.ShapeDtypeStruct((B, Cp), x.dtype),
        grid=(NB, NT),
        in_specs=[
            # x: pipelined over (batch block, time block); batch-first, no
            # wrapper-side transpose pass over HBM.
            pl.BlockSpec((BB, TT, D), lambda bb, nt: (bb, nt, 0)),
            # Weights / biases: constant index_maps -> DMA'd once, VMEM-resident.
            pl.BlockSpec((D, 4 * H), lambda bb, nt: (0, 0)),
            pl.BlockSpec((Lr, H, 4 * H), lambda bb, nt: (0, 0, 0)),
            pl.BlockSpec((L, H, 4 * H), lambda bb, nt: (0, 0, 0)),
            pl.BlockSpec((L, 1, 4 * H), lambda bb, nt: (0, 0, 0)),
            pl.BlockSpec((H, Fp), lambda bb, nt: (0, 0)),
            pl.BlockSpec((1, Fp), lambda bb, nt: (0, 0)),
            pl.BlockSpec((Fp, Cp), lambda bb, nt: (0, 0)),
            pl.BlockSpec((1, Cp), lambda bb, nt: (0, 0)),
        ],
        # Constant over the time axis -> block stays resident until the final
        # write on the last time block (accumulator pattern).
        out_specs=pl.BlockSpec((BB, Cp), lambda bb, nt: (bb, 0)),
        scratch_shapes=[pltpu.VMEM((L, BB, H), jnp.float32),   # h per layer
                        pltpu.VMEM((L, BB, H), jnp.float32)],  # c per layer
        compiler_params=pltpu.CompilerParams(
            # batch blocks are independent (megacore on v7x); the time
            # recurrence is sequential.
            dimension_semantics=("parallel", "arbitrary"),
            vmem_limit_bytes=32 * 1024 * 1024),
        cost_estimate=pl.CostEstimate(flops=flops,
                                      transcendentals=transcendentals,
                                      bytes_accessed=bytes_accessed),
    )(x, w_ih0_T, w_ihr_T, w_hh_T, b, fc1_wT, fc1_b, fc2_wT, fc2_b)

    return out_padded[:, :C]


def build_params(key, D, H, L, F_dim, C):
    keys = jax.random.split(key, 4 * L + 4)
    s = 0.1
    w_ih, w_hh, b_ih, b_hh = [], [], [], []
    for l in range(L):
        in_dim = D if l == 0 else H
        w_ih.append(s * jax.random.normal(keys[4 * l + 0], (4 * H, in_dim), jnp.float32))
        w_hh.append(s * jax.random.normal(keys[4 * l + 1], (4 * H, H), jnp.float32))
        b_ih.append(s * jax.random.normal(keys[4 * l + 2], (4 * H,), jnp.float32))
        b_hh.append(s * jax.random.normal(keys[4 * l + 3], (4 * H,), jnp.float32))
    fc1_w = s * jax.random.normal(keys[-4], (F_dim, H), jnp.float32)
    fc1_b = s * jax.random.normal(keys[-3], (F_dim,), jnp.float32)
    fc2_w = s * jax.random.normal(keys[-2], (C, F_dim), jnp.float32)
    fc2_b = s * jax.random.normal(keys[-1], (C,), jnp.float32)
    return dict(w_ih=w_ih, w_hh=w_hh, b_ih=b_ih, b_hh=b_hh,
                fc1_w=fc1_w, fc1_b=fc1_b, fc2_w=fc2_w, fc2_b=fc2_b)


def decoder_rnn_ref(x, params):
    """Pure-JAX reference mirroring the PyTorch forward (eval mode)."""
    B, T, D = x.shape
    L = len(params["w_ih"])
    H = params["w_hh"][0].shape[1]
    h = [jnp.zeros((B, H), jnp.float32) for _ in range(L)]
    c = [jnp.zeros((B, H), jnp.float32) for _ in range(L)]
    for t in range(T):
        inp = x[:, t, :]
        for l in range(L):
            gates = (inp @ params["w_ih"][l].T + params["b_ih"][l]
                     + h[l] @ params["w_hh"][l].T + params["b_hh"][l])
            i_g = jax.nn.sigmoid(gates[:, 0:H])
            f_g = jax.nn.sigmoid(gates[:, H:2 * H])
            g_g = jnp.tanh(gates[:, 2 * H:3 * H])
            o_g = jax.nn.sigmoid(gates[:, 3 * H:4 * H])
            c[l] = f_g * c[l] + i_g * g_g
            h[l] = o_g * jnp.tanh(c[l])
            inp = h[l]
    z = jnp.maximum(h[-1] @ params["fc1_w"].T + params["fc1_b"], 0.0)
    return z @ params["fc2_w"].T + params["fc2_b"]


if __name__ == "__main__":
    # Small shapes consistent with DecoderRNN (scaled-down defaults).
    B, T = 2, 16           # batch, sequence length (2 time blocks of 8)
    D, H = 32, 32          # CNN_embed_dim, h_RNN
    L = 3                  # h_RNN_layers
    F_dim, C = 16, 3       # h_FC_dim, num_classes

    key = jax.random.PRNGKey(0)
    kx, kp = jax.random.split(key)
    x = jax.random.normal(kx, (B, T, D), jnp.float32)
    params = build_params(kp, D, H, L, F_dim, C)

    # time_block=8 -> grid of 2 time blocks: exercises the cross-block
    # hidden/cell-state carry in VMEM scratch.
    out = decoder_rnn_forward(x, params, time_block=8)
    out = jax.block_until_ready(out)

    ref = decoder_rnn_ref(x, params)
    assert out.shape == (B, C)
    max_err = float(jnp.max(jnp.abs(out - ref)))
    assert jnp.allclose(out, ref, atol=2e-3, rtol=2e-3), \
        f"mismatch vs reference (max abs err {max_err})"

    print("KERNEL_OK")
</pallas_src>

<mosaic_0001>
module attributes {stable_mosaic.version = 11 : i64} {
  func.func @_lstm_fc_kernel(%arg0: i32, %arg1: i32, %arg2: memref<2x8x32xf32, #tpu.memory_space<vmem>>, %arg3: memref<32x128xf32, #tpu.memory_space<vmem>>, %arg4: memref<2x32x128xf32, #tpu.memory_space<vmem>>, %arg5: memref<3x32x128xf32, #tpu.memory_space<vmem>>, %arg6: memref<3x1x128xf32, #tpu.memory_space<vmem>>, %arg7: memref<32x128xf32, #tpu.memory_space<vmem>>, %arg8: memref<1x128xf32, #tpu.memory_space<vmem>>, %arg9: memref<128x128xf32, #tpu.memory_space<vmem>>, %arg10: memref<1x128xf32, #tpu.memory_space<vmem>>, %arg11: memref<2x128xf32, #tpu.memory_space<vmem>>, %arg12: memref<3x2x32xf32, #tpu.memory_space<vmem>>, %arg13: memref<3x2x32xf32, #tpu.memory_space<vmem>>) attributes {dimension_semantics = [#tpu.dimension_semantics<parallel>, #tpu.dimension_semantics<arbitrary>], iteration_bounds = array<i64: 1, 2>, scalar_prefetch = 0 : i64, scratch_operands = 2 : i64, tpu.core_type = #tpu.core_type<tc>, window_params = [{transform_indices = @transform_0, window_bounds = array<i64: 2, 8, 32>}, {pipeline_mode = #tpu.pipeline_mode<synchronous>, transform_indices = @transform_1, window_bounds = array<i64: 32, 128>}, {pipeline_mode = #tpu.pipeline_mode<synchronous>, transform_indices = @transform_2, window_bounds = array<i64: 2, 32, 128>}, {pipeline_mode = #tpu.pipeline_mode<synchronous>, transform_indices = @transform_3, window_bounds = array<i64: 3, 32, 128>}, {pipeline_mode = #tpu.pipeline_mode<synchronous>, transform_indices = @transform_4, window_bounds = array<i64: 3, 1, 128>}, {pipeline_mode = #tpu.pipeline_mode<synchronous>, transform_indices = @transform_5, window_bounds = array<i64: 32, 128>}, {pipeline_mode = #tpu.pipeline_mode<synchronous>, transform_indices = @transform_6, window_bounds = array<i64: 1, 128>}, {pipeline_mode = #tpu.pipeline_mode<synchronous>, transform_indices = @transform_7, window_bounds = array<i64: 128, 128>}, {pipeline_mode = #tpu.pipeline_mode<synchronous>, transform_indices = @transform_8, window_bounds = array<i64: 1, 128>}, {transform_indices = @transform_9, window_bounds = array<i64: 2, 128>}]} {
    %c0_i32 = arith.constant 0 : i32
    %0 = arith.cmpi eq, %arg1, %c0_i32 : i32
    %1 = arith.extui %0 : i1 to i32
    %c0_i32_0 = arith.constant 0 : i32
    %2 = arith.cmpi ne, %1, %c0_i32_0 : i32
    scf.if %2 {
      %cst_428 = arith.constant 0.000000e+00 : f32
      %969 = vector.broadcast %cst_428 : f32 to vector<3x2x32xf32>
      %c0_429 = arith.constant 0 : index
      %c0_430 = arith.constant 0 : index
      %c0_431 = arith.constant 0 : index
      %970 = vector.load %arg12[%c0_429, %c0_430, %c0_431] : memref<3x2x32xf32, #tpu.memory_space<vmem>>, vector<3x2x32xf32>
      tpu.vector_store %arg12[%c0_429, %c0_430, %c0_431], %969 {strides = array<i32>} : memref<3x2x32xf32, #tpu.memory_space<vmem>>, vector<3x2x32xf32>,
      %cst_432 = arith.constant 0.000000e+00 : f32
      %971 = vector.broadcast %cst_432 : f32 to vector<3x2x32xf32>
      %c0_433 = arith.constant 0 : index
      %c0_434 = arith.constant 0 : index
      %c0_435 = arith.constant 0 : index
      %972 = vector.load %arg13[%c0_433, %c0_434, %c0_435] : memref<3x2x32xf32, #tpu.memory_space<vmem>>, vector<3x2x32xf32>
      tpu.vector_store %arg13[%c0_433, %c0_434, %c0_435], %971 {strides = array<i32>} : memref<3x2x32xf32, #tpu.memory_space<vmem>>, vector<3x2x32xf32>,
    } else {
    }
    %c0 = arith.constant 0 : index
    %c0_1 = arith.constant 0 : index
    %c0_2 = arith.constant 0 : index
    %3 = vector.load %arg2[%c0, %c0_1, %c0_2] : memref<2x8x32xf32, #tpu.memory_space<vmem>>, vector<2x8x32xf32>
    %4 = vector.shape_cast %3 : vector<2x8x32xf32> to vector<16x32xf32>
    %c0_3 = arith.constant 0 : index
    %c0_4 = arith.constant 0 : index
    %5 = vector.load %arg3[%c0_3, %c0_4] : memref<32x128xf32, #tpu.memory_space<vmem>>, vector<32x128xf32>
    %cst = arith.constant dense<0.000000e+00> : vector<16x128xf32>
    %6 = tpu.matmul %4, %5, %cst {dimension_numbers = #tpu.dot_dimension_numbers<[1], [0], [0], [1], [0, 0, 1, 1], [], []>} : vector<16x32xf32>, vector<32x128xf32>, vector<16x128xf32> -> vector<16x128xf32>
    %c0_5 = arith.constant 0 : index
    %c0_6 = arith.constant 0 : index
    %c0_7 = arith.constant 0 : index
    %7 = vector.load %arg6[%c0_5, %c0_6, %c0_7] : memref<3x1x128xf32, #tpu.memory_space<vmem>>, vector<1x1x128xf32>
    %8 = vector.shape_cast %7 : vector<1x1x128xf32> to vector<1x128xf32>
    %9 = vector.broadcast %8 : vector<1x128xf32> to vector<16x128xf32>
    %10 = arith.addf %6, %9 : vector<16x128xf32>
    %11 = vector.shape_cast %10 : vector<16x128xf32> to vector<2x8x128xf32>
    %c0_8 = arith.constant 0 : index
    %c0_9 = arith.constant 0 : index
    %c0_10 = arith.constant 0 : index
    %12 = vector.load %arg5[%c0_8, %c0_9, %c0_10] : memref<3x32x128xf32, #tpu.memory_space<vmem>>, vector<1x32x128xf32>
    %13 = vector.shape_cast %12 : vector<1x32x128xf32> to vector<32x128xf32>
    %c1 = arith.constant 1 : index
    %c0_11 = arith.constant 0 : index
    %c0_12 = arith.constant 0 : index
    %14 = vector.load %arg5[%c1, %c0_11, %c0_12] : memref<3x32x128xf32, #tpu.memory_space<vmem>>, vector<1x32x128xf32>
    %15 = vector.shape_cast %14 : vector<1x32x128xf32> to vector<32x128xf32>
    %c2 = arith.constant 2 : index
    %c0_13 = arith.constant 0 : index
    %c0_14 = arith.constant 0 : index
    %16 = vector.load %arg5[%c2, %c0_13, %c0_14] : memref<3x32x128xf32, #tpu.memory_space<vmem>>, vector<1x32x128xf32>
    %17 = vector.shape_cast %16 : vector<1x32x128xf32> to vector<32x128xf32>
    %c0_15 = arith.constant 0 : index
    %c0_16 = arith.constant 0 : index
    %c0_17 = arith.constant 0 : index
    %18 = vector.load %arg4[%c0_15, %c0_16, %c0_17] : memref<2x32x128xf32, #tpu.memory_space<vmem>>, vector<1x32x128xf32>
    %19 = vector.shape_cast %18 : vector<1x32x128xf32> to vector<32x128xf32>
    %c1_18 = arith.constant 1 : index
    %c0_19 = arith.constant 0 : index
    %c0_20 = arith.constant 0 : index
    %20 = vector.load %arg4[%c1_18, %c0_19, %c0_20] : memref<2x32x128xf32, #tpu.memory_space<vmem>>, vector<1x32x128xf32>
    %21 = vector.shape_cast %20 : vector<1x32x128xf32> to vector<32x128xf32>
    %c1_21 = arith.constant 1 : index
    %c0_22 = arith.constant 0 : index
    %c0_23 = arith.constant 0 : index
    %22 = vector.load %arg6[%c1_21, %c0_22, %c0_23] : memref<3x1x128xf32, #tpu.memory_space<vmem>>, vector<1x1x128xf32>
    %23 = vector.shape_cast %22 : vector<1x1x128xf32> to vector<1x128xf32>
    %24 = vector.shape_cast %23 : vector<1x128xf32> to vector<1x128xf32>
    %25 = vector.broadcast %24 : vector<1x128xf32> to vector<2x128xf32>
    %c2_24 = arith.constant 2 : index
    %c0_25 = arith.constant 0 : index
    %c0_26 = arith.constant 0 : index
    %26 = vector.load %arg6[%c2_24, %c0_25, %c0_26] : memref<3x1x128xf32, #tpu.memory_space<vmem>>, vector<1x1x128xf32>
    %27 = vector.shape_cast %26 : vector<1x1x128xf32> to vector<1x128xf32>
    %28 = vector.shape_cast %27 : vector<1x128xf32> to vector<1x128xf32>
    %29 = vector.broadcast %28 : vector<1x128xf32> to vector<2x128xf32>
    %30 = vector.extract_strided_slice %11 {offsets = [0, 0, 0], sizes = [2, 1, 128], strides = [1, 1, 1]} : vector<2x8x128xf32> to vector<2x1x128xf32>
    %31 = vector.shape_cast %30 : vector<2x1x128xf32> to vector<2x128xf32>
    %c0_27 = arith.constant 0 : index
    %c0_28 = arith.constant 0 : index
    %c0_29 = arith.constant 0 : index
    %32 = vector.load %arg12[%c0_27, %c0_28, %c0_29] : memref<3x2x32xf32, #tpu.memory_space<vmem>>, vector<1x2x32xf32>
    %33 = vector.shape_cast %32 : vector<1x2x32xf32> to vector<2x32xf32>
    %cst_30 = arith.constant dense<0.000000e+00> : vector<2x128xf32>
    %34 = tpu.matmul %33, %13, %cst_30 {dimension_numbers = #tpu.dot_dimension_numbers<[1], [0], [0], [1], [0, 0, 1, 1], [], []>} : vector<2x32xf32>, vector<32x128xf32>, vector<2x128xf32> -> vector<2x128xf32>
    %35 = arith.addf %31, %34 : vector<2x128xf32>
    %c0_31 = arith.constant 0 : index
    %c0_32 = arith.constant 0 : index
    %c0_33 = arith.constant 0 : index
    %36 = vector.load %arg13[%c0_31, %c0_32, %c0_33] : memref<3x2x32xf32, #tpu.memory_space<vmem>>, vector<1x2x32xf32>
    %37 = vector.shape_cast %36 : vector<1x2x32xf32> to vector<2x32xf32>
    %38 = vector.extract_strided_slice %35 {offsets = [0, 0], sizes = [2, 32], strides = [1, 1]} : vector<2x128xf32> to vector<2x32xf32>
    %39 = arith.negf %38 : vector<2x32xf32>
    %40 = math.exp %39 : vector<2x32xf32>
    %cst_34 = arith.constant 1.000000e+00 : f32
    %41 = vector.broadcast %cst_34 : f32 to vector<2x32xf32>
    %42 = arith.addf %41, %40 : vector<2x32xf32>
    %43 = arith.divf %41, %42 : vector<2x32xf32>
    %44 = vector.extract_strided_slice %35 {offsets = [0, 32], sizes = [2, 32], strides = [1, 1]} : vector<2x128xf32> to vector<2x32xf32>
    %45 = arith.negf %44 : vector<2x32xf32>
    %46 = math.exp %45 : vector<2x32xf32>
    %cst_35 = arith.constant 1.000000e+00 : f32
    %47 = vector.broadcast %cst_35 : f32 to vector<2x32xf32>
    %48 = arith.addf %47, %46 : vector<2x32xf32>
    %49 = arith.divf %47, %48 : vector<2x32xf32>
    %50 = vector.extract_strided_slice %35 {offsets = [0, 64], sizes = [2, 32], strides = [1, 1]} : vector<2x128xf32> to vector<2x32xf32>
    %51 = math.tanh %50 : vector<2x32xf32>
    %52 = vector.extract_strided_slice %35 {offsets = [0, 96], sizes = [2, 32], strides = [1, 1]} : vector<2x128xf32> to vector<2x32xf32>
    %53 = arith.negf %52 : vector<2x32xf32>
    %54 = math.exp %53 : vector<2x32xf32>
    %cst_36 = arith.constant 1.000000e+00 : f32
    %55 = vector.broadcast %cst_36 : f32 to vector<2x32xf32>
    %56 = arith.addf %55, %54 : vector<2x32xf32>
    %57 = arith.divf %55, %56 : vector<2x32xf32>
    %58 = arith.mulf %49, %37 : vector<2x32xf32>
    %59 = arith.mulf %43, %51 : vector<2x32xf32>
    %60 = arith.addf %58, %59 : vector<2x32xf32>
    %61 = math.tanh %60 : vector<2x32xf32>
    %62 = arith.mulf %57, %61 : vector<2x32xf32>
    %c0_37 = arith.constant 0 : index
    %c0_38 = arith.constant 0 : index
    %c0_39 = arith.constant 0 : index
    %63 = vector.load %arg12[%c0_37, %c0_38, %c0_39] : memref<3x2x32xf32, #tpu.memory_space<vmem>>, vector<1x2x32xf32>
    %64 = vector.shape_cast %63 : vector<1x2x32xf32> to vector<2x32xf32>
    %65 = vector.shape_cast %62 : vector<2x32xf32> to vector<1x2x32xf32>
    tpu.vector_store %arg12[%c0_37, %c0_38, %c0_39], %65 {strides = array<i32>} : memref<3x2x32xf32, #tpu.memory_space<vmem>>, vector<1x2x32xf32>,
    %c0_40 = arith.constant 0 : index
    %c0_41 = arith.constant 0 : index
    %c0_42 = arith.constant 0 : index
    %66 = vector.load %arg13[%c0_40, %c0_41, %c0_42] : memref<3x2x32xf32, #tpu.memory_space<vmem>>, vector<1x2x32xf32>
    %67 = vector.shape_cast %66 : vector<1x2x32xf32> to vector<2x32xf32>
    %68 = vector.shape_cast %60 : vector<2x32xf32> to vector<1x2x32xf32>
    tpu.vector_store %arg13[%c0_40, %c0_41, %c0_42], %68 {strides = array<i32>} : memref<3x2x32xf32, #tpu.memory_space<vmem>>, vector<1x2x32xf32>,
    %cst_43 = arith.constant dense<0.000000e+00> : vector<2x128xf32>
    %69 = tpu.matmul %62, %19, %cst_43 {dimension_numbers = #tpu.dot_dimension_numbers<[1], [0], [0], [1], [0, 0, 1, 1], [], []>} : vector<2x32xf32>, vector<32x128xf32>, vector<2x128xf32> -> vector<2x128xf32>
    %c1_44 = arith.constant 1 : index
    %c0_45 = arith.constant 0 : index
    %c0_46 = arith.constant 0 : index
    %70 = vector.load %arg12[%c1_44, %c0_45, %c0_46] : memref<3x2x32xf32, #tpu.memory_space<vmem>>, vector<1x2x32xf32>
    %71 = vector.shape_cast %70 : vector<1x2x32xf32> to vector<2x32xf32>
    %cst_47 = arith.constant dense<0.000000e+00> : vector<2x128xf32>
    %72 = tpu.matmul %71, %15, %cst_47 {dimension_numbers = #tpu.dot_dimension_numbers<[1], [0], [0], [1], [0, 0, 1, 1], [], []>} : vector<2x32xf32>, vector<32x128xf32>, vector<2x128xf32> -> vector<2x128xf32>
    %73 = arith.addf %69, %72 : vector<2x128xf32>
    %74 = arith.addf %73, %25 : vector<2x128xf32>
    %c1_48 = arith.constant 1 : index
    %c0_49 = arith.constant 0 : index
    %c0_50 = arith.constant 0 : index
    %75 = vector.load %arg13[%c1_48, %c0_49, %c0_50] : memref<3x2x32xf32, #tpu.memory_space<vmem>>, vector<1x2x32xf32>
    %76 = vector.shape_cast %75 : vector<1x2x32xf32> to vector<2x32xf32>
    %77 = vector.extract_strided_slice %74 {offsets = [0, 0], sizes = [2, 32], strides = [1, 1]} : vector<2x128xf32> to vector<2x32xf32>
    %78 = arith.negf %77 : vector<2x32xf32>
    %79 = math.exp %78 : vector<2x32xf32>
    %cst_51 = arith.constant 1.000000e+00 : f32
    %80 = vector.broadcast %cst_51 : f32 to vector<2x32xf32>
    %81 = arith.addf %80, %79 : vector<2x32xf32>
    %82 = arith.divf %80, %81 : vector<2x32xf32>
    %83 = vector.extract_strided_slice %74 {offsets = [0, 32], sizes = [2, 32], strides = [1, 1]} : vector<2x128xf32> to vector<2x32xf32>
    %84 = arith.negf %83 : vector<2x32xf32>
    %85 = math.exp %84 : vector<2x32xf32>
    %cst_52 = arith.constant 1.000000e+00 : f32
    %86 = vector.broadcast %cst_52 : f32 to vector<2x32xf32>
    %87 = arith.addf %86, %85 : vector<2x32xf32>
    %88 = arith.divf %86, %87 : vector<2x32xf32>
    %89 = vector.extract_strided_slice %74 {offsets = [0, 64], sizes = [2, 32], strides = [1, 1]} : vector<2x128xf32> to vector<2x32xf32>
    %90 = math.tanh %89 : vector<2x32xf32>
    %91 = vector.extract_strided_slice %74 {offsets = [0, 96], sizes = [2, 32], strides = [1, 1]} : vector<2x128xf32> to vector<2x32xf32>
    %92 = arith.negf %91 : vector<2x32xf32>
    %93 = math.exp %92 : vector<2x32xf32>
    %cst_53 = arith.constant 1.000000e+00 : f32
    %94 = vector.broadcast %cst_53 : f32 to vector<2x32xf32>
    %95 = arith.addf %94, %93 : vector<2x32xf32>
    %96 = arith.divf %94, %95 : vector<2x32xf32>
    %97 = arith.mulf %88, %76 : vector<2x32xf32>
    %98 = arith.mulf %82, %90 : vector<2x32xf32>
    %99 = arith.addf %97, %98 : vector<2x32xf32>
    %100 = math.tanh %99 : vector<2x32xf32>
    %101 = arith.mulf %96, %100 : vector<2x32xf32>
    %c1_54 = arith.constant 1 : index
    %c0_55 = arith.constant 0 : index
    %c0_56 = arith.constant 0 : index
    %102 = vector.load %arg12[%c1_54, %c0_55, %c0_56] : memref<3x2x32xf32, #tpu.memory_space<vmem>>, vector<1x2x32xf32>
    %103 = vector.shape_cast %102 : vector<1x2x32xf32> to vector<2x32xf32>
    %104 = vector.shape_cast %101 : vector<2x32xf32> to vector<1x2x32xf32>
    tpu.vector_store %arg12[%c1_54, %c0_55, %c0_56], %104 {strides = array<i32>} : memref<3x2x32xf32, #tpu.memory_space<vmem>>, vector<1x2x32xf32>,
    %c1_57 = arith.constant 1 : index
    %c0_58 = arith.constant 0 : index
    %c0_59 = arith.constant 0 : index
    %105 = vector.load %arg13[%c1_57, %c0_58, %c0_59] : memref<3x2x32xf32, #tpu.memory_space<vmem>>, vector<1x2x32xf32>
    %106 = vector.shape_cast %105 : vector<1x2x32xf32> to vector<2x32xf32>
    %107 = vector.shape_cast %99 : vector<2x32xf32> to vector<1x2x32xf32>
    tpu.vector_store %arg13[%c1_57, %c0_58, %c0_59], %107 {strides = array<i32>} : memref<3x2x32xf32, #tpu.memory_space<vmem>>, vector<1x2x32xf32>,
    %cst_60 = arith.constant dense<0.000000e+00> : vector<2x128xf32>
    %108 = tpu.matmul %101, %21, %cst_60 {dimension_numbers = #tpu.dot_dimension_numbers<[1], [0], [0], [1], [0, 0, 1, 1], [], []>} : vector<2x32xf32>, vector<32x128xf32>, vector<2x128xf32> -> vector<2x128xf32>
    %c2_61 = arith.constant 2 : index
    %c0_62 = arith.constant 0 : index
    %c0_63 = arith.constant 0 : index
    %109 = vector.load %arg12[%c2_61, %c0_62, %c0_63] : memref<3x2x32xf32, #tpu.memory_space<vmem>>, vector<1x2x32xf32>
    %110 = vector.shape_cast %109 : vector<1x2x32xf32> to vector<2x32xf32>
    %cst_64 = arith.constant dense<0.000000e+00> : vector<2x128xf32>
    %111 = tpu.matmul %110, %17, %cst_64 {dimension_numbers = #tpu.dot_dimension_numbers<[1], [0], [0], [1], [0, 0, 1, 1], [], []>} : vector<2x32xf32>, vector<32x128xf32>, vector<2x128xf32> -> vector<2x128xf32>
    %112 = arith.addf %108, %111 : vector<2x128xf32>
    %113 = arith.addf %112, %29 : vector<2x128xf32>
    %c2_65 = arith.constant 2 : index
    %c0_66 = arith.constant 0 : index
    %c0_67 = arith.constant 0 : index
    %114 = vector.load %arg13[%c2_65, %c0_66, %c0_67] : memref<3x2x32xf32, #tpu.memory_space<vmem>>, vector<1x2x32xf32>
    %115 = vector.shape_cast %114 : vector<1x2x32xf32> to vector<2x32xf32>
    %116 = vector.extract_strided_slice %113 {offsets = [0, 0], sizes = [2, 32], strides = [1, 1]} : vector<2x128xf32> to vector<2x32xf32>
    %117 = arith.negf %116 : vector<2x32xf32>
    %118 = math.exp %117 : vector<2x32xf32>
    %cst_68 = arith.constant 1.000000e+00 : f32
    %119 = vector.broadcast %cst_68 : f32 to vector<2x32xf32>
    %120 = arith.addf %119, %118 : vector<2x32xf32>
    %121 = arith.divf %119, %120 : vector<2x32xf32>
    %122 = vector.extract_strided_slice %113 {offsets = [0, 32], sizes = [2, 32], strides = [1, 1]} : vector<2x128xf32> to vector<2x32xf32>
    %123 = arith.negf %122 : vector<2x32xf32>
    %124 = math.exp %123 : vector<2x32xf32>
    %cst_69 = arith.constant 1.000000e+00 : f32
    %125 = vector.broadcast %cst_69 : f32 to vector<2x32xf32>
    %126 = arith.addf %125, %124 : vector<2x32xf32>
    %127 = arith.divf %125, %126 : vector<2x32xf32>
    %128 = vector.extract_strided_slice %113 {offsets = [0, 64], sizes = [2, 32], strides = [1, 1]} : vector<2x128xf32> to vector<2x32xf32>
    %129 = math.tanh %128 : vector<2x32xf32>
    %130 = vector.extract_strided_slice %113 {offsets = [0, 96], sizes = [2, 32], strides = [1, 1]} : vector<2x128xf32> to vector<2x32xf32>
    %131 = arith.negf %130 : vector<2x32xf32>
    %132 = math.exp %131 : vector<2x32xf32>
    %cst_70 = arith.constant 1.000000e+00 : f32
    %133 = vector.broadcast %cst_70 : f32 to vector<2x32xf32>
    %134 = arith.addf %133, %132 : vector<2x32xf32>
    %135 = arith.divf %133, %134 : vector<2x32xf32>
    %136 = arith.mulf %127, %115 : vector<2x32xf32>
    %137 = arith.mulf %121, %129 : vector<2x32xf32>
    %138 = arith.addf %136, %137 : vector<2x32xf32>
    %139 = math.tanh %138 : vector<2x32xf32>
    %140 = arith.mulf %135, %139 : vector<2x32xf32>
    %c2_71 = arith.constant 2 : index
    %c0_72 = arith.constant 0 : index
    %c0_73 = arith.constant 0 : index
    %141 = vector.load %arg12[%c2_71, %c0_72, %c0_73] : memref<3x2x32xf32, #tpu.memory_space<vmem>>, vector<1x2x32xf32>
    %142 = vector.shape_cast %141 : vector<1x2x32xf32> to vector<2x32xf32>
    %143 = vector.shape_cast %140 : vector<2x32xf32> to vector<1x2x32xf32>
    tpu.vector_store %arg12[%c2_71, %c0_72, %c0_73], %143 {strides = array<i32>} : memref<3x2x32xf32, #tpu.memory_space<vmem>>, vector<1x2x32xf32>,
    %c2_74 = arith.constant 2 : index
    %c0_75 = arith.constant 0 : index
    %c0_76 = arith.constant 0 : index
    %144 = vector.load %arg13[%c2_74, %c0_75, %c0_76] : memref<3x2x32xf32, #tpu.memory_space<vmem>>, vector<1x2x32xf32>
    %145 = vector.shape_cast %144 : vector<1x2x32xf32> to vector<2x32xf32>
    %146 = vector.shape_cast %138 : vector<2x32xf32> to vector<1x2x32xf32>
    tpu.vector_store %arg13[%c2_74, %c0_75, %c0_76], %146 {strides = array<i32>} : memref<3x2x32xf32, #tpu.memory_space<vmem>>, vector<1x2x32xf32>,
    %147 = vector.extract_strided_slice %11 {offsets = [0, 1, 0], sizes = [2, 1, 128], strides = [1, 1, 1]} : vector<2x8x128xf32> to vector<2x1x128xf32>
    %148 = vector.shape_cast %147 : vector<2x1x128xf32> to vector<2x128xf32>
    %c0_77 = arith.constant 0 : index
    %c0_78 = arith.constant 0 : index
    %c0_79 = arith.constant 0 : index
    %149 = vector.load %arg12[%c0_77, %c0_78, %c0_79] : memref<3x2x32xf32, #tpu.memory_space<vmem>>, vector<1x2x32xf32>
    %150 = vector.shape_cast %149 : vector<1x2x32xf32> to vector<2x32xf32>
    %cst_80 = arith.constant dense<0.000000e+00> : vector<2x128xf32>
    %151 = tpu.matmul %150, %13, %cst_80 {dimension_numbers = #tpu.dot_dimension_numbers<[1], [0], [0], [1], [0, 0, 1, 1], [], []>} : vector<2x32xf32>, vector<32x128xf32>, vector<2x128xf32> -> vector<2x128xf32>
    %152 = arith.addf %148, %151 : vector<2x128xf32>
    %c0_81 = arith.constant 0 : index
    %c0_82 = arith.constant 0 : index
    %c0_83 = arith.constant 0 : index
    %153 = vector.load %arg13[%c0_81, %c0_82, %c0_83] : memref<3x2x32xf32, #tpu.memory_space<vmem>>, vector<1x2x32xf32>
    %154 = vector.shape_cast %153 : vector<1x2x32xf32> to vector<2x32xf32>
    %155 = vector.extract_strided_slice %152 {offsets = [0, 0], sizes = [2, 32], strides = [1, 1]} : vector<2x128xf32> to vector<2x32xf32>
    %156 = arith.negf %155 : vector<2x32xf32>
    %157 = math.exp %156 : vector<2x32xf32>
    %cst_84 = arith.constant 1.000000e+00 : f32
    %158 = vector.broadcast %cst_84 : f32 to vector<2x32xf32>
    %159 = arith.addf %158, %157 : vector<2x32xf32>
    %160 = arith.divf %158, %159 : vector<2x32xf32>
    %161 = vector.extract_strided_slice %152 {offsets = [0, 32], sizes = [2, 32], strides = [1, 1]} : vector<2x128xf32> to vector<2x32xf32>
    %162 = arith.negf %161 : vector<2x32xf32>
    %163 = math.exp %162 : vector<2x32xf32>
    %cst_85 = arith.constant 1.000000e+00 : f32
    %164 = vector.broadcast %cst_85 : f32 to vector<2x32xf32>
    %165 = arith.addf %164, %163 : vector<2x32xf32>
    %166 = arith.divf %164, %165 : vector<2x32xf32>
    %167 = vector.extract_strided_slice %152 {offsets = [0, 64], sizes = [2, 32], strides = [1, 1]} : vector<2x128xf32> to vector<2x32xf32>
    %168 = math.tanh %167 : vector<2x32xf32>
    %169 = vector.extract_strided_slice %152 {offsets = [0, 96], sizes = [2, 32], strides = [1, 1]} : vector<2x128xf32> to vector<2x32xf32>
    %170 = arith.negf %169 : vector<2x32xf32>
    %171 = math.exp %170 : vector<2x32xf32>
    %cst_86 = arith.constant 1.000000e+00 : f32
    %172 = vector.broadcast %cst_86 : f32 to vector<2x32xf32>
    %173 = arith.addf %172, %171 : vector<2x32xf32>
    %174 = arith.divf %172, %173 : vector<2x32xf32>
    %175 = arith.mulf %166, %154 : vector<2x32xf32>
    %176 = arith.mulf %160, %168 : vector<2x32xf32>
    %177 = arith.addf %175, %176 : vector<2x32xf32>
    %178 = math.tanh %177 : vector<2x32xf32>
    %179 = arith.mulf %174, %178 : vector<2x32xf32>
    %c0_87 = arith.constant 0 : index
    %c0_88 = arith.constant 0 : index
    %c0_89 = arith.constant 0 : index
    %180 = vector.load %arg12[%c0_87, %c0_88, %c0_89] : memref<3x2x32xf32, #tpu.memory_space<vmem>>, vector<1x2x32xf32>
    %181 = vector.shape_cast %180 : vector<1x2x32xf32> to vector<2x32xf32>
    %182 = vector.shape_cast %179 : vector<2x32xf32> to vector<1x2x32xf32>
    tpu.vector_store %arg12[%c0_87, %c0_88, %c0_89], %182 {strides = array<i32>} : memref<3x2x32xf32, #tpu.memory_space<vmem>>, vector<1x2x32xf32>,
    %c0_90 = arith.constant 0 : index
    %c0_91 = arith.constant 0 : index
    %c0_92 = arith.constant 0 : index
    %183 = vector.load %arg13[%c0_90, %c0_91, %c0_92] : memref<3x2x32xf32, #tpu.memory_space<vmem>>, vector<1x2x32xf32>
    %184 = vector.shape_cast %183 : vector<1x2x32xf32> to vector<2x32xf32>
    %185 = vector.shape_cast %177 : vector<2x32xf32> to vector<1x2x32xf32>
    tpu.vector_store %arg13[%c0_90, %c0_91, %c0_92], %185 {strides = array<i32>} : memref<3x2x32xf32, #tpu.memory_space<vmem>>, vector<1x2x32xf32>,
    %cst_93 = arith.constant dense<0.000000e+00> : vector<2x128xf32>
    %186 = tpu.matmul %179, %19, %cst_93 {dimension_numbers = #tpu.dot_dimension_numbers<[1], [0], [0], [1], [0, 0, 1, 1], [], []>} : vector<2x32xf32>, vector<32x128xf32>, vector<2x128xf32> -> vector<2x128xf32>
    %c1_94 = arith.constant 1 : index
    %c0_95 = arith.constant 0 : index
    %c0_96 = arith.constant 0 : index
    %187 = vector.load %arg12[%c1_94, %c0_95, %c0_96] : memref<3x2x32xf32, #tpu.memory_space<vmem>>, vector<1x2x32xf32>
    %188 = vector.shape_cast %187 : vector<1x2x32xf32> to vector<2x32xf32>
    %cst_97 = arith.constant dense<0.000000e+00> : vector<2x128xf32>
    %189 = tpu.matmul %188, %15, %cst_97 {dimension_numbers = #tpu.dot_dimension_numbers<[1], [0], [0], [1], [0, 0, 1, 1], [], []>} : vector<2x32xf32>, vector<32x128xf32>, vector<2x128xf32> -> vector<2x128xf32>
    %190 = arith.addf %186, %189 : vector<2x128xf32>
    %191 = arith.addf %190, %25 : vector<2x128xf32>
    %c1_98 = arith.constant 1 : index
    %c0_99 = arith.constant 0 : index
    %c0_100 = arith.constant 0 : index
    %192 = vector.load %arg13[%c1_98, %c0_99, %c0_100] : memref<3x2x32xf32, #tpu.memory_space<vmem>>, vector<1x2x32xf32>
    %193 = vector.shape_cast %192 : vector<1x2x32xf32> to vector<2x32xf32>
    %194 = vector.extract_strided_slice %191 {offsets = [0, 0], sizes = [2, 32], strides = [1, 1]} : vector<2x128xf32> to vector<2x32xf32>
    %195 = arith.negf %194 : vector<2x32xf32>
    %196 = math.exp %195 : vector<2x32xf32>
    %cst_101 = arith.constant 1.000000e+00 : f32
    %197 = vector.broadcast %cst_101 : f32 to vector<2x32xf32>
    %198 = arith.addf %197, %196 : vector<2x32xf32>
    %199 = arith.divf %197, %198 : vector<2x32xf32>
    %200 = vector.extract_strided_slice %191 {offsets = [0, 32], sizes = [2, 32], strides = [1, 1]} : vector<2x128xf32> to vector<2x32xf32>
    %201 = arith.negf %200 : vector<2x32xf32>
    %202 = math.exp %201 : vector<2x32xf32>
    %cst_102 = arith.constant 1.000000e+00 : f32
    %203 = vector.broadcast %cst_102 : f32 to vector<2x32xf32>
    %204 = arith.addf %203, %202 : vector<2x32xf32>
    %205 = arith.divf %203, %204 : vector<2x32xf32>
    %206 = vector.extract_strided_slice %191 {offsets = [0, 64], sizes = [2, 32], strides = [1, 1]} : vector<2x128xf32> to vector<2x32xf32>
    %207 = math.tanh %206 : vector<2x32xf32>
    %208 = vector.extract_strided_slice %191 {offsets = [0, 96], sizes = [2, 32], strides = [1, 1]} : vector<2x128xf32> to vector<2x32xf32>
    %209 = arith.negf %208 : vector<2x32xf32>
    %210 = math.exp %209 : vector<2x32xf32>
    %cst_103 = arith.constant 1.000000e+00 : f32
    %211 = vector.broadcast %cst_103 : f32 to vector<2x32xf32>
    %212 = arith.addf %211, %210 : vector<2x32xf32>
    %213 = arith.divf %211, %212 : vector<2x32xf32>
    %214 = arith.mulf %205, %193 : vector<2x32xf32>
    %215 = arith.mulf %199, %207 : vector<2x32xf32>
    %216 = arith.addf %214, %215 : vector<2x32xf32>
    %217 = math.tanh %216 : vector<2x32xf32>
    %218 = arith.mulf %213, %217 : vector<2x32xf32>
    %c1_104 = arith.constant 1 : index
    %c0_105 = arith.constant 0 : index
    %c0_106 = arith.constant 0 : index
    %219 = vector.load %arg12[%c1_104, %c0_105, %c0_106] : memref<3x2x32xf32, #tpu.memory_space<vmem>>, vector<1x2x32xf32>
    %220 = vector.shape_cast %219 : vector<1x2x32xf32> to vector<2x32xf32>
    %221 = vector.shape_cast %218 : vector<2x32xf32> to vector<1x2x32xf32>
    tpu.vector_store %arg12[%c1_104, %c0_105, %c0_106], %221 {strides = array<i32>} : memref<3x2x32xf32, #tpu.memory_space<vmem>>, vector<1x2x32xf32>,
    %c1_107 = arith.constant 1 : index
    %c0_108 = arith.constant 0 : index
    %c0_109 = arith.constant 0 : index
    %222 = vector.load %arg13[%c1_107, %c0_108, %c0_109] : memref<3x2x32xf32, #tpu.memory_space<vmem>>, vector<1x2x32xf32>
    %223 = vector.shape_cast %222 : vector<1x2x32xf32> to vector<2x32xf32>
    %224 = vector.shape_cast %216 : vector<2x32xf32> to vector<1x2x32xf32>
    tpu.vector_store %arg13[%c1_107, %c0_108, %c0_109], %224 {strides = array<i32>} : memref<3x2x32xf32, #tpu.memory_space<vmem>>, vector<1x2x32xf32>,
    %cst_110 = arith.constant dense<0.000000e+00> : vector<2x128xf32>
    %225 = tpu.matmul %218, %21, %cst_110 {dimension_numbers = #tpu.dot_dimension_numbers<[1], [0], [0], [1], [0, 0, 1, 1], [], []>} : vector<2x32xf32>, vector<32x128xf32>, vector<2x128xf32> -> vector<2x128xf32>
    %c2_111 = arith.constant 2 : index
    %c0_112 = arith.constant 0 : index
    %c0_113 = arith.constant 0 : index
    %226 = vector.load %arg12[%c2_111, %c0_112, %c0_113] : memref<3x2x32xf32, #tpu.memory_space<vmem>>, vector<1x2x32xf32>
    %227 = vector.shape_cast %226 : vector<1x2x32xf32> to vector<2x32xf32>
    %cst_114 = arith.constant dense<0.000000e+00> : vector<2x128xf32>
    %228 = tpu.matmul %227, %17, %cst_114 {dimension_numbers = #tpu.dot_dimension_numbers<[1], [0], [0], [1], [0, 0, 1, 1], [], []>} : vector<2x32xf32>, vector<32x128xf32>, vector<2x128xf32> -> vector<2x128xf32>
    %229 = arith.addf %225, %228 : vector<2x128xf32>
    %230 = arith.addf %229, %29 : vector<2x128xf32>
    %c2_115 = arith.constant 2 : index
    %c0_116 = arith.constant 0 : index
    %c0_117 = arith.constant 0 : index
    %231 = vector.load %arg13[%c2_115, %c0_116, %c0_117] : memref<3x2x32xf32, #tpu.memory_space<vmem>>, vector<1x2x32xf32>
    %232 = vector.shape_cast %231 : vector<1x2x32xf32> to vector<2x32xf32>
    %233 = vector.extract_strided_slice %230 {offsets = [0, 0], sizes = [2, 32], strides = [1, 1]} : vector<2x128xf32> to vector<2x32xf32>
    %234 = arith.negf %233 : vector<2x32xf32>
    %235 = math.exp %234 : vector<2x32xf32>
    %cst_118 = arith.constant 1.000000e+00 : f32
    %236 = vector.broadcast %cst_118 : f32 to vector<2x32xf32>
    %237 = arith.addf %236, %235 : vector<2x32xf32>
    %238 = arith.divf %236, %237 : vector<2x32xf32>
    %239 = vector.extract_strided_slice %230 {offsets = [0, 32], sizes = [2, 32], strides = [1, 1]} : vector<2x128xf32> to vector<2x32xf32>
    %240 = arith.negf %239 : vector<2x32xf32>
    %241 = math.exp %240 : vector<2x32xf32>
    %cst_119 = arith.constant 1.000000e+00 : f32
    %242 = vector.broadcast %cst_119 : f32 to vector<2x32xf32>
    %243 = arith.addf %242, %241 : vector<2x32xf32>
    %244 = arith.divf %242, %243 : vector<2x32xf32>
    %245 = vector.extract_strided_slice %230 {offsets = [0, 64], sizes = [2, 32], strides = [1, 1]} : vector<2x128xf32> to vector<2x32xf32>
    %246 = math.tanh %245 : vector<2x32xf32>
    %247 = vector.extract_strided_slice %230 {offsets = [0, 96], sizes = [2, 32], strides = [1, 1]} : vector<2x128xf32> to vector<2x32xf32>
    %248 = arith.negf %247 : vector<2x32xf32>
    %249 = math.exp %248 : vector<2x32xf32>
    %cst_120 = arith.constant 1.000000e+00 : f32
    %250 = vector.broadcast %cst_120 : f32 to vector<2x32xf32>
    %251 = arith.addf %250, %249 : vector<2x32xf32>
    %252 = arith.divf %250, %251 : vector<2x32xf32>
    %253 = arith.mulf %244, %232 : vector<2x32xf32>
    %254 = arith.mulf %238, %246 : vector<2x32xf32>
    %255 = arith.addf %253, %254 : vector<2x32xf32>
    %256 = math.tanh %255 : vector<2x32xf32>
    %257 = arith.mulf %252, %256 : vector<2x32xf32>
    %c2_121 = arith.constant 2 : index
    %c0_122 = arith.constant 0 : index
    %c0_123 = arith.constant 0 : index
    %258 = vector.load %arg12[%c2_121, %c0_122, %c0_123] : memref<3x2x32xf32, #tpu.memory_space<vmem>>, vector<1x2x32xf32>
    %259 = vector.shape_cast %258 : vector<1x2x32xf32> to vector<2x32xf32>
    %260 = vector.shape_cast %257 : vector<2x32xf32> to vector<1x2x32xf32>
    tpu.vector_store %arg12[%c2_121, %c0_122, %c0_123], %260 {strides = array<i32>} : memref<3x2x32xf32, #tpu.memory_space<vmem>>, vector<1x2x32xf32>,
    %c2_124 = arith.constant 2 : index
    %c0_125 = arith.constant 0 : index
    %c0_126 = arith.constant 0 : index
    %261 = vector.load %arg13[%c2_124, %c0_125, %c0_126] : memref<3x2x32xf32, #tpu.memory_space<vmem>>, vector<1x2x32xf32>
    %262 = vector.shape_cast %261 : vector<1x2x32xf32> to vector<2x32xf32>
    %263 = vector.shape_cast %255 : vector<2x32xf32> to vector<1x2x32xf32>
    tpu.vector_store %arg13[%c2_124, %c0_125, %c0_126], %263 {strides = array<i32>} : memref<3x2x32xf32, #tpu.memory_space<vmem>>, vector<1x2x32xf32>,
    %264 = vector.extract_strided_slice %11 {offsets = [0, 2, 0], sizes = [2, 1, 128], strides = [1, 1, 1]} : vector<2x8x128xf32> to vector<2x1x128xf32>
    %265 = vector.shape_cast %264 : vector<2x1x128xf32> to vector<2x128xf32>
    %c0_127 = arith.constant 0 : index
    %c0_128 = arith.constant 0 : index
    %c0_129 = arith.constant 0 : index
    %266 = vector.load %arg12[%c0_127, %c0_128, %c0_129] : memref<3x2x32xf32, #tpu.memory_space<vmem>>, vector<1x2x32xf32>
    %267 = vector.shape_cast %266 : vector<1x2x32xf32> to vector<2x32xf32>
    %cst_130 = arith.constant dense<0.000000e+00> : vector<2x128xf32>
    %268 = tpu.matmul %267, %13, %cst_130 {dimension_numbers = #tpu.dot_dimension_numbers<[1], [0], [0], [1], [0, 0, 1, 1], [], []>} : vector<2x32xf32>, vector<32x128xf32>, vector<2x128xf32> -> vector<2x128xf32>
    %269 = arith.addf %265, %268 : vector<2x128xf32>
    %c0_131 = arith.constant 0 : index
    %c0_132 = arith.constant 0 : index
    %c0_133 = arith.constant 0 : index
    %270 = vector.load %arg13[%c0_131, %c0_132, %c0_133] : memref<3x2x32xf32, #tpu.memory_space<vmem>>, vector<1x2x32xf32>
    %271 = vector.shape_cast %270 : vector<1x2x32xf32> to vector<2x32xf32>
    %272 = vector.extract_strided_slice %269 {offsets = [0, 0], sizes = [2, 32], strides = [1, 1]} : vector<2x128xf32> to vector<2x32xf32>
    %273 = arith.negf %272 : vector<2x32xf32>
    %274 = math.exp %273 : vector<2x32xf32>
    %cst_134 = arith.constant 1.000000e+00 : f32
    %275 = vector.broadcast %cst_134 : f32 to vector<2x32xf32>
    %276 = arith.addf %275, %274 : vector<2x32xf32>
    %277 = arith.divf %275, %276 : vector<2x32xf32>
    %278 = vector.extract_strided_slice %269 {offsets = [0, 32], sizes = [2, 32], strides = [1, 1]} : vector<2x128xf32> to vector<2x32xf32>
    %279 = arith.negf %278 : vector<2x32xf32>
    %280 = math.exp %279 : vector<2x32xf32>
    %cst_135 = arith.constant 1.000000e+00 : f32
    %281 = vector.broadcast %cst_135 : f32 to vector<2x32xf32>
    %282 = arith.addf %281, %280 : vector<2x32xf32>
    %283 = arith.divf %281, %282 : vector<2x32xf32>
    %284 = vector.extract_strided_slice %269 {offsets = [0, 64], sizes = [2, 32], strides = [1, 1]} : vector<2x128xf32> to vector<2x32xf32>
    %285 = math.tanh %284 : vector<2x32xf32>
    %286 = vector.extract_strided_slice %269 {offsets = [0, 96], sizes = [2, 32], strides = [1, 1]} : vector<2x128xf32> to vector<2x32xf32>
    %287 = arith.negf %286 : vector<2x32xf32>
    %288 = math.exp %287 : vector<2x32xf32>
    %cst_136 = arith.constant 1.000000e+00 : f32
    %289 = vector.broadcast %cst_136 : f32 to vector<2x32xf32>
    %290 = arith.addf %289, %288 : vector<2x32xf32>
    %291 = arith.divf %289, %290 : vector<2x32xf32>
    %292 = arith.mulf %283, %271 : vector<2x32xf32>
    %293 = arith.mulf %277, %285 : vector<2x32xf32>
    %294 = arith.addf %292, %293 : vector<2x32xf32>
    %295 = math.tanh %294 : vector<2x32xf32>
    %296 = arith.mulf %291, %295 : vector<2x32xf32>
    %c0_137 = arith.constant 0 : index
    %c0_138 = arith.constant 0 : index
    %c0_139 = arith.constant 0 : index
    %297 = vector.load %arg12[%c0_137, %c0_138, %c0_139] : memref<3x2x32xf32, #tpu.memory_space<vmem>>, vector<1x2x32xf32>
    %298 = vector.shape_cast %297 : vector<1x2x32xf32> to vector<2x32xf32>
    %299 = vector.shape_cast %296 : vector<2x32xf32> to vector<1x2x32xf32>
    tpu.vector_store %arg12[%c0_137, %c0_138, %c0_139], %299 {strides = array<i32>} : memref<3x2x32xf32, #tpu.memory_space<vmem>>, vector<1x2x32xf32>,
    %c0_140 = arith.constant 0 : index
    %c0_141 = arith.constant 0 : index
    %c0_142 = arith.constant 0 : index
    %300 = vector.load %arg13[%c0_140, %c0_141, %c0_142] : memref<3x2x32xf32, #tpu.memory_space<vmem>>, vector<1x2x32xf32>
    %301 = vector.shape_cast %300 : vector<1x2x32xf32> to vector<2x32xf32>
    %302 = vector.shape_cast %294 : vector<2x32xf32> to vector<1x2x32xf32>
    tpu.vector_store %arg13[%c0_140, %c0_141, %c0_142], %302 {strides = array<i32>} : memref<3x2x32xf32, #tpu.memory_space<vmem>>, vector<1x2x32xf32>,
    %cst_143 = arith.constant dense<0.000000e+00> : vector<2x128xf32>
    %303 = tpu.matmul %296, %19, %cst_143 {dimension_numbers = #tpu.dot_dimension_numbers<[1], [0], [0], [1], [0, 0, 1, 1], [], []>} : vector<2x32xf32>, vector<32x128xf32>, vector<2x128xf32> -> vector<2x128xf32>
    %c1_144 = arith.constant 1 : index
    %c0_145 = arith.constant 0 : index
    %c0_146 = arith.constant 0 : index
    %304 = vector.load %arg12[%c1_144, %c0_145, %c0_146] : memref<3x2x32xf32, #tpu.memory_space<vmem>>, vector<1x2x32xf32>
    %305 = vector.shape_cast %304 : vector<1x2x32xf32> to vector<2x32xf32>
    %cst_147 = arith.constant dense<0.000000e+00> : vector<2x128xf32>
    %306 = tpu.matmul %305, %15, %cst_147 {dimension_numbers = #tpu.dot_dimension_numbers<[1], [0], [0], [1], [0, 0, 1, 1], [], []>} : vector<2x32xf32>, vector<32x128xf32>, vector<2x128xf32> -> vector<2x128xf32>
    %307 = arith.addf %303, %306 : vector<2x128xf32>
    %308 = arith.addf %307, %25 : vector<2x128xf32>
    %c1_148 = arith.constant 1 : index
    %c0_149 = arith.constant 0 : index
    %c0_150 = arith.constant 0 : index
    %309 = vector.load %arg13[%c1_148, %c0_149, %c0_150] : memref<3x2x32xf32, #tpu.memory_space<vmem>>, vector<1x2x32xf32>
    %310 = vector.shape_cast %309 : vector<1x2x32xf32> to vector<2x32xf32>
    %311 = vector.extract_strided_slice %308 {offsets = [0, 0], sizes = [2, 32], strides = [1, 1]} : vector<2x128xf32> to vector<2x32xf32>
    %312 = arith.negf %311 : vector<2x32xf32>
    %313 = math.exp %312 : vector<2x32xf32>
    %cst_151 = arith.constant 1.000000e+00 : f32
    %314 = vector.broadcast %cst_151 : f32 to vector<2x32xf32>
    %315 = arith.addf %314, %313 : vector<2x32xf32>
    %316 = arith.divf %314, %315 : vector<2x32xf32>
    %317 = vector.extract_strided_slice %308 {offsets = [0, 32], sizes = [2, 32], strides = [1, 1]} : vector<2x128xf32> to vector<2x32xf32>
    %318 = arith.negf %317 : vector<2x32xf32>
    %319 = math.exp %318 : vector<2x32xf32>
    %cst_152 = arith.constant 1.000000e+00 : f32
    %320 = vector.broadcast %cst_152 : f32 to vector<2x32xf32>
    %321 = arith.addf %320, %319 : vector<2x32xf32>
    %322 = arith.divf %320, %321 : vector<2x32xf32>
    %323 = vector.extract_strided_slice %308 {offsets = [0, 64], sizes = [2, 32], strides = [1, 1]} : vector<2x128xf32> to vector<2x32xf32>
    %324 = math.tanh %323 : vector<2x32xf32>
    %325 = vector.extract_strided_slice %308 {offsets = [0, 96], sizes = [2, 32], strides = [1, 1]} : vector<2x128xf32> to vector<2x32xf32>
    %326 = arith.negf %325 : vector<2x32xf32>
    %327 = math.exp %326 : vector<2x32xf32>
    %cst_153 = arith.constant 1.000000e+00 : f32
    %328 = vector.broadcast %cst_153 : f32 to vector<2x32xf32>
    %329 = arith.addf %328, %327 : vector<2x32xf32>
    %330 = arith.divf %328, %329 : vector<2x32xf32>
    %331 = arith.mulf %322, %310 : vector<2x32xf32>
    %332 = arith.mulf %316, %324 : vector<2x32xf32>
    %333 = arith.addf %331, %332 : vector<2x32xf32>
    %334 = math.tanh %333 : vector<2x32xf32>
    %335 = arith.mulf %330, %334 : vector<2x32xf32>
    %c1_154 = arith.constant 1 : index
    %c0_155 = arith.constant 0 : index
    %c0_156 = arith.constant 0 : index
    %336 = vector.load %arg12[%c1_154, %c0_155, %c0_156] : memref<3x2x32xf32, #tpu.memory_space<vmem>>, vector<1x2x32xf32>
    %337 = vector.shape_cast %336 : vector<1x2x32xf32> to vector<2x32xf32>
    %338 = vector.shape_cast %335 : vector<2x32xf32> to vector<1x2x32xf32>
    tpu.vector_store %arg12[%c1_154, %c0_155, %c0_156], %338 {strides = array<i32>} : memref<3x2x32xf32, #tpu.memory_space<vmem>>, vector<1x2x32xf32>,
    %c1_157 = arith.constant 1 : index
    %c0_158 = arith.constant 0 : index
    %c0_159 = arith.constant 0 : index
    %339 = vector.load %arg13[%c1_157, %c0_158, %c0_159] : memref<3x2x32xf32, #tpu.memory_space<vmem>>, vector<1x2x32xf32>
    %340 = vector.shape_cast %339 : vector<1x2x32xf32> to vector<2x32xf32>
    %341 = vector.shape_cast %333 : vector<2x32xf32> to vector<1x2x32xf32>
    tpu.vector_store %arg13[%c1_157, %c0_158, %c0_159], %341 {strides = array<i32>} : memref<3x2x32xf32, #tpu.memory_space<vmem>>, vector<1x2x32xf32>,
    %cst_160 = arith.constant dense<0.000000e+00> : vector<2x128xf32>
    %342 = tpu.matmul %335, %21, %cst_160 {dimension_numbers = #tpu.dot_dimension_numbers<[1], [0], [0], [1], [0, 0, 1, 1], [], []>} : vector<2x32xf32>, vector<32x128xf32>, vector<2x128xf32> -> vector<2x128xf32>
    %c2_161 = arith.constant 2 : index
    %c0_162 = arith.constant 0 : index
    %c0_163 = arith.constant 0 : index
    %343 = vector.load %arg12[%c2_161, %c0_162, %c0_163] : memref<3x2x32xf32, #tpu.memory_space<vmem>>, vector<1x2x32xf32>
    %344 = vector.shape_cast %343 : vector<1x2x32xf32> to vector<2x32xf32>
    %cst_164 = arith.constant dense<0.000000e+00> : vector<2x128xf32>
    %345 = tpu.matmul %344, %17, %cst_164 {dimension_numbers = #tpu.dot_dimension_numbers<[1], [0], [0], [1], [0, 0, 1, 1], [], []>} : vector<2x32xf32>, vector<32x128xf32>, vector<2x128xf32> -> vector<2x128xf32>
    %346 = arith.addf %342, %345 : vector<2x128xf32>
    %347 = arith.addf %346, %29 : vector<2x128xf32>
    %c2_165 = arith.constant 2 : index
    %c0_166 = arith.constant 0 : index
    %c0_167 = arith.constant 0 : index
    %348 = vector.load %arg13[%c2_165, %c0_166, %c0_167] : memref<3x2x32xf32, #tpu.memory_space<vmem>>, vector<1x2x32xf32>
    %349 = vector.shape_cast %348 : vector<1x2x32xf32> to vector<2x32xf32>
    %350 = vector.extract_strided_slice %347 {offsets = [0, 0], sizes = [2, 32], strides = [1, 1]} : vector<2x128xf32> to vector<2x32xf32>
    %351 = arith.negf %350 : vector<2x32xf32>
    %352 = math.exp %351 : vector<2x32xf32>
    %cst_168 = arith.constant 1.000000e+00 : f32
    %353 = vector.broadcast %cst_168 : f32 to vector<2x32xf32>
    %354 = arith.addf %353, %352 : vector<2x32xf32>
    %355 = arith.divf %353, %354 : vector<2x32xf32>
    %356 = vector.extract_strided_slice %347 {offsets = [0, 32], sizes = [2, 32], strides = [1, 1]} : vector<2x128xf32> to vector<2x32xf32>
    %357 = arith.negf %356 : vector<2x32xf32>
    %358 = math.exp %357 : vector<2x32xf32>
    %cst_169 = arith.constant 1.000000e+00 : f32
    %359 = vector.broadcast %cst_169 : f32 to vector<2x32xf32>
    %360 = arith.addf %359, %358 : vector<2x32xf32>
    %361 = arith.divf %359, %360 : vector<2x32xf32>
    %362 = vector.extract_strided_slice %347 {offsets = [0, 64], sizes = [2, 32], strides = [1, 1]} : vector<2x128xf32> to vector<2x32xf32>
    %363 = math.tanh %362 : vector<2x32xf32>
    %364 = vector.extract_strided_slice %347 {offsets = [0, 96], sizes = [2, 32], strides = [1, 1]} : vector<2x128xf32> to vector<2x32xf32>
    %365 = arith.negf %364 : vector<2x32xf32>
    %366 = math.exp %365 : vector<2x32xf32>
    %cst_170 = arith.constant 1.000000e+00 : f32
    %367 = vector.broadcast %cst_170 : f32 to vector<2x32xf32>
    %368 = arith.addf %367, %366 : vector<2x32xf32>
    %369 = arith.divf %367, %368 : vector<2x32xf32>
    %370 = arith.mulf %361, %349 : vector<2x32xf32>
    %371 = arith.mulf %355, %363 : vector<2x32xf32>
    %372 = arith.addf %370, %371 : vector<2x32xf32>
    %373 = math.tanh %372 : vector<2x32xf32>
    %374 = arith.mulf %369, %373 : vector<2x32xf32>
    %c2_171 = arith.constant 2 : index
    %c0_172 = arith.constant 0 : index
    %c0_173 = arith.constant 0 : index
    %375 = vector.load %arg12[%c2_171, %c0_172, %c0_173] : memref<3x2x32xf32, #tpu.memory_space<vmem>>, vector<1x2x32xf32>
    %376 = vector.shape_cast %375 : vector<1x2x32xf32> to vector<2x32xf32>
    %377 = vector.shape_cast %374 : vector<2x32xf32> to vector<1x2x32xf32>
    tpu.vector_store %arg12[%c2_171, %c0_172, %c0_173], %377 {strides = array<i32>} : memref<3x2x32xf32, #tpu.memory_space<vmem>>, vector<1x2x32xf32>,
    %c2_174 = arith.constant 2 : index
    %c0_175 = arith.constant 0 : index
    %c0_176 = arith.constant 0 : index
    %378 = vector.load %arg13[%c2_174, %c0_175, %c0_176] : memref<3x2x32xf32, #tpu.memory_space<vmem>>, vector<1x2x32xf32>
    %379 = vector.shape_cast %378 : vector<1x2x32xf32> to vector<2x32xf32>
    %380 = vector.shape_cast %372 : vector<2x32xf32> to vector<1x2x32xf32>
    tpu.vector_store %arg13[%c2_174, %c0_175, %c0_176], %380 {strides = array<i32>} : memref<3x2x32xf32, #tpu.memory_space<vmem>>, vector<1x2x32xf32>,
    %381 = vector.extract_strided_slice %11 {offsets = [0, 3, 0], sizes = [2, 1, 128], strides = [1, 1, 1]} : vector<2x8x128xf32> to vector<2x1x128xf32>
    %382 = vector.shape_cast %381 : vector<2x1x128xf32> to vector<2x128xf32>
    %c0_177 = arith.constant 0 : index
    %c0_178 = arith.constant 0 : index
    %c0_179 = arith.constant 0 : index
    %383 = vector.load %arg12[%c0_177, %c0_178, %c0_179] : memref<3x2x32xf32, #tpu.memory_space<vmem>>, vector<1x2x32xf32>
    %384 = vector.shape_cast %383 : vector<1x2x32xf32> to vector<2x32xf32>
    %cst_180 = arith.constant dense<0.000000e+00> : vector<2x128xf32>
    %385 = tpu.matmul %384, %13, %cst_180 {dimension_numbers = #tpu.dot_dimension_numbers<[1], [0], [0], [1], [0, 0, 1, 1], [], []>} : vector<2x32xf32>, vector<32x128xf32>, vector<2x128xf32> -> vector<2x128xf32>
    %386 = arith.addf %382, %385 : vector<2x128xf32>
    %c0_181 = arith.constant 0 : index
    %c0_182 = arith.constant 0 : index
    %c0_183 = arith.constant 0 : index
    %387 = vector.load %arg13[%c0_181, %c0_182, %c0_183] : memref<3x2x32xf32, #tpu.memory_space<vmem>>, vector<1x2x32xf32>
    %388 = vector.shape_cast %387 : vector<1x2x32xf32> to vector<2x32xf32>
    %389 = vector.extract_strided_slice %386 {offsets = [0, 0], sizes = [2, 32], strides = [1, 1]} : vector<2x128xf32> to vector<2x32xf32>
    %390 = arith.negf %389 : vector<2x32xf32>
    %391 = math.exp %390 : vector<2x32xf32>
    %cst_184 = arith.constant 1.000000e+00 : f32
    %392 = vector.broadcast %cst_184 : f32 to vector<2x32xf32>
    %393 = arith.addf %392, %391 : vector<2x32xf32>
    %394 = arith.divf %392, %393 : vector<2x32xf32>
    %395 = vector.extract_strided_slice %386 {offsets = [0, 32], sizes = [2, 32], strides = [1, 1]} : vector<2x128xf32> to vector<2x32xf32>
    %396 = arith.negf %395 : vector<2x32xf32>
    %397 = math.exp %396 : vector<2x32xf32>
    %cst_185 = arith.constant 1.000000e+00 : f32
    %398 = vector.broadcast %cst_185 : f32 to vector<2x32xf32>
    %399 = arith.addf %398, %397 : vector<2x32xf32>
    %400 = arith.divf %398, %399 : vector<2x32xf32>
    %401 = vector.extract_strided_slice %386 {offsets = [0, 64], sizes = [2, 32], strides = [1, 1]} : vector<2x128xf32> to vector<2x32xf32>
    %402 = math.tanh %401 : vector<2x32xf32>
    %403 = vector.extract_strided_slice %386 {offsets = [0, 96], sizes = [2, 32], strides = [1, 1]} : vector<2x128xf32> to vector<2x32xf32>
    %404 = arith.negf %403 : vector<2x32xf32>
    %405 = math.exp %404 : vector<2x32xf32>
    %cst_186 = arith.constant 1.000000e+00 : f32
    %406 = vector.broadcast %cst_186 : f32 to vector<2x32xf32>
    %407 = arith.addf %406, %405 : vector<2x32xf32>
    %408 = arith.divf %406, %407 : vector<2x32xf32>
    %409 = arith.mulf %400, %388 : vector<2x32xf32>
    %410 = arith.mulf %394, %402 : vector<2x32xf32>
    %411 = arith.addf %409, %410 : vector<2x32xf32>
    %412 = math.tanh %411 : vector<2x32xf32>
    %413 = arith.mulf %408, %412 : vector<2x32xf32>
    %c0_187 = arith.constant 0 : index
    %c0_188 = arith.constant 0 : index
    %c0_189 = arith.constant 0 : index
    %414 = vector.load %arg12[%c0_187, %c0_188, %c0_189] : memref<3x2x32xf32, #tpu.memory_space<vmem>>, vector<1x2x32xf32>
    %415 = vector.shape_cast %414 : vector<1x2x32xf32> to vector<2x32xf32>
    %416 = vector.shape_cast %413 : vector<2x32xf32> to vector<1x2x32xf32>
    tpu.vector_store %arg12[%c0_187, %c0_188, %c0_189], %416 {strides = array<i32>} : memref<3x2x32xf32, #tpu.memory_space<vmem>>, vector<1x2x32xf32>,
    %c0_190 = arith.constant 0 : index
    %c0_191 = arith.constant 0 : index
    %c0_192 = arith.constant 0 : index
    %417 = vector.load %arg13[%c0_190, %c0_191, %c0_192] : memref<3x2x32xf32, #tpu.memory_space<vmem>>, vector<1x2x32xf32>
    %418 = vector.shape_cast %417 : vector<1x2x32xf32> to vector<2x32xf32>
    %419 = vector.shape_cast %411 : vector<2x32xf32> to vector<1x2x32xf32>
    tpu.vector_store %arg13[%c0_190, %c0_191, %c0_192], %419 {strides = array<i32>} : memref<3x2x32xf32, #tpu.memory_space<vmem>>, vector<1x2x32xf32>,
    %cst_193 = arith.constant dense<0.000000e+00> : vector<2x128xf32>
    %420 = tpu.matmul %413, %19, %cst_193 {dimension_numbers = #tpu.dot_dimension_numbers<[1], [0], [0], [1], [0, 0, 1, 1], [], []>} : vector<2x32xf32>, vector<32x128xf32>, vector<2x128xf32> -> vector<2x128xf32>
    %c1_194 = arith.constant 1 : index
    %c0_195 = arith.constant 0 : index
    %c0_196 = arith.constant 0 : index
    %421 = vector.load %arg12[%c1_194, %c0_195, %c0_196] : memref<3x2x32xf32, #tpu.memory_space<vmem>>, vector<1x2x32xf32>
    %422 = vector.shape_cast %421 : vector<1x2x32xf32> to vector<2x32xf32>
    %cst_197 = arith.constant dense<0.000000e+00> : vector<2x128xf32>
    %423 = tpu.matmul %422, %15, %cst_197 {dimension_numbers = #tpu.dot_dimension_numbers<[1], [0], [0], [1], [0, 0, 1, 1], [], []>} : vector<2x32xf32>, vector<32x128xf32>, vector<2x128xf32> -> vector<2x128xf32>
    %424 = arith.addf %420, %423 : vector<2x128xf32>
    %425 = arith.addf %424, %25 : vector<2x128xf32>
    %c1_198 = arith.constant 1 : index
    %c0_199 = arith.constant 0 : index
    %c0_200 = arith.constant 0 : index
    %426 = vector.load %arg13[%c1_198, %c0_199, %c0_200] : memref<3x2x32xf32, #tpu.memory_space<vmem>>, vector<1x2x32xf32>
    %427 = vector.shape_cast %426 : vector<1x2x32xf32> to vector<2x32xf32>
    %428 = vector.extract_strided_slice %425 {offsets = [0, 0], sizes = [2, 32], strides = [1, 1]} : vector<2x128xf32> to vector<2x32xf32>
    %429 = arith.negf %428 : vector<2x32xf32>
    %430 = math.exp %429 : vector<2x32xf32>
    %cst_201 = arith.constant 1.000000e+00 : f32
    %431 = vector.broadcast %cst_201 : f32 to vector<2x32xf32>
    %432 = arith.addf %431, %430 : vector<2x32xf32>
    %433 = arith.divf %431, %432 : vector<2x32xf32>
    %434 = vector.extract_strided_slice %425 {offsets = [0, 32], sizes = [2, 32], strides = [1, 1]} : vector<2x128xf32> to vector<2x32xf32>
    %435 = arith.negf %434 : vector<2x32xf32>
    %436 = math.exp %435 : vector<2x32xf32>
    %cst_202 = arith.constant 1.000000e+00 : f32
    %437 = vector.broadcast %cst_202 : f32 to vector<2x32xf32>
    %438 = arith.addf %437, %436 : vector<2x32xf32>
    %439 = arith.divf %437, %438 : vector<2x32xf32>
    %440 = vector.extract_strided_slice %425 {offsets = [0, 64], sizes = [2, 32], strides = [1, 1]} : vector<2x128xf32> to vector<2x32xf32>
    %441 = math.tanh %440 : vector<2x32xf32>
    %442 = vector.extract_strided_slice %425 {offsets = [0, 96], sizes = [2, 32], strides = [1, 1]} : vector<2x128xf32> to vector<2x32xf32>
    %443 = arith.negf %442 : vector<2x32xf32>
    %444 = math.exp %443 : vector<2x32xf32>
    %cst_203 = arith.constant 1.000000e+00 : f32
    %445 = vector.broadcast %cst_203 : f32 to vector<2x32xf32>
    %446 = arith.addf %445, %444 : vector<2x32xf32>
    %447 = arith.divf %445, %446 : vector<2x32xf32>
    %448 = arith.mulf %439, %427 : vector<2x32xf32>
    %449 = arith.mulf %433, %441 : vector<2x32xf32>
    %450 = arith.addf %448, %449 : vector<2x32xf32>
    %451 = math.tanh %450 : vector<2x32xf32>
    %452 = arith.mulf %447, %451 : vector<2x32xf32>
    %c1_204 = arith.constant 1 : index
    %c0_205 = arith.constant 0 : index
    %c0_206 = arith.constant 0 : index
    %453 = vector.load %arg12[%c1_204, %c0_205, %c0_206] : memref<3x2x32xf32, #tpu.memory_space<vmem>>, vector<1x2x32xf32>
    %454 = vector.shape_cast %453 : vector<1x2x32xf32> to vector<2x32xf32>
    %455 = vector.shape_cast %452 : vector<2x32xf32> to vector<1x2x32xf32>
    tpu.vector_store %arg12[%c1_204, %c0_205, %c0_206], %455 {strides = array<i32>} : memref<3x2x32xf32, #tpu.memory_space<vmem>>, vector<1x2x32xf32>,
    %c1_207 = arith.constant 1 : index
    %c0_208 = arith.constant 0 : index
    %c0_209 = arith.constant 0 : index
    %456 = vector.load %arg13[%c1_207, %c0_208, %c0_209] : memref<3x2x32xf32, #tpu.memory_space<vmem>>, vector<1x2x32xf32>
    %457 = vector.shape_cast %456 : vector<1x2x32xf32> to vector<2x32xf32>
    %458 = vector.shape_cast %450 : vector<2x32xf32> to vector<1x2x32xf32>
    tpu.vector_store %arg13[%c1_207, %c0_208, %c0_209], %458 {strides = array<i32>} : memref<3x2x32xf32, #tpu.memory_space<vmem>>, vector<1x2x32xf32>,
    %cst_210 = arith.constant dense<0.000000e+00> : vector<2x128xf32>
    %459 = tpu.matmul %452, %21, %cst_210 {dimension_numbers = #tpu.dot_dimension_numbers<[1], [0], [0], [1], [0, 0, 1, 1], [], []>} : vector<2x32xf32>, vector<32x128xf32>, vector<2x128xf32> -> vector<2x128xf32>
    %c2_211 = arith.constant 2 : index
    %c0_212 = arith.constant 0 : index
    %c0_213 = arith.constant 0 : index
    %460 = vector.load %arg12[%c2_211, %c0_212, %c0_213] : memref<3x2x32xf32, #tpu.memory_space<vmem>>, vector<1x2x32xf32>
    %461 = vector.shape_cast %460 : vector<1x2x32xf32> to vector<2x32xf32>
    %cst_214 = arith.constant dense<0.000000e+00> : vector<2x128xf32>
    %462 = tpu.matmul %461, %17, %cst_214 {dimension_numbers = #tpu.dot_dimension_numbers<[1], [0], [0], [1], [0, 0, 1, 1], [], []>} : vector<2x32xf32>, vector<32x128xf32>, vector<2x128xf32> -> vector<2x128xf32>
    %463 = arith.addf %459, %462 : vector<2x128xf32>
    %464 = arith.addf %463, %29 : vector<2x128xf32>
    %c2_215 = arith.constant 2 : index
    %c0_216 = arith.constant 0 : index
    %c0_217 = arith.constant 0 : index
    %465 = vector.load %arg13[%c2_215, %c0_216, %c0_217] : memref<3x2x32xf32, #tpu.memory_space<vmem>>, vector<1x2x32xf32>
    %466 = vector.shape_cast %465 : vector<1x2x32xf32> to vector<2x32xf32>
    %467 = vector.extract_strided_slice %464 {offsets = [0, 0], sizes = [2, 32], strides = [1, 1]} : vector<2x128xf32> to vector<2x32xf32>
    %468 = arith.negf %467 : vector<2x32xf32>
    %469 = math.exp %468 : vector<2x32xf32>
    %cst_218 = arith.constant 1.000000e+00 : f32
    %470 = vector.broadcast %cst_218 : f32 to vector<2x32xf32>
    %471 = arith.addf %470, %469 : vector<2x32xf32>
    %472 = arith.divf %470, %471 : vector<2x32xf32>
    %473 = vector.extract_strided_slice %464 {offsets = [0, 32], sizes = [2, 32], strides = [1, 1]} : vector<2x128xf32> to vector<2x32xf32>
    %474 = arith.negf %473 : vector<2x32xf32>
    %475 = math.exp %474 : vector<2x32xf32>
    %cst_219 = arith.constant 1.000000e+00 : f32
    %476 = vector.broadcast %cst_219 : f32 to vector<2x32xf32>
    %477 = arith.addf %476, %475 : vector<2x32xf32>
    %478 = arith.divf %476, %477 : vector<2x32xf32>
    %479 = vector.extract_strided_slice %464 {offsets = [0, 64], sizes = [2, 32], strides = [1, 1]} : vector<2x128xf32> to vector<2x32xf32>
    %480 = math.tanh %479 : vector<2x32xf32>
    %481 = vector.extract_strided_slice %464 {offsets = [0, 96], sizes = [2, 32], strides = [1, 1]} : vector<2x128xf32> to vector<2x32xf32>
    %482 = arith.negf %481 : vector<2x32xf32>
    %483 = math.exp %482 : vector<2x32xf32>
    %cst_220 = arith.constant 1.000000e+00 : f32
    %484 = vector.broadcast %cst_220 : f32 to vector<2x32xf32>
    %485 = arith.addf %484, %483 : vector<2x32xf32>
    %486 = arith.divf %484, %485 : vector<2x32xf32>
    %487 = arith.mulf %478, %466 : vector<2x32xf32>
    %488 = arith.mulf %472, %480 : vector<2x32xf32>
    %489 = arith.addf %487, %488 : vector<2x32xf32>
    %490 = math.tanh %489 : vector<2x32xf32>
    %491 = arith.mulf %486, %490 : vector<2x32xf32>
    %c2_221 = arith.constant 2 : index
    %c0_222 = arith.constant 0 : index
    %c0_223 = arith.constant 0 : index
    %492 = vector.load %arg12[%c2_221, %c0_222, %c0_223] : memref<3x2x32xf32, #tpu.memory_space<vmem>>, vector<1x2x32xf32>
    %493 = vector.shape_cast %492 : vector<1x2x32xf32> to vector<2x32xf32>
    %494 = vector.shape_cast %491 : vector<2x32xf32> to vector<1x2x32xf32>
    tpu.vector_store %arg12[%c2_221, %c0_222, %c0_223], %494 {strides = array<i32>} : memref<3x2x32xf32, #tpu.memory_space<vmem>>, vector<1x2x32xf32>,
    %c2_224 = arith.constant 2 : index
    %c0_225 = arith.constant 0 : index
    %c0_226 = arith.constant 0 : index
    %495 = vector.load %arg13[%c2_224, %c0_225, %c0_226] : memref<3x2x32xf32, #tpu.memory_space<vmem>>, vector<1x2x32xf32>
    %496 = vector.shape_cast %495 : vector<1x2x32xf32> to vector<2x32xf32>
    %497 = vector.shape_cast %489 : vector<2x32xf32> to vector<1x2x32xf32>
    tpu.vector_store %arg13[%c2_224, %c0_225, %c0_226], %497 {strides = array<i32>} : memref<3x2x32xf32, #tpu.memory_space<vmem>>, vector<1x2x32xf32>,
    %498 = vector.extract_strided_slice %11 {offsets = [0, 4, 0], sizes = [2, 1, 128], strides = [1, 1, 1]} : vector<2x8x128xf32> to vector<2x1x128xf32>
    %499 = vector.shape_cast %498 : vector<2x1x128xf32> to vector<2x128xf32>
    %c0_227 = arith.constant 0 : index
    %c0_228 = arith.constant 0 : index
    %c0_229 = arith.constant 0 : index
    %500 = vector.load %arg12[%c0_227, %c0_228, %c0_229] : memref<3x2x32xf32, #tpu.memory_space<vmem>>, vector<1x2x32xf32>
    %501 = vector.shape_cast %500 : vector<1x2x32xf32> to vector<2x32xf32>
    %cst_230 = arith.constant dense<0.000000e+00> : vector<2x128xf32>
    %502 = tpu.matmul %501, %13, %cst_230 {dimension_numbers = #tpu.dot_dimension_numbers<[1], [0], [0], [1], [0, 0, 1, 1], [], []>} : vector<2x32xf32>, vector<32x128xf32>, vector<2x128xf32> -> vector<2x128xf32>
    %503 = arith.addf %499, %502 : vector<2x128xf32>
    %c0_231 = arith.constant 0 : index
    %c0_232 = arith.constant 0 : index
    %c0_233 = arith.constant 0 : index
    %504 = vector.load %arg13[%c0_231, %c0_232, %c0_233] : memref<3x2x32xf32, #tpu.memory_space<vmem>>, vector<1x2x32xf32>
    %505 = vector.shape_cast %504 : vector<1x2x32xf32> to vector<2x32xf32>
    %506 = vector.extract_strided_slice %503 {offsets = [0, 0], sizes = [2, 32], strides = [1, 1]} : vector<2x128xf32> to vector<2x32xf32>
    %507 = arith.negf %506 : vector<2x32xf32>
    %508 = math.exp %507 : vector<2x32xf32>
    %cst_234 = arith.constant 1.000000e+00 : f32
    %509 = vector.broadcast %cst_234 : f32 to vector<2x32xf32>
    %510 = arith.addf %509, %508 : vector<2x32xf32>
    %511 = arith.divf %509, %510 : vector<2x32xf32>
    %512 = vector.extract_strided_slice %503 {offsets = [0, 32], sizes = [2, 32], strides = [1, 1]} : vector<2x128xf32> to vector<2x32xf32>
    %513 = arith.negf %512 : vector<2x32xf32>
    %514 = math.exp %513 : vector<2x32xf32>
    %cst_235 = arith.constant 1.000000e+00 : f32
    %515 = vector.broadcast %cst_235 : f32 to vector<2x32xf32>
    %516 = arith.addf %515, %514 : vector<2x32xf32>
    %517 = arith.divf %515, %516 : vector<2x32xf32>
    %518 = vector.extract_strided_slice %503 {offsets = [0, 64], sizes = [2, 32], strides = [1, 1]} : vector<2x128xf32> to vector<2x32xf32>
    %519 = math.tanh %518 : vector<2x32xf32>
    %520 = vector.extract_strided_slice %503 {offsets = [0, 96], sizes = [2, 32], strides = [1, 1]} : vector<2x128xf32> to vector<2x32xf32>
    %521 = arith.negf %520 : vector<2x32xf32>
    %522 = math.exp %521 : vector<2x32xf32>
    %cst_236 = arith.constant 1.000000e+00 : f32
    %523 = vector.broadcast %cst_236 : f32 to vector<2x32xf32>
    %524 = arith.addf %523, %522 : vector<2x32xf32>
    %525 = arith.divf %523, %524 : vector<2x32xf32>
    %526 = arith.mulf %517, %505 : vector<2x32xf32>
    %527 = arith.mulf %511, %519 : vector<2x32xf32>
    %528 = arith.addf %526, %527 : vector<2x32xf32>
    %529 = math.tanh %528 : vector<2x32xf32>
    %530 = arith.mulf %525, %529 : vector<2x32xf32>
    %c0_237 = arith.constant 0 : index
    %c0_238 = arith.constant 0 : index
    %c0_239 = arith.constant 0 : index
    %531 = vector.load %arg12[%c0_237, %c0_238, %c0_239] : memref<3x2x32xf32, #tpu.memory_space<vmem>>, vector<1x2x32xf32>
    %532 = vector.shape_cast %531 : vector<1x2x32xf32> to vector<2x32xf32>
    %533 = vector.shape_cast %530 : vector<2x32xf32> to vector<1x2x32xf32>
    tpu.vector_store %arg12[%c0_237, %c0_238, %c0_239], %533 {strides = array<i32>} : memref<3x2x32xf32, #tpu.memory_space<vmem>>, vector<1x2x32xf32>,
    %c0_240 = arith.constant 0 : index
    %c0_241 = arith.constant 0 : index
    %c0_242 = arith.constant 0 : index
    %534 = vector.load %arg13[%c0_240, %c0_241, %c0_242] : memref<3x2x32xf32, #tpu.memory_space<vmem>>, vector<1x2x32xf32>
    %535 = vector.shape_cast %534 : vector<1x2x32xf32> to vector<2x32xf32>
    %536 = vector.shape_cast %528 : vector<2x32xf32> to vector<1x2x32xf32>
    tpu.vector_store %arg13[%c0_240, %c0_241, %c0_242], %536 {strides = array<i32>} : memref<3x2x32xf32, #tpu.memory_space<vmem>>, vector<1x2x32xf32>,
    %cst_243 = arith.constant dense<0.000000e+00> : vector<2x128xf32>
    %537 = tpu.matmul %530, %19, %cst_243 {dimension_numbers = #tpu.dot_dimension_numbers<[1], [0], [0], [1], [0, 0, 1, 1], [], []>} : vector<2x32xf32>, vector<32x128xf32>, vector<2x128xf32> -> vector<2x128xf32>
    %c1_244 = arith.constant 1 : index
    %c0_245 = arith.constant 0 : index
    %c0_246 = arith.constant 0 : index
    %538 = vector.load %arg12[%c1_244, %c0_245, %c0_246] : memref<3x2x32xf32, #tpu.memory_space<vmem>>, vector<1x2x32xf32>
    %539 = vector.shape_cast %538 : vector<1x2x32xf32> to vector<2x32xf32>
    %cst_247 = arith.constant dense<0.000000e+00> : vector<2x128xf32>
    %540 = tpu.matmul %539, %15, %cst_247 {dimension_numbers = #tpu.dot_dimension_numbers<[1], [0], [0], [1], [0, 0, 1, 1], [], []>} : vector<2x32xf32>, vector<32x128xf32>, vector<2x128xf32> -> vector<2x128xf32>
    %541 = arith.addf %537, %540 : vector<2x128xf32>
    %542 = arith.addf %541, %25 : vector<2x128xf32>
    %c1_248 = arith.constant 1 : index
    %c0_249 = arith.constant 0 : index
    %c0_250 = arith.constant 0 : index
    %543 = vector.load %arg13[%c1_248, %c0_249, %c0_250] : memref<3x2x32xf32, #tpu.memory_space<vmem>>, vector<1x2x32xf32>
    %544 = vector.shape_cast %543 : vector<1x2x32xf32> to vector<2x32xf32>
    %545 = vector.extract_strided_slice %542 {offsets = [0, 0], sizes = [2, 32], strides = [1, 1]} : vector<2x128xf32> to vector<2x32xf32>
    %546 = arith.negf %545 : vector<2x32xf32>
    %547 = math.exp %546 : vector<2x32xf32>
    %cst_251 = arith.constant 1.000000e+00 : f32
    %548 = vector.broadcast %cst_251 : f32 to vector<2x32xf32>
    %549 = arith.addf %548, %547 : vector<2x32xf32>
    %550 = arith.divf %548, %549 : vector<2x32xf32>
    %551 = vector.extract_strided_slice %542 {offsets = [0, 32], sizes = [2, 32], strides = [1, 1]} : vector<2x128xf32> to vector<2x32xf32>
    %552 = arith.negf %551 : vector<2x32xf32>
    %553 = math.exp %552 : vector<2x32xf32>
    %cst_252 = arith.constant 1.000000e+00 : f32
    %554 = vector.broadcast %cst_252 : f32 to vector<2x32xf32>
    %555 = arith.addf %554, %553 : vector<2x32xf32>
    %556 = arith.divf %554, %555 : vector<2x32xf32>
    %557 = vector.extract_strided_slice %542 {offsets = [0, 64], sizes = [2, 32], strides = [1, 1]} : vector<2x128xf32> to vector<2x32xf32>
    %558 = math.tanh %557 : vector<2x32xf32>
    %559 = vector.extract_strided_slice %542 {offsets = [0, 96], sizes = [2, 32], strides = [1, 1]} : vector<2x128xf32> to vector<2x32xf32>
    %560 = arith.negf %559 : vector<2x32xf32>
    %561 = math.exp %560 : vector<2x32xf32>
    %cst_253 = arith.constant 1.000000e+00 : f32
    %562 = vector.broadcast %cst_253 : f32 to vector<2x32xf32>
    %563 = arith.addf %562, %561 : vector<2x32xf32>
    %564 = arith.divf %562, %563 : vector<2x32xf32>
    %565 = arith.mulf %556, %544 : vector<2x32xf32>
    %566 = arith.mulf %550, %558 : vector<2x32xf32>
    %567 = arith.addf %565, %566 : vector<2x32xf32>
    %568 = math.tanh %567 : vector<2x32xf32>
    %569 = arith.mulf %564, %568 : vector<2x32xf32>
    %c1_254 = arith.constant 1 : index
    %c0_255 = arith.constant 0 : index
    %c0_256 = arith.constant 0 : index
    %570 = vector.load %arg12[%c1_254, %c0_255, %c0_256] : memref<3x2x32xf32, #tpu.memory_space<vmem>>, vector<1x2x32xf32>
    %571 = vector.shape_cast %570 : vector<1x2x32xf32> to vector<2x32xf32>
    %572 = vector.shape_cast %569 : vector<2x32xf32> to vector<1x2x32xf32>
    tpu.vector_store %arg12[%c1_254, %c0_255, %c0_256], %572 {strides = array<i32>} : memref<3x2x32xf32, #tpu.memory_space<vmem>>, vector<1x2x32xf32>,
    %c1_257 = arith.constant 1 : index
    %c0_258 = arith.constant 0 : index
    %c0_259 = arith.constant 0 : index
    %573 = vector.load %arg13[%c1_257, %c0_258, %c0_259] : memref<3x2x32xf32, #tpu.memory_space<vmem>>, vector<1x2x32xf32>
    %574 = vector.shape_cast %573 : vector<1x2x32xf32> to vector<2x32xf32>
    %575 = vector.shape_cast %567 : vector<2x32xf32> to vector<1x2x32xf32>
    tpu.vector_store %arg13[%c1_257, %c0_258, %c0_259], %575 {strides = array<i32>} : memref<3x2x32xf32, #tpu.memory_space<vmem>>, vector<1x2x32xf32>,
    %cst_260 = arith.constant dense<0.000000e+00> : vector<2x128xf32>
    %576 = tpu.matmul %569, %21, %cst_260 {dimension_numbers = #tpu.dot_dimension_numbers<[1], [0], [0], [1], [0, 0, 1, 1], [], []>} : vector<2x32xf32>, vector<32x128xf32>, vector<2x128xf32> -> vector<2x128xf32>
    %c2_261 = arith.constant 2 : index
    %c0_262 = arith.constant 0 : index
    %c0_263 = arith.constant 0 : index
    %577 = vector.load %arg12[%c2_261, %c0_262, %c0_263] : memref<3x2x32xf32, #tpu.memory_space<vmem>>, vector<1x2x32xf32>
    %578 = vector.shape_cast %577 : vector<1x2x32xf32> to vector<2x32xf32>
    %cst_264 = arith.constant dense<0.000000e+00> : vector<2x128xf32>
    %579 = tpu.matmul %578, %17, %cst_264 {dimension_numbers = #tpu.dot_dimension_numbers<[1], [0], [0], [1], [0, 0, 1, 1], [], []>} : vector<2x32xf32>, vector<32x128xf32>, vector<2x128xf32> -> vector<2x128xf32>
    %580 = arith.addf %576, %579 : vector<2x128xf32>
    %581 = arith.addf %580, %29 : vector<2x128xf32>
    %c2_265 = arith.constant 2 : index
    %c0_266 = arith.constant 0 : index
    %c0_267 = arith.constant 0 : index
    %582 = vector.load %arg13[%c2_265, %c0_266, %c0_267] : memref<3x2x32xf32, #tpu.memory_space<vmem>>, vector<1x2x32xf32>
    %583 = vector.shape_cast %582 : vector<1x2x32xf32> to vector<2x32xf32>
    %584 = vector.extract_strided_slice %581 {offsets = [0, 0], sizes = [2, 32], strides = [1, 1]} : vector<2x128xf32> to vector<2x32xf32>
    %585 = arith.negf %584 : vector<2x32xf32>
    %586 = math.exp %585 : vector<2x32xf32>
    %cst_268 = arith.constant 1.000000e+00 : f32
    %587 = vector.broadcast %cst_268 : f32 to vector<2x32xf32>
    %588 = arith.addf %587, %586 : vector<2x32xf32>
    %589 = arith.divf %587, %588 : vector<2x32xf32>
    %590 = vector.extract_strided_slice %581 {offsets = [0, 32], sizes = [2, 32], strides = [1, 1]} : vector<2x128xf32> to vector<2x32xf32>
    %591 = arith.negf %590 : vector<2x32xf32>
    %592 = math.exp %591 : vector<2x32xf32>
    %cst_269 = arith.constant 1.000000e+00 : f32
    %593 = vector.broadcast %cst_269 : f32 to vector<2x32xf32>
    %594 = arith.addf %593, %592 : vector<2x32xf32>
    %595 = arith.divf %593, %594 : vector<2x32xf32>
    %596 = vector.extract_strided_slice %581 {offsets = [0, 64], sizes = [2, 32], strides = [1, 1]} : vector<2x128xf32> to vector<2x32xf32>
    %597 = math.tanh %596 : vector<2x32xf32>
    %598 = vector.extract_strided_slice %581 {offsets = [0, 96], sizes = [2, 32], strides = [1, 1]} : vector<2x128xf32> to vector<2x32xf32>
    %599 = arith.negf %598 : vector<2x32xf32>
    %600 = math.exp %599 : vector<2x32xf32>
    %cst_270 = arith.constant 1.000000e+00 : f32
    %601 = vector.broadcast %cst_270 : f32 to vector<2x32xf32>
    %602 = arith.addf %601, %600 : vector<2x32xf32>
    %603 = arith.divf %601, %602 : vector<2x32xf32>
    %604 = arith.mulf %595, %583 : vector<2x32xf32>
    %605 = arith.mulf %589, %597 : vector<2x32xf32>
    %606 = arith.addf %604, %605 : vector<2x32xf32>
    %607 = math.tanh %606 : vector<2x32xf32>
    %608 = arith.mulf %603, %607 : vector<2x32xf32>
    %c2_271 = arith.constant 2 : index
    %c0_272 = arith.constant 0 : index
    %c0_273 = arith.constant 0 : index
    %609 = vector.load %arg12[%c2_271, %c0_272, %c0_273] : memref<3x2x32xf32, #tpu.memory_space<vmem>>, vector<1x2x32xf32>
    %610 = vector.shape_cast %609 : vector<1x2x32xf32> to vector<2x32xf32>
    %611 = vector.shape_cast %608 : vector<2x32xf32> to vector<1x2x32xf32>
    tpu.vector_store %arg12[%c2_271, %c0_272, %c0_273], %611 {strides = array<i32>} : memref<3x2x32xf32, #tpu.memory_space<vmem>>, vector<1x2x32xf32>,
    %c2_274 = arith.constant 2 : index
    %c0_275 = arith.constant 0 : index
    %c0_276 = arith.constant 0 : index
    %612 = vector.load %arg13[%c2_274, %c0_275, %c0_276] : memref<3x2x32xf32, #tpu.memory_space<vmem>>, vector<1x2x32xf32>
    %613 = vector.shape_cast %612 : vector<1x2x32xf32> to vector<2x32xf32>
    %614 = vector.shape_cast %606 : vector<2x32xf32> to vector<1x2x32xf32>
    tpu.vector_store %arg13[%c2_274, %c0_275, %c0_276], %614 {strides = array<i32>} : memref<3x2x32xf32, #tpu.memory_space<vmem>>, vector<1x2x32xf32>,
    %615 = vector.extract_strided_slice %11 {offsets = [0, 5, 0], sizes = [2, 1, 128], strides = [1, 1, 1]} : vector<2x8x128xf32> to vector<2x1x128xf32>
    %616 = vector.shape_cast %615 : vector<2x1x128xf32> to vector<2x128xf32>
    %c0_277 = arith.constant 0 : index
    %c0_278 = arith.constant 0 : index
    %c0_279 = arith.constant 0 : index
    %617 = vector.load %arg12[%c0_277, %c0_278, %c0_279] : memref<3x2x32xf32, #tpu.memory_space<vmem>>, vector<1x2x32xf32>
    %618 = vector.shape_cast %617 : vector<1x2x32xf32> to vector<2x32xf32>
    %cst_280 = arith.constant dense<0.000000e+00> : vector<2x128xf32>
    %619 = tpu.matmul %618, %13, %cst_280 {dimension_numbers = #tpu.dot_dimension_numbers<[1], [0], [0], [1], [0, 0, 1, 1], [], []>} : vector<2x32xf32>, vector<32x128xf32>, vector<2x128xf32> -> vector<2x128xf32>
    %620 = arith.addf %616, %619 : vector<2x128xf32>
    %c0_281 = arith.constant 0 : index
    %c0_282 = arith.constant 0 : index
    %c0_283 = arith.constant 0 : index
    %621 = vector.load %arg13[%c0_281, %c0_282, %c0_283] : memref<3x2x32xf32, #tpu.memory_space<vmem>>, vector<1x2x32xf32>
    %622 = vector.shape_cast %621 : vector<1x2x32xf32> to vector<2x32xf32>
    %623 = vector.extract_strided_slice %620 {offsets = [0, 0], sizes = [2, 32], strides = [1, 1]} : vector<2x128xf32> to vector<2x32xf32>
    %624 = arith.negf %623 : vector<2x32xf32>
    %625 = math.exp %624 : vector<2x32xf32>
    %cst_284 = arith.constant 1.000000e+00 : f32
    %626 = vector.broadcast %cst_284 : f32 to vector<2x32xf32>
    %627 = arith.addf %626, %625 : vector<2x32xf32>
    %628 = arith.divf %626, %627 : vector<2x32xf32>
    %629 = vector.extract_strided_slice %620 {offsets = [0, 32], sizes = [2, 32], strides = [1, 1]} : vector<2x128xf32> to vector<2x32xf32>
    %630 = arith.negf %629 : vector<2x32xf32>
    %631 = math.exp %630 : vector<2x32xf32>
    %cst_285 = arith.constant 1.000000e+00 : f32
    %632 = vector.broadcast %cst_285 : f32 to vector<2x32xf32>
    %633 = arith.addf %632, %631 : vector<2x32xf32>
    %634 = arith.divf %632, %633 : vector<2x32xf32>
    %635 = vector.extract_strided_slice %620 {offsets = [0, 64], sizes = [2, 32], strides = [1, 1]} : vector<2x128xf32> to vector<2x32xf32>
    %636 = math.tanh %635 : vector<2x32xf32>
    %637 = vector.extract_strided_slice %620 {offsets = [0, 96], sizes = [2, 32], strides = [1, 1]} : vector<2x128xf32> to vector<2x32xf32>
    %638 = arith.negf %637 : vector<2x32xf32>
    %639 = math.exp %638 : vector<2x32xf32>
    %cst_286 = arith.constant 1.000000e+00 : f32
    %640 = vector.broadcast %cst_286 : f32 to vector<2x32xf32>
    %641 = arith.addf %640, %639 : vector<2x32xf32>
    %642 = arith.divf %640, %641 : vector<2x32xf32>
    %643 = arith.mulf %634, %622 : vector<2x32xf32>
    %644 = arith.mulf %628, %636 : vector<2x32xf32>
    %645 = arith.addf %643, %644 : vector<2x32xf32>
    %646 = math.tanh %645 : vector<2x32xf32>
    %647 = arith.mulf %642, %646 : vector<2x32xf32>
    %c0_287 = arith.constant 0 : index
    %c0_288 = arith.constant 0 : index
    %c0_289 = arith.constant 0 : index
    %648 = vector.load %arg12[%c0_287, %c0_288, %c0_289] : memref<3x2x32xf32, #tpu.memory_space<vmem>>, vector<1x2x32xf32>
    %649 = vector.shape_cast %648 : vector<1x2x32xf32> to vector<2x32xf32>
    %650 = vector.shape_cast %647 : vector<2x32xf32> to vector<1x2x32xf32>
    tpu.vector_store %arg12[%c0_287, %c0_288, %c0_289], %650 {strides = array<i32>} : memref<3x2x32xf32, #tpu.memory_space<vmem>>, vector<1x2x32xf32>,
    %c0_290 = arith.constant 0 : index
    %c0_291 = arith.constant 0 : index
    %c0_292 = arith.constant 0 : index
    %651 = vector.load %arg13[%c0_290, %c0_291, %c0_292] : memref<3x2x32xf32, #tpu.memory_space<vmem>>, vector<1x2x32xf32>
    %652 = vector.shape_cast %651 : vector<1x2x32xf32> to vector<2x32xf32>
    %653 = vector.shape_cast %645 : vector<2x32xf32> to vector<1x2x32xf32>
    tpu.vector_store %arg13[%c0_290, %c0_291, %c0_292], %653 {strides = array<i32>} : memref<3x2x32xf32, #tpu.memory_space<vmem>>, vector<1x2x32xf32>,
    %cst_293 = arith.constant dense<0.000000e+00> : vector<2x128xf32>
    %654 = tpu.matmul %647, %19, %cst_293 {dimension_numbers = #tpu.dot_dimension_numbers<[1], [0], [0], [1], [0, 0, 1, 1], [], []>} : vector<2x32xf32>, vector<32x128xf32>, vector<2x128xf32> -> vector<2x128xf32>
    %c1_294 = arith.constant 1 : index
    %c0_295 = arith.constant 0 : index
    %c0_296 = arith.constant 0 : index
    %655 = vector.load %arg12[%c1_294, %c0_295, %c0_296] : memref<3x2x32xf32, #tpu.memory_space<vmem>>, vector<1x2x32xf32>
    %656 = vector.shape_cast %655 : vector<1x2x32xf32> to vector<2x32xf32>
    %cst_297 = arith.constant dense<0.000000e+00> : vector<2x128xf32>
    %657 = tpu.matmul %656, %15, %cst_297 {dimension_numbers = #tpu.dot_dimension_numbers<[1], [0], [0], [1], [0, 0, 1, 1], [], []>} : vector<2x32xf32>, vector<32x128xf32>, vector<2x128xf32> -> vector<2x128xf32>
    %658 = arith.addf %654, %657 : vector<2x128xf32>
    %659 = arith.addf %658, %25 : vector<2x128xf32>
    %c1_298 = arith.constant 1 : index
    %c0_299 = arith.constant 0 : index
    %c0_300 = arith.constant 0 : index
    %660 = vector.load %arg13[%c1_298, %c0_299, %c0_300] : memref<3x2x32xf32, #tpu.memory_space<vmem>>, vector<1x2x32xf32>
    %661 = vector.shape_cast %660 : vector<1x2x32xf32> to vector<2x32xf32>
    %662 = vector.extract_strided_slice %659 {offsets = [0, 0], sizes = [2, 32], strides = [1, 1]} : vector<2x128xf32> to vector<2x32xf32>
    %663 = arith.negf %662 : vector<2x32xf32>
    %664 = math.exp %663 : vector<2x32xf32>
    %cst_301 = arith.constant 1.000000e+00 : f32
    %665 = vector.broadcast %cst_301 : f32 to vector<2x32xf32>
    %666 = arith.addf %665, %664 : vector<2x32xf32>
    %667 = arith.divf %665, %666 : vector<2x32xf32>
    %668 = vector.extract_strided_slice %659 {offsets = [0, 32], sizes = [2, 32], strides = [1, 1]} : vector<2x128xf32> to vector<2x32xf32>
    %669 = arith.negf %668 : vector<2x32xf32>
    %670 = math.exp %669 : vector<2x32xf32>
    %cst_302 = arith.constant 1.000000e+00 : f32
    %671 = vector.broadcast %cst_302 : f32 to vector<2x32xf32>
    %672 = arith.addf %671, %670 : vector<2x32xf32>
    %673 = arith.divf %671, %672 : vector<2x32xf32>
    %674 = vector.extract_strided_slice %659 {offsets = [0, 64], sizes = [2, 32], strides = [1, 1]} : vector<2x128xf32> to vector<2x32xf32>
    %675 = math.tanh %674 : vector<2x32xf32>
    %676 = vector.extract_strided_slice %659 {offsets = [0, 96], sizes = [2, 32], strides = [1, 1]} : vector<2x128xf32> to vector<2x32xf32>
    %677 = arith.negf %676 : vector<2x32xf32>
    %678 = math.exp %677 : vector<2x32xf32>
    %cst_303 = arith.constant 1.000000e+00 : f32
    %679 = vector.broadcast %cst_303 : f32 to vector<2x32xf32>
    %680 = arith.addf %679, %678 : vector<2x32xf32>
    %681 = arith.divf %679, %680 : vector<2x32xf32>
    %682 = arith.mulf %673, %661 : vector<2x32xf32>
    %683 = arith.mulf %667, %675 : vector<2x32xf32>
    %684 = arith.addf %682, %683 : vector<2x32xf32>
    %685 = math.tanh %684 : vector<2x32xf32>
    %686 = arith.mulf %681, %685 : vector<2x32xf32>
    %c1_304 = arith.constant 1 : index
    %c0_305 = arith.constant 0 : index
    %c0_306 = arith.constant 0 : index
    %687 = vector.load %arg12[%c1_304, %c0_305, %c0_306] : memref<3x2x32xf32, #tpu.memory_space<vmem>>, vector<1x2x32xf32>
    %688 = vector.shape_cast %687 : vector<1x2x32xf32> to vector<2x32xf32>
    %689 = vector.shape_cast %686 : vector<2x32xf32> to vector<1x2x32xf32>
    tpu.vector_store %arg12[%c1_304, %c0_305, %c0_306], %689 {strides = array<i32>} : memref<3x2x32xf32, #tpu.memory_space<vmem>>, vector<1x2x32xf32>,
    %c1_307 = arith.constant 1 : index
    %c0_308 = arith.constant 0 : index
    %c0_309 = arith.constant 0 : index
    %690 = vector.load %arg13[%c1_307, %c0_308, %c0_309] : memref<3x2x32xf32, #tpu.memory_space<vmem>>, vector<1x2x32xf32>
    %691 = vector.shape_cast %690 : vector<1x2x32xf32> to vector<2x32xf32>
    %692 = vector.shape_cast %684 : vector<2x32xf32> to vector<1x2x32xf32>
    tpu.vector_store %arg13[%c1_307, %c0_308, %c0_309], %692 {strides = array<i32>} : memref<3x2x32xf32, #tpu.memory_space<vmem>>, vector<1x2x32xf32>,
    %cst_310 = arith.constant dense<0.000000e+00> : vector<2x128xf32>
    %693 = tpu.matmul %686, %21, %cst_310 {dimension_numbers = #tpu.dot_dimension_numbers<[1], [0], [0], [1], [0, 0, 1, 1], [], []>} : vector<2x32xf32>, vector<32x128xf32>, vector<2x128xf32> -> vector<2x128xf32>
    %c2_311 = arith.constant 2 : index
    %c0_312 = arith.constant 0 : index
    %c0_313 = arith.constant 0 : index
    %694 = vector.load %arg12[%c2_311, %c0_312, %c0_313] : memref<3x2x32xf32, #tpu.memory_space<vmem>>, vector<1x2x32xf32>
    %695 = vector.shape_cast %694 : vector<1x2x32xf32> to vector<2x32xf32>
    %cst_314 = arith.constant dense<0.000000e+00> : vector<2x128xf32>
    %696 = tpu.matmul %695, %17, %cst_314 {dimension_numbers = #tpu.dot_dimension_numbers<[1], [0], [0], [1], [0, 0, 1, 1], [], []>} : vector<2x32xf32>, vector<32x128xf32>, vector<2x128xf32> -> vector<2x128xf32>
    %697 = arith.addf %693, %696 : vector<2x128xf32>
    %698 = arith.addf %697, %29 : vector<2x128xf32>
    %c2_315 = arith.constant 2 : index
    %c0_316 = arith.constant 0 : index
    %c0_317 = arith.constant 0 : index
    %699 = vector.load %arg13[%c2_315, %c0_316, %c0_317] : memref<3x2x32xf32, #tpu.memory_space<vmem>>, vector<1x2x32xf32>
    %700 = vector.shape_cast %699 : vector<1x2x32xf32> to vector<2x32xf32>
    %701 = vector.extract_strided_slice %698 {offsets = [0, 0], sizes = [2, 32], strides = [1, 1]} : vector<2x128xf32> to vector<2x32xf32>
    %702 = arith.negf %701 : vector<2x32xf32>
    %703 = math.exp %702 : vector<2x32xf32>
    %cst_318 = arith.constant 1.000000e+00 : f32
    %704 = vector.broadcast %cst_318 : f32 to vector<2x32xf32>
    %705 = arith.addf %704, %703 : vector<2x32xf32>
    %706 = arith.divf %704, %705 : vector<2x32xf32>
    %707 = vector.extract_strided_slice %698 {offsets = [0, 32], sizes = [2, 32], strides = [1, 1]} : vector<2x128xf32> to vector<2x32xf32>
    %708 = arith.negf %707 : vector<2x32xf32>
    %709 = math.exp %708 : vector<2x32xf32>
    %cst_319 = arith.constant 1.000000e+00 : f32
    %710 = vector.broadcast %cst_319 : f32 to vector<2x32xf32>
    %711 = arith.addf %710, %709 : vector<2x32xf32>
    %712 = arith.divf %710, %711 : vector<2x32xf32>
    %713 = vector.extract_strided_slice %698 {offsets = [0, 64], sizes = [2, 32], strides = [1, 1]} : vector<2x128xf32> to vector<2x32xf32>
    %714 = math.tanh %713 : vector<2x32xf32>
    %715 = vector.extract_strided_slice %698 {offsets = [0, 96], sizes = [2, 32], strides = [1, 1]} : vector<2x128xf32> to vector<2x32xf32>
    %716 = arith.negf %715 : vector<2x32xf32>
    %717 = math.exp %716 : vector<2x32xf32>
    %cst_320 = arith.constant 1.000000e+00 : f32
    %718 = vector.broadcast %cst_320 : f32 to vector<2x32xf32>
    %719 = arith.addf %718, %717 : vector<2x32xf32>
    %720 = arith.divf %718, %719 : vector<2x32xf32>
    %721 = arith.mulf %712, %700 : vector<2x32xf32>
    %722 = arith.mulf %706, %714 : vector<2x32xf32>
    %723 = arith.addf %721, %722 : vector<2x32xf32>
    %724 = math.tanh %723 : vector<2x32xf32>
    %725 = arith.mulf %720, %724 : vector<2x32xf32>
    %c2_321 = arith.constant 2 : index
    %c0_322 = arith.constant 0 : index
    %c0_323 = arith.constant 0 : index
    %726 = vector.load %arg12[%c2_321, %c0_322, %c0_323] : memref<3x2x32xf32, #tpu.memory_space<vmem>>, vector<1x2x32xf32>
    %727 = vector.shape_cast %726 : vector<1x2x32xf32> to vector<2x32xf32>
    %728 = vector.shape_cast %725 : vector<2x32xf32> to vector<1x2x32xf32>
    tpu.vector_store %arg12[%c2_321, %c0_322, %c0_323], %728 {strides = array<i32>} : memref<3x2x32xf32, #tpu.memory_space<vmem>>, vector<1x2x32xf32>,
    %c2_324 = arith.constant 2 : index
    %c0_325 = arith.constant 0 : index
    %c0_326 = arith.constant 0 : index
    %729 = vector.load %arg13[%c2_324, %c0_325, %c0_326] : memref<3x2x32xf32, #tpu.memory_space<vmem>>, vector<1x2x32xf32>
    %730 = vector.shape_cast %729 : vector<1x2x32xf32> to vector<2x32xf32>
    %731 = vector.shape_cast %723 : vector<2x32xf32> to vector<1x2x32xf32>
    tpu.vector_store %arg13[%c2_324, %c0_325, %c0_326], %731 {strides = array<i32>} : memref<3x2x32xf32, #tpu.memory_space<vmem>>, vector<1x2x32xf32>,
    %732 = vector.extract_strided_slice %11 {offsets = [0, 6, 0], sizes = [2, 1, 128], strides = [1, 1, 1]} : vector<2x8x128xf32> to vector<2x1x128xf32>
    %733 = vector.shape_cast %732 : vector<2x1x128xf32> to vector<2x128xf32>
    %c0_327 = arith.constant 0 : index
    %c0_328 = arith.constant 0 : index
    %c0_329 = arith.constant 0 : index
    %734 = vector.load %arg12[%c0_327, %c0_328, %c0_329] : memref<3x2x32xf32, #tpu.memory_space<vmem>>, vector<1x2x32xf32>
    %735 = vector.shape_cast %734 : vector<1x2x32xf32> to vector<2x32xf32>
    %cst_330 = arith.constant dense<0.000000e+00> : vector<2x128xf32>
    %736 = tpu.matmul %735, %13, %cst_330 {dimension_numbers = #tpu.dot_dimension_numbers<[1], [0], [0], [1], [0, 0, 1, 1], [], []>} : vector<2x32xf32>, vector<32x128xf32>, vector<2x128xf32> -> vector<2x128xf32>
    %737 = arith.addf %733, %736 : vector<2x128xf32>
    %c0_331 = arith.constant 0 : index
    %c0_332 = arith.constant 0 : index
    %c0_333 = arith.constant 0 : index
    %738 = vector.load %arg13[%c0_331, %c0_332, %c0_333] : memref<3x2x32xf32, #tpu.memory_space<vmem>>, vector<1x2x32xf32>
    %739 = vector.shape_cast %738 : vector<1x2x32xf32> to vector<2x32xf32>
    %740 = vector.extract_strided_slice %737 {offsets = [0, 0], sizes = [2, 32], strides = [1, 1]} : vector<2x128xf32> to vector<2x32xf32>
    %741 = arith.negf %740 : vector<2x32xf32>
    %742 = math.exp %741 : vector<2x32xf32>
    %cst_334 = arith.constant 1.000000e+00 : f32
    %743 = vector.broadcast %cst_334 : f32 to vector<2x32xf32>
    %744 = arith.addf %743, %742 : vector<2x32xf32>
    %745 = arith.divf %743, %744 : vector<2x32xf32>
    %746 = vector.extract_strided_slice %737 {offsets = [0, 32], sizes = [2, 32], strides = [1, 1]} : vector<2x128xf32> to vector<2x32xf32>
    %747 = arith.negf %746 : vector<2x32xf32>
    %748 = math.exp %747 : vector<2x32xf32>
    %cst_335 = arith.constant 1.000000e+00 : f32
    %749 = vector.broadcast %cst_335 : f32 to vector<2x32xf32>
    %750 = arith.addf %749, %748 : vector<2x32xf32>
    %751 = arith.divf %749, %750 : vector<2x32xf32>
    %752 = vector.extract_strided_slice %737 {offsets = [0, 64], sizes = [2, 32], strides = [1, 1]} : vector<2x128xf32> to vector<2x32xf32>
    %753 = math.tanh %752 : vector<2x32xf32>
    %754 = vector.extract_strided_slice %737 {offsets = [0, 96], sizes = [2, 32], strides = [1, 1]} : vector<2x128xf32> to vector<2x32xf32>
    %755 = arith.negf %754 : vector<2x32xf32>
    %756 = math.exp %755 : vector<2x32xf32>
    %cst_336 = arith.constant 1.000000e+00 : f32
    %757 = vector.broadcast %cst_336 : f32 to vector<2x32xf32>
    %758 = arith.addf %757, %756 : vector<2x32xf32>
    %759 = arith.divf %757, %758 : vector<2x32xf32>
    %760 = arith.mulf %751, %739 : vector<2x32xf32>
    %761 = arith.mulf %745, %753 : vector<2x32xf32>
    %762 = arith.addf %760, %761 : vector<2x32xf32>
    %763 = math.tanh %762 : vector<2x32xf32>
    %764 = arith.mulf %759, %763 : vector<2x32xf32>
    %c0_337 = arith.constant 0 : index
    %c0_338 = arith.constant 0 : index
    %c0_339 = arith.constant 0 : index
    %765 = vector.load %arg12[%c0_337, %c0_338, %c0_339] : memref<3x2x32xf32, #tpu.memory_space<vmem>>, vector<1x2x32xf32>
    %766 = vector.shape_cast %765 : vector<1x2x32xf32> to vector<2x32xf32>
    %767 = vector.shape_cast %764 : vector<2x32xf32> to vector<1x2x32xf32>
    tpu.vector_store %arg12[%c0_337, %c0_338, %c0_339], %767 {strides = array<i32>} : memref<3x2x32xf32, #tpu.memory_space<vmem>>, vector<1x2x32xf32>,
    %c0_340 = arith.constant 0 : index
    %c0_341 = arith.constant 0 : index
    %c0_342 = arith.constant 0 : index
    %768 = vector.load %arg13[%c0_340, %c0_341, %c0_342] : memref<3x2x32xf32, #tpu.memory_space<vmem>>, vector<1x2x32xf32>
    %769 = vector.shape_cast %768 : vector<1x2x32xf32> to vector<2x32xf32>
    %770 = vector.shape_cast %762 : vector<2x32xf32> to vector<1x2x32xf32>
    tpu.vector_store %arg13[%c0_340, %c0_341, %c0_342], %770 {strides = array<i32>} : memref<3x2x32xf32, #tpu.memory_space<vmem>>, vector<1x2x32xf32>,
    %cst_343 = arith.constant dense<0.000000e+00> : vector<2x128xf32>
    %771 = tpu.matmul %764, %19, %cst_343 {dimension_numbers = #tpu.dot_dimension_numbers<[1], [0], [0], [1], [0, 0, 1, 1], [], []>} : vector<2x32xf32>, vector<32x128xf32>, vector<2x128xf32> -> vector<2x128xf32>
    %c1_344 = arith.constant 1 : index
    %c0_345 = arith.constant 0 : index
    %c0_346 = arith.constant 0 : index
    %772 = vector.load %arg12[%c1_344, %c0_345, %c0_346] : memref<3x2x32xf32, #tpu.memory_space<vmem>>, vector<1x2x32xf32>
    %773 = vector.shape_cast %772 : vector<1x2x32xf32> to vector<2x32xf32>
    %cst_347 = arith.constant dense<0.000000e+00> : vector<2x128xf32>
    %774 = tpu.matmul %773, %15, %cst_347 {dimension_numbers = #tpu.dot_dimension_numbers<[1], [0], [0], [1], [0, 0, 1, 1], [], []>} : vector<2x32xf32>, vector<32x128xf32>, vector<2x128xf32> -> vector<2x128xf32>
    %775 = arith.addf %771, %774 : vector<2x128xf32>
    %776 = arith.addf %775, %25 : vector<2x128xf32>
    %c1_348 = arith.constant 1 : index
    %c0_349 = arith.constant 0 : index
    %c0_350 = arith.constant 0 : index
    %777 = vector.load %arg13[%c1_348, %c0_349, %c0_350] : memref<3x2x32xf32, #tpu.memory_space<vmem>>, vector<1x2x32xf32>
    %778 = vector.shape_cast %777 : vector<1x2x32xf32> to vector<2x32xf32>
    %779 = vector.extract_strided_slice %776 {offsets = [0, 0], sizes = [2, 32], strides = [1, 1]} : vector<2x128xf32> to vector<2x32xf32>
    %780 = arith.negf %779 : vector<2x32xf32>
    %781 = math.exp %780 : vector<2x32xf32>
    %cst_351 = arith.constant 1.000000e+00 : f32
    %782 = vector.broadcast %cst_351 : f32 to vector<2x32xf32>
    %783 = arith.addf %782, %781 : vector<2x32xf32>
    %784 = arith.divf %782, %783 : vector<2x32xf32>
    %785 = vector.extract_strided_slice %776 {offsets = [0, 32], sizes = [2, 32], strides = [1, 1]} : vector<2x128xf32> to vector<2x32xf32>
    %786 = arith.negf %785 : vector<2x32xf32>
    %787 = math.exp %786 : vector<2x32xf32>
    %cst_352 = arith.constant 1.000000e+00 : f32
    %788 = vector.broadcast %cst_352 : f32 to vector<2x32xf32>
    %789 = arith.addf %788, %787 : vector<2x32xf32>
    %790 = arith.divf %788, %789 : vector<2x32xf32>
    %791 = vector.extract_strided_slice %776 {offsets = [0, 64], sizes = [2, 32], strides = [1, 1]} : vector<2x128xf32> to vector<2x32xf32>
    %792 = math.tanh %791 : vector<2x32xf32>
    %793 = vector.extract_strided_slice %776 {offsets = [0, 96], sizes = [2, 32], strides = [1, 1]} : vector<2x128xf32> to vector<2x32xf32>
    %794 = arith.negf %793 : vector<2x32xf32>
    %795 = math.exp %794 : vector<2x32xf32>
    %cst_353 = arith.constant 1.000000e+00 : f32
    %796 = vector.broadcast %cst_353 : f32 to vector<2x32xf32>
    %797 = arith.addf %796, %795 : vector<2x32xf32>
    %798 = arith.divf %796, %797 : vector<2x32xf32>
    %799 = arith.mulf %790, %778 : vector<2x32xf32>
    %800 = arith.mulf %784, %792 : vector<2x32xf32>
    %801 = arith.addf %799, %800 : vector<2x32xf32>
    %802 = math.tanh %801 : vector<2x32xf32>
    %803 = arith.mulf %798, %802 : vector<2x32xf32>
    %c1_354 = arith.constant 1 : index
    %c0_355 = arith.constant 0 : index
    %c0_356 = arith.constant 0 : index
    %804 = vector.load %arg12[%c1_354, %c0_355, %c0_356] : memref<3x2x32xf32, #tpu.memory_space<vmem>>, vector<1x2x32xf32>
    %805 = vector.shape_cast %804 : vector<1x2x32xf32> to vector<2x32xf32>
    %806 = vector.shape_cast %803 : vector<2x32xf32> to vector<1x2x32xf32>
    tpu.vector_store %arg12[%c1_354, %c0_355, %c0_356], %806 {strides = array<i32>} : memref<3x2x32xf32, #tpu.memory_space<vmem>>, vector<1x2x32xf32>,
    %c1_357 = arith.constant 1 : index
    %c0_358 = arith.constant 0 : index
    %c0_359 = arith.constant 0 : index
    %807 = vector.load %arg13[%c1_357, %c0_358, %c0_359] : memref<3x2x32xf32, #tpu.memory_space<vmem>>, vector<1x2x32xf32>
    %808 = vector.shape_cast %807 : vector<1x2x32xf32> to vector<2x32xf32>
    %809 = vector.shape_cast %801 : vector<2x32xf32> to vector<1x2x32xf32>
    tpu.vector_store %arg13[%c1_357, %c0_358, %c0_359], %809 {strides = array<i32>} : memref<3x2x32xf32, #tpu.memory_space<vmem>>, vector<1x2x32xf32>,
    %cst_360 = arith.constant dense<0.000000e+00> : vector<2x128xf32>
    %810 = tpu.matmul %803, %21, %cst_360 {dimension_numbers = #tpu.dot_dimension_numbers<[1], [0], [0], [1], [0, 0, 1, 1], [], []>} : vector<2x32xf32>, vector<32x128xf32>, vector<2x128xf32> -> vector<2x128xf32>
    %c2_361 = arith.constant 2 : index
    %c0_362 = arith.constant 0 : index
    %c0_363 = arith.constant 0 : index
    %811 = vector.load %arg12[%c2_361, %c0_362, %c0_363] : memref<3x2x32xf32, #tpu.memory_space<vmem>>, vector<1x2x32xf32>
    %812 = vector.shape_cast %811 : vector<1x2x32xf32> to vector<2x32xf32>
    %cst_364 = arith.constant dense<0.000000e+00> : vector<2x128xf32>
    %813 = tpu.matmul %812, %17, %cst_364 {dimension_numbers = #tpu.dot_dimension_numbers<[1], [0], [0], [1], [0, 0, 1, 1], [], []>} : vector<2x32xf32>, vector<32x128xf32>, vector<2x128xf32> -> vector<2x128xf32>
    %814 = arith.addf %810, %813 : vector<2x128xf32>
    %815 = arith.addf %814, %29 : vector<2x128xf32>
    %c2_365 = arith.constant 2 : index
    %c0_366 = arith.constant 0 : index
    %c0_367 = arith.constant 0 : index
    %816 = vector.load %arg13[%c2_365, %c0_366, %c0_367] : memref<3x2x32xf32, #tpu.memory_space<vmem>>, vector<1x2x32xf32>
    %817 = vector.shape_cast %816 : vector<1x2x32xf32> to vector<2x32xf32>
    %818 = vector.extract_strided_slice %815 {offsets = [0, 0], sizes = [2, 32], strides = [1, 1]} : vector<2x128xf32> to vector<2x32xf32>
    %819 = arith.negf %818 : vector<2x32xf32>
    %820 = math.exp %819 : vector<2x32xf32>
    %cst_368 = arith.constant 1.000000e+00 : f32
    %821 = vector.broadcast %cst_368 : f32 to vector<2x32xf32>
    %822 = arith.addf %821, %820 : vector<2x32xf32>
    %823 = arith.divf %821, %822 : vector<2x32xf32>
    %824 = vector.extract_strided_slice %815 {offsets = [0, 32], sizes = [2, 32], strides = [1, 1]} : vector<2x128xf32> to vector<2x32xf32>
    %825 = arith.negf %824 : vector<2x32xf32>
    %826 = math.exp %825 : vector<2x32xf32>
    %cst_369 = arith.constant 1.000000e+00 : f32
    %827 = vector.broadcast %cst_369 : f32 to vector<2x32xf32>
    %828 = arith.addf %827, %826 : vector<2x32xf32>
    %829 = arith.divf %827, %828 : vector<2x32xf32>
    %830 = vector.extract_strided_slice %815 {offsets = [0, 64], sizes = [2, 32], strides = [1, 1]} : vector<2x128xf32> to vector<2x32xf32>
    %831 = math.tanh %830 : vector<2x32xf32>
    %832 = vector.extract_strided_slice %815 {offsets = [0, 96], sizes = [2, 32], strides = [1, 1]} : vector<2x128xf32> to vector<2x32xf32>
    %833 = arith.negf %832 : vector<2x32xf32>
    %834 = math.exp %833 : vector<2x32xf32>
    %cst_370 = arith.constant 1.000000e+00 : f32
    %835 = vector.broadcast %cst_370 : f32 to vector<2x32xf32>
    %836 = arith.addf %835, %834 : vector<2x32xf32>
    %837 = arith.divf %835, %836 : vector<2x32xf32>
    %838 = arith.mulf %829, %817 : vector<2x32xf32>
    %839 = arith.mulf %823, %831 : vector<2x32xf32>
    %840 = arith.addf %838, %839 : vector<2x32xf32>
    %841 = math.tanh %840 : vector<2x32xf32>
    %842 = arith.mulf %837, %841 : vector<2x32xf32>
    %c2_371 = arith.constant 2 : index
    %c0_372 = arith.constant 0 : index
    %c0_373 = arith.constant 0 : index
    %843 = vector.load %arg12[%c2_371, %c0_372, %c0_373] : memref<3x2x32xf32, #tpu.memory_space<vmem>>, vector<1x2x32xf32>
    %844 = vector.shape_cast %843 : vector<1x2x32xf32> to vector<2x32xf32>
    %845 = vector.shape_cast %842 : vector<2x32xf32> to vector<1x2x32xf32>
    tpu.vector_store %arg12[%c2_371, %c0_372, %c0_373], %845 {strides = array<i32>} : memref<3x2x32xf32, #tpu.memory_space<vmem>>, vector<1x2x32xf32>,
    %c2_374 = arith.constant 2 : index
    %c0_375 = arith.constant 0 : index
    %c0_376 = arith.constant 0 : index
    %846 = vector.load %arg13[%c2_374, %c0_375, %c0_376] : memref<3x2x32xf32, #tpu.memory_space<vmem>>, vector<1x2x32xf32>
    %847 = vector.shape_cast %846 : vector<1x2x32xf32> to vector<2x32xf32>
    %848 = vector.shape_cast %840 : vector<2x32xf32> to vector<1x2x32xf32>
    tpu.vector_store %arg13[%c2_374, %c0_375, %c0_376], %848 {strides = array<i32>} : memref<3x2x32xf32, #tpu.memory_space<vmem>>, vector<1x2x32xf32>,
    %849 = vector.extract_strided_slice %11 {offsets = [0, 7, 0], sizes = [2, 1, 128], strides = [1, 1, 1]} : vector<2x8x128xf32> to vector<2x1x128xf32>
    %850 = vector.shape_cast %849 : vector<2x1x128xf32> to vector<2x128xf32>
    %c0_377 = arith.constant 0 : index
    %c0_378 = arith.constant 0 : index
    %c0_379 = arith.constant 0 : index
    %851 = vector.load %arg12[%c0_377, %c0_378, %c0_379] : memref<3x2x32xf32, #tpu.memory_space<vmem>>, vector<1x2x32xf32>
    %852 = vector.shape_cast %851 : vector<1x2x32xf32> to vector<2x32xf32>
    %cst_380 = arith.constant dense<0.000000e+00> : vector<2x128xf32>
    %853 = tpu.matmul %852, %13, %cst_380 {dimension_numbers = #tpu.dot_dimension_numbers<[1], [0], [0], [1], [0, 0, 1, 1], [], []>} : vector<2x32xf32>, vector<32x128xf32>, vector<2x128xf32> -> vector<2x128xf32>
    %854 = arith.addf %850, %853 : vector<2x128xf32>
    %c0_381 = arith.constant 0 : index
    %c0_382 = arith.constant 0 : index
    %c0_383 = arith.constant 0 : index
    %855 = vector.load %arg13[%c0_381, %c0_382, %c0_383] : memref<3x2x32xf32, #tpu.memory_space<vmem>>, vector<1x2x32xf32>
    %856 = vector.shape_cast %855 : vector<1x2x32xf32> to vector<2x32xf32>
    %857 = vector.extract_strided_slice %854 {offsets = [0, 0], sizes = [2, 32], strides = [1, 1]} : vector<2x128xf32> to vector<2x32xf32>
    %858 = arith.negf %857 : vector<2x32xf32>
    %859 = math.exp %858 : vector<2x32xf32>
    %cst_384 = arith.constant 1.000000e+00 : f32
    %860 = vector.broadcast %cst_384 : f32 to vector<2x32xf32>
    %861 = arith.addf %860, %859 : vector<2x32xf32>
    %862 = arith.divf %860, %861 : vector<2x32xf32>
    %863 = vector.extract_strided_slice %854 {offsets = [0, 32], sizes = [2, 32], strides = [1, 1]} : vector<2x128xf32> to vector<2x32xf32>
    %864 = arith.negf %863 : vector<2x32xf32>
    %865 = math.exp %864 : vector<2x32xf32>
    %cst_385 = arith.constant 1.000000e+00 : f32
    %866 = vector.broadcast %cst_385 : f32 to vector<2x32xf32>
    %867 = arith.addf %866, %865 : vector<2x32xf32>
    %868 = arith.divf %866, %867 : vector<2x32xf32>
    %869 = vector.extract_strided_slice %854 {offsets = [0, 64], sizes = [2, 32], strides = [1, 1]} : vector<2x128xf32> to vector<2x32xf32>
    %870 = math.tanh %869 : vector<2x32xf32>
    %871 = vector.extract_strided_slice %854 {offsets = [0, 96], sizes = [2, 32], strides = [1, 1]} : vector<2x128xf32> to vector<2x32xf32>
    %872 = arith.negf %871 : vector<2x32xf32>
    %873 = math.exp %872 : vector<2x32xf32>
    %cst_386 = arith.constant 1.000000e+00 : f32
    %874 = vector.broadcast %cst_386 : f32 to vector<2x32xf32>
    %875 = arith.addf %874, %873 : vector<2x32xf32>
    %876 = arith.divf %874, %875 : vector<2x32xf32>
    %877 = arith.mulf %868, %856 : vector<2x32xf32>
    %878 = arith.mulf %862, %870 : vector<2x32xf32>
    %879 = arith.addf %877, %878 : vector<2x32xf32>
    %880 = math.tanh %879 : vector<2x32xf32>
    %881 = arith.mulf %876, %880 : vector<2x32xf32>
    %c0_387 = arith.constant 0 : index
    %c0_388 = arith.constant 0 : index
    %c0_389 = arith.constant 0 : index
    %882 = vector.load %arg12[%c0_387, %c0_388, %c0_389] : memref<3x2x32xf32, #tpu.memory_space<vmem>>, vector<1x2x32xf32>
    %883 = vector.shape_cast %882 : vector<1x2x32xf32> to vector<2x32xf32>
    %884 = vector.shape_cast %881 : vector<2x32xf32> to vector<1x2x32xf32>
    tpu.vector_store %arg12[%c0_387, %c0_388, %c0_389], %884 {strides = array<i32>} : memref<3x2x32xf32, #tpu.memory_space<vmem>>, vector<1x2x32xf32>,
    %c0_390 = arith.constant 0 : index
    %c0_391 = arith.constant 0 : index
    %c0_392 = arith.constant 0 : index
    %885 = vector.load %arg13[%c0_390, %c0_391, %c0_392] : memref<3x2x32xf32, #tpu.memory_space<vmem>>, vector<1x2x32xf32>
    %886 = vector.shape_cast %885 : vector<1x2x32xf32> to vector<2x32xf32>
    %887 = vector.shape_cast %879 : vector<2x32xf32> to vector<1x2x32xf32>
    tpu.vector_store %arg13[%c0_390, %c0_391, %c0_392], %887 {strides = array<i32>} : memref<3x2x32xf32, #tpu.memory_space<vmem>>, vector<1x2x32xf32>,
    %cst_393 = arith.constant dense<0.000000e+00> : vector<2x128xf32>
    %888 = tpu.matmul %881, %19, %cst_393 {dimension_numbers = #tpu.dot_dimension_numbers<[1], [0], [0], [1], [0, 0, 1, 1], [], []>} : vector<2x32xf32>, vector<32x128xf32>, vector<2x128xf32> -> vector<2x128xf32>
    %c1_394 = arith.constant 1 : index
    %c0_395 = arith.constant 0 : index
    %c0_396 = arith.constant 0 : index
    %889 = vector.load %arg12[%c1_394, %c0_395, %c0_396] : memref<3x2x32xf32, #tpu.memory_space<vmem>>, vector<1x2x32xf32>
    %890 = vector.shape_cast %889 : vector<1x2x32xf32> to vector<2x32xf32>
    %cst_397 = arith.constant dense<0.000000e+00> : vector<2x128xf32>
    %891 = tpu.matmul %890, %15, %cst_397 {dimension_numbers = #tpu.dot_dimension_numbers<[1], [0], [0], [1], [0, 0, 1, 1], [], []>} : vector<2x32xf32>, vector<32x128xf32>, vector<2x128xf32> -> vector<2x128xf32>
    %892 = arith.addf %888, %891 : vector<2x128xf32>
    %893 = arith.addf %892, %25 : vector<2x128xf32>
    %c1_398 = arith.constant 1 : index
    %c0_399 = arith.constant 0 : index
    %c0_400 = arith.constant 0 : index
    %894 = vector.load %arg13[%c1_398, %c0_399, %c0_400] : memref<3x2x32xf32, #tpu.memory_space<vmem>>, vector<1x2x32xf32>
    %895 = vector.shape_cast %894 : vector<1x2x32xf32> to vector<2x32xf32>
    %896 = vector.extract_strided_slice %893 {offsets = [0, 0], sizes = [2, 32], strides = [1, 1]} : vector<2x128xf32> to vector<2x32xf32>
    %897 = arith.negf %896 : vector<2x32xf32>
    %898 = math.exp %897 : vector<2x32xf32>
    %cst_401 = arith.constant 1.000000e+00 : f32
    %899 = vector.broadcast %cst_401 : f32 to vector<2x32xf32>
    %900 = arith.addf %899, %898 : vector<2x32xf32>
    %901 = arith.divf %899, %900 : vector<2x32xf32>
    %902 = vector.extract_strided_slice %893 {offsets = [0, 32], sizes = [2, 32], strides = [1, 1]} : vector<2x128xf32> to vector<2x32xf32>
    %903 = arith.negf %902 : vector<2x32xf32>
    %904 = math.exp %903 : vector<2x32xf32>
    %cst_402 = arith.constant 1.000000e+00 : f32
    %905 = vector.broadcast %cst_402 : f32 to vector<2x32xf32>
    %906 = arith.addf %905, %904 : vector<2x32xf32>
    %907 = arith.divf %905, %906 : vector<2x32xf32>
    %908 = vector.extract_strided_slice %893 {offsets = [0, 64], sizes = [2, 32], strides = [1, 1]} : vector<2x128xf32> to vector<2x32xf32>
    %909 = math.tanh %908 : vector<2x32xf32>
    %910 = vector.extract_strided_slice %893 {offsets = [0, 96], sizes = [2, 32], strides = [1, 1]} : vector<2x128xf32> to vector<2x32xf32>
    %911 = arith.negf %910 : vector<2x32xf32>
    %912 = math.exp %911 : vector<2x32xf32>
    %cst_403 = arith.constant 1.000000e+00 : f32
    %913 = vector.broadcast %cst_403 : f32 to vector<2x32xf32>
    %914 = arith.addf %913, %912 : vector<2x32xf32>
    %915 = arith.divf %913, %914 : vector<2x32xf32>
    %916 = arith.mulf %907, %895 : vector<2x32xf32>
    %917 = arith.mulf %901, %909 : vector<2x32xf32>
    %918 = arith.addf %916, %917 : vector<2x32xf32>
    %919 = math.tanh %918 : vector<2x32xf32>
    %920 = arith.mulf %915, %919 : vector<2x32xf32>
    %c1_404 = arith.constant 1 : index
    %c0_405 = arith.constant 0 : index
    %c0_406 = arith.constant 0 : index
    %921 = vector.load %arg12[%c1_404, %c0_405, %c0_406] : memref<3x2x32xf32, #tpu.memory_space<vmem>>, vector<1x2x32xf32>
    %922 = vector.shape_cast %921 : vector<1x2x32xf32> to vector<2x32xf32>
    %923 = vector.shape_cast %920 : vector<2x32xf32> to vector<1x2x32xf32>
    tpu.vector_store %arg12[%c1_404, %c0_405, %c0_406], %923 {strides = array<i32>} : memref<3x2x32xf32, #tpu.memory_space<vmem>>, vector<1x2x32xf32>,
    %c1_407 = arith.constant 1 : index
    %c0_408 = arith.constant 0 : index
    %c0_409 = arith.constant 0 : index
    %924 = vector.load %arg13[%c1_407, %c0_408, %c0_409] : memref<3x2x32xf32, #tpu.memory_space<vmem>>, vector<1x2x32xf32>
    %925 = vector.shape_cast %924 : vector<1x2x32xf32> to vector<2x32xf32>
    %926 = vector.shape_cast %918 : vector<2x32xf32> to vector<1x2x32xf32>
    tpu.vector_store %arg13[%c1_407, %c0_408, %c0_409], %926 {strides = array<i32>} : memref<3x2x32xf32, #tpu.memory_space<vmem>>, vector<1x2x32xf32>,
    %cst_410 = arith.constant dense<0.000000e+00> : vector<2x128xf32>
    %927 = tpu.matmul %920, %21, %cst_410 {dimension_numbers = #tpu.dot_dimension_numbers<[1], [0], [0], [1], [0, 0, 1, 1], [], []>} : vector<2x32xf32>, vector<32x128xf32>, vector<2x128xf32> -> vector<2x128xf32>
    %c2_411 = arith.constant 2 : index
    %c0_412 = arith.constant 0 : index
    %c0_413 = arith.constant 0 : index
    %928 = vector.load %arg12[%c2_411, %c0_412, %c0_413] : memref<3x2x32xf32, #tpu.memory_space<vmem>>, vector<1x2x32xf32>
    %929 = vector.shape_cast %928 : vector<1x2x32xf32> to vector<2x32xf32>
    %cst_414 = arith.constant dense<0.000000e+00> : vector<2x128xf32>
    %930 = tpu.matmul %929, %17, %cst_414 {dimension_numbers = #tpu.dot_dimension_numbers<[1], [0], [0], [1], [0, 0, 1, 1], [], []>} : vector<2x32xf32>, vector<32x128xf32>, vector<2x128xf32> -> vector<2x128xf32>
    %931 = arith.addf %927, %930 : vector<2x128xf32>
    %932 = arith.addf %931, %29 : vector<2x128xf32>
    %c2_415 = arith.constant 2 : index
    %c0_416 = arith.constant 0 : index
    %c0_417 = arith.constant 0 : index
    %933 = vector.load %arg13[%c2_415, %c0_416, %c0_417] : memref<3x2x32xf32, #tpu.memory_space<vmem>>, vector<1x2x32xf32>
    %934 = vector.shape_cast %933 : vector<1x2x32xf32> to vector<2x32xf32>
    %935 = vector.extract_strided_slice %932 {offsets = [0, 0], sizes = [2, 32], strides = [1, 1]} : vector<2x128xf32> to vector<2x32xf32>
    %936 = arith.negf %935 : vector<2x32xf32>
    %937 = math.exp %936 : vector<2x32xf32>
    %cst_418 = arith.constant 1.000000e+00 : f32
    %938 = vector.broadcast %cst_418 : f32 to vector<2x32xf32>
    %939 = arith.addf %938, %937 : vector<2x32xf32>
    %940 = arith.divf %938, %939 : vector<2x32xf32>
    %941 = vector.extract_strided_slice %932 {offsets = [0, 32], sizes = [2, 32], strides = [1, 1]} : vector<2x128xf32> to vector<2x32xf32>
    %942 = arith.negf %941 : vector<2x32xf32>
    %943 = math.exp %942 : vector<2x32xf32>
    %cst_419 = arith.constant 1.000000e+00 : f32
    %944 = vector.broadcast %cst_419 : f32 to vector<2x32xf32>
    %945 = arith.addf %944, %943 : vector<2x32xf32>
    %946 = arith.divf %944, %945 : vector<2x32xf32>
    %947 = vector.extract_strided_slice %932 {offsets = [0, 64], sizes = [2, 32], strides = [1, 1]} : vector<2x128xf32> to vector<2x32xf32>
    %948 = math.tanh %947 : vector<2x32xf32>
    %949 = vector.extract_strided_slice %932 {offsets = [0, 96], sizes = [2, 32], strides = [1, 1]} : vector<2x128xf32> to vector<2x32xf32>
    %950 = arith.negf %949 : vector<2x32xf32>
    %951 = math.exp %950 : vector<2x32xf32>
    %cst_420 = arith.constant 1.000000e+00 : f32
    %952 = vector.broadcast %cst_420 : f32 to vector<2x32xf32>
    %953 = arith.addf %952, %951 : vector<2x32xf32>
    %954 = arith.divf %952, %953 : vector<2x32xf32>
    %955 = arith.mulf %946, %934 : vector<2x32xf32>
    %956 = arith.mulf %940, %948 : vector<2x32xf32>
    %957 = arith.addf %955, %956 : vector<2x32xf32>
    %958 = math.tanh %957 : vector<2x32xf32>
    %959 = arith.mulf %954, %958 : vector<2x32xf32>
    %c2_421 = arith.constant 2 : index
    %c0_422 = arith.constant 0 : index
    %c0_423 = arith.constant 0 : index
    %960 = vector.load %arg12[%c2_421, %c0_422, %c0_423] : memref<3x2x32xf32, #tpu.memory_space<vmem>>, vector<1x2x32xf32>
    %961 = vector.shape_cast %960 : vector<1x2x32xf32> to vector<2x32xf32>
    %962 = vector.shape_cast %959 : vector<2x32xf32> to vector<1x2x32xf32>
    tpu.vector_store %arg12[%c2_421, %c0_422, %c0_423], %962 {strides = array<i32>} : memref<3x2x32xf32, #tpu.memory_space<vmem>>, vector<1x2x32xf32>,
    %c2_424 = arith.constant 2 : index
    %c0_425 = arith.constant 0 : index
    %c0_426 = arith.constant 0 : index
    %963 = vector.load %arg13[%c2_424, %c0_425, %c0_426] : memref<3x2x32xf32, #tpu.memory_space<vmem>>, vector<1x2x32xf32>
    %964 = vector.shape_cast %963 : vector<1x2x32xf32> to vector<2x32xf32>
    %965 = vector.shape_cast %957 : vector<2x32xf32> to vector<1x2x32xf32>
    tpu.vector_store %arg13[%c2_424, %c0_425, %c0_426], %965 {strides = array<i32>} : memref<3x2x32xf32, #tpu.memory_space<vmem>>, vector<1x2x32xf32>,
    %c1_i32 = arith.constant 1 : i32
    %966 = arith.cmpi eq, %arg1, %c1_i32 : i32
    %967 = arith.extui %966 : i1 to i32
    %c0_i32_427 = arith.constant 0 : i32
    %968 = arith.cmpi ne, %967, %c0_i32_427 : i32
    scf.if %968 {
      %c2_428 = arith.constant 2 : index
      %c0_429 = arith.constant 0 : index
      %c0_430 = arith.constant 0 : index
      %969 = vector.load %arg12[%c2_428, %c0_429, %c0_430] : memref<3x2x32xf32, #tpu.memory_space<vmem>>, vector<1x2x32xf32>
      %970 = vector.shape_cast %969 : vector<1x2x32xf32> to vector<2x32xf32>
      %c0_431 = arith.constant 0 : index
      %c0_432 = arith.constant 0 : index
      %971 = vector.load %arg7[%c0_431, %c0_432] : memref<32x128xf32, #tpu.memory_space<vmem>>, vector<32x128xf32>
      %cst_433 = arith.constant dense<0.000000e+00> : vector<2x128xf32>
      %972 = tpu.matmul %970, %971, %cst_433 {dimension_numbers = #tpu.dot_dimension_numbers<[1], [0], [0], [1], [0, 0, 1, 1], [], []>} : vector<2x32xf32>, vector<32x128xf32>, vector<2x128xf32> -> vector<2x128xf32>
      %c0_434 = arith.constant 0 : index
      %c0_435 = arith.constant 0 : index
      %973 = vector.load %arg8[%c0_434, %c0_435] : memref<1x128xf32, #tpu.memory_space<vmem>>, vector<1x128xf32>
      %974 = vector.broadcast %973 : vector<1x128xf32> to vector<2x128xf32>
      %975 = arith.addf %972, %974 : vector<2x128xf32>
      %cst_436 = arith.constant 0.000000e+00 : f32
      %976 = vector.broadcast %cst_436 : f32 to vector<2x128xf32>
      %977 = arith.maximumf %975, %976 : vector<2x128xf32>
      %c0_437 = arith.constant 0 : index
      %c0_438 = arith.constant 0 : index
      %978 = vector.load %arg9[%c0_437, %c0_438] : memref<128x128xf32, #tpu.memory_space<vmem>>, vector<128x128xf32>
      %cst_439 = arith.constant dense<0.000000e+00> : vector<2x128xf32>
      %979 = tpu.matmul %977, %978, %cst_439 {dimension_numbers = #tpu.dot_dimension_numbers<[1], [0], [0], [1], [0, 0, 1, 1], [], []>} : vector<2x128xf32>, vector<128x128xf32>, vector<2x128xf32> -> vector<2x128xf32>
      %c0_440 = arith.constant 0 : index
      %c0_441 = arith.constant 0 : index
      %980 = vector.load %arg10[%c0_440, %c0_441] : memref<1x128xf32, #tpu.memory_space<vmem>>, vector<1x128xf32>
      %981 = vector.broadcast %980 : vector<1x128xf32> to vector<2x128xf32>
      %982 = arith.addf %979, %981 : vector<2x128xf32>
      %c0_442 = arith.constant 0 : index
      %c0_443 = arith.constant 0 : index
      %983 = vector.load %arg11[%c0_442, %c0_443] : memref<2x128xf32, #tpu.memory_space<vmem>>, vector<2x128xf32>
      tpu.vector_store %arg11[%c0_442, %c0_443], %982 {strides = array<i32>} : memref<2x128xf32, #tpu.memory_space<vmem>>, vector<2x128xf32>,
    } else {
    }
    return
  }
  func.func @transform_0(%arg0: i32, %arg1: i32) -> (i32, i32, i32) {
    %c0_i32 = arith.constant 0 : i32
    %c0_i32_0 = arith.constant 0 : i32
    return %arg0, %arg1, %c0_i32 : i32, i32, i32
  }
  func.func @transform_1(%arg0: i32, %arg1: i32) -> (i32, i32) {
    %c0_i32 = arith.constant 0 : i32
    %c0_i32_0 = arith.constant 0 : i32
    %c0_i32_1 = arith.constant 0 : i32
    return %c0_i32, %c0_i32_0 : i32, i32
  }
  func.func @transform_2(%arg0: i32, %arg1: i32) -> (i32, i32, i32) {
    %c0_i32 = arith.constant 0 : i32
    %c0_i32_0 = arith.constant 0 : i32
    %c0_i32_1 = arith.constant 0 : i32
    %c0_i32_2 = arith.constant 0 : i32
    return %c0_i32, %c0_i32_0, %c0_i32_1 : i32, i32, i32
  }
  func.func @transform_3(%arg0: i32, %arg1: i32) -> (i32, i32, i32) {
    %c0_i32 = arith.constant 0 : i32
    %c0_i32_0 = arith.constant 0 : i32
    %c0_i32_1 = arith.constant 0 : i32
    %c0_i32_2 = arith.constant 0 : i32
    return %c0_i32, %c0_i32_0, %c0_i32_1 : i32, i32, i32
  }
  func.func @transform_4(%arg0: i32, %arg1: i32) -> (i32, i32, i32) {
    %c0_i32 = arith.constant 0 : i32
    %c0_i32_0 = arith.constant 0 : i32
    %c0_i32_1 = arith.constant 0 : i32
    %c0_i32_2 = arith.constant 0 : i32
    return %c0_i32, %c0_i32_0, %c0_i32_1 : i32, i32, i32
  }
  func.func @transform_5(%arg0: i32, %arg1: i32) -> (i32, i32) {
    %c0_i32 = arith.constant 0 : i32
    %c0_i32_0 = arith.constant 0 : i32
    %c0_i32_1 = arith.constant 0 : i32
    return %c0_i32, %c0_i32_0 : i32, i32
  }
  func.func @transform_6(%arg0: i32, %arg1: i32) -> (i32, i32) {
    %c0_i32 = arith.constant 0 : i32
    %c0_i32_0 = arith.constant 0 : i32
    %c0_i32_1 = arith.constant 0 : i32
    return %c0_i32, %c0_i32_0 : i32, i32
  }
  func.func @transform_7(%arg0: i32, %arg1: i32) -> (i32, i32) {
    %c0_i32 = arith.constant 0 : i32
    %c0_i32_0 = arith.constant 0 : i32
    %c0_i32_1 = arith.constant 0 : i32
    return %c0_i32, %c0_i32_0 : i32, i32
  }
  func.func @transform_8(%arg0: i32, %arg1: i32) -> (i32, i32) {
    %c0_i32 = arith.constant 0 : i32
    %c0_i32_0 = arith.constant 0 : i32
    %c0_i32_1 = arith.constant 0 : i32
    return %c0_i32, %c0_i32_0 : i32, i32
  }
  func.func @transform_9(%arg0: i32, %arg1: i32) -> (i32, i32) {
    %c0_i32 = arith.constant 0 : i32
    %c0_i32_0 = arith.constant 0 : i32
    return %arg0, %c0_i32 : i32, i32
  }
}

</mosaic_0001>

<llo_original>
// kernel: tpu_custom_call.1
$region0: #{tpu_custom_call.1}
  #allocation0 [shape = 'u32[]', space=smem, size = 0x4, offset = 0x4, fixed_abs, tag = 'smem constant byte address 0x4 - core index']
  #allocation1 [shape = 'u32[144,128]{1,0:T(1,128)}', space=vmem, size = 0x12000, scoped, tag = 'internal scratch']
  #allocation2 [shape = 'f32[3,2,32]{2,1,0:T(2,128)}', space=vmem, size = 0xc00, scoped, tag = 'scratch operand']
  #allocation3 [shape = 'f32[3,2,32]{2,1,0:T(2,128)}', space=vmem, size = 0xc00, scoped, tag = 'scratch operand']
  %s0 = inlined_call_operand.hbm [shape: f32[2,16,32], index: 0, kind: input, shape index: {}]
  %s1 = inlined_call_operand.hbm [shape: f32[32,128], index: 1, kind: input, shape index: {}]
  %s2 = inlined_call_operand.hbm [shape: f32[2,32,128], index: 2, kind: input, shape index: {}]
  %s3 = inlined_call_operand.hbm [shape: f32[3,32,128], index: 3, kind: input, shape index: {}]
  %s4 = inlined_call_operand.vmem [shape: f32[3,1,128], index: 4, kind: input, shape index: {}]
  %s5 = inlined_call_operand.hbm [shape: f32[32,128], index: 5, kind: input, shape index: {}]
  %s6 = inlined_call_operand.vmem [shape: f32[1,128], index: 6, kind: input, shape index: {}]
  %s7 = inlined_call_operand.hbm [shape: f32[128,128], index: 7, kind: input, shape index: {}]
  %s8 = inlined_call_operand.vmem [shape: f32[1,128], index: 8, kind: input, shape index: {}]
  %s9 = inlined_call_operand.hbm [shape: f32[2,128], index: 9, kind: output, shape index: {}]
  %s10 = sld [smem:[#allocation0]]
  $region101: #{tpu_custom_call.1} parent=0
    _
  %s12 = ssub.s32 1, %s10
  %s13 = scalar_select 0, %s12, %s10
  $region1: #{tpu_custom_call.1} parent=0
    #allocation4 [shape = 'u8[16384]{0}', space=vmem, size = 0x4000, scoped, tag = 'input window, operand 0']
    #allocation5 [shape = 's32[2]{0}', space=sflag, size = 0x8, scoped, tag = 'scoped memory for tpu_custom_call.1']
    #allocation6 [shape = 's32[2]{0}', space=sflag, size = 0x8, scoped, tag = 'scoped memory for tpu_custom_call.1']
    #allocation7 [shape = 'u8[16384]{0}', space=vmem, size = 0x4000, scoped, tag = 'input window, operand 1, single buffered']
    #allocation8 [shape = 's32[1]{0}', space=sflag, size = 0x4, scoped, tag = 'scoped memory for tpu_custom_call.1']
    #allocation9 [shape = 'u8[32768]{0}', space=vmem, size = 0x8000, scoped, tag = 'input window, operand 2, single buffered']
    #allocation10 [shape = 'u8[49152]{0}', space=vmem, size = 0xc000, scoped, tag = 'input window, operand 3, single buffered']
    #allocation11 [shape = 's32[1]{0}', space=sflag, size = 0x4, scoped, tag = 'scoped memory for tpu_custom_call.1']
    #allocation12 [shape = 'u8[16384]{0}', space=vmem, size = 0x4000, scoped, tag = 'input window, operand 5, single buffered']
    #allocation13 [shape = 'u8[65536]{0}', space=vmem, size = 0x10000, scoped, tag = 'input window, operand 7, single buffered']
    #allocation14 [shape = 's32[1]{0}', space=sflag, size = 0x4, scoped, tag = 'scoped memory for tpu_custom_call.1']
    #allocation15 [shape = 'u8[1024]{0}', space=vmem, size = 0x400, scoped, tag = 'output window, operand 0, single buffered']
    %14 = vsyncpa [#allocation5], 0
    %s15 = scalar_lea.sflag [#allocation5], 1
    %16 = vsyncpa %s15, 0
    %17 = vsyncpa [#allocation8], 0
    %18 = vsyncpa [#allocation11], 0
    %19 = vsyncpa [#allocation14], 0
    %20 = vsyncpa [#allocation6], 0
    loop: start=0, step=1, limit=4
    $region2: #{tpu_custom_call.1} parent=1 // loop_pre_header
      _
    $region3: #{tpu_custom_call.1} parent=1 // loop_header
      %s22 = sphi 0, %s26
      %p23 = scmp.ge.s32.totalorder %s22, 4
      %s29 = sphi 0, %s41
      %s30 = sphi 0, %s37
      %s31 = sphi 0, %s29
      %s32 = sphi 0, %s30
      %s33 = sphi 0, %s31
      %s34 = sphi 0, %s32
      %s46 = sphi 0, %s48
      %s49 = sphi 0, %s46
      %s50 = sphi 0, %s49
      %s66 = sphi 0, %s50
      %s70 = sphi 0, %s70
      %s72 = sphi 0, %s70
      %s73 = sphi 0, %s72
      %s87 = sphi 0, %s73
      %s91 = sphi 0, %s91
      %s93 = sphi 0, %s91
      %s94 = sphi 0, %s93
      %s108 = sphi 0, %s94
      %s112 = sphi 0, %s112
      %s114 = sphi 0, %s112
      %s115 = sphi 0, %s114
      %s129 = sphi 0, %s115
      %s133 = sphi 0, %s133
      %s135 = sphi 0, %s133
      %s136 = sphi 0, %s135
      %s150 = sphi 0, %s136
      %s154 = sphi 0, %s154
      %s156 = sphi 0, %s154
      %s157 = sphi 0, %s156
      %s171 = sphi 0, %s157
      %s175 = sphi 0, %s175
      %s177 = sphi 0, %s175
      %s178 = sphi 0, %s177
      %s192 = sphi 0, %s178
      %s196 = sphi 0, %s196
      %s198 = sphi 0, %s196
      %s199 = sphi 0, %s198
      %s213 = sphi 0, %s199
      %s217 = sphi 0, %s217
      %s219 = sphi 0, %s217
      %s220 = sphi 0, %s219
      %s234 = sphi 0, %s220
      %s240 = sphi 0, %s242
      %s243 = sphi 0, %s240
      %s244 = sphi 0, %s243
      %s260 = sphi 0, %s244
    $region4: #{tpu_custom_call.1} parent=1 // loop_header_branch
      %25 = sbr.rel (%p23) target = $region8
    $region5: #{tpu_custom_call.1} parent=1 // loop_body
      %s27 = ssub.s32 %s22, 1
      %s28 = ssub.s32 %s22, 2
      %s35 = sadd.s32 1, %s30
      %p36 = scmp.ge.s32.totalorder %s35, 2
      %s37 = scalar_select %p36, 0, %s35
      %s38 = sadd.s32 1, %s29
      %s39 = scalar_select %p36, %s38, %s29
      %p40 = scmp.ge.s32.totalorder %s39, 1
      %s41 = scalar_select %p40, 0, %s39
      %s42 = ssub.s32 %s29, %s41
      %s43 = ssub.s32 %s30, %s37
      %s44 = sor.u32 %s42, %s43
      %p45 = scmp.eq.s32.totalorder %s44, 0
      %s47 = sadd.s32 %s46, 1
      %s48 = scalar_select %p45, %s46, %s47
      %p51 = pneg %p45
      %p52 = scmp.eq.s32.totalorder %s22, 1
      %p53 = por %p51, %p52
      %p54 = scmp.ne.s32.totalorder %s46, %s49
      %p55 = scmp.eq.s32.totalorder %s22, 0
      %p56 = por %p54, %p55
      %p57 = scmp.ne.s32.totalorder %s46, %s49
      %p58 = scmp.eq.s32.totalorder %s27, 1
      %p59 = por %p57, %p58
      %p60 = scmp.ne.s32.totalorder %s49, %s50
      %p61 = scmp.eq.s32.totalorder %s27, 0
      %p62 = por %p60, %p61
      %p63 = scmp.ne.s32.totalorder %s49, %s50
      %p64 = scmp.eq.s32.totalorder %s28, 1
      %p65 = por %p63, %p64
      %p67 = scmp.ne.s32.totalorder %s50, %s66
      %p68 = scmp.eq.s32.totalorder %s28, 0
      %p69 = por %p67, %p68
      %s71 = sadd.s32 %s70, 1
      %p74 = scmp.eq.s32.totalorder %s22, 1
      %p75 = scmp.ne.s32.totalorder %s70, %s72
      %p76 = scmp.eq.s32.totalorder %s22, 0
      %p77 = por %p75, %p76
      %p78 = scmp.ne.s32.totalorder %s70, %s72
      %p79 = scmp.eq.s32.totalorder %s27, 1
      %p80 = por %p78, %p79
      %p81 = scmp.ne.s32.totalorder %s72, %s73
      %p82 = scmp.eq.s32.totalorder %s27, 0
      %p83 = por %p81, %p82
      %p84 = scmp.ne.s32.totalorder %s72, %s73
      %p85 = scmp.eq.s32.totalorder %s28, 1
      %p86 = por %p84, %p85
      %p88 = scmp.ne.s32.totalorder %s73, %s87
      %p89 = scmp.eq.s32.totalorder %s28, 0
      %p90 = por %p88, %p89
      %s92 = sadd.s32 %s91, 1
      %p95 = scmp.eq.s32.totalorder %s22, 1
      %p96 = scmp.ne.s32.totalorder %s91, %s93
      %p97 = scmp.eq.s32.totalorder %s22, 0
      %p98 = por %p96, %p97
      %p99 = scmp.ne.s32.totalorder %s91, %s93
      %p100 = scmp.eq.s32.totalorder %s27, 1
      %p101 = por %p99, %p100
      %p102 = scmp.ne.s32.totalorder %s93, %s94
      %p103 = scmp.eq.s32.totalorder %s27, 0
      %p104 = por %p102, %p103
      %p105 = scmp.ne.s32.totalorder %s93, %s94
      %p106 = scmp.eq.s32.totalorder %s28, 1
      %p107 = por %p105, %p106
      %p109 = scmp.ne.s32.totalorder %s94, %s108
      %p110 = scmp.eq.s32.totalorder %s28, 0
      %p111 = por %p109, %p110
      %s113 = sadd.s32 %s112, 1
      %p116 = scmp.eq.s32.totalorder %s22, 1
      %p117 = scmp.ne.s32.totalorder %s112, %s114
      %p118 = scmp.eq.s32.totalorder %s22, 0
      %p119 = por %p117, %p118
      %p120 = scmp.ne.s32.totalorder %s112, %s114
      %p121 = scmp.eq.s32.totalorder %s27, 1
      %p122 = por %p120, %p121
      %p123 = scmp.ne.s32.totalorder %s114, %s115
      %p124 = scmp.eq.s32.totalorder %s27, 0
      %p125 = por %p123, %p124
      %p126 = scmp.ne.s32.totalorder %s114, %s115
      %p127 = scmp.eq.s32.totalorder %s28, 1
      %p128 = por %p126, %p127
      %p130 = scmp.ne.s32.totalorder %s115, %s129
      %p131 = scmp.eq.s32.totalorder %s28, 0
      %p132 = por %p130, %p131
      %s134 = sadd.s32 %s133, 1
      %p137 = scmp.eq.s32.totalorder %s22, 1
      %p138 = scmp.ne.s32.totalorder %s133, %s135
      %p139 = scmp.eq.s32.totalorder %s22, 0
      %p140 = por %p138, %p139
      %p141 = scmp.ne.s32.totalorder %s133, %s135
      %p142 = scmp.eq.s32.totalorder %s27, 1
      %p143 = por %p141, %p142
      %p144 = scmp.ne.s32.totalorder %s135, %s136
      %p145 = scmp.eq.s32.totalorder %s27, 0
      %p146 = por %p144, %p145
      %p147 = scmp.ne.s32.totalorder %s135, %s136
      %p148 = scmp.eq.s32.totalorder %s28, 1
      %p149 = por %p147, %p148
      %p151 = scmp.ne.s32.totalorder %s136, %s150
      %p152 = scmp.eq.s32.totalorder %s28, 0
      %p153 = por %p151, %p152
      %s155 = sadd.s32 %s154, 1
      %p158 = scmp.eq.s32.totalorder %s22, 1
      %p159 = scmp.ne.s32.totalorder %s154, %s156
      %p160 = scmp.eq.s32.totalorder %s22, 0
      %p161 = por %p159, %p160
      %p162 = scmp.ne.s32.totalorder %s154, %s156
      %p163 = scmp.eq.s32.totalorder %s27, 1
      %p164 = por %p162, %p163
      %p165 = scmp.ne.s32.totalorder %s156, %s157
      %p166 = scmp.eq.s32.totalorder %s27, 0
      %p167 = por %p165, %p166
      %p168 = scmp.ne.s32.totalorder %s156, %s157
      %p169 = scmp.eq.s32.totalorder %s28, 1
      %p170 = por %p168, %p169
      %p172 = scmp.ne.s32.totalorder %s157, %s171
      %p173 = scmp.eq.s32.totalorder %s28, 0
      %p174 = por %p172, %p173
      %s176 = sadd.s32 %s175, 1
      %p179 = scmp.eq.s32.totalorder %s22, 1
      %p180 = scmp.ne.s32.totalorder %s175, %s177
      %p181 = scmp.eq.s32.totalorder %s22, 0
      %p182 = por %p180, %p181
      %p183 = scmp.ne.s32.totalorder %s175, %s177
      %p184 = scmp.eq.s32.totalorder %s27, 1
      %p185 = por %p183, %p184
      %p186 = scmp.ne.s32.totalorder %s177, %s178
      %p187 = scmp.eq.s32.totalorder %s27, 0
      %p188 = por %p186, %p187
      %p189 = scmp.ne.s32.totalorder %s177, %s178
      %p190 = scmp.eq.s32.totalorder %s28, 1
      %p191 = por %p189, %p190
      %p193 = scmp.ne.s32.totalorder %s178, %s192
      %p194 = scmp.eq.s32.totalorder %s28, 0
      %p195 = por %p193, %p194
      %s197 = sadd.s32 %s196, 1
      %p200 = scmp.eq.s32.totalorder %s22, 1
      %p201 = scmp.ne.s32.totalorder %s196, %s198
      %p202 = scmp.eq.s32.totalorder %s22, 0
      %p203 = por %p201, %p202
      %p204 = scmp.ne.s32.totalorder %s196, %s198
      %p205 = scmp.eq.s32.totalorder %s27, 1
      %p206 = por %p204, %p205
      %p207 = scmp.ne.s32.totalorder %s198, %s199
      %p208 = scmp.eq.s32.totalorder %s27, 0
      %p209 = por %p207, %p208
      %p210 = scmp.ne.s32.totalorder %s198, %s199
      %p211 = scmp.eq.s32.totalorder %s28, 1
      %p212 = por %p210, %p211
      %p214 = scmp.ne.s32.totalorder %s199, %s213
      %p215 = scmp.eq.s32.totalorder %s28, 0
      %p216 = por %p214, %p215
      %s218 = sadd.s32 %s217, 1
      %p221 = scmp.eq.s32.totalorder %s22, 1
      %p222 = scmp.ne.s32.totalorder %s217, %s219
      %p223 = scmp.eq.s32.totalorder %s22, 0
      %p224 = por %p222, %p223
      %p225 = scmp.ne.s32.totalorder %s217, %s219
      %p226 = scmp.eq.s32.totalorder %s27, 1
      %p227 = por %p225, %p226
      %p228 = scmp.ne.s32.totalorder %s219, %s220
      %p229 = scmp.eq.s32.totalorder %s27, 0
      %p230 = por %p228, %p229
      %p231 = scmp.ne.s32.totalorder %s219, %s220
      %p232 = scmp.eq.s32.totalorder %s28, 1
      %p233 = por %p231, %p232
      %p235 = scmp.ne.s32.totalorder %s220, %s234
      %p236 = scmp.eq.s32.totalorder %s28, 0
      %p237 = por %p235, %p236
      %s238 = ssub.s32 %s29, %s41
      %p239 = scmp.eq.s32.totalorder %s238, 0
      %s241 = sadd.s32 %s240, 1
      %s242 = scalar_select %p239, %s240, %s241
      %p245 = pneg %p239
      %p246 = scmp.eq.s32.totalorder %s22, 1
      %p247 = por %p245, %p246
      %p248 = scmp.ne.s32.totalorder %s240, %s243
      %p249 = scmp.eq.s32.totalorder %s22, 0
      %p250 = por %p248, %p249
      %p251 = scmp.ne.s32.totalorder %s240, %s243
      %p252 = scmp.eq.s32.totalorder %s27, 1
      %p253 = por %p251, %p252
      %p254 = scmp.ne.s32.totalorder %s243, %s244
      %p255 = scmp.eq.s32.totalorder %s27, 0
      %p256 = por %p254, %p255
      %p257 = scmp.ne.s32.totalorder %s243, %s244
      %p258 = scmp.eq.s32.totalorder %s28, 1
      %p259 = por %p257, %p258
      %p261 = scmp.ne.s32.totalorder %s244, %s260
      %p262 = scmp.eq.s32.totalorder %s28, 0
      %p263 = por %p261, %p262
      %p264 = scmp.le.s32.totalorder 1, %s22
      %p265 = scmp.lt.s32.totalorder %s22, 3
      %p266 = pnand %p264, %p265
      %p267 = pneg %p266
      // Predicated region
      $region9: #{tpu_custom_call.1} parent=5 // pred_check
        _
      $region10: #{tpu_custom_call.1} parent=5 // pred_check_branch
        %269 = sbr.rel (%p266) target = $region12
      $region11: #{tpu_custom_call.1} parent=5 // pred_region
        %s270 = ssub.s32 %s22, 1
        // Predicated region
        $region13: #{tpu_custom_call.1} parent=11 // pred_check
          %p271 = pneg %p83
        $region14: #{tpu_custom_call.1} parent=11 // pred_check_branch
          %273 = sbr.rel (%p271) target = $region16
        $region15: #{tpu_custom_call.1} parent=11 // pred_region
          %s275 = ssub.s32 512, 512
          %276 = vsyncadd [#allocation8], %s275
          %s277 = sshll.u32 [#allocation7], 4
          %s278 = int_to_ptr.vmem [resolvable:$true] %s277
          %283 = dma.hbm_to_vmem [thread:$0]  %s1, 512, %s278, [#allocation8], 128, 128, 8
        $region16: #{tpu_custom_call.1} parent=11 // pred_fallthru
          _
        // Predicated region
        $region17: #{tpu_custom_call.1} parent=11 // pred_check
          %p284 = pneg %p104
        $region18: #{tpu_custom_call.1} parent=11 // pred_check_branch
          %286 = sbr.rel (%p284) target = $region20
        $region19: #{tpu_custom_call.1} parent=11 // pred_region
          %s288 = ssub.s32 1024, 1024
          %289 = vsyncadd [#allocation8], %s288
          %s290 = sshll.u32 [#allocation9], 4
          %s291 = int_to_ptr.vmem [resolvable:$true] %s290
          %296 = dma.hbm_to_vmem [thread:$0]  %s2, 1024, %s291, [#allocation8], 128, 128, 8
        $region20: #{tpu_custom_call.1} parent=11 // pred_fallthru
          _
        // Predicated region
        $region21: #{tpu_custom_call.1} parent=11 // pred_check
          %p297 = pneg %p125
        $region22: #{tpu_custom_call.1} parent=11 // pred_check_branch
          %299 = sbr.rel (%p297) target = $region24
        $region23: #{tpu_custom_call.1} parent=11 // pred_region
          %s301 = ssub.s32 1536, 1536
          %302 = vsyncadd [#allocation11], %s301
          %s303 = sshll.u32 [#allocation10], 4
          %s304 = int_to_ptr.vmem [resolvable:$true] %s303
          %309 = dma.hbm_to_vmem [thread:$0]  %s3, 1536, %s304, [#allocation11], 128, 128, 8
        $region24: #{tpu_custom_call.1} parent=11 // pred_fallthru
          _
        // Predicated region
        $region25: #{tpu_custom_call.1} parent=11 // pred_check
          %p310 = pneg %p146
        $region26: #{tpu_custom_call.1} parent=11 // pred_check_branch
          %312 = sbr.rel (%p310) target = $region28
        $region27: #{tpu_custom_call.1} parent=11 // pred_region
          _
        $region28: #{tpu_custom_call.1} parent=11 // pred_fallthru
          _
        // Predicated region
        $region29: #{tpu_custom_call.1} parent=11 // pred_check
          %p313 = pneg %p167
        $region30: #{tpu_custom_call.1} parent=11 // pred_check_branch
          %315 = sbr.rel (%p313) target = $region32
        $region31: #{tpu_custom_call.1} parent=11 // pred_region
          %s317 = ssub.s32 512, 512
          %318 = vsyncadd [#allocation11], %s317
          %s319 = sshll.u32 [#allocation12], 4
          %s320 = int_to_ptr.vmem [resolvable:$true] %s319
          %325 = dma.hbm_to_vmem [thread:$0]  %s5, 512, %s320, [#allocation11], 128, 128, 8
        $region32: #{tpu_custom_call.1} parent=11 // pred_fallthru
          _
        // Predicated region
        $region33: #{tpu_custom_call.1} parent=11 // pred_check
          %p326 = pneg %p188
        $region34: #{tpu_custom_call.1} parent=11 // pred_check_branch
          %328 = sbr.rel (%p326) target = $region36
        $region35: #{tpu_custom_call.1} parent=11 // pred_region
          _
        $region36: #{tpu_custom_call.1} parent=11 // pred_fallthru
          _
        // Predicated region
        $region37: #{tpu_custom_call.1} parent=11 // pred_check
          %p329 = pneg %p209
        $region38: #{tpu_custom_call.1} parent=11 // pred_check_branch
          %331 = sbr.rel (%p329) target = $region40
        $region39: #{tpu_custom_call.1} parent=11 // pred_region
          %s333 = ssub.s32 2048, 2048
          %334 = vsyncadd [#allocation14], %s333
          %s335 = sshll.u32 [#allocation13], 4
          %s336 = int_to_ptr.vmem [resolvable:$true] %s335
          %341 = dma.hbm_to_vmem [thread:$0]  %s7, 2048, %s336, [#allocation14], 128, 128, 8
        $region40: #{tpu_custom_call.1} parent=11 // pred_fallthru
          _
        // Predicated region
        $region41: #{tpu_custom_call.1} parent=11 // pred_check
          %p342 = pneg %p230
        $region42: #{tpu_custom_call.1} parent=11 // pred_check_branch
          %344 = sbr.rel (%p342) target = $region44
        $region43: #{tpu_custom_call.1} parent=11 // pred_region
          _
        $region44: #{tpu_custom_call.1} parent=11 // pred_fallthru
          _
      $region12: #{tpu_custom_call.1} parent=5 // pred_fallthru
        _
      %p345 = scmp.lt.s32.totalorder %s22, 2
      // Predicated region
      $region45: #{tpu_custom_call.1} parent=5 // pred_check
        %p346 = pneg %p345
      $region46: #{tpu_custom_call.1} parent=5 // pred_check_branch
        %348 = sbr.rel (%p346) target = $region48
      $region47: #{tpu_custom_call.1} parent=5 // pred_region
        // Predicated region
        $region49: #{tpu_custom_call.1} parent=47 // pred_check
          %p349 = pneg %p56
        $region50: #{tpu_custom_call.1} parent=47 // pred_check_branch
          %351 = sbr.rel (%p349) target = $region52
        $region51: #{tpu_custom_call.1} parent=47 // pred_region
          %s352 = sand.u32 %s46, 1
          %s353 = scalar_lea.sflag [#allocation5], %s352
          %s354 = sand.u32 %s46, 1
          %s355 = smul.addr %s354, 16
          %s356 = scalar_lea.vmem [#allocation4], %s355
          %s357 = smul.u32 2, %s29
          %s359 = ssub.s32 256, 256
          %360 = vsyncadd %s353, %s359
          %s361 = smul.addr %s357, 2
          %s362 = sadd.s32 %s30, %s361
          %s363 = smul.addr %s362, 128
          %s364 = scalar_lea.hbm %s0, %s363
          %s365 = sshll.u32 %s356, 4
          %s366 = int_to_ptr.vmem [resolvable:$true] %s365
          %371 = dma.hbm_to_vmem [thread:$0]  %s364, 256, %s366, %s353, 256, 128, 8
        $region52: #{tpu_custom_call.1} parent=47 // pred_fallthru
          _
      $region48: #{tpu_custom_call.1} parent=5 // pred_fallthru
        _
      %p372 = scmp.le.s32.totalorder 1, %s22
      %p373 = scmp.lt.s32.totalorder %s22, 3
      %p374 = pnand %p372, %p373
      %p375 = pneg %p374
      // Predicated region
      $region53: #{tpu_custom_call.1} parent=5 // pred_check
        _
      $region54: #{tpu_custom_call.1} parent=5 // pred_check_branch
        %377 = sbr.rel (%p374) target = $region56
      $region55: #{tpu_custom_call.1} parent=5 // pred_region
        %s378 = ssub.s32 %s22, 1
        %s379 = sand.u32 %s49, 1
        %s380 = scalar_lea.sflag [#allocation5], %s379
        %s381 = sand.u32 %s49, 1
        %s382 = smul.addr %s381, 16
        %s383 = scalar_lea.vmem [#allocation4], %s382
        // Predicated region
        $region57: #{tpu_custom_call.1} parent=55 // pred_check
          %p384 = pneg %p62
        $region58: #{tpu_custom_call.1} parent=55 // pred_check_branch
          %386 = sbr.rel (%p384) target = $region60
        $region59: #{tpu_custom_call.1} parent=55 // pred_region
          %387 = dma.done %s380, 256
        $region60: #{tpu_custom_call.1} parent=55 // pred_fallthru
          _
        // Predicated region
        $region61: #{tpu_custom_call.1} parent=55 // pred_check
          %p388 = pneg %p83
        $region62: #{tpu_custom_call.1} parent=55 // pred_check_branch
          %390 = sbr.rel (%p388) target = $region64
        $region63: #{tpu_custom_call.1} parent=55 // pred_region
          %391 = dma.done [#allocation8], 512
        $region64: #{tpu_custom_call.1} parent=55 // pred_fallthru
          _
        // Predicated region
        $region65: #{tpu_custom_call.1} parent=55 // pred_check
          %p392 = pneg %p104
        $region66: #{tpu_custom_call.1} parent=55 // pred_check_branch
          %394 = sbr.rel (%p392) target = $region68
        $region67: #{tpu_custom_call.1} parent=55 // pred_region
          %395 = dma.done [#allocation8], 1024
        $region68: #{tpu_custom_call.1} parent=55 // pred_fallthru
          _
        // Predicated region
        $region69: #{tpu_custom_call.1} parent=55 // pred_check
          %p396 = pneg %p125
        $region70: #{tpu_custom_call.1} parent=55 // pred_check_branch
          %398 = sbr.rel (%p396) target = $region72
        $region71: #{tpu_custom_call.1} parent=55 // pred_region
          %399 = dma.done [#allocation11], 1536
        $region72: #{tpu_custom_call.1} parent=55 // pred_fallthru
          _
        // Predicated region
        $region73: #{tpu_custom_call.1} parent=55 // pred_check
          %p400 = pneg %p167
        $region74: #{tpu_custom_call.1} parent=55 // pred_check_branch
          %402 = sbr.rel (%p400) target = $region76
        $region75: #{tpu_custom_call.1} parent=55 // pred_region
          %403 = dma.done [#allocation11], 512
        $region76: #{tpu_custom_call.1} parent=55 // pred_fallthru
          _
        // Predicated region
        $region77: #{tpu_custom_call.1} parent=55 // pred_check
          %p404 = pneg %p209
        $region78: #{tpu_custom_call.1} parent=55 // pred_check_branch
          %406 = sbr.rel (%p404) target = $region80
        $region79: #{tpu_custom_call.1} parent=55 // pred_region
          %407 = dma.done [#allocation14], 2048
        $region80: #{tpu_custom_call.1} parent=55 // pred_fallthru
          _
        %s408 = sand.u32 %s49, 1
        %s409 = scalar_lea.sflag [#allocation5], %s408
        %s410 = sand.u32 %s49, 1
        %s411 = smul.addr %s410, 16
        %s412 = scalar_lea.vmem [#allocation4], %s411
        %p413 = pneg %p62
        %p414 = pneg %p59
        %p415 = pneg %p83
        %p416 = pneg %p80
        %p417 = pneg %p104
        %p418 = pneg %p101
        %p419 = pneg %p125
        %p420 = pneg %p122
        %p421 = pneg %p146
        %p422 = pneg %p143
        %p423 = pneg %p167
        %p424 = pneg %p164
        %p425 = pneg %p188
        %p426 = pneg %p185
        %p427 = pneg %p209
        %p428 = pneg %p206
        %p429 = pneg %p230
        %p430 = pneg %p227
        %p431 = pneg %p256
        %p432 = pneg %p253
        %s433 = smul.u32 2, %s31
        %p434 = scmp.eq.s32.totalorder %s32, 0
        // Predicated region
        $region81: #{tpu_custom_call.1} parent=55 // pred_check
          %p435 = pneg %p434
        $region82: #{tpu_custom_call.1} parent=55 // pred_check_branch
          %437 = sbr.rel (%p435) target = $region84
        $region83: #{tpu_custom_call.1} parent=55 // pred_region
          %vm438 = vcmask 254976
          %439 = vst.msk [vmem:[#allocation2] sm:$0x3] %vm438, 0.0
          %440 = vst.msk [vmem:[#allocation2 + $0x2] sm:$0x3] %vm438, 0.0
          %441 = vst.msk [vmem:[#allocation2 + $0x4] sm:$0x3] %vm438, 0.0
          %442 = vst.msk [vmem:[#allocation3] sm:$0x3] %vm438, 0.0
          %443 = vst.msk [vmem:[#allocation3 + $0x2] sm:$0x3] %vm438, 0.0
          %444 = vst.msk [vmem:[#allocation3 + $0x4] sm:$0x3] %vm438, 0.0
        $region84: #{tpu_custom_call.1} parent=55 // pred_fallthru
          _
        %v445 = vld [vmem:[%s383] sm:$0xff]
        %v446 = vld [vmem:[%s383 + $0x8] sm:$0xff]
        %v447 = vld [vmem:[#allocation7] sm:$0xff]
        %v448 = vld [vmem:[#allocation7 + $0x8] sm:$0xff]
        %v449 = vld [vmem:[#allocation7 + $0x10] sm:$0xff]
        %v450 = vld [vmem:[#allocation7 + $0x18] sm:$0xff]
        %v451 = vld [vmem:[%s4] sm:$0x1]
        %v453 = vlaneseq
        %v454 = vshrl.u32 %v453, 7
        %v455 = vsub.s32 0, %v454
        %v456 = vrot.slane %v451, %v455
        %vm458 = vcmask 261120
        %v460 = vsel %vm458, %v445, 0
        %v463 = vsel %vm458, %v446, 0
        %465 = vmatprep.subr.mxu0 0.0
        %466 = vmatpush1.msra.mxu0 %v447
        %467 = vmatprep.subr.mxu0 0.0
        %468 = vmatpush1.msra.mxu0 %v448
        %469 = vmatprep.subr.mxu0 0.0
        %470 = vmatpush1.msra.mxu0 %v449
        %471 = vmatprep.subr.mxu0 0.0
        %472 = vmatpush1.msra.mxu0 %v450
        %473 = vmatprep.subr.mxu0 0.0
        %474 = vmatpush1.msra.mxu0 0.0
        %475 = vmatprep.subr.mxu0 0.0
        %476 = vmatpush1.msra.mxu0 0.0
        %477 = vmatprep.subr.mxu0 0.0
        %478 = vmatpush1.msra.mxu0 0.0
        %479 = vmatprep.subr.mxu0 0.0
        %480 = vmatpush1.msra.mxu0 0.0
        %481 = vmatprep.subr.mxu0 0.0
        %482 = vmatpush1.msra.mxu0 0.0
        %483 = vmatprep.subr.mxu0 0.0
        %484 = vmatpush1.msra.mxu0 0.0
        %485 = vmatprep.subr.mxu0 0.0
        %486 = vmatpush1.msra.mxu0 0.0
        %487 = vmatprep.subr.mxu0 0.0
        %488 = vmatpush1.msra.mxu0 0.0
        %489 = vmatprep.subr.mxu0 0.0
        %490 = vmatpush1.msra.mxu0 0.0
        %491 = vmatprep.subr.mxu0 0.0
        %492 = vmatpush1.msra.mxu0 0.0
        %493 = vmatprep.subr.mxu0 0.0
        %494 = vmatpush1.msra.mxu0 0.0
        %495 = vmatprep.subr.mxu0 0.0
        %496 = vmatpush1.msra.mxu0 0.0
        %497 = vmatprep.subr.mxu0 0.0
        %498 = vmatpush1.msra.mxu0 0.0
        %499 = vmatprep.subr.mxu0 0.0
        %500 = vmatpush1.msra.mxu0 0.0
        %501 = vmatprep.subr.mxu0 0.0
        %502 = vmatpush1.msra.mxu0 0.0
        %503 = vmatprep.subr.mxu0 0.0
        %504 = vmatpush1.msra.mxu0 0.0
        %505 = vmatprep.subr.mxu0 0.0
        %506 = vmatpush1.msra.mxu0 0.0
        %507 = vmatprep.subr.mxu0 0.0
        %508 = vmatpush1.msra.mxu0 0.0
        %509 = vmatprep.subr.mxu0 0.0
        %510 = vmatpush1.msra.mxu0 0.0
        %511 = vmatprep.subr.mxu0 0.0
        %512 = vmatpush1.msra.mxu0 0.0
        %513 = vmatprep.subr.mxu0 0.0
        %514 = vmatpush1.msra.mxu0 0.0
        %515 = vmatprep.subr.mxu0 0.0
        %516 = vmatpush1.msra.mxu0 0.0
        %517 = vmatprep.subr.mxu0 0.0
        %518 = vmatpush1.msra.mxu0 0.0
        %519 = vmatprep.subr.mxu0 0.0
        %520 = vmatpush1.msra.mxu0 0.0
        %521 = vmatprep.subr.mxu0 0.0
        %522 = vmatpush1.msra.mxu0 0.0
        %523 = vmatprep.subr.mxu0 0.0
        %524 = vmatpush1.msra.mxu0 0.0
        %525 = vmatprep.subr.mxu0 0.0
        %526 = vmatpush1.msra.mxu0 0.0
        %527 = vmatprep.subr.mxu0 0.0
        %528 = vmatpush1.msra.mxu0 0.0
        %529 = vmatprep.mubr.f32.mxu0 0.0
        %530 = vmatmul.mubr.f32.gmra.mrb[0].mxu0 %v460
        %v531 = vpop.f32.mrb[0].mxu0
        %v532 = vadd.f32 %v456, %v531
        %v533 = vpop.f32.mrb[0].mxu0
        %534 = vmatprep.mubr.f32.mxu0 0.0
        %535 = vmatmul.mubr.f32.gmra.mrb[0].mxu0 %v463
        %v536 = vpop.f32.mrb[0].mxu0
        %v537 = vadd.f32 %v456, %v536
        %v538 = vpop.f32.mrb[0].mxu0
        %539 = vdwg.mxu0
        %v540 = vld [vmem:[#allocation10] sm:$0xff]
        %v541 = vld [vmem:[#allocation10 + $0x8] sm:$0xff]
        %v542 = vld [vmem:[#allocation10 + $0x10] sm:$0xff]
        %v543 = vld [vmem:[#allocation10 + $0x18] sm:$0xff]
        %s544 = scalar_lea.vmem [#allocation10], 32
        %v545 = vld [vmem:[%s544] sm:$0xff]
        %v546 = vld [vmem:[%s544 + $0x8] sm:$0xff]
        %v547 = vld [vmem:[%s544 + $0x10] sm:$0xff]
        %v548 = vld [vmem:[%s544 + $0x18] sm:$0xff]
        %s549 = scalar_lea.vmem [#allocation10], 64
        %v550 = vld [vmem:[%s549] sm:$0xff]
        %v551 = vld [vmem:[%s549 + $0x8] sm:$0xff]
        %v552 = vld [vmem:[%s549 + $0x10] sm:$0xff]
        %v553 = vld [vmem:[%s549 + $0x18] sm:$0xff]
        %v554 = vld [vmem:[#allocation9] sm:$0xff]
        %v555 = vld [vmem:[#allocation9 + $0x8] sm:$0xff]
        %v556 = vld [vmem:[#allocation9 + $0x10] sm:$0xff]
        %v557 = vld [vmem:[#allocation9 + $0x18] sm:$0xff]
        %s558 = scalar_lea.vmem [#allocation9], 32
        %v559 = vld [vmem:[%s558] sm:$0xff]
        %v560 = vld [vmem:[%s558 + $0x8] sm:$0xff]
        %v561 = vld [vmem:[%s558 + $0x10] sm:$0xff]
        %v562 = vld [vmem:[%s558 + $0x18] sm:$0xff]
        %s563 = scalar_lea.vmem %s4, 1
        %v564 = vld [vmem:[%s563] sm:$0x1]
        %v566 = vlaneseq
        %v567 = vshrl.u32 %v566, 7
        %v568 = vsub.s32 0, %v567
        %v569 = vrot.slane %v564, %v568
        %s571 = scalar_lea.vmem %s4, 2
        %v572 = vld [vmem:[%s571] sm:$0x1]
        %v574 = vlaneseq
        %v575 = vshrl.u32 %v574, 7
        %v576 = vsub.s32 0, %v575
        %v577 = vrot.slane %v572, %v576
        %v579 = vld [vmem:[#allocation2] sm:$0x3]
        %v581 = vsel %vm458, %v579, 0
        %583 = vmatprep.subr.mxu0 0.0
        %584 = vmatpush1.msra.mxu0 %v540
        %585 = vmatprep.subr.mxu0 0.0
        %586 = vmatpush1.msra.mxu0 %v541
        %587 = vmatprep.subr.mxu0 0.0
        %588 = vmatpush1.msra.mxu0 %v542
        %589 = vmatprep.subr.mxu0 0.0
        %590 = vmatpush1.msra.mxu0 %v543
        %591 = vmatprep.subr.mxu0 0.0
        %592 = vmatpush1.msra.mxu0 0.0
        %593 = vmatprep.subr.mxu0 0.0
        %594 = vmatpush1.msra.mxu0 0.0
        %595 = vmatprep.subr.mxu0 0.0
        %596 = vmatpush1.msra.mxu0 0.0
        %597 = vmatprep.subr.mxu0 0.0
        %598 = vmatpush1.msra.mxu0 0.0
        %599 = vmatprep.subr.mxu0 0.0
        %600 = vmatpush1.msra.mxu0 0.0
        %601 = vmatprep.subr.mxu0 0.0
        %602 = vmatpush1.msra.mxu0 0.0
        %603 = vmatprep.subr.mxu0 0.0
        %604 = vmatpush1.msra.mxu0 0.0
        %605 = vmatprep.subr.mxu0 0.0
        %606 = vmatpush1.msra.mxu0 0.0
        %607 = vmatprep.subr.mxu0 0.0
        %608 = vmatpush1.msra.mxu0 0.0
        %609 = vmatprep.subr.mxu0 0.0
        %610 = vmatpush1.msra.mxu0 0.0
        %611 = vmatprep.subr.mxu0 0.0
        %612 = vmatpush1.msra.mxu0 0.0
        %613 = vmatprep.subr.mxu0 0.0
        %614 = vmatpush1.msra.mxu0 0.0
        %615 = vmatprep.subr.mxu0 0.0
        %616 = vmatpush1.msra.mxu0 0.0
        %617 = vmatprep.subr.mxu0 0.0
        %618 = vmatpush1.msra.mxu0 0.0
        %619 = vmatprep.subr.mxu0 0.0
        %620 = vmatpush1.msra.mxu0 0.0
        %621 = vmatprep.subr.mxu0 0.0
        %622 = vmatpush1.msra.mxu0 0.0
        %623 = vmatprep.subr.mxu0 0.0
        %624 = vmatpush1.msra.mxu0 0.0
        %625 = vmatprep.subr.mxu0 0.0
        %626 = vmatpush1.msra.mxu0 0.0
        %627 = vmatprep.subr.mxu0 0.0
        %628 = vmatpush1.msra.mxu0 0.0
        %629 = vmatprep.subr.mxu0 0.0
        %630 = vmatpush1.msra.mxu0 0.0
        %631 = vmatprep.subr.mxu0 0.0
        %632 = vmatpush1.msra.mxu0 0.0
        %633 = vmatprep.subr.mxu0 0.0
        %634 = vmatpush1.msra.mxu0 0.0
        %635 = vmatprep.subr.mxu0 0.0
        %636 = vmatpush1.msra.mxu0 0.0
        %637 = vmatprep.subr.mxu0 0.0
        %638 = vmatpush1.msra.mxu0 0.0
        %639 = vmatprep.subr.mxu0 0.0
        %640 = vmatpush1.msra.mxu0 0.0
        %641 = vmatprep.subr.mxu0 0.0
        %642 = vmatpush1.msra.mxu0 0.0
        %643 = vmatprep.subr.mxu0 0.0
        %644 = vmatpush1.msra.mxu0 0.0
        %645 = vmatprep.subr.mxu0 0.0
        %646 = vmatpush1.msra.mxu0 0.0
        %647 = vmatprep.mubr.f32.mxu0 0.0
        %648 = vmatmul.mubr.f32.gmra.mrb[0].mxu0 %v581
        %v649 = vpop.f32.mrb[0].mxu0
        %v650 = vadd.f32 0.0, %v649
        %v651 = vpop.f32.mrb[0].mxu0
        %652 = vdwg.mxu0
        %v654 = vrot.slane %v650, 1
        %v657 = vadd.f32 %v532, %v650
        %v658 = vadd.f32 %v537, %v654
        %v659 = vld [vmem:[#allocation3] sm:$0x3]
        %v660 = vxor.u32 %v657, 2147483648
        %v661 = vxor.u32 %v658, 2147483648
        %v662 = vmul.f32 %v660, 1.442695
        %v663 = vpow.pop %v662
        %v664 = vmul.f32 %v661, 1.442695
        %v665 = vpow.pop %v664
        %v666 = vadd.f32 %v663, 1.0
        %v667 = vadd.f32 %v665, 1.0
        %v668 = vrcp.pop %v666
        %v669 = vmul.f32 1.0, %v668
        %v670 = vrcp.pop %v667
        %v671 = vmul.f32 1.0, %v670
        %v672 = vtanh.pop %v657
        %v673 = vtanh.pop %v658
        %v675 = vrot.slane %v659, 1
        %676 = vrot.lane.b32.xlu0 %v659, 32
        %v677 = vpop.permute.xlu0 %676
        %678 = vrot.lane.b32.xlu0 %v675, 32
        %v679 = vpop.permute.xlu0 %678
        %v682 = vmul.f32 %v669, %v677
        %v683 = vmul.f32 %v671, %v679
        %686 = vrot.lane.b32.xlu0 %v672, 64
        %v687 = vpop.permute.xlu0 %686
        %688 = vrot.lane.b32.xlu0 %v673, 64
        %v689 = vpop.permute.xlu0 %688
        %v692 = vmul.f32 %v669, %v687
        %v693 = vmul.f32 %v671, %v689
        %696 = vrot.lane.b32.xlu0 %v692, 32
        %v697 = vpop.permute.xlu0 %696
        %698 = vrot.lane.b32.xlu0 %v693, 32
        %v699 = vpop.permute.xlu0 %698
        %v702 = vadd.f32 %v682, %v697
        %v703 = vadd.f32 %v683, %v699
        %v704 = vtanh.pop %v702
        %v705 = vtanh.pop %v703
        %708 = vrot.lane.b32.xlu0 %v704, 64
        %v709 = vpop.permute.xlu0 %708
        %710 = vrot.lane.b32.xlu0 %v705, 64
        %v711 = vpop.permute.xlu0 %710
        %v714 = vmul.f32 %v669, %v709
        %v715 = vmul.f32 %v671, %v711
        %v718 = vrot.slane %v715, 7
        %vm719 = vcmask 1041409
        %v720 = vsel %vm719, %v718, %v714
        %721 = vrot.lane.b32.xlu0 %v720, 32
        %v722 = vpop.permute.xlu0 %721
        %vm724 = vcmask 254976
        %725 = vst.msk [vmem:[#allocation2] sm:$0x3] %vm724, %v722
        %v728 = vrot.slane %v703, 7
        %v729 = vsel %vm719, %v728, %v702
        %730 = vrot.lane.b32.xlu0 %v729, 96
        %v731 = vpop.permute.xlu0 %730
        %733 = vst.msk [vmem:[#allocation3] sm:$0x3] %vm724, %v731
        %s734 = scalar_lea.vmem [#allocation2], 2
        %v735 = vld [vmem:[%s734] sm:$0x3]
        %v737 = vsel %vm458, %v735, 0
        %739 = vmatprep.subr.mxu0 0.0
        %740 = vmatpush1.msra.mxu0 %v545
        %741 = vmatprep.subr.mxu0 0.0
        %742 = vmatpush1.msra.mxu0 %v546
        %743 = vmatprep.subr.mxu0 0.0
        %744 = vmatpush1.msra.mxu0 %v547
        %745 = vmatprep.subr.mxu0 0.0
        %746 = vmatpush1.msra.mxu0 %v548
        %747 = vmatprep.subr.mxu0 0.0
        %748 = vmatpush1.msra.mxu0 0.0
        %749 = vmatprep.subr.mxu0 0.0
        %750 = vmatpush1.msra.mxu0 0.0
        %751 = vmatprep.subr.mxu0 0.0
        %752 = vmatpush1.msra.mxu0 0.0
        %753 = vmatprep.subr.mxu0 0.0
        %754 = vmatpush1.msra.mxu0 0.0
        %755 = vmatprep.subr.mxu0 0.0
        %756 = vmatpush1.msra.mxu0 0.0
        %757 = vmatprep.subr.mxu0 0.0
        %758 = vmatpush1.msra.mxu0 0.0
        %759 = vmatprep.subr.mxu0 0.0
        %760 = vmatpush1.msra.mxu0 0.0
        %761 = vmatprep.subr.mxu0 0.0
        %762 = vmatpush1.msra.mxu0 0.0
        %763 = vmatprep.subr.mxu0 0.0
        %764 = vmatpush1.msra.mxu0 0.0
        %765 = vmatprep.subr.mxu0 0.0
        %766 = vmatpush1.msra.mxu0 0.0
        %767 = vmatprep.subr.mxu0 0.0
        %768 = vmatpush1.msra.mxu0 0.0
        %769 = vmatprep.subr.mxu0 0.0
        %770 = vmatpush1.msra.mxu0 0.0
        %771 = vmatprep.subr.mxu0 0.0
        %772 = vmatpush1.msra.mxu0 0.0
        %773 = vmatprep.subr.mxu0 0.0
        %774 = vmatpush1.msra.mxu0 0.0
        %775 = vmatprep.subr.mxu0 0.0
        %776 = vmatpush1.msra.mxu0 0.0
        %777 = vmatprep.subr.mxu0 0.0
        %778 = vmatpush1.msra.mxu0 0.0
        %779 = vmatprep.subr.mxu0 0.0
        %780 = vmatpush1.msra.mxu0 0.0
        %781 = vmatprep.subr.mxu0 0.0
        %782 = vmatpush1.msra.mxu0 0.0
        %783 = vmatprep.subr.mxu0 0.0
        %784 = vmatpush1.msra.mxu0 0.0
        %785 = vmatprep.subr.mxu0 0.0
        %786 = vmatpush1.msra.mxu0 0.0
        %787 = vmatprep.subr.mxu0 0.0
        %788 = vmatpush1.msra.mxu0 0.0
        %789 = vmatprep.subr.mxu0 0.0
        %790 = vmatpush1.msra.mxu0 0.0
        %791 = vmatprep.subr.mxu0 0.0
        %792 = vmatpush1.msra.mxu0 0.0
        %793 = vmatprep.subr.mxu0 0.0
        %794 = vmatpush1.msra.mxu0 0.0
        %795 = vmatprep.subr.mxu0 0.0
        %796 = vmatpush1.msra.mxu0 0.0
        %797 = vmatprep.subr.mxu0 0.0
        %798 = vmatpush1.msra.mxu0 0.0
        %799 = vmatprep.subr.mxu0 0.0
        %800 = vmatpush1.msra.mxu0 0.0
        %801 = vmatprep.subr.mxu0 0.0
        %802 = vmatpush1.msra.mxu0 0.0
        %803 = vmatprep.mubr.f32.mxu0 0.0
        %804 = vmatmul.mubr.f32.gmra.mrb[0].mxu0 %v737
        %v805 = vpop.f32.mrb[0].mxu0
        %v806 = vadd.f32 0.0, %v805
        %v807 = vpop.f32.mrb[0].mxu0
        %808 = vdwg.mxu0
        %v809 = vsel %vm458, %v722, 0
        %811 = vmatprep.subr.mxu0 0.0
        %812 = vmatpush1.msra.mxu0 %v554
        %813 = vmatprep.subr.mxu0 0.0
        %814 = vmatpush1.msra.mxu0 %v555
        %815 = vmatprep.subr.mxu0 0.0
        %816 = vmatpush1.msra.mxu0 %v556
        %817 = vmatprep.subr.mxu0 0.0
        %818 = vmatpush1.msra.mxu0 %v557
        %819 = vmatprep.subr.mxu0 0.0
        %820 = vmatpush1.msra.mxu0 0.0
        %821 = vmatprep.subr.mxu0 0.0
        %822 = vmatpush1.msra.mxu0 0.0
        %823 = vmatprep.subr.mxu0 0.0
        %824 = vmatpush1.msra.mxu0 0.0
        %825 = vmatprep.subr.mxu0 0.0
        %826 = vmatpush1.msra.mxu0 0.0
        %827 = vmatprep.subr.mxu0 0.0
        %828 = vmatpush1.msra.mxu0 0.0
        %829 = vmatprep.subr.mxu0 0.0
        %830 = vmatpush1.msra.mxu0 0.0
        %831 = vmatprep.subr.mxu0 0.0
        %832 = vmatpush1.msra.mxu0 0.0
        %833 = vmatprep.subr.mxu0 0.0
        %834 = vmatpush1.msra.mxu0 0.0
        %835 = vmatprep.subr.mxu0 0.0
        %836 = vmatpush1.msra.mxu0 0.0
        %837 = vmatprep.subr.mxu0 0.0
        %838 = vmatpush1.msra.mxu0 0.0
        %839 = vmatprep.subr.mxu0 0.0
        %840 = vmatpush1.msra.mxu0 0.0
        %841 = vmatprep.subr.mxu0 0.0
        %842 = vmatpush1.msra.mxu0 0.0
        %843 = vmatprep.subr.mxu0 0.0
        %844 = vmatpush1.msra.mxu0 0.0
        %845 = vmatprep.subr.mxu0 0.0
        %846 = vmatpush1.msra.mxu0 0.0
        %847 = vmatprep.subr.mxu0 0.0
        %848 = vmatpush1.msra.mxu0 0.0
        %849 = vmatprep.subr.mxu0 0.0
        %850 = vmatpush1.msra.mxu0 0.0
        %851 = vmatprep.subr.mxu0 0.0
        %852 = vmatpush1.msra.mxu0 0.0
        %853 = vmatprep.subr.mxu0 0.0
        %854 = vmatpush1.msra.mxu0 0.0
        %855 = vmatprep.subr.mxu0 0.0
        %856 = vmatpush1.msra.mxu0 0.0
        %857 = vmatprep.subr.mxu0 0.0
        %858 = vmatpush1.msra.mxu0 0.0
        %859 = vmatprep.subr.mxu0 0.0
        %860 = vmatpush1.msra.mxu0 0.0
        %861 = vmatprep.subr.mxu0 0.0
        %862 = vmatpush1.msra.mxu0 0.0
        %863 = vmatprep.subr.mxu0 0.0
        %864 = vmatpush1.msra.mxu0 0.0
        %865 = vmatprep.subr.mxu0 0.0
        %866 = vmatpush1.msra.mxu0 0.0
        %867 = vmatprep.subr.mxu0 0.0
        %868 = vmatpush1.msra.mxu0 0.0
        %869 = vmatprep.subr.mxu0 0.0
        %870 = vmatpush1.msra.mxu0 0.0
        %871 = vmatprep.subr.mxu0 0.0
        %872 = vmatpush1.msra.mxu0 0.0
        %873 = vmatprep.subr.mxu0 0.0
        %874 = vmatpush1.msra.mxu0 0.0
        %875 = vmatprep.mubr.f32.mxu0 0.0
        %876 = vmatmul.mubr.f32.gmra.mrb[0].mxu0 %v809
        %v877 = vpop.f32.mrb[0].mxu0
        %v878 = vadd.f32 %v806, %v877
        %v879 = vpop.f32.mrb[0].mxu0
        %880 = vdwg.mxu0
        %v881 = vadd.f32 %v878, %v569
        %s882 = scalar_lea.vmem [#allocation3], 2
        %v883 = vld [vmem:[%s882] sm:$0x3]
        %v884 = vxor.u32 %v881, 2147483648
        %v885 = vmul.f32 %v884, 1.442695
        %v886 = vpow.pop %v885
        %v887 = vadd.f32 %v886, 1.0
        %v888 = vrcp.pop %v887
        %v889 = vmul.f32 1.0, %v888
        %v890 = vtanh.pop %v881
        %892 = vrot.lane.b32.xlu0 %v883, 32
        %v893 = vpop.permute.xlu0 %892
        %v895 = vmul.f32 %v889, %v893
        %897 = vrot.lane.b32.xlu0 %v890, 64
        %v898 = vpop.permute.xlu0 %897
        %v900 = vmul.f32 %v889, %v898
        %902 = vrot.lane.b32.xlu0 %v900, 32
        %v903 = vpop.permute.xlu0 %902
        %v905 = vadd.f32 %v895, %v903
        %v906 = vtanh.pop %v905
        %908 = vrot.lane.b32.xlu0 %v906, 64
        %v909 = vpop.permute.xlu0 %908
        %v911 = vmul.f32 %v889, %v909
        %913 = vrot.lane.b32.xlu0 %v911, 32
        %v914 = vpop.permute.xlu0 %913
        %916 = vst.msk [vmem:[%s734] sm:$0x3] %vm724, %v914
        %918 = vrot.lane.b32.xlu0 %v905, 96
        %v919 = vpop.permute.xlu0 %918
        %921 = vst.msk [vmem:[%s882] sm:$0x3] %vm724, %v919
        %s922 = scalar_lea.vmem [#allocation2], 4
        %v923 = vld [vmem:[%s922] sm:$0x3]
        %v925 = vsel %vm458, %v923, 0
        %927 = vmatprep.subr.mxu0 0.0
        %928 = vmatpush1.msra.mxu0 %v550
        %929 = vmatprep.subr.mxu0 0.0
        %930 = vmatpush1.msra.mxu0 %v551
        %931 = vmatprep.subr.mxu0 0.0
        %932 = vmatpush1.msra.mxu0 %v552
        %933 = vmatprep.subr.mxu0 0.0
        %934 = vmatpush1.msra.mxu0 %v553
        %935 = vmatprep.subr.mxu0 0.0
        %936 = vmatpush1.msra.mxu0 0.0
        %937 = vmatprep.subr.mxu0 0.0
        %938 = vmatpush1.msra.mxu0 0.0
        %939 = vmatprep.subr.mxu0 0.0
        %940 = vmatpush1.msra.mxu0 0.0
        %941 = vmatprep.subr.mxu0 0.0
        %942 = vmatpush1.msra.mxu0 0.0
        %943 = vmatprep.subr.mxu0 0.0
        %944 = vmatpush1.msra.mxu0 0.0
        %945 = vmatprep.subr.mxu0 0.0
        %946 = vmatpush1.msra.mxu0 0.0
        %947 = vmatprep.subr.mxu0 0.0
        %948 = vmatpush1.msra.mxu0 0.0
        %949 = vmatprep.subr.mxu0 0.0
        %950 = vmatpush1.msra.mxu0 0.0
        %951 = vmatprep.subr.mxu0 0.0
        %952 = vmatpush1.msra.mxu0 0.0
        %953 = vmatprep.subr.mxu0 0.0
        %954 = vmatpush1.msra.mxu0 0.0
        %955 = vmatprep.subr.mxu0 0.0
        %956 = vmatpush1.msra.mxu0 0.0
        %957 = vmatprep.subr.mxu0 0.0
        %958 = vmatpush1.msra.mxu0 0.0
        %959 = vmatprep.subr.mxu0 0.0
        %960 = vmatpush1.msra.mxu0 0.0
        %961 = vmatprep.subr.mxu0 0.0
        %962 = vmatpush1.msra.mxu0 0.0
        %963 = vmatprep.subr.mxu0 0.0
        %964 = vmatpush1.msra.mxu0 0.0
        %965 = vmatprep.subr.mxu0 0.0
        %966 = vmatpush1.msra.mxu0 0.0
        %967 = vmatprep.subr.mxu0 0.0
        %968 = vmatpush1.msra.mxu0 0.0
        %969 = vmatprep.subr.mxu0 0.0
        %970 = vmatpush1.msra.mxu0 0.0
        %971 = vmatprep.subr.mxu0 0.0
        %972 = vmatpush1.msra.mxu0 0.0
        %973 = vmatprep.subr.mxu0 0.0
        %974 = vmatpush1.msra.mxu0 0.0
        %975 = vmatprep.subr.mxu0 0.0
        %976 = vmatpush1.msra.mxu0 0.0
        %977 = vmatprep.subr.mxu0 0.0
        %978 = vmatpush1.msra.mxu0 0.0
        %979 = vmatprep.subr.mxu0 0.0
        %980 = vmatpush1.msra.mxu0 0.0
        %981 = vmatprep.subr.mxu0 0.0
        %982 = vmatpush1.msra.mxu0 0.0
        %983 = vmatprep.subr.mxu0 0.0
        %984 = vmatpush1.msra.mxu0 0.0
        %985 = vmatprep.subr.mxu0 0.0
        %986 = vmatpush1.msra.mxu0 0.0
        %987 = vmatprep.subr.mxu0 0.0
        %988 = vmatpush1.msra.mxu0 0.0
        %989 = vmatprep.subr.mxu0 0.0
        %990 = vmatpush1.msra.mxu0 0.0
        %991 = vmatprep.mubr.f32.mxu0 0.0
        %992 = vmatmul.mubr.f32.gmra.mrb[0].mxu0 %v925
        %v993 = vpop.f32.mrb[0].mxu0
        %v994 = vadd.f32 0.0, %v993
        %v995 = vpop.f32.mrb[0].mxu0
        %996 = vdwg.mxu0
        %v997 = vsel %vm458, %v914, 0
        %999 = vmatprep.subr.mxu0 0.0
        %1000 = vmatpush1.msra.mxu0 %v559
        %1001 = vmatprep.subr.mxu0 0.0
        %1002 = vmatpush1.msra.mxu0 %v560
        %1003 = vmatprep.subr.mxu0 0.0
        %1004 = vmatpush1.msra.mxu0 %v561
        %1005 = vmatprep.subr.mxu0 0.0
        %1006 = vmatpush1.msra.mxu0 %v562
        %1007 = vmatprep.subr.mxu0 0.0
        %1008 = vmatpush1.msra.mxu0 0.0
        %1009 = vmatprep.subr.mxu0 0.0
        %1010 = vmatpush1.msra.mxu0 0.0
        %1011 = vmatprep.subr.mxu0 0.0
        %1012 = vmatpush1.msra.mxu0 0.0
        %1013 = vmatprep.subr.mxu0 0.0
        %1014 = vmatpush1.msra.mxu0 0.0
        %1015 = vmatprep.subr.mxu0 0.0
        %1016 = vmatpush1.msra.mxu0 0.0
        %1017 = vmatprep.subr.mxu0 0.0
        %1018 = vmatpush1.msra.mxu0 0.0
        %1019 = vmatprep.subr.mxu0 0.0
        %1020 = vmatpush1.msra.mxu0 0.0
        %1021 = vmatprep.subr.mxu0 0.0
        %1022 = vmatpush1.msra.mxu0 0.0
        %1023 = vmatprep.subr.mxu0 0.0
        %1024 = vmatpush1.msra.mxu0 0.0
        %1025 = vmatprep.subr.mxu0 0.0
        %1026 = vmatpush1.msra.mxu0 0.0
        %1027 = vmatprep.subr.mxu0 0.0
        %1028 = vmatpush1.msra.mxu0 0.0
        %1029 = vmatprep.subr.mxu0 0.0
        %1030 = vmatpush1.msra.mxu0 0.0
        %1031 = vmatprep.subr.mxu0 0.0
        %1032 = vmatpush1.msra.mxu0 0.0
        %1033 = vmatprep.subr.mxu0 0.0
        %1034 = vmatpush1.msra.mxu0 0.0
        %1035 = vmatprep.subr.mxu0 0.0
        %1036 = vmatpush1.msra.mxu0 0.0
        %1037 = vmatprep.subr.mxu0 0.0
        %1038 = vmatpush1.msra.mxu0 0.0
        %1039 = vmatprep.subr.mxu0 0.0
        %1040 = vmatpush1.msra.mxu0 0.0
        %1041 = vmatprep.subr.mxu0 0.0
        %1042 = vmatpush1.msra.mxu0 0.0
        %1043 = vmatprep.subr.mxu0 0.0
        %1044 = vmatpush1.msra.mxu0 0.0
        %1045 = vmatprep.subr.mxu0 0.0
        %1046 = vmatpush1.msra.mxu0 0.0
        %1047 = vmatprep.subr.mxu0 0.0
        %1048 = vmatpush1.msra.mxu0 0.0
        %1049 = vmatprep.subr.mxu0 0.0
        %1050 = vmatpush1.msra.mxu0 0.0
        %1051 = vmatprep.subr.mxu0 0.0
        %1052 = vmatpush1.msra.mxu0 0.0
        %1053 = vmatprep.subr.mxu0 0.0
        %1054 = vmatpush1.msra.mxu0 0.0
        %1055 = vmatprep.subr.mxu0 0.0
        %1056 = vmatpush1.msra.mxu0 0.0
        %1057 = vmatprep.subr.mxu0 0.0
        %1058 = vmatpush1.msra.mxu0 0.0
        %1059 = vmatprep.subr.mxu0 0.0
        %1060 = vmatpush1.msra.mxu0 0.0
        %1061 = vmatprep.subr.mxu0 0.0
        %1062 = vmatpush1.msra.mxu0 0.0
        %1063 = vmatprep.mubr.f32.mxu0 0.0
        %1064 = vmatmul.mubr.f32.gmra.mrb[0].mxu0 %v997
        %v1065 = vpop.f32.mrb[0].mxu0
        %v1066 = vadd.f32 %v994, %v1065
        %v1067 = vpop.f32.mrb[0].mxu0
        %1068 = vdwg.mxu0
        %v1069 = vadd.f32 %v1066, %v577
        %s1070 = scalar_lea.vmem [#allocation3], 4
        %v1071 = vld [vmem:[%s1070] sm:$0x3]
        %v1072 = vxor.u32 %v1069, 2147483648
        %v1073 = vmul.f32 %v1072, 1.442695
        %v1074 = vpow.pop %v1073
        %v1075 = vadd.f32 %v1074, 1.0
        %v1076 = vrcp.pop %v1075
        %v1077 = vmul.f32 1.0, %v1076
        %v1078 = vtanh.pop %v1069
        %1080 = vrot.lane.b32.xlu0 %v1071, 32
        %v1081 = vpop.permute.xlu0 %1080
        %v1083 = vmul.f32 %v1077, %v1081
        %1085 = vrot.lane.b32.xlu0 %v1078, 64
        %v1086 = vpop.permute.xlu0 %1085
        %v1088 = vmul.f32 %v1077, %v1086
        %1090 = vrot.lane.b32.xlu0 %v1088, 32
        %v1091 = vpop.permute.xlu0 %1090
        %v1093 = vadd.f32 %v1083, %v1091
        %v1094 = vtanh.pop %v1093
        %1096 = vrot.lane.b32.xlu0 %v1094, 64
        %v1097 = vpop.permute.xlu0 %1096
        %v1099 = vmul.f32 %v1077, %v1097
        %1101 = vrot.lane.b32.xlu0 %v1099, 32
        %v1102 = vpop.permute.xlu0 %1101
        %1104 = vst.msk [vmem:[%s922] sm:$0x3] %vm724, %v1102
        %1106 = vrot.lane.b32.xlu0 %v1093, 96
        %v1107 = vpop.permute.xlu0 %1106
        %1109 = vst.msk [vmem:[%s1070] sm:$0x3] %vm724, %v1107
        %v1110 = vld [vmem:[#allocation2] sm:$0x3]
        %v1112 = vsel %vm458, %v1110, 0
        %1114 = vmatprep.subr.mxu0 0.0
        %1115 = vmatpush1.msra.mxu0 %v540
        %1116 = vmatprep.subr.mxu0 0.0
        %1117 = vmatpush1.msra.mxu0 %v541
        %1118 = vmatprep.subr.mxu0 0.0
        %1119 = vmatpush1.msra.mxu0 %v542
        %1120 = vmatprep.subr.mxu0 0.0
        %1121 = vmatpush1.msra.mxu0 %v543
        %1122 = vmatprep.subr.mxu0 0.0
        %1123 = vmatpush1.msra.mxu0 0.0
        %1124 = vmatprep.subr.mxu0 0.0
        %1125 = vmatpush1.msra.mxu0 0.0
        %1126 = vmatprep.subr.mxu0 0.0
        %1127 = vmatpush1.msra.mxu0 0.0
        %1128 = vmatprep.subr.mxu0 0.0
        %1129 = vmatpush1.msra.mxu0 0.0
        %1130 = vmatprep.subr.mxu0 0.0
        %1131 = vmatpush1.msra.mxu0 0.0
        %1132 = vmatprep.subr.mxu0 0.0
        %1133 = vmatpush1.msra.mxu0 0.0
        %1134 = vmatprep.subr.mxu0 0.0
        %1135 = vmatpush1.msra.mxu0 0.0
        %1136 = vmatprep.subr.mxu0 0.0
        %1137 = vmatpush1.msra.mxu0 0.0
        %1138 = vmatprep.subr.mxu0 0.0
        %1139 = vmatpush1.msra.mxu0 0.0
        %1140 = vmatprep.subr.mxu0 0.0
        %1141 = vmatpush1.msra.mxu0 0.0
        %1142 = vmatprep.subr.mxu0 0.0
        %1143 = vmatpush1.msra.mxu0 0.0
        %1144 = vmatprep.subr.mxu0 0.0
        %1145 = vmatpush1.msra.mxu0 0.0
        %1146 = vmatprep.subr.mxu0 0.0
        %1147 = vmatpush1.msra.mxu0 0.0
        %1148 = vmatprep.subr.mxu0 0.0
        %1149 = vmatpush1.msra.mxu0 0.0
        %1150 = vmatprep.subr.mxu0 0.0
        %1151 = vmatpush1.msra.mxu0 0.0
        %1152 = vmatprep.subr.mxu0 0.0
        %1153 = vmatpush1.msra.mxu0 0.0
        %1154 = vmatprep.subr.mxu0 0.0
        %1155 = vmatpush1.msra.mxu0 0.0
        %1156 = vmatprep.subr.mxu0 0.0
        %1157 = vmatpush1.msra.mxu0 0.0
        %1158 = vmatprep.subr.mxu0 0.0
        %1159 = vmatpush1.msra.mxu0 0.0
        %1160 = vmatprep.subr.mxu0 0.0
        %1161 = vmatpush1.msra.mxu0 0.0
        %1162 = vmatprep.subr.mxu0 0.0
        %1163 = vmatpush1.msra.mxu0 0.0
        %1164 = vmatprep.subr.mxu0 0.0
        %1165 = vmatpush1.msra.mxu0 0.0
        %1166 = vmatprep.subr.mxu0 0.0
        %1167 = vmatpush1.msra.mxu0 0.0
        %1168 = vmatprep.subr.mxu0 0.0
        %1169 = vmatpush1.msra.mxu0 0.0
        %1170 = vmatprep.subr.mxu0 0.0
        %1171 = vmatpush1.msra.mxu0 0.0
        %1172 = vmatprep.subr.mxu0 0.0
        %1173 = vmatpush1.msra.mxu0 0.0
        %1174 = vmatprep.subr.mxu0 0.0
        %1175 = vmatpush1.msra.mxu0 0.0
        %1176 = vmatprep.subr.mxu0 0.0
        %1177 = vmatpush1.msra.mxu0 0.0
        %1178 = vmatprep.mubr.f32.mxu0 0.0
        %1179 = vmatmul.mubr.f32.gmra.mrb[0].mxu0 %v1112
        %v1180 = vpop.f32.mrb[0].mxu0
        %v1181 = vadd.f32 0.0, %v1180
        %v1182 = vpop.f32.mrb[0].mxu0
        %1183 = vdwg.mxu0
        %v1185 = vrot.slane %v1181, 7
        %v1188 = vadd.f32 %v532, %v1185
        %v1189 = vadd.f32 %v537, %v1181
        %v1190 = vld [vmem:[#allocation3] sm:$0x3]
        %v1191 = vxor.u32 %v1188, 2147483648
        %v1192 = vxor.u32 %v1189, 2147483648
        %v1193 = vmul.f32 %v1191, 1.442695
        %v1194 = vpow.pop %v1193
        %v1195 = vmul.f32 %v1192, 1.442695
        %v1196 = vpow.pop %v1195
        %v1197 = vadd.f32 %v1194, 1.0
        %v1198 = vadd.f32 %v1196, 1.0
        %v1199 = vrcp.pop %v1197
        %v1200 = vmul.f32 1.0, %v1199
        %v1201 = vrcp.pop %v1198
        %v1202 = vmul.f32 1.0, %v1201
        %v1203 = vtanh.pop %v1188
        %v1204 = vtanh.pop %v1189
        %v1206 = vrot.slane %v1190, 7
        %1207 = vrot.lane.b32.xlu0 %v1206, 32
        %v1208 = vpop.permute.xlu0 %1207
        %1209 = vrot.lane.b32.xlu0 %v1190, 32
        %v1210 = vpop.permute.xlu0 %1209
        %v1213 = vmul.f32 %v1200, %v1208
        %v1214 = vmul.f32 %v1202, %v1210
        %1217 = vrot.lane.b32.xlu0 %v1203, 64
        %v1218 = vpop.permute.xlu0 %1217
        %1219 = vrot.lane.b32.xlu0 %v1204, 64
        %v1220 = vpop.permute.xlu0 %1219
        %v1223 = vmul.f32 %v1200, %v1218
        %v1224 = vmul.f32 %v1202, %v1220
        %1227 = vrot.lane.b32.xlu0 %v1223, 32
        %v1228 = vpop.permute.xlu0 %1227
        %1229 = vrot.lane.b32.xlu0 %v1224, 32
        %v1230 = vpop.permute.xlu0 %1229
        %v1233 = vadd.f32 %v1213, %v1228
        %v1234 = vadd.f32 %v1214, %v1230
        %v1235 = vtanh.pop %v1233
        %v1236 = vtanh.pop %v1234
        %1239 = vrot.lane.b32.xlu0 %v1235, 64
        %v1240 = vpop.permute.xlu0 %1239
        %1241 = vrot.lane.b32.xlu0 %v1236, 64
        %v1242 = vpop.permute.xlu0 %1241
        %v1245 = vmul.f32 %v1200, %v1240
        %v1246 = vmul.f32 %v1202, %v1242
        %v1249 = vrot.slane %v1246, 7
        %vm1250 = vcmask 1042434
        %v1251 = vsel %vm1250, %v1249, %v1245
        %1252 = vrot.lane.b32.xlu0 %v1251, 32
        %v1253 = vpop.permute.xlu0 %1252
        %vm1255 = vcmask 256001
        %1256 = vst.msk [vmem:[#allocation2 - $0x1] sm:$0x6] %vm1255, %v1253
        %v1259 = vrot.slane %v1234, 7
        %v1260 = vsel %vm1250, %v1259, %v1233
        %1261 = vrot.lane.b32.xlu0 %v1260, 96
        %v1262 = vpop.permute.xlu0 %1261
        %1264 = vst.msk [vmem:[#allocation3 - $0x1] sm:$0x6] %vm1255, %v1262
        %v1265 = vld [vmem:[%s734] sm:$0x3]
        %v1267 = vsel %vm458, %v1265, 0
        %1269 = vmatprep.subr.mxu0 0.0
        %1270 = vmatpush1.msra.mxu0 %v545
        %1271 = vmatprep.subr.mxu0 0.0
        %1272 = vmatpush1.msra.mxu0 %v546
        %1273 = vmatprep.subr.mxu0 0.0
        %1274 = vmatpush1.msra.mxu0 %v547
        %1275 = vmatprep.subr.mxu0 0.0
        %1276 = vmatpush1.msra.mxu0 %v548
        %1277 = vmatprep.subr.mxu0 0.0
        %1278 = vmatpush1.msra.mxu0 0.0
        %1279 = vmatprep.subr.mxu0 0.0
        %1280 = vmatpush1.msra.mxu0 0.0
        %1281 = vmatprep.subr.mxu0 0.0
        %1282 = vmatpush1.msra.mxu0 0.0
        %1283 = vmatprep.subr.mxu0 0.0
        %1284 = vmatpush1.msra.mxu0 0.0
        %1285 = vmatprep.subr.mxu0 0.0
        %1286 = vmatpush1.msra.mxu0 0.0
        %1287 = vmatprep.subr.mxu0 0.0
        %1288 = vmatpush1.msra.mxu0 0.0
        %1289 = vmatprep.subr.mxu0 0.0
        %1290 = vmatpush1.msra.mxu0 0.0
        %1291 = vmatprep.subr.mxu0 0.0
        %1292 = vmatpush1.msra.mxu0 0.0
        %1293 = vmatprep.subr.mxu0 0.0
        %1294 = vmatpush1.msra.mxu0 0.0
        %1295 = vmatprep.subr.mxu0 0.0
        %1296 = vmatpush1.msra.mxu0 0.0
        %1297 = vmatprep.subr.mxu0 0.0
        %1298 = vmatpush1.msra.mxu0 0.0
        %1299 = vmatprep.subr.mxu0 0.0
        %1300 = vmatpush1.msra.mxu0 0.0
        %1301 = vmatprep.subr.mxu0 0.0
        %1302 = vmatpush1.msra.mxu0 0.0
        %1303 = vmatprep.subr.mxu0 0.0
        %1304 = vmatpush1.msra.mxu0 0.0
        %1305 = vmatprep.subr.mxu0 0.0
        %1306 = vmatpush1.msra.mxu0 0.0
        %1307 = vmatprep.subr.mxu0 0.0
        %1308 = vmatpush1.msra.mxu0 0.0
        %1309 = vmatprep.subr.mxu0 0.0
        %1310 = vmatpush1.msra.mxu0 0.0
        %1311 = vmatprep.subr.mxu0 0.0
        %1312 = vmatpush1.msra.mxu0 0.0
        %1313 = vmatprep.subr.mxu0 0.0
        %1314 = vmatpush1.msra.mxu0 0.0
        %1315 = vmatprep.subr.mxu0 0.0
        %1316 = vmatpush1.msra.mxu0 0.0
        %1317 = vmatprep.subr.mxu0 0.0
        %1318 = vmatpush1.msra.mxu0 0.0
        %1319 = vmatprep.subr.mxu0 0.0
        %1320 = vmatpush1.msra.mxu0 0.0
        %1321 = vmatprep.subr.mxu0 0.0
        %1322 = vmatpush1.msra.mxu0 0.0
        %1323 = vmatprep.subr.mxu0 0.0
        %1324 = vmatpush1.msra.mxu0 0.0
        %1325 = vmatprep.subr.mxu0 0.0
        %1326 = vmatpush1.msra.mxu0 0.0
        %1327 = vmatprep.subr.mxu0 0.0
        %1328 = vmatpush1.msra.mxu0 0.0
        %1329 = vmatprep.subr.mxu0 0.0
        %1330 = vmatpush1.msra.mxu0 0.0
        %1331 = vmatprep.subr.mxu0 0.0
        %1332 = vmatpush1.msra.mxu0 0.0
        %1333 = vmatprep.mubr.f32.mxu0 0.0
        %1334 = vmatmul.mubr.f32.gmra.mrb[0].mxu0 %v1267
        %v1335 = vpop.f32.mrb[0].mxu0
        %v1336 = vadd.f32 0.0, %v1335
        %v1337 = vpop.f32.mrb[0].mxu0
        %1338 = vdwg.mxu0
        %v1339 = vrot.slane %v1245, 1
        %v1340 = vsel %vm719, %v1246, %v1339
        %1341 = vrot.lane.b32.xlu0 %v1340, 32
        %v1342 = vpop.permute.xlu0 %1341
        %v1343 = vsel %vm458, %v1342, 0
        %1345 = vmatprep.subr.mxu0 0.0
        %1346 = vmatpush1.msra.mxu0 %v554
        %1347 = vmatprep.subr.mxu0 0.0
        %1348 = vmatpush1.msra.mxu0 %v555
        %1349 = vmatprep.subr.mxu0 0.0
        %1350 = vmatpush1.msra.mxu0 %v556
        %1351 = vmatprep.subr.mxu0 0.0
        %1352 = vmatpush1.msra.mxu0 %v557
        %1353 = vmatprep.subr.mxu0 0.0
        %1354 = vmatpush1.msra.mxu0 0.0
        %1355 = vmatprep.subr.mxu0 0.0
        %1356 = vmatpush1.msra.mxu0 0.0
        %1357 = vmatprep.subr.mxu0 0.0
        %1358 = vmatpush1.msra.mxu0 0.0
        %1359 = vmatprep.subr.mxu0 0.0
        %1360 = vmatpush1.msra.mxu0 0.0
        %1361 = vmatprep.subr.mxu0 0.0
        %1362 = vmatpush1.msra.mxu0 0.0
        %1363 = vmatprep.subr.mxu0 0.0
        %1364 = vmatpush1.msra.mxu0 0.0
        %1365 = vmatprep.subr.mxu0 0.0
        %1366 = vmatpush1.msra.mxu0 0.0
        %1367 = vmatprep.subr.mxu0 0.0
        %1368 = vmatpush1.msra.mxu0 0.0
        %1369 = vmatprep.subr.mxu0 0.0
        %1370 = vmatpush1.msra.mxu0 0.0
        %1371 = vmatprep.subr.mxu0 0.0
        %1372 = vmatpush1.msra.mxu0 0.0
        %1373 = vmatprep.subr.mxu0 0.0
        %1374 = vmatpush1.msra.mxu0 0.0
        %1375 = vmatprep.subr.mxu0 0.0
        %1376 = vmatpush1.msra.mxu0 0.0
        %1377 = vmatprep.subr.mxu0 0.0
        %1378 = vmatpush1.msra.mxu0 0.0
        %1379 = vmatprep.subr.mxu0 0.0
        %1380 = vmatpush1.msra.mxu0 0.0
        %1381 = vmatprep.subr.mxu0 0.0
        %1382 = vmatpush1.msra.mxu0 0.0
        %1383 = vmatprep.subr.mxu0 0.0
        %1384 = vmatpush1.msra.mxu0 0.0
        %1385 = vmatprep.subr.mxu0 0.0
        %1386 = vmatpush1.msra.mxu0 0.0
        %1387 = vmatprep.subr.mxu0 0.0
        %1388 = vmatpush1.msra.mxu0 0.0
        %1389 = vmatprep.subr.mxu0 0.0
        %1390 = vmatpush1.msra.mxu0 0.0
        %1391 = vmatprep.subr.mxu0 0.0
        %1392 = vmatpush1.msra.mxu0 0.0
        %1393 = vmatprep.subr.mxu0 0.0
        %1394 = vmatpush1.msra.mxu0 0.0
        %1395 = vmatprep.subr.mxu0 0.0
        %1396 = vmatpush1.msra.mxu0 0.0
        %1397 = vmatprep.subr.mxu0 0.0
        %1398 = vmatpush1.msra.mxu0 0.0
        %1399 = vmatprep.subr.mxu0 0.0
        %1400 = vmatpush1.msra.mxu0 0.0
        %1401 = vmatprep.subr.mxu0 0.0
        %1402 = vmatpush1.msra.mxu0 0.0
        %1403 = vmatprep.subr.mxu0 0.0
        %1404 = vmatpush1.msra.mxu0 0.0
        %1405 = vmatprep.subr.mxu0 0.0
        %1406 = vmatpush1.msra.mxu0 0.0
        %1407 = vmatprep.subr.mxu0 0.0
        %1408 = vmatpush1.msra.mxu0 0.0
        %1409 = vmatprep.mubr.f32.mxu0 0.0
        %1410 = vmatmul.mubr.f32.gmra.mrb[0].mxu0 %v1343
        %v1411 = vpop.f32.mrb[0].mxu0
        %v1412 = vadd.f32 %v1336, %v1411
        %v1413 = vpop.f32.mrb[0].mxu0
        %1414 = vdwg.mxu0
        %v1415 = vadd.f32 %v1412, %v569
        %v1416 = vld [vmem:[%s882] sm:$0x3]
        %v1417 = vxor.u32 %v1415, 2147483648
        %v1418 = vmul.f32 %v1417, 1.442695
        %v1419 = vpow.pop %v1418
        %v1420 = vadd.f32 %v1419, 1.0
        %v1421 = vrcp.pop %v1420
        %v1422 = vmul.f32 1.0, %v1421
        %v1423 = vtanh.pop %v1415
        %1425 = vrot.lane.b32.xlu0 %v1416, 32
        %v1426 = vpop.permute.xlu0 %1425
        %v1428 = vmul.f32 %v1422, %v1426
        %1430 = vrot.lane.b32.xlu0 %v1423, 64
        %v1431 = vpop.permute.xlu0 %1430
        %v1433 = vmul.f32 %v1422, %v1431
        %1435 = vrot.lane.b32.xlu0 %v1433, 32
        %v1436 = vpop.permute.xlu0 %1435
        %v1438 = vadd.f32 %v1428, %v1436
        %v1439 = vtanh.pop %v1438
        %1441 = vrot.lane.b32.xlu0 %v1439, 64
        %v1442 = vpop.permute.xlu0 %1441
        %v1444 = vmul.f32 %v1422, %v1442
        %1446 = vrot.lane.b32.xlu0 %v1444, 32
        %v1447 = vpop.permute.xlu0 %1446
        %1449 = vst.msk [vmem:[%s734] sm:$0x3] %vm724, %v1447
        %1451 = vrot.lane.b32.xlu0 %v1438, 96
        %v1452 = vpop.permute.xlu0 %1451
        %1454 = vst.msk [vmem:[%s882] sm:$0x3] %vm724, %v1452
        %v1455 = vld [vmem:[%s922] sm:$0x3]
        %v1457 = vsel %vm458, %v1455, 0
        %1459 = vmatprep.subr.mxu0 0.0
        %1460 = vmatpush1.msra.mxu0 %v550
        %1461 = vmatprep.subr.mxu0 0.0
        %1462 = vmatpush1.msra.mxu0 %v551
        %1463 = vmatprep.subr.mxu0 0.0
        %1464 = vmatpush1.msra.mxu0 %v552
        %1465 = vmatprep.subr.mxu0 0.0
        %1466 = vmatpush1.msra.mxu0 %v553
        %1467 = vmatprep.subr.mxu0 0.0
        %1468 = vmatpush1.msra.mxu0 0.0
        %1469 = vmatprep.subr.mxu0 0.0
        %1470 = vmatpush1.msra.mxu0 0.0
        %1471 = vmatprep.subr.mxu0 0.0
        %1472 = vmatpush1.msra.mxu0 0.0
        %1473 = vmatprep.subr.mxu0 0.0
        %1474 = vmatpush1.msra.mxu0 0.0
        %1475 = vmatprep.subr.mxu0 0.0
        %1476 = vmatpush1.msra.mxu0 0.0
        %1477 = vmatprep.subr.mxu0 0.0
        %1478 = vmatpush1.msra.mxu0 0.0
        %1479 = vmatprep.subr.mxu0 0.0
        %1480 = vmatpush1.msra.mxu0 0.0
        %1481 = vmatprep.subr.mxu0 0.0
        %1482 = vmatpush1.msra.mxu0 0.0
        %1483 = vmatprep.subr.mxu0 0.0
        %1484 = vmatpush1.msra.mxu0 0.0
        %1485 = vmatprep.subr.mxu0 0.0
        %1486 = vmatpush1.msra.mxu0 0.0
        %1487 = vmatprep.subr.mxu0 0.0
        %1488 = vmatpush1.msra.mxu0 0.0
        %1489 = vmatprep.subr.mxu0 0.0
        %1490 = vmatpush1.msra.mxu0 0.0
        %1491 = vmatprep.subr.mxu0 0.0
        %1492 = vmatpush1.msra.mxu0 0.0
        %1493 = vmatprep.subr.mxu0 0.0
        %1494 = vmatpush1.msra.mxu0 0.0
        %1495 = vmatprep.subr.mxu0 0.0
        %1496 = vmatpush1.msra.mxu0 0.0
        %1497 = vmatprep.subr.mxu0 0.0
        %1498 = vmatpush1.msra.mxu0 0.0
        %1499 = vmatprep.subr.mxu0 0.0
        %1500 = vmatpush1.msra.mxu0 0.0
        %1501 = vmatprep.subr.mxu0 0.0
        %1502 = vmatpush1.msra.mxu0 0.0
        %1503 = vmatprep.subr.mxu0 0.0
        %1504 = vmatpush1.msra.mxu0 0.0
        %1505 = vmatprep.subr.mxu0 0.0
        %1506 = vmatpush1.msra.mxu0 0.0
        %1507 = vmatprep.subr.mxu0 0.0
        %1508 = vmatpush1.msra.mxu0 0.0
        %1509 = vmatprep.subr.mxu0 0.0
        %1510 = vmatpush1.msra.mxu0 0.0
        %1511 = vmatprep.subr.mxu0 0.0
        %1512 = vmatpush1.msra.mxu0 0.0
        %1513 = vmatprep.subr.mxu0 0.0
        %1514 = vmatpush1.msra.mxu0 0.0
        %1515 = vmatprep.subr.mxu0 0.0
        %1516 = vmatpush1.msra.mxu0 0.0
        %1517 = vmatprep.subr.mxu0 0.0
        %1518 = vmatpush1.msra.mxu0 0.0
        %1519 = vmatprep.subr.mxu0 0.0
        %1520 = vmatpush1.msra.mxu0 0.0
        %1521 = vmatprep.subr.mxu0 0.0
        %1522 = vmatpush1.msra.mxu0 0.0
        %1523 = vmatprep.mubr.f32.mxu0 0.0
        %1524 = vmatmul.mubr.f32.gmra.mrb[0].mxu0 %v1457
        %v1525 = vpop.f32.mrb[0].mxu0
        %v1526 = vadd.f32 0.0, %v1525
        %v1527 = vpop.f32.mrb[0].mxu0
        %1528 = vdwg.mxu0
        %v1529 = vsel %vm458, %v1447, 0
        %1531 = vmatprep.subr.mxu0 0.0
        %1532 = vmatpush1.msra.mxu0 %v559
        %1533 = vmatprep.subr.mxu0 0.0
        %1534 = vmatpush1.msra.mxu0 %v560
        %1535 = vmatprep.subr.mxu0 0.0
        %1536 = vmatpush1.msra.mxu0 %v561
        %1537 = vmatprep.subr.mxu0 0.0
        %1538 = vmatpush1.msra.mxu0 %v562
        %1539 = vmatprep.subr.mxu0 0.0
        %1540 = vmatpush1.msra.mxu0 0.0
        %1541 = vmatprep.subr.mxu0 0.0
        %1542 = vmatpush1.msra.mxu0 0.0
        %1543 = vmatprep.subr.mxu0 0.0
        %1544 = vmatpush1.msra.mxu0 0.0
        %1545 = vmatprep.subr.mxu0 0.0
        %1546 = vmatpush1.msra.mxu0 0.0
        %1547 = vmatprep.subr.mxu0 0.0
        %1548 = vmatpush1.msra.mxu0 0.0
        %1549 = vmatprep.subr.mxu0 0.0
        %1550 = vmatpush1.msra.mxu0 0.0
        %1551 = vmatprep.subr.mxu0 0.0
        %1552 = vmatpush1.msra.mxu0 0.0
        %1553 = vmatprep.subr.mxu0 0.0
        %1554 = vmatpush1.msra.mxu0 0.0
        %1555 = vmatprep.subr.mxu0 0.0
        %1556 = vmatpush1.msra.mxu0 0.0
        %1557 = vmatprep.subr.mxu0 0.0
        %1558 = vmatpush1.msra.mxu0 0.0
        %1559 = vmatprep.subr.mxu0 0.0
        %1560 = vmatpush1.msra.mxu0 0.0
        %1561 = vmatprep.subr.mxu0 0.0
        %1562 = vmatpush1.msra.mxu0 0.0
        %1563 = vmatprep.subr.mxu0 0.0
        %1564 = vmatpush1.msra.mxu0 0.0
        %1565 = vmatprep.subr.mxu0 0.0
        %1566 = vmatpush1.msra.mxu0 0.0
        %1567 = vmatprep.subr.mxu0 0.0
        %1568 = vmatpush1.msra.mxu0 0.0
        %1569 = vmatprep.subr.mxu0 0.0
        %1570 = vmatpush1.msra.mxu0 0.0
        %1571 = vmatprep.subr.mxu0 0.0
        %1572 = vmatpush1.msra.mxu0 0.0
        %1573 = vmatprep.subr.mxu0 0.0
        %1574 = vmatpush1.msra.mxu0 0.0
        %1575 = vmatprep.subr.mxu0 0.0
        %1576 = vmatpush1.msra.mxu0 0.0
        %1577 = vmatprep.subr.mxu0 0.0
        %1578 = vmatpush1.msra.mxu0 0.0
        %1579 = vmatprep.subr.mxu0 0.0
        %1580 = vmatpush1.msra.mxu0 0.0
        %1581 = vmatprep.subr.mxu0 0.0
        %1582 = vmatpush1.msra.mxu0 0.0
        %1583 = vmatprep.subr.mxu0 0.0
        %1584 = vmatpush1.msra.mxu0 0.0
        %1585 = vmatprep.subr.mxu0 0.0
        %1586 = vmatpush1.msra.mxu0 0.0
        %1587 = vmatprep.subr.mxu0 0.0
        %1588 = vmatpush1.msra.mxu0 0.0
        %1589 = vmatprep.subr.mxu0 0.0
        %1590 = vmatpush1.msra.mxu0 0.0
        %1591 = vmatprep.subr.mxu0 0.0
        %1592 = vmatpush1.msra.mxu0 0.0
        %1593 = vmatprep.subr.mxu0 0.0
        %1594 = vmatpush1.msra.mxu0 0.0
        %1595 = vmatprep.mubr.f32.mxu0 0.0
        %1596 = vmatmul.mubr.f32.gmra.mrb[0].mxu0 %v1529
        %v1597 = vpop.f32.mrb[0].mxu0
        %v1598 = vadd.f32 %v1526, %v1597
        %v1599 = vpop.f32.mrb[0].mxu0
        %1600 = vdwg.mxu0
        %v1601 = vadd.f32 %v1598, %v577
        %v1602 = vld [vmem:[%s1070] sm:$0x3]
        %v1603 = vxor.u32 %v1601, 2147483648
        %v1604 = vmul.f32 %v1603, 1.442695
        %v1605 = vpow.pop %v1604
        %v1606 = vadd.f32 %v1605, 1.0
        %v1607 = vrcp.pop %v1606
        %v1608 = vmul.f32 1.0, %v1607
        %v1609 = vtanh.pop %v1601
        %1611 = vrot.lane.b32.xlu0 %v1602, 32
        %v1612 = vpop.permute.xlu0 %1611
        %v1614 = vmul.f32 %v1608, %v1612
        %1616 = vrot.lane.b32.xlu0 %v1609, 64
        %v1617 = vpop.permute.xlu0 %1616
        %v1619 = vmul.f32 %v1608, %v1617
        %1621 = vrot.lane.b32.xlu0 %v1619, 32
        %v1622 = vpop.permute.xlu0 %1621
        %v1624 = vadd.f32 %v1614, %v1622
        %v1625 = vtanh.pop %v1624
        %1627 = vrot.lane.b32.xlu0 %v1625, 64
        %v1628 = vpop.permute.xlu0 %1627
        %v1630 = vmul.f32 %v1608, %v1628
        %1632 = vrot.lane.b32.xlu0 %v1630, 32
        %v1633 = vpop.permute.xlu0 %1632
        %1635 = vst.msk [vmem:[%s922] sm:$0x3] %vm724, %v1633
        %1637 = vrot.lane.b32.xlu0 %v1624, 96
        %v1638 = vpop.permute.xlu0 %1637
        %1640 = vst.msk [vmem:[%s1070] sm:$0x3] %vm724, %v1638
        %v1641 = vld [vmem:[#allocation2] sm:$0x3]
        %v1643 = vsel %vm458, %v1641, 0
        %1645 = vmatprep.subr.mxu0 0.0
        %1646 = vmatpush1.msra.mxu0 %v540
        %1647 = vmatprep.subr.mxu0 0.0
        %1648 = vmatpush1.msra.mxu0 %v541
        %1649 = vmatprep.subr.mxu0 0.0
        %1650 = vmatpush1.msra.mxu0 %v542
        %1651 = vmatprep.subr.mxu0 0.0
        %1652 = vmatpush1.msra.mxu0 %v543
        %1653 = vmatprep.subr.mxu0 0.0
        %1654 = vmatpush1.msra.mxu0 0.0
        %1655 = vmatprep.subr.mxu0 0.0
        %1656 = vmatpush1.msra.mxu0 0.0
        %1657 = vmatprep.subr.mxu0 0.0
        %1658 = vmatpush1.msra.mxu0 0.0
        %1659 = vmatprep.subr.mxu0 0.0
        %1660 = vmatpush1.msra.mxu0 0.0
        %1661 = vmatprep.subr.mxu0 0.0
        %1662 = vmatpush1.msra.mxu0 0.0
        %1663 = vmatprep.subr.mxu0 0.0
        %1664 = vmatpush1.msra.mxu0 0.0
        %1665 = vmatprep.subr.mxu0 0.0
        %1666 = vmatpush1.msra.mxu0 0.0
        %1667 = vmatprep.subr.mxu0 0.0
        %1668 = vmatpush1.msra.mxu0 0.0
        %1669 = vmatprep.subr.mxu0 0.0
        %1670 = vmatpush1.msra.mxu0 0.0
        %1671 = vmatprep.subr.mxu0 0.0
        %1672 = vmatpush1.msra.mxu0 0.0
        %1673 = vmatprep.subr.mxu0 0.0
        %1674 = vmatpush1.msra.mxu0 0.0
        %1675 = vmatprep.subr.mxu0 0.0
        %1676 = vmatpush1.msra.mxu0 0.0
        %1677 = vmatprep.subr.mxu0 0.0
        %1678 = vmatpush1.msra.mxu0 0.0
        %1679 = vmatprep.subr.mxu0 0.0
        %1680 = vmatpush1.msra.mxu0 0.0
        %1681 = vmatprep.subr.mxu0 0.0
        %1682 = vmatpush1.msra.mxu0 0.0
        %1683 = vmatprep.subr.mxu0 0.0
        %1684 = vmatpush1.msra.mxu0 0.0
        %1685 = vmatprep.subr.mxu0 0.0
        %1686 = vmatpush1.msra.mxu0 0.0
        %1687 = vmatprep.subr.mxu0 0.0
        %1688 = vmatpush1.msra.mxu0 0.0
        %1689 = vmatprep.subr.mxu0 0.0
        %1690 = vmatpush1.msra.mxu0 0.0
        %1691 = vmatprep.subr.mxu0 0.0
        %1692 = vmatpush1.msra.mxu0 0.0
        %1693 = vmatprep.subr.mxu0 0.0
        %1694 = vmatpush1.msra.mxu0 0.0
        %1695 = vmatprep.subr.mxu0 0.0
        %1696 = vmatpush1.msra.mxu0 0.0
        %1697 = vmatprep.subr.mxu0 0.0
        %1698 = vmatpush1.msra.mxu0 0.0
        %1699 = vmatprep.subr.mxu0 0.0
        %1700 = vmatpush1.msra.mxu0 0.0
        %1701 = vmatprep.subr.mxu0 0.0
        %1702 = vmatpush1.msra.mxu0 0.0
        %1703 = vmatprep.subr.mxu0 0.0
        %1704 = vmatpush1.msra.mxu0 0.0
        %1705 = vmatprep.subr.mxu0 0.0
        %1706 = vmatpush1.msra.mxu0 0.0
        %1707 = vmatprep.subr.mxu0 0.0
        %1708 = vmatpush1.msra.mxu0 0.0
        %1709 = vmatprep.mubr.f32.mxu0 0.0
        %1710 = vmatmul.mubr.f32.gmra.mrb[0].mxu0 %v1643
        %v1711 = vpop.f32.mrb[0].mxu0
        %v1712 = vadd.f32 0.0, %v1711
        %v1713 = vpop.f32.mrb[0].mxu0
        %1714 = vdwg.mxu0
        %v1716 = vrot.slane %v1712, 6
        %v1717 = vrot.slane %v1712, 7
        %v1720 = vadd.f32 %v532, %v1716
        %v1721 = vadd.f32 %v537, %v1717
        %v1722 = vld [vmem:[#allocation3] sm:$0x3]
        %v1723 = vxor.u32 %v1720, 2147483648
        %v1724 = vxor.u32 %v1721, 2147483648
        %v1725 = vmul.f32 %v1723, 1.442695
        %v1726 = vpow.pop %v1725
        %v1727 = vmul.f32 %v1724, 1.442695
        %v1728 = vpow.pop %v1727
        %v1729 = vadd.f32 %v1726, 1.0
        %v1730 = vadd.f32 %v1728, 1.0
        %v1731 = vrcp.pop %v1729
        %v1732 = vmul.f32 1.0, %v1731
        %v1733 = vrcp.pop %v1730
        %v1734 = vmul.f32 1.0, %v1733
        %v1735 = vtanh.pop %v1720
        %v1736 = vtanh.pop %v1721
        %v1738 = vrot.slane %v1722, 6
        %v1739 = vrot.slane %v1722, 7
        %1740 = vrot.lane.b32.xlu0 %v1738, 32
        %v1741 = vpop.permute.xlu0 %1740
        %1742 = vrot.lane.b32.xlu0 %v1739, 32
        %v1743 = vpop.permute.xlu0 %1742
        %v1746 = vmul.f32 %v1732, %v1741
        %v1747 = vmul.f32 %v1734, %v1743
        %1750 = vrot.lane.b32.xlu0 %v1735, 64
        %v1751 = vpop.permute.xlu0 %1750
        %1752 = vrot.lane.b32.xlu0 %v1736, 64
        %v1753 = vpop.permute.xlu0 %1752
        %v1756 = vmul.f32 %v1732, %v1751
        %v1757 = vmul.f32 %v1734, %v1753
        %1760 = vrot.lane.b32.xlu0 %v1756, 32
        %v1761 = vpop.permute.xlu0 %1760
        %1762 = vrot.lane.b32.xlu0 %v1757, 32
        %v1763 = vpop.permute.xlu0 %1762
        %v1766 = vadd.f32 %v1746, %v1761
        %v1767 = vadd.f32 %v1747, %v1763
        %v1768 = vtanh.pop %v1766
        %v1769 = vtanh.pop %v1767
        %1772 = vrot.lane.b32.xlu0 %v1768, 64
        %v1773 = vpop.permute.xlu0 %1772
        %1774 = vrot.lane.b32.xlu0 %v1769, 64
        %v1775 = vpop.permute.xlu0 %1774
        %v1778 = vmul.f32 %v1732, %v1773
        %v1779 = vmul.f32 %v1734, %v1775
        %v1782 = vrot.slane %v1779, 7
        %vm1783 = vcmask 1043459
        %v1784 = vsel %vm1783, %v1782, %v1778
        %1785 = vrot.lane.b32.xlu0 %v1784, 32
        %v1786 = vpop.permute.xlu0 %1785
        %vm1788 = vcmask 257026
        %1789 = vst.msk [vmem:[#allocation2 - $0x2] sm:$0xc] %vm1788, %v1786
        %v1792 = vrot.slane %v1767, 7
        %v1793 = vsel %vm1783, %v1792, %v1766
        %1794 = vrot.lane.b32.xlu0 %v1793, 96
        %v1795 = vpop.permute.xlu0 %1794
        %1797 = vst.msk [vmem:[#allocation3 - $0x2] sm:$0xc] %vm1788, %v1795
        %v1798 = vld [vmem:[%s734] sm:$0x3]
        %v1800 = vsel %vm458, %v1798, 0
        %1802 = vmatprep.subr.mxu0 0.0
        %1803 = vmatpush1.msra.mxu0 %v545
        %1804 = vmatprep.subr.mxu0 0.0
        %1805 = vmatpush1.msra.mxu0 %v546
        %1806 = vmatprep.subr.mxu0 0.0
        %1807 = vmatpush1.msra.mxu0 %v547
        %1808 = vmatprep.subr.mxu0 0.0
        %1809 = vmatpush1.msra.mxu0 %v548
        %1810 = vmatprep.subr.mxu0 0.0
        %1811 = vmatpush1.msra.mxu0 0.0
        %1812 = vmatprep.subr.mxu0 0.0
        %1813 = vmatpush1.msra.mxu0 0.0
        %1814 = vmatprep.subr.mxu0 0.0
        %1815 = vmatpush1.msra.mxu0 0.0
        %1816 = vmatprep.subr.mxu0 0.0
        %1817 = vmatpush1.msra.mxu0 0.0
        %1818 = vmatprep.subr.mxu0 0.0
        %1819 = vmatpush1.msra.mxu0 0.0
        %1820 = vmatprep.subr.mxu0 0.0
        %1821 = vmatpush1.msra.mxu0 0.0
        %1822 = vmatprep.subr.mxu0 0.0
        %1823 = vmatpush1.msra.mxu0 0.0
        %1824 = vmatprep.subr.mxu0 0.0
        %1825 = vmatpush1.msra.mxu0 0.0
        %1826 = vmatprep.subr.mxu0 0.0
        %1827 = vmatpush1.msra.mxu0 0.0
        %1828 = vmatprep.subr.mxu0 0.0
        %1829 = vmatpush1.msra.mxu0 0.0
        %1830 = vmatprep.subr.mxu0 0.0
        %1831 = vmatpush1.msra.mxu0 0.0
        %1832 = vmatprep.subr.mxu0 0.0
        %1833 = vmatpush1.msra.mxu0 0.0
        %1834 = vmatprep.subr.mxu0 0.0
        %1835 = vmatpush1.msra.mxu0 0.0
        %1836 = vmatprep.subr.mxu0 0.0
        %1837 = vmatpush1.msra.mxu0 0.0
        %1838 = vmatprep.subr.mxu0 0.0
        %1839 = vmatpush1.msra.mxu0 0.0
        %1840 = vmatprep.subr.mxu0 0.0
        %1841 = vmatpush1.msra.mxu0 0.0
        %1842 = vmatprep.subr.mxu0 0.0
        %1843 = vmatpush1.msra.mxu0 0.0
        %1844 = vmatprep.subr.mxu0 0.0
        %1845 = vmatpush1.msra.mxu0 0.0
        %1846 = vmatprep.subr.mxu0 0.0
        %1847 = vmatpush1.msra.mxu0 0.0
        %1848 = vmatprep.subr.mxu0 0.0
        %1849 = vmatpush1.msra.mxu0 0.0
        %1850 = vmatprep.subr.mxu0 0.0
        %1851 = vmatpush1.msra.mxu0 0.0
        %1852 = vmatprep.subr.mxu0 0.0
        %1853 = vmatpush1.msra.mxu0 0.0
        %1854 = vmatprep.subr.mxu0 0.0
        %1855 = vmatpush1.msra.mxu0 0.0
        %1856 = vmatprep.subr.mxu0 0.0
        %1857 = vmatpush1.msra.mxu0 0.0
        %1858 = vmatprep.subr.mxu0 0.0
        %1859 = vmatpush1.msra.mxu0 0.0
        %1860 = vmatprep.subr.mxu0 0.0
        %1861 = vmatpush1.msra.mxu0 0.0
        %1862 = vmatprep.subr.mxu0 0.0
        %1863 = vmatpush1.msra.mxu0 0.0
        %1864 = vmatprep.subr.mxu0 0.0
        %1865 = vmatpush1.msra.mxu0 0.0
        %1866 = vmatprep.mubr.f32.mxu0 0.0
        %1867 = vmatmul.mubr.f32.gmra.mrb[0].mxu0 %v1800
        %v1868 = vpop.f32.mrb[0].mxu0
        %v1869 = vadd.f32 0.0, %v1868
        %v1870 = vpop.f32.mrb[0].mxu0
        %1871 = vdwg.mxu0
        %v1872 = vrot.slane %v1778, 2
        %v1873 = vrot.slane %v1779, 1
        %v1874 = vsel %vm719, %v1873, %v1872
        %1875 = vrot.lane.b32.xlu0 %v1874, 32
        %v1876 = vpop.permute.xlu0 %1875
        %v1877 = vsel %vm458, %v1876, 0
        %1879 = vmatprep.subr.mxu0 0.0
        %1880 = vmatpush1.msra.mxu0 %v554
        %1881 = vmatprep.subr.mxu0 0.0
        %1882 = vmatpush1.msra.mxu0 %v555
        %1883 = vmatprep.subr.mxu0 0.0
        %1884 = vmatpush1.msra.mxu0 %v556
        %1885 = vmatprep.subr.mxu0 0.0
        %1886 = vmatpush1.msra.mxu0 %v557
        %1887 = vmatprep.subr.mxu0 0.0
        %1888 = vmatpush1.msra.mxu0 0.0
        %1889 = vmatprep.subr.mxu0 0.0
        %1890 = vmatpush1.msra.mxu0 0.0
        %1891 = vmatprep.subr.mxu0 0.0
        %1892 = vmatpush1.msra.mxu0 0.0
        %1893 = vmatprep.subr.mxu0 0.0
        %1894 = vmatpush1.msra.mxu0 0.0
        %1895 = vmatprep.subr.mxu0 0.0
        %1896 = vmatpush1.msra.mxu0 0.0
        %1897 = vmatprep.subr.mxu0 0.0
        %1898 = vmatpush1.msra.mxu0 0.0
        %1899 = vmatprep.subr.mxu0 0.0
        %1900 = vmatpush1.msra.mxu0 0.0
        %1901 = vmatprep.subr.mxu0 0.0
        %1902 = vmatpush1.msra.mxu0 0.0
        %1903 = vmatprep.subr.mxu0 0.0
        %1904 = vmatpush1.msra.mxu0 0.0
        %1905 = vmatprep.subr.mxu0 0.0
        %1906 = vmatpush1.msra.mxu0 0.0
        %1907 = vmatprep.subr.mxu0 0.0
        %1908 = vmatpush1.msra.mxu0 0.0
        %1909 = vmatprep.subr.mxu0 0.0
        %1910 = vmatpush1.msra.mxu0 0.0
        %1911 = vmatprep.subr.mxu0 0.0
        %1912 = vmatpush1.msra.mxu0 0.0
        %1913 = vmatprep.subr.mxu0 0.0
        %1914 = vmatpush1.msra.mxu0 0.0
        %1915 = vmatprep.subr.mxu0 0.0
        %1916 = vmatpush1.msra.mxu0 0.0
        %1917 = vmatprep.subr.mxu0 0.0
        %1918 = vmatpush1.msra.mxu0 0.0
        %1919 = vmatprep.subr.mxu0 0.0
        %1920 = vmatpush1.msra.mxu0 0.0
        %1921 = vmatprep.subr.mxu0 0.0
        %1922 = vmatpush1.msra.mxu0 0.0
        %1923 = vmatprep.subr.mxu0 0.0
        %1924 = vmatpush1.msra.mxu0 0.0
        %1925 = vmatprep.subr.mxu0 0.0
        %1926 = vmatpush1.msra.mxu0 0.0
        %1927 = vmatprep.subr.mxu0 0.0
        %1928 = vmatpush1.msra.mxu0 0.0
        %1929 = vmatprep.subr.mxu0 0.0
        %1930 = vmatpush1.msra.mxu0 0.0
        %1931 = vmatprep.subr.mxu0 0.0
        %1932 = vmatpush1.msra.mxu0 0.0
        %1933 = vmatprep.subr.mxu0 0.0
        %1934 = vmatpush1.msra.mxu0 0.0
        %1935 = vmatprep.subr.mxu0 0.0
        %1936 = vmatpush1.msra.mxu0 0.0
        %1937 = vmatprep.subr.mxu0 0.0
        %1938 = vmatpush1.msra.mxu0 0.0
        %1939 = vmatprep.subr.mxu0 0.0
        %1940 = vmatpush1.msra.mxu0 0.0
        %1941 = vmatprep.subr.mxu0 0.0
        %1942 = vmatpush1.msra.mxu0 0.0
        %1943 = vmatprep.mubr.f32.mxu0 0.0
        %1944 = vmatmul.mubr.f32.gmra.mrb[0].mxu0 %v1877
        %v1945 = vpop.f32.mrb[0].mxu0
        %v1946 = vadd.f32 %v1869, %v1945
        %v1947 = vpop.f32.mrb[0].mxu0
        %1948 = vdwg.mxu0
        %v1949 = vadd.f32 %v1946, %v569
        %v1950 = vld [vmem:[%s882] sm:$0x3]
        %v1951 = vxor.u32 %v1949, 2147483648
        %v1952 = vmul.f32 %v1951, 1.442695
        %v1953 = vpow.pop %v1952
        %v1954 = vadd.f32 %v1953, 1.0
        %v1955 = vrcp.pop %v1954
        %v1956 = vmul.f32 1.0, %v1955
        %v1957 = vtanh.pop %v1949
        %1959 = vrot.lane.b32.xlu0 %v1950, 32
        %v1960 = vpop.permute.xlu0 %1959
        %v1962 = vmul.f32 %v1956, %v1960
        %1964 = vrot.lane.b32.xlu0 %v1957, 64
        %v1965 = vpop.permute.xlu0 %1964
        %v1967 = vmul.f32 %v1956, %v1965
        %1969 = vrot.lane.b32.xlu0 %v1967, 32
        %v1970 = vpop.permute.xlu0 %1969
        %v1972 = vadd.f32 %v1962, %v1970
        %v1973 = vtanh.pop %v1972
        %1975 = vrot.lane.b32.xlu0 %v1973, 64
        %v1976 = vpop.permute.xlu0 %1975
        %v1978 = vmul.f32 %v1956, %v1976
        %1980 = vrot.lane.b32.xlu0 %v1978, 32
        %v1981 = vpop.permute.xlu0 %1980
        %1983 = vst.msk [vmem:[%s734] sm:$0x3] %vm724, %v1981
        %1985 = vrot.lane.b32.xlu0 %v1972, 96
        %v1986 = vpop.permute.xlu0 %1985
        %1988 = vst.msk [vmem:[%s882] sm:$0x3] %vm724, %v1986
        %v1989 = vld [vmem:[%s922] sm:$0x3]
        %v1991 = vsel %vm458, %v1989, 0
        %1993 = vmatprep.subr.mxu0 0.0
        %1994 = vmatpush1.msra.mxu0 %v550
        %1995 = vmatprep.subr.mxu0 0.0
        %1996 = vmatpush1.msra.mxu0 %v551
        %1997 = vmatprep.subr.mxu0 0.0
        %1998 = vmatpush1.msra.mxu0 %v552
        %1999 = vmatprep.subr.mxu0 0.0
        %2000 = vmatpush1.msra.mxu0 %v553
        %2001 = vmatprep.subr.mxu0 0.0
        %2002 = vmatpush1.msra.mxu0 0.0
        %2003 = vmatprep.subr.mxu0 0.0
        %2004 = vmatpush1.msra.mxu0 0.0
        %2005 = vmatprep.subr.mxu0 0.0
        %2006 = vmatpush1.msra.mxu0 0.0
        %2007 = vmatprep.subr.mxu0 0.0
        %2008 = vmatpush1.msra.mxu0 0.0
        %2009 = vmatprep.subr.mxu0 0.0
        %2010 = vmatpush1.msra.mxu0 0.0
        %2011 = vmatprep.subr.mxu0 0.0
        %2012 = vmatpush1.msra.mxu0 0.0
        %2013 = vmatprep.subr.mxu0 0.0
        %2014 = vmatpush1.msra.mxu0 0.0
        %2015 = vmatprep.subr.mxu0 0.0
        %2016 = vmatpush1.msra.mxu0 0.0
        %2017 = vmatprep.subr.mxu0 0.0
        %2018 = vmatpush1.msra.mxu0 0.0
        %2019 = vmatprep.subr.mxu0 0.0
        %2020 = vmatpush1.msra.mxu0 0.0
        %2021 = vmatprep.subr.mxu0 0.0
        %2022 = vmatpush1.msra.mxu0 0.0
        %2023 = vmatprep.subr.mxu0 0.0
        %2024 = vmatpush1.msra.mxu0 0.0
        %2025 = vmatprep.subr.mxu0 0.0
        %2026 = vmatpush1.msra.mxu0 0.0
        %2027 = vmatprep.subr.mxu0 0.0
        %2028 = vmatpush1.msra.mxu0 0.0
        %2029 = vmatprep.subr.mxu0 0.0
        %2030 = vmatpush1.msra.mxu0 0.0
        %2031 = vmatprep.subr.mxu0 0.0
        %2032 = vmatpush1.msra.mxu0 0.0
        %2033 = vmatprep.subr.mxu0 0.0
        %2034 = vmatpush1.msra.mxu0 0.0
        %2035 = vmatprep.subr.mxu0 0.0
        %2036 = vmatpush1.msra.mxu0 0.0
        %2037 = vmatprep.subr.mxu0 0.0
        %2038 = vmatpush1.msra.mxu0 0.0
        %2039 = vmatprep.subr.mxu0 0.0
        %2040 = vmatpush1.msra.mxu0 0.0
        %2041 = vmatprep.subr.mxu0 0.0
        %2042 = vmatpush1.msra.mxu0 0.0
        %2043 = vmatprep.subr.mxu0 0.0
        %2044 = vmatpush1.msra.mxu0 0.0
        %2045 = vmatprep.subr.mxu0 0.0
        %2046 = vmatpush1.msra.mxu0 0.0
        %2047 = vmatprep.subr.mxu0 0.0
        %2048 = vmatpush1.msra.mxu0 0.0
        %2049 = vmatprep.subr.mxu0 0.0
        %2050 = vmatpush1.msra.mxu0 0.0
        %2051 = vmatprep.subr.mxu0 0.0
        %2052 = vmatpush1.msra.mxu0 0.0
        %2053 = vmatprep.subr.mxu0 0.0
        %2054 = vmatpush1.msra.mxu0 0.0
        %2055 = vmatprep.subr.mxu0 0.0
        %2056 = vmatpush1.msra.mxu0 0.0
        %2057 = vmatprep.mubr.f32.mxu0 0.0
        %2058 = vmatmul.mubr.f32.gmra.mrb[0].mxu0 %v1991
        %v2059 = vpop.f32.mrb[0].mxu0
        %v2060 = vadd.f32 0.0, %v2059
        %v2061 = vpop.f32.mrb[0].mxu0
        %2062 = vdwg.mxu0
        %v2063 = vsel %vm458, %v1981, 0
        %2065 = vmatprep.subr.mxu0 0.0
        %2066 = vmatpush1.msra.mxu0 %v559
        %2067 = vmatprep.subr.mxu0 0.0
        %2068 = vmatpush1.msra.mxu0 %v560
        %2069 = vmatprep.subr.mxu0 0.0
        %2070 = vmatpush1.msra.mxu0 %v561
        %2071 = vmatprep.subr.mxu0 0.0
        %2072 = vmatpush1.msra.mxu0 %v562
        %2073 = vmatprep.subr.mxu0 0.0
        %2074 = vmatpush1.msra.mxu0 0.0
        %2075 = vmatprep.subr.mxu0 0.0
        %2076 = vmatpush1.msra.mxu0 0.0
        %2077 = vmatprep.subr.mxu0 0.0
        %2078 = vmatpush1.msra.mxu0 0.0
        %2079 = vmatprep.subr.mxu0 0.0
        %2080 = vmatpush1.msra.mxu0 0.0
        %2081 = vmatprep.subr.mxu0 0.0
        %2082 = vmatpush1.msra.mxu0 0.0
        %2083 = vmatprep.subr.mxu0 0.0
        %2084 = vmatpush1.msra.mxu0 0.0
        %2085 = vmatprep.subr.mxu0 0.0
        %2086 = vmatpush1.msra.mxu0 0.0
        %2087 = vmatprep.subr.mxu0 0.0
        %2088 = vmatpush1.msra.mxu0 0.0
        %2089 = vmatprep.subr.mxu0 0.0
        %2090 = vmatpush1.msra.mxu0 0.0
        %2091 = vmatprep.subr.mxu0 0.0
        %2092 = vmatpush1.msra.mxu0 0.0
        %2093 = vmatprep.subr.mxu0 0.0
        %2094 = vmatpush1.msra.mxu0 0.0
        %2095 = vmatprep.subr.mxu0 0.0
        %2096 = vmatpush1.msra.mxu0 0.0
        %2097 = vmatprep.subr.mxu0 0.0
        %2098 = vmatpush1.msra.mxu0 0.0
        %2099 = vmatprep.subr.mxu0 0.0
        %2100 = vmatpush1.msra.mxu0 0.0
        %2101 = vmatprep.subr.mxu0 0.0
        %2102 = vmatpush1.msra.mxu0 0.0
        %2103 = vmatprep.subr.mxu0 0.0
        %2104 = vmatpush1.msra.mxu0 0.0
        %2105 = vmatprep.subr.mxu0 0.0
        %2106 = vmatpush1.msra.mxu0 0.0
        %2107 = vmatprep.subr.mxu0 0.0
        %2108 = vmatpush1.msra.mxu0 0.0
        %2109 = vmatprep.subr.mxu0 0.0
        %2110 = vmatpush1.msra.mxu0 0.0
        %2111 = vmatprep.subr.mxu0 0.0
        %2112 = vmatpush1.msra.mxu0 0.0
        %2113 = vmatprep.subr.mxu0 0.0
        %2114 = vmatpush1.msra.mxu0 0.0
        %2115 = vmatprep.subr.mxu0 0.0
        %2116 = vmatpush1.msra.mxu0 0.0
        %2117 = vmatprep.subr.mxu0 0.0
        %2118 = vmatpush1.msra.mxu0 0.0
        %2119 = vmatprep.subr.mxu0 0.0
        %2120 = vmatpush1.msra.mxu0 0.0
        %2121 = vmatprep.subr.mxu0 0.0
        %2122 = vmatpush1.msra.mxu0 0.0
        %2123 = vmatprep.subr.mxu0 0.0
        %2124 = vmatpush1.msra.mxu0 0.0
        %2125 = vmatprep.subr.mxu0 0.0
        %2126 = vmatpush1.msra.mxu0 0.0
        %2127 = vmatprep.subr.mxu0 0.0
        %2128 = vmatpush1.msra.mxu0 0.0
        %2129 = vmatprep.mubr.f32.mxu0 0.0
        %2130 = vmatmul.mubr.f32.gmra.mrb[0].mxu0 %v2063
        %v2131 = vpop.f32.mrb[0].mxu0
        %v2132 = vadd.f32 %v2060, %v2131
        %v2133 = vpop.f32.mrb[0].mxu0
        %2134 = vdwg.mxu0
        %v2135 = vadd.f32 %v2132, %v577
        %v2136 = vld [vmem:[%s1070] sm:$0x3]
        %v2137 = vxor.u32 %v2135, 2147483648
        %v2138 = vmul.f32 %v2137, 1.442695
        %v2139 = vpow.pop %v2138
        %v2140 = vadd.f32 %v2139, 1.0
        %v2141 = vrcp.pop %v2140
        %v2142 = vmul.f32 1.0, %v2141
        %v2143 = vtanh.pop %v2135
        %2145 = vrot.lane.b32.xlu0 %v2136, 32
        %v2146 = vpop.permute.xlu0 %2145
        %v2148 = vmul.f32 %v2142, %v2146
        %2150 = vrot.lane.b32.xlu0 %v2143, 64
        %v2151 = vpop.permute.xlu0 %2150
        %v2153 = vmul.f32 %v2142, %v2151
        %2155 = vrot.lane.b32.xlu0 %v2153, 32
        %v2156 = vpop.permute.xlu0 %2155
        %v2158 = vadd.f32 %v2148, %v2156
        %v2159 = vtanh.pop %v2158
        %2161 = vrot.lane.b32.xlu0 %v2159, 64
        %v2162 = vpop.permute.xlu0 %2161
        %v2164 = vmul.f32 %v2142, %v2162
        %2166 = vrot.lane.b32.xlu0 %v2164, 32
        %v2167 = vpop.permute.xlu0 %2166
        %2169 = vst.msk [vmem:[%s922] sm:$0x3] %vm724, %v2167
        %2171 = vrot.lane.b32.xlu0 %v2158, 96
        %v2172 = vpop.permute.xlu0 %2171
        %2174 = vst.msk [vmem:[%s1070] sm:$0x3] %vm724, %v2172
        %v2175 = vld [vmem:[#allocation2] sm:$0x3]
        %v2177 = vsel %vm458, %v2175, 0
        %2179 = vmatprep.subr.mxu0 0.0
        %2180 = vmatpush1.msra.mxu0 %v540
        %2181 = vmatprep.subr.mxu0 0.0
        %2182 = vmatpush1.msra.mxu0 %v541
        %2183 = vmatprep.subr.mxu0 0.0
        %2184 = vmatpush1.msra.mxu0 %v542
        %2185 = vmatprep.subr.mxu0 0.0
        %2186 = vmatpush1.msra.mxu0 %v543
        %2187 = vmatprep.subr.mxu0 0.0
        %2188 = vmatpush1.msra.mxu0 0.0
        %2189 = vmatprep.subr.mxu0 0.0
        %2190 = vmatpush1.msra.mxu0 0.0
        %2191 = vmatprep.subr.mxu0 0.0
        %2192 = vmatpush1.msra.mxu0 0.0
        %2193 = vmatprep.subr.mxu0 0.0
        %2194 = vmatpush1.msra.mxu0 0.0
        %2195 = vmatprep.subr.mxu0 0.0
        %2196 = vmatpush1.msra.mxu0 0.0
        %2197 = vmatprep.subr.mxu0 0.0
        %2198 = vmatpush1.msra.mxu0 0.0
        %2199 = vmatprep.subr.mxu0 0.0
        %2200 = vmatpush1.msra.mxu0 0.0
        %2201 = vmatprep.subr.mxu0 0.0
        %2202 = vmatpush1.msra.mxu0 0.0
        %2203 = vmatprep.subr.mxu0 0.0
        %2204 = vmatpush1.msra.mxu0 0.0
        %2205 = vmatprep.subr.mxu0 0.0
        %2206 = vmatpush1.msra.mxu0 0.0
        %2207 = vmatprep.subr.mxu0 0.0
        %2208 = vmatpush1.msra.mxu0 0.0
        %2209 = vmatprep.subr.mxu0 0.0
        %2210 = vmatpush1.msra.mxu0 0.0
        %2211 = vmatprep.subr.mxu0 0.0
        %2212 = vmatpush1.msra.mxu0 0.0
        %2213 = vmatprep.subr.mxu0 0.0
        %2214 = vmatpush1.msra.mxu0 0.0
        %2215 = vmatprep.subr.mxu0 0.0
        %2216 = vmatpush1.msra.mxu0 0.0
        %2217 = vmatprep.subr.mxu0 0.0
        %2218 = vmatpush1.msra.mxu0 0.0
        %2219 = vmatprep.subr.mxu0 0.0
        %2220 = vmatpush1.msra.mxu0 0.0
        %2221 = vmatprep.subr.mxu0 0.0
        %2222 = vmatpush1.msra.mxu0 0.0
        %2223 = vmatprep.subr.mxu0 0.0
        %2224 = vmatpush1.msra.mxu0 0.0
        %2225 = vmatprep.subr.mxu0 0.0
        %2226 = vmatpush1.msra.mxu0 0.0
        %2227 = vmatprep.subr.mxu0 0.0
        %2228 = vmatpush1.msra.mxu0 0.0
        %2229 = vmatprep.subr.mxu0 0.0
        %2230 = vmatpush1.msra.mxu0 0.0
        %2231 = vmatprep.subr.mxu0 0.0
        %2232 = vmatpush1.msra.mxu0 0.0
        %2233 = vmatprep.subr.mxu0 0.0
        %2234 = vmatpush1.msra.mxu0 0.0
        %2235 = vmatprep.subr.mxu0 0.0
        %2236 = vmatpush1.msra.mxu0 0.0
        %2237 = vmatprep.subr.mxu0 0.0
        %2238 = vmatpush1.msra.mxu0 0.0
        %2239 = vmatprep.subr.mxu0 0.0
        %2240 = vmatpush1.msra.mxu0 0.0
        %2241 = vmatprep.subr.mxu0 0.0
        %2242 = vmatpush1.msra.mxu0 0.0
        %2243 = vmatprep.mubr.f32.mxu0 0.0
        %2244 = vmatmul.mubr.f32.gmra.mrb[0].mxu0 %v2177
        %v2245 = vpop.f32.mrb[0].mxu0
        %v2246 = vadd.f32 0.0, %v2245
        %v2247 = vpop.f32.mrb[0].mxu0
        %2248 = vdwg.mxu0
        %v2250 = vrot.slane %v2246, 5
        %v2251 = vrot.slane %v2246, 6
        %v2254 = vadd.f32 %v532, %v2250
        %v2255 = vadd.f32 %v537, %v2251
        %v2256 = vld [vmem:[#allocation3] sm:$0x3]
        %v2257 = vxor.u32 %v2254, 2147483648
        %v2258 = vxor.u32 %v2255, 2147483648
        %v2259 = vmul.f32 %v2257, 1.442695
        %v2260 = vpow.pop %v2259
        %v2261 = vmul.f32 %v2258, 1.442695
        %v2262 = vpow.pop %v2261
        %v2263 = vadd.f32 %v2260, 1.0
        %v2264 = vadd.f32 %v2262, 1.0
        %v2265 = vrcp.pop %v2263
        %v2266 = vmul.f32 1.0, %v2265
        %v2267 = vrcp.pop %v2264
        %v2268 = vmul.f32 1.0, %v2267
        %v2269 = vtanh.pop %v2254
        %v2270 = vtanh.pop %v2255
        %v2272 = vrot.slane %v2256, 5
        %v2273 = vrot.slane %v2256, 6
        %2274 = vrot.lane.b32.xlu0 %v2272, 32
        %v2275 = vpop.permute.xlu0 %2274
        %2276 = vrot.lane.b32.xlu0 %v2273, 32
        %v2277 = vpop.permute.xlu0 %2276
        %v2280 = vmul.f32 %v2266, %v2275
        %v2281 = vmul.f32 %v2268, %v2277
        %2284 = vrot.lane.b32.xlu0 %v2269, 64
        %v2285 = vpop.permute.xlu0 %2284
        %2286 = vrot.lane.b32.xlu0 %v2270, 64
        %v2287 = vpop.permute.xlu0 %2286
        %v2290 = vmul.f32 %v2266, %v2285
        %v2291 = vmul.f32 %v2268, %v2287
        %2294 = vrot.lane.b32.xlu0 %v2290, 32
        %v2295 = vpop.permute.xlu0 %2294
        %2296 = vrot.lane.b32.xlu0 %v2291, 32
        %v2297 = vpop.permute.xlu0 %2296
        %v2300 = vadd.f32 %v2280, %v2295
        %v2301 = vadd.f32 %v2281, %v2297
        %v2302 = vtanh.pop %v2300
        %v2303 = vtanh.pop %v2301
        %2306 = vrot.lane.b32.xlu0 %v2302, 64
        %v2307 = vpop.permute.xlu0 %2306
        %2308 = vrot.lane.b32.xlu0 %v2303, 64
        %v2309 = vpop.permute.xlu0 %2308
        %v2312 = vmul.f32 %v2266, %v2307
        %v2313 = vmul.f32 %v2268, %v2309
        %v2316 = vrot.slane %v2313, 7
        %vm2317 = vcmask 1044484
        %v2318 = vsel %vm2317, %v2316, %v2312
        %2319 = vrot.lane.b32.xlu0 %v2318, 32
        %v2320 = vpop.permute.xlu0 %2319
        %vm2322 = vcmask 258051
        %2323 = vst.msk [vmem:[#allocation2 - $0x3] sm:$0x18] %vm2322, %v2320
        %v2326 = vrot.slane %v2301, 7
        %v2327 = vsel %vm2317, %v2326, %v2300
        %2328 = vrot.lane.b32.xlu0 %v2327, 96
        %v2329 = vpop.permute.xlu0 %2328
        %2331 = vst.msk [vmem:[#allocation3 - $0x3] sm:$0x18] %vm2322, %v2329
        %v2332 = vld [vmem:[%s734] sm:$0x3]
        %v2334 = vsel %vm458, %v2332, 0
        %2336 = vmatprep.subr.mxu0 0.0
        %2337 = vmatpush1.msra.mxu0 %v545
        %2338 = vmatprep.subr.mxu0 0.0
        %2339 = vmatpush1.msra.mxu0 %v546
        %2340 = vmatprep.subr.mxu0 0.0
        %2341 = vmatpush1.msra.mxu0 %v547
        %2342 = vmatprep.subr.mxu0 0.0
        %2343 = vmatpush1.msra.mxu0 %v548
        %2344 = vmatprep.subr.mxu0 0.0
        %2345 = vmatpush1.msra.mxu0 0.0
        %2346 = vmatprep.subr.mxu0 0.0
        %2347 = vmatpush1.msra.mxu0 0.0
        %2348 = vmatprep.subr.mxu0 0.0
        %2349 = vmatpush1.msra.mxu0 0.0
        %2350 = vmatprep.subr.mxu0 0.0
        %2351 = vmatpush1.msra.mxu0 0.0
        %2352 = vmatprep.subr.mxu0 0.0
        %2353 = vmatpush1.msra.mxu0 0.0
        %2354 = vmatprep.subr.mxu0 0.0
        %2355 = vmatpush1.msra.mxu0 0.0
        %2356 = vmatprep.subr.mxu0 0.0
        %2357 = vmatpush1.msra.mxu0 0.0
        %2358 = vmatprep.subr.mxu0 0.0
        %2359 = vmatpush1.msra.mxu0 0.0
        %2360 = vmatprep.subr.mxu0 0.0
        %2361 = vmatpush1.msra.mxu0 0.0
        %2362 = vmatprep.subr.mxu0 0.0
        %2363 = vmatpush1.msra.mxu0 0.0
        %2364 = vmatprep.subr.mxu0 0.0
        %2365 = vmatpush1.msra.mxu0 0.0
        %2366 = vmatprep.subr.mxu0 0.0
        %2367 = vmatpush1.msra.mxu0 0.0
        %2368 = vmatprep.subr.mxu0 0.0
        %2369 = vmatpush1.msra.mxu0 0.0
        %2370 = vmatprep.subr.mxu0 0.0
        %2371 = vmatpush1.msra.mxu0 0.0
        %2372 = vmatprep.subr.mxu0 0.0
        %2373 = vmatpush1.msra.mxu0 0.0
        %2374 = vmatprep.subr.mxu0 0.0
        %2375 = vmatpush1.msra.mxu0 0.0
        %2376 = vmatprep.subr.mxu0 0.0
        %2377 = vmatpush1.msra.mxu0 0.0
        %2378 = vmatprep.subr.mxu0 0.0
        %2379 = vmatpush1.msra.mxu0 0.0
        %2380 = vmatprep.subr.mxu0 0.0
        %2381 = vmatpush1.msra.mxu0 0.0
        %2382 = vmatprep.subr.mxu0 0.0
        %2383 = vmatpush1.msra.mxu0 0.0
        %2384 = vmatprep.subr.mxu0 0.0
        %2385 = vmatpush1.msra.mxu0 0.0
        %2386 = vmatprep.subr.mxu0 0.0
        %2387 = vmatpush1.msra.mxu0 0.0
        %2388 = vmatprep.subr.mxu0 0.0
        %2389 = vmatpush1.msra.mxu0 0.0
        %2390 = vmatprep.subr.mxu0 0.0
        %2391 = vmatpush1.msra.mxu0 0.0
        %2392 = vmatprep.subr.mxu0 0.0
        %2393 = vmatpush1.msra.mxu0 0.0
        %2394 = vmatprep.subr.mxu0 0.0
        %2395 = vmatpush1.msra.mxu0 0.0
        %2396 = vmatprep.subr.mxu0 0.0
        %2397 = vmatpush1.msra.mxu0 0.0
        %2398 = vmatprep.subr.mxu0 0.0
        %2399 = vmatpush1.msra.mxu0 0.0
        %2400 = vmatprep.mubr.f32.mxu0 0.0
        %2401 = vmatmul.mubr.f32.gmra.mrb[0].mxu0 %v2334
        %v2402 = vpop.f32.mrb[0].mxu0
        %v2403 = vadd.f32 0.0, %v2402
        %v2404 = vpop.f32.mrb[0].mxu0
        %2405 = vdwg.mxu0
        %v2406 = vrot.slane %v2312, 3
        %v2407 = vrot.slane %v2313, 2
        %v2408 = vsel %vm719, %v2407, %v2406
        %2409 = vrot.lane.b32.xlu0 %v2408, 32
        %v2410 = vpop.permute.xlu0 %2409
        %v2411 = vsel %vm458, %v2410, 0
        %2413 = vmatprep.subr.mxu0 0.0
        %2414 = vmatpush1.msra.mxu0 %v554
        %2415 = vmatprep.subr.mxu0 0.0
        %2416 = vmatpush1.msra.mxu0 %v555
        %2417 = vmatprep.subr.mxu0 0.0
        %2418 = vmatpush1.msra.mxu0 %v556
        %2419 = vmatprep.subr.mxu0 0.0
        %2420 = vmatpush1.msra.mxu0 %v557
        %2421 = vmatprep.subr.mxu0 0.0
        %2422 = vmatpush1.msra.mxu0 0.0
        %2423 = vmatprep.subr.mxu0 0.0
        %2424 = vmatpush1.msra.mxu0 0.0
        %2425 = vmatprep.subr.mxu0 0.0
        %2426 = vmatpush1.msra.mxu0 0.0
        %2427 = vmatprep.subr.mxu0 0.0
        %2428 = vmatpush1.msra.mxu0 0.0
        %2429 = vmatprep.subr.mxu0 0.0
        %2430 = vmatpush1.msra.mxu0 0.0
        %2431 = vmatprep.subr.mxu0 0.0
        %2432 = vmatpush1.msra.mxu0 0.0
        %2433 = vmatprep.subr.mxu0 0.0
        %2434 = vmatpush1.msra.mxu0 0.0
        %2435 = vmatprep.subr.mxu0 0.0
        %2436 = vmatpush1.msra.mxu0 0.0
        %2437 = vmatprep.subr.mxu0 0.0
        %2438 = vmatpush1.msra.mxu0 0.0
        %2439 = vmatprep.subr.mxu0 0.0
        %2440 = vmatpush1.msra.mxu0 0.0
        %2441 = vmatprep.subr.mxu0 0.0
        %2442 = vmatpush1.msra.mxu0 0.0
        %2443 = vmatprep.subr.mxu0 0.0
        %2444 = vmatpush1.msra.mxu0 0.0
        %2445 = vmatprep.subr.mxu0 0.0
        %2446 = vmatpush1.msra.mxu0 0.0
        %2447 = vmatprep.subr.mxu0 0.0
        %2448 = vmatpush1.msra.mxu0 0.0
        %2449 = vmatprep.subr.mxu0 0.0
        %2450 = vmatpush1.msra.mxu0 0.0
        %2451 = vmatprep.subr.mxu0 0.0
        %2452 = vmatpush1.msra.mxu0 0.0
        %2453 = vmatprep.subr.mxu0 0.0
        %2454 = vmatpush1.msra.mxu0 0.0
        %2455 = vmatprep.subr.mxu0 0.0
        %2456 = vmatpush1.msra.mxu0 0.0
        %2457 = vmatprep.subr.mxu0 0.0
        %2458 = vmatpush1.msra.mxu0 0.0
        %2459 = vmatprep.subr.mxu0 0.0
        %2460 = vmatpush1.msra.mxu0 0.0
        %2461 = vmatprep.subr.mxu0 0.0
        %2462 = vmatpush1.msra.mxu0 0.0
        %2463 = vmatprep.subr.mxu0 0.0
        %2464 = vmatpush1.msra.mxu0 0.0
        %2465 = vmatprep.subr.mxu0 0.0
        %2466 = vmatpush1.msra.mxu0 0.0
        %2467 = vmatprep.subr.mxu0 0.0
        %2468 = vmatpush1.msra.mxu0 0.0
        %2469 = vmatprep.subr.mxu0 0.0
        %2470 = vmatpush1.msra.mxu0 0.0
        %2471 = vmatprep.subr.mxu0 0.0
        %2472 = vmatpush1.msra.mxu0 0.0
        %2473 = vmatprep.subr.mxu0 0.0
        %2474 = vmatpush1.msra.mxu0 0.0
        %2475 = vmatprep.subr.mxu0 0.0
        %2476 = vmatpush1.msra.mxu0 0.0
        %2477 = vmatprep.mubr.f32.mxu0 0.0
        %2478 = vmatmul.mubr.f32.gmra.mrb[0].mxu0 %v2411
        %v2479 = vpop.f32.mrb[0].mxu0
        %v2480 = vadd.f32 %v2403, %v2479
        %v2481 = vpop.f32.mrb[0].mxu0
        %2482 = vdwg.mxu0
        %v2483 = vadd.f32 %v2480, %v569
        %v2484 = vld [vmem:[%s882] sm:$0x3]
        %v2485 = vxor.u32 %v2483, 2147483648
        %v2486 = vmul.f32 %v2485, 1.442695
        %v2487 = vpow.pop %v2486
        %v2488 = vadd.f32 %v2487, 1.0
        %v2489 = vrcp.pop %v2488
        %v2490 = vmul.f32 1.0, %v2489
        %v2491 = vtanh.pop %v2483
        %2493 = vrot.lane.b32.xlu0 %v2484, 32
        %v2494 = vpop.permute.xlu0 %2493
        %v2496 = vmul.f32 %v2490, %v2494
        %2498 = vrot.lane.b32.xlu0 %v2491, 64
        %v2499 = vpop.permute.xlu0 %2498
        %v2501 = vmul.f32 %v2490, %v2499
        %2503 = vrot.lane.b32.xlu0 %v2501, 32
        %v2504 = vpop.permute.xlu0 %2503
        %v2506 = vadd.f32 %v2496, %v2504
        %v2507 = vtanh.pop %v2506
        %2509 = vrot.lane.b32.xlu0 %v2507, 64
        %v2510 = vpop.permute.xlu0 %2509
        %v2512 = vmul.f32 %v2490, %v2510
        %2514 = vrot.lane.b32.xlu0 %v2512, 32
        %v2515 = vpop.permute.xlu0 %2514
        %2517 = vst.msk [vmem:[%s734] sm:$0x3] %vm724, %v2515
        %2519 = vrot.lane.b32.xlu0 %v2506, 96
        %v2520 = vpop.permute.xlu0 %2519
        %2522 = vst.msk [vmem:[%s882] sm:$0x3] %vm724, %v2520
        %v2523 = vld [vmem:[%s922] sm:$0x3]
        %v2525 = vsel %vm458, %v2523, 0
        %2527 = vmatprep.subr.mxu0 0.0
        %2528 = vmatpush1.msra.mxu0 %v550
        %2529 = vmatprep.subr.mxu0 0.0
        %2530 = vmatpush1.msra.mxu0 %v551
        %2531 = vmatprep.subr.mxu0 0.0
        %2532 = vmatpush1.msra.mxu0 %v552
        %2533 = vmatprep.subr.mxu0 0.0
        %2534 = vmatpush1.msra.mxu0 %v553
        %2535 = vmatprep.subr.mxu0 0.0
        %2536 = vmatpush1.msra.mxu0 0.0
        %2537 = vmatprep.subr.mxu0 0.0
        %2538 = vmatpush1.msra.mxu0 0.0
        %2539 = vmatprep.subr.mxu0 0.0
        %2540 = vmatpush1.msra.mxu0 0.0
        %2541 = vmatprep.subr.mxu0 0.0
        %2542 = vmatpush1.msra.mxu0 0.0
        %2543 = vmatprep.subr.mxu0 0.0
        %2544 = vmatpush1.msra.mxu0 0.0
        %2545 = vmatprep.subr.mxu0 0.0
        %2546 = vmatpush1.msra.mxu0 0.0
        %2547 = vmatprep.subr.mxu0 0.0
        %2548 = vmatpush1.msra.mxu0 0.0
        %2549 = vmatprep.subr.mxu0 0.0
        %2550 = vmatpush1.msra.mxu0 0.0
        %2551 = vmatprep.subr.mxu0 0.0
        %2552 = vmatpush1.msra.mxu0 0.0
        %2553 = vmatprep.subr.mxu0 0.0
        %2554 = vmatpush1.msra.mxu0 0.0
        %2555 = vmatprep.subr.mxu0 0.0
        %2556 = vmatpush1.msra.mxu0 0.0
        %2557 = vmatprep.subr.mxu0 0.0
        %2558 = vmatpush1.msra.mxu0 0.0
        %2559 = vmatprep.subr.mxu0 0.0
        %2560 = vmatpush1.msra.mxu0 0.0
        %2561 = vmatprep.subr.mxu0 0.0
        %2562 = vmatpush1.msra.mxu0 0.0
        %2563 = vmatprep.subr.mxu0 0.0
        %2564 = vmatpush1.msra.mxu0 0.0
        %2565 = vmatprep.subr.mxu0 0.0
        %2566 = vmatpush1.msra.mxu0 0.0
        %2567 = vmatprep.subr.mxu0 0.0
        %2568 = vmatpush1.msra.mxu0 0.0
        %2569 = vmatprep.subr.mxu0 0.0
        %2570 = vmatpush1.msra.mxu0 0.0
        %2571 = vmatprep.subr.mxu0 0.0
        %2572 = vmatpush1.msra.mxu0 0.0
        %2573 = vmatprep.subr.mxu0 0.0
        %2574 = vmatpush1.msra.mxu0 0.0
        %2575 = vmatprep.subr.mxu0 0.0
        %2576 = vmatpush1.msra.mxu0 0.0
        %2577 = vmatprep.subr.mxu0 0.0
        %2578 = vmatpush1.msra.mxu0 0.0
        %2579 = vmatprep.subr.mxu0 0.0
        %2580 = vmatpush1.msra.mxu0 0.0
        %2581 = vmatprep.subr.mxu0 0.0
        %2582 = vmatpush1.msra.mxu0 0.0
        %2583 = vmatprep.subr.mxu0 0.0
        %2584 = vmatpush1.msra.mxu0 0.0
        %2585 = vmatprep.subr.mxu0 0.0
        %2586 = vmatpush1.msra.mxu0 0.0
        %2587 = vmatprep.subr.mxu0 0.0
        %2588 = vmatpush1.msra.mxu0 0.0
        %2589 = vmatprep.subr.mxu0 0.0
        %2590 = vmatpush1.msra.mxu0 0.0
        %2591 = vmatprep.mubr.f32.mxu0 0.0
        %2592 = vmatmul.mubr.f32.gmra.mrb[0].mxu0 %v2525
        %v2593 = vpop.f32.mrb[0].mxu0
        %v2594 = vadd.f32 0.0, %v2593
        %v2595 = vpop.f32.mrb[0].mxu0
        %2596 = vdwg.mxu0
        %v2597 = vsel %vm458, %v2515, 0
        %2599 = vmatprep.subr.mxu0 0.0
        %2600 = vmatpush1.msra.mxu0 %v559
        %2601 = vmatprep.subr.mxu0 0.0
        %2602 = vmatpush1.msra.mxu0 %v560
        %2603 = vmatprep.subr.mxu0 0.0
        %2604 = vmatpush1.msra.mxu0 %v561
        %2605 = vmatprep.subr.mxu0 0.0
        %2606 = vmatpush1.msra.mxu0 %v562
        %2607 = vmatprep.subr.mxu0 0.0
        %2608 = vmatpush1.msra.mxu0 0.0
        %2609 = vmatprep.subr.mxu0 0.0
        %2610 = vmatpush1.msra.mxu0 0.0
        %2611 = vmatprep.subr.mxu0 0.0
        %2612 = vmatpush1.msra.mxu0 0.0
        %2613 = vmatprep.subr.mxu0 0.0
        %2614 = vmatpush1.msra.mxu0 0.0
        %2615 = vmatprep.subr.mxu0 0.0
        %2616 = vmatpush1.msra.mxu0 0.0
        %2617 = vmatprep.subr.mxu0 0.0
        %2618 = vmatpush1.msra.mxu0 0.0
        %2619 = vmatprep.subr.mxu0 0.0
        %2620 = vmatpush1.msra.mxu0 0.0
        %2621 = vmatprep.subr.mxu0 0.0
        %2622 = vmatpush1.msra.mxu0 0.0
        %2623 = vmatprep.subr.mxu0 0.0
        %2624 = vmatpush1.msra.mxu0 0.0
        %2625 = vmatprep.subr.mxu0 0.0
        %2626 = vmatpush1.msra.mxu0 0.0
        %2627 = vmatprep.subr.mxu0 0.0
        %2628 = vmatpush1.msra.mxu0 0.0
        %2629 = vmatprep.subr.mxu0 0.0
        %2630 = vmatpush1.msra.mxu0 0.0
        %2631 = vmatprep.subr.mxu0 0.0
        %2632 = vmatpush1.msra.mxu0 0.0
        %2633 = vmatprep.subr.mxu0 0.0
        %2634 = vmatpush1.msra.mxu0 0.0
        %2635 = vmatprep.subr.mxu0 0.0
        %2636 = vmatpush1.msra.mxu0 0.0
        %2637 = vmatprep.subr.mxu0 0.0
        %2638 = vmatpush1.msra.mxu0 0.0
        %2639 = vmatprep.subr.mxu0 0.0
        %2640 = vmatpush1.msra.mxu0 0.0
        %2641 = vmatprep.subr.mxu0 0.0
        %2642 = vmatpush1.msra.mxu0 0.0
        %2643 = vmatprep.subr.mxu0 0.0
        %2644 = vmatpush1.msra.mxu0 0.0
        %2645 = vmatprep.subr.mxu0 0.0
        %2646 = vmatpush1.msra.mxu0 0.0
        %2647 = vmatprep.subr.mxu0 0.0
        %2648 = vmatpush1.msra.mxu0 0.0
        %2649 = vmatprep.subr.mxu0 0.0
        %2650 = vmatpush1.msra.mxu0 0.0
        %2651 = vmatprep.subr.mxu0 0.0
        %2652 = vmatpush1.msra.mxu0 0.0
        %2653 = vmatprep.subr.mxu0 0.0
        %2654 = vmatpush1.msra.mxu0 0.0
        %2655 = vmatprep.subr.mxu0 0.0
        %2656 = vmatpush1.msra.mxu0 0.0
        %2657 = vmatprep.subr.mxu0 0.0
        %2658 = vmatpush1.msra.mxu0 0.0
        %2659 = vmatprep.subr.mxu0 0.0
        %2660 = vmatpush1.msra.mxu0 0.0
        %2661 = vmatprep.subr.mxu0 0.0
        %2662 = vmatpush1.msra.mxu0 0.0
        %2663 = vmatprep.mubr.f32.mxu0 0.0
        %2664 = vmatmul.mubr.f32.gmra.mrb[0].mxu0 %v2597
        %v2665 = vpop.f32.mrb[0].mxu0
        %v2666 = vadd.f32 %v2594, %v2665
        %v2667 = vpop.f32.mrb[0].mxu0
        %2668 = vdwg.mxu0
        %v2669 = vadd.f32 %v2666, %v577
        %v2670 = vld [vmem:[%s1070] sm:$0x3]
        %v2671 = vxor.u32 %v2669, 2147483648
        %v2672 = vmul.f32 %v2671, 1.442695
        %v2673 = vpow.pop %v2672
        %v2674 = vadd.f32 %v2673, 1.0
        %v2675 = vrcp.pop %v2674
        %v2676 = vmul.f32 1.0, %v2675
        %v2677 = vtanh.pop %v2669
        %2679 = vrot.lane.b32.xlu0 %v2670, 32
        %v2680 = vpop.permute.xlu0 %2679
        %v2682 = vmul.f32 %v2676, %v2680
        %2684 = vrot.lane.b32.xlu0 %v2677, 64
        %v2685 = vpop.permute.xlu0 %2684
        %v2687 = vmul.f32 %v2676, %v2685
        %2689 = vrot.lane.b32.xlu0 %v2687, 32
        %v2690 = vpop.permute.xlu0 %2689
        %v2692 = vadd.f32 %v2682, %v2690
        %v2693 = vtanh.pop %v2692
        %2695 = vrot.lane.b32.xlu0 %v2693, 64
        %v2696 = vpop.permute.xlu0 %2695
        %v2698 = vmul.f32 %v2676, %v2696
        %2700 = vrot.lane.b32.xlu0 %v2698, 32
        %v2701 = vpop.permute.xlu0 %2700
        %2703 = vst.msk [vmem:[%s922] sm:$0x3] %vm724, %v2701
        %2705 = vrot.lane.b32.xlu0 %v2692, 96
        %v2706 = vpop.permute.xlu0 %2705
        %2708 = vst.msk [vmem:[%s1070] sm:$0x3] %vm724, %v2706
        %v2709 = vld [vmem:[#allocation2] sm:$0x3]
        %v2711 = vsel %vm458, %v2709, 0
        %2713 = vmatprep.subr.mxu0 0.0
        %2714 = vmatpush1.msra.mxu0 %v540
        %2715 = vmatprep.subr.mxu0 0.0
        %2716 = vmatpush1.msra.mxu0 %v541
        %2717 = vmatprep.subr.mxu0 0.0
        %2718 = vmatpush1.msra.mxu0 %v542
        %2719 = vmatprep.subr.mxu0 0.0
        %2720 = vmatpush1.msra.mxu0 %v543
        %2721 = vmatprep.subr.mxu0 0.0
        %2722 = vmatpush1.msra.mxu0 0.0
        %2723 = vmatprep.subr.mxu0 0.0
        %2724 = vmatpush1.msra.mxu0 0.0
        %2725 = vmatprep.subr.mxu0 0.0
        %2726 = vmatpush1.msra.mxu0 0.0
        %2727 = vmatprep.subr.mxu0 0.0
        %2728 = vmatpush1.msra.mxu0 0.0
        %2729 = vmatprep.subr.mxu0 0.0
        %2730 = vmatpush1.msra.mxu0 0.0
        %2731 = vmatprep.subr.mxu0 0.0
        %2732 = vmatpush1.msra.mxu0 0.0
        %2733 = vmatprep.subr.mxu0 0.0
        %2734 = vmatpush1.msra.mxu0 0.0
        %2735 = vmatprep.subr.mxu0 0.0
        %2736 = vmatpush1.msra.mxu0 0.0
        %2737 = vmatprep.subr.mxu0 0.0
        %2738 = vmatpush1.msra.mxu0 0.0
        %2739 = vmatprep.subr.mxu0 0.0
        %2740 = vmatpush1.msra.mxu0 0.0
        %2741 = vmatprep.subr.mxu0 0.0
        %2742 = vmatpush1.msra.mxu0 0.0
        %2743 = vmatprep.subr.mxu0 0.0
        %2744 = vmatpush1.msra.mxu0 0.0
        %2745 = vmatprep.subr.mxu0 0.0
        %2746 = vmatpush1.msra.mxu0 0.0
        %2747 = vmatprep.subr.mxu0 0.0
        %2748 = vmatpush1.msra.mxu0 0.0
        %2749 = vmatprep.subr.mxu0 0.0
        %2750 = vmatpush1.msra.mxu0 0.0
        %2751 = vmatprep.subr.mxu0 0.0
        %2752 = vmatpush1.msra.mxu0 0.0
        %2753 = vmatprep.subr.mxu0 0.0
        %2754 = vmatpush1.msra.mxu0 0.0
        %2755 = vmatprep.subr.mxu0 0.0
        %2756 = vmatpush1.msra.mxu0 0.0
        %2757 = vmatprep.subr.mxu0 0.0
        %2758 = vmatpush1.msra.mxu0 0.0
        %2759 = vmatprep.subr.mxu0 0.0
        %2760 = vmatpush1.msra.mxu0 0.0
        %2761 = vmatprep.subr.mxu0 0.0
        %2762 = vmatpush1.msra.mxu0 0.0
        %2763 = vmatprep.subr.mxu0 0.0
        %2764 = vmatpush1.msra.mxu0 0.0
        %2765 = vmatprep.subr.mxu0 0.0
        %2766 = vmatpush1.msra.mxu0 0.0
        %2767 = vmatprep.subr.mxu0 0.0
        %2768 = vmatpush1.msra.mxu0 0.0
        %2769 = vmatprep.subr.mxu0 0.0
        %2770 = vmatpush1.msra.mxu0 0.0
        %2771 = vmatprep.subr.mxu0 0.0
        %2772 = vmatpush1.msra.mxu0 0.0
        %2773 = vmatprep.subr.mxu0 0.0
        %2774 = vmatpush1.msra.mxu0 0.0
        %2775 = vmatprep.subr.mxu0 0.0
        %2776 = vmatpush1.msra.mxu0 0.0
        %2777 = vmatprep.mubr.f32.mxu0 0.0
        %2778 = vmatmul.mubr.f32.gmra.mrb[0].mxu0 %v2711
        %v2779 = vpop.f32.mrb[0].mxu0
        %v2780 = vadd.f32 0.0, %v2779
        %v2781 = vpop.f32.mrb[0].mxu0
        %2782 = vdwg.mxu0
        %v2784 = vrot.slane %v2780, 4
        %v2785 = vrot.slane %v2780, 5
        %v2788 = vadd.f32 %v532, %v2784
        %v2789 = vadd.f32 %v537, %v2785
        %v2790 = vld [vmem:[#allocation3] sm:$0x3]
        %v2791 = vxor.u32 %v2788, 2147483648
        %v2792 = vxor.u32 %v2789, 2147483648
        %v2793 = vmul.f32 %v2791, 1.442695
        %v2794 = vpow.pop %v2793
        %v2795 = vmul.f32 %v2792, 1.442695
        %v2796 = vpow.pop %v2795
        %v2797 = vadd.f32 %v2794, 1.0
        %v2798 = vadd.f32 %v2796, 1.0
        %v2799 = vrcp.pop %v2797
        %v2800 = vmul.f32 1.0, %v2799
        %v2801 = vrcp.pop %v2798
        %v2802 = vmul.f32 1.0, %v2801
        %v2803 = vtanh.pop %v2788
        %v2804 = vtanh.pop %v2789
        %v2806 = vrot.slane %v2790, 4
        %v2807 = vrot.slane %v2790, 5
        %2808 = vrot.lane.b32.xlu0 %v2806, 32
        %v2809 = vpop.permute.xlu0 %2808
        %2810 = vrot.lane.b32.xlu0 %v2807, 32
        %v2811 = vpop.permute.xlu0 %2810
        %v2814 = vmul.f32 %v2800, %v2809
        %v2815 = vmul.f32 %v2802, %v2811
        %2818 = vrot.lane.b32.xlu0 %v2803, 64
        %v2819 = vpop.permute.xlu0 %2818
        %2820 = vrot.lane.b32.xlu0 %v2804, 64
        %v2821 = vpop.permute.xlu0 %2820
        %v2824 = vmul.f32 %v2800, %v2819
        %v2825 = vmul.f32 %v2802, %v2821
        %2828 = vrot.lane.b32.xlu0 %v2824, 32
        %v2829 = vpop.permute.xlu0 %2828
        %2830 = vrot.lane.b32.xlu0 %v2825, 32
        %v2831 = vpop.permute.xlu0 %2830
        %v2834 = vadd.f32 %v2814, %v2829
        %v2835 = vadd.f32 %v2815, %v2831
        %v2836 = vtanh.pop %v2834
        %v2837 = vtanh.pop %v2835
        %2840 = vrot.lane.b32.xlu0 %v2836, 64
        %v2841 = vpop.permute.xlu0 %2840
        %2842 = vrot.lane.b32.xlu0 %v2837, 64
        %v2843 = vpop.permute.xlu0 %2842
        %v2846 = vmul.f32 %v2800, %v2841
        %v2847 = vmul.f32 %v2802, %v2843
        %v2850 = vrot.slane %v2847, 7
        %vm2851 = vcmask 1045509
        %v2852 = vsel %vm2851, %v2850, %v2846
        %2853 = vrot.lane.b32.xlu0 %v2852, 32
        %v2854 = vpop.permute.xlu0 %2853
        %vm2856 = vcmask 259076
        %2857 = vst.msk [vmem:[#allocation2 - $0x4] sm:$0x30] %vm2856, %v2854
        %v2860 = vrot.slane %v2835, 7
        %v2861 = vsel %vm2851, %v2860, %v2834
        %2862 = vrot.lane.b32.xlu0 %v2861, 96
        %v2863 = vpop.permute.xlu0 %2862
        %2865 = vst.msk [vmem:[#allocation3 - $0x4] sm:$0x30] %vm2856, %v2863
        %v2866 = vld [vmem:[%s734] sm:$0x3]
        %v2868 = vsel %vm458, %v2866, 0
        %2870 = vmatprep.subr.mxu0 0.0
        %2871 = vmatpush1.msra.mxu0 %v545
        %2872 = vmatprep.subr.mxu0 0.0
        %2873 = vmatpush1.msra.mxu0 %v546
        %2874 = vmatprep.subr.mxu0 0.0
        %2875 = vmatpush1.msra.mxu0 %v547
        %2876 = vmatprep.subr.mxu0 0.0
        %2877 = vmatpush1.msra.mxu0 %v548
        %2878 = vmatprep.subr.mxu0 0.0
        %2879 = vmatpush1.msra.mxu0 0.0
        %2880 = vmatprep.subr.mxu0 0.0
        %2881 = vmatpush1.msra.mxu0 0.0
        %2882 = vmatprep.subr.mxu0 0.0
        %2883 = vmatpush1.msra.mxu0 0.0
        %2884 = vmatprep.subr.mxu0 0.0
        %2885 = vmatpush1.msra.mxu0 0.0
        %2886 = vmatprep.subr.mxu0 0.0
        %2887 = vmatpush1.msra.mxu0 0.0
        %2888 = vmatprep.subr.mxu0 0.0
        %2889 = vmatpush1.msra.mxu0 0.0
        %2890 = vmatprep.subr.mxu0 0.0
        %2891 = vmatpush1.msra.mxu0 0.0
        %2892 = vmatprep.subr.mxu0 0.0
        %2893 = vmatpush1.msra.mxu0 0.0
        %2894 = vmatprep.subr.mxu0 0.0
        %2895 = vmatpush1.msra.mxu0 0.0
        %2896 = vmatprep.subr.mxu0 0.0
        %2897 = vmatpush1.msra.mxu0 0.0
        %2898 = vmatprep.subr.mxu0 0.0
        %2899 = vmatpush1.msra.mxu0 0.0
        %2900 = vmatprep.subr.mxu0 0.0
        %2901 = vmatpush1.msra.mxu0 0.0
        %2902 = vmatprep.subr.mxu0 0.0
        %2903 = vmatpush1.msra.mxu0 0.0
        %2904 = vmatprep.subr.mxu0 0.0
        %2905 = vmatpush1.msra.mxu0 0.0
        %2906 = vmatprep.subr.mxu0 0.0
        %2907 = vmatpush1.msra.mxu0 0.0
        %2908 = vmatprep.subr.mxu0 0.0
        %2909 = vmatpush1.msra.mxu0 0.0
        %2910 = vmatprep.subr.mxu0 0.0
        %2911 = vmatpush1.msra.mxu0 0.0
        %2912 = vmatprep.subr.mxu0 0.0
        %2913 = vmatpush1.msra.mxu0 0.0
        %2914 = vmatprep.subr.mxu0 0.0
        %2915 = vmatpush1.msra.mxu0 0.0
        %2916 = vmatprep.subr.mxu0 0.0
        %2917 = vmatpush1.msra.mxu0 0.0
        %2918 = vmatprep.subr.mxu0 0.0
        %2919 = vmatpush1.msra.mxu0 0.0
        %2920 = vmatprep.subr.mxu0 0.0
        %2921 = vmatpush1.msra.mxu0 0.0
        %2922 = vmatprep.subr.mxu0 0.0
        %2923 = vmatpush1.msra.mxu0 0.0
        %2924 = vmatprep.subr.mxu0 0.0
        %2925 = vmatpush1.msra.mxu0 0.0
        %2926 = vmatprep.subr.mxu0 0.0
        %2927 = vmatpush1.msra.mxu0 0.0
        %2928 = vmatprep.subr.mxu0 0.0
        %2929 = vmatpush1.msra.mxu0 0.0
        %2930 = vmatprep.subr.mxu0 0.0
        %2931 = vmatpush1.msra.mxu0 0.0
        %2932 = vmatprep.subr.mxu0 0.0
        %2933 = vmatpush1.msra.mxu0 0.0
        %2934 = vmatprep.mubr.f32.mxu0 0.0
        %2935 = vmatmul.mubr.f32.gmra.mrb[0].mxu0 %v2868
        %v2936 = vpop.f32.mrb[0].mxu0
        %v2937 = vadd.f32 0.0, %v2936
        %v2938 = vpop.f32.mrb[0].mxu0
        %2939 = vdwg.mxu0
        %v2940 = vrot.slane %v2846, 4
        %v2941 = vrot.slane %v2847, 3
        %v2942 = vsel %vm719, %v2941, %v2940
        %2943 = vrot.lane.b32.xlu0 %v2942, 32
        %v2944 = vpop.permute.xlu0 %2943
        %v2945 = vsel %vm458, %v2944, 0
        %2947 = vmatprep.subr.mxu0 0.0
        %2948 = vmatpush1.msra.mxu0 %v554
        %2949 = vmatprep.subr.mxu0 0.0
        %2950 = vmatpush1.msra.mxu0 %v555
        %2951 = vmatprep.subr.mxu0 0.0
        %2952 = vmatpush1.msra.mxu0 %v556
        %2953 = vmatprep.subr.mxu0 0.0
        %2954 = vmatpush1.msra.mxu0 %v557
        %2955 = vmatprep.subr.mxu0 0.0
        %2956 = vmatpush1.msra.mxu0 0.0
        %2957 = vmatprep.subr.mxu0 0.0
        %2958 = vmatpush1.msra.mxu0 0.0
        %2959 = vmatprep.subr.mxu0 0.0
        %2960 = vmatpush1.msra.mxu0 0.0
        %2961 = vmatprep.subr.mxu0 0.0
        %2962 = vmatpush1.msra.mxu0 0.0
        %2963 = vmatprep.subr.mxu0 0.0
        %2964 = vmatpush1.msra.mxu0 0.0
        %2965 = vmatprep.subr.mxu0 0.0
        %2966 = vmatpush1.msra.mxu0 0.0
        %2967 = vmatprep.subr.mxu0 0.0
        %2968 = vmatpush1.msra.mxu0 0.0
        %2969 = vmatprep.subr.mxu0 0.0
        %2970 = vmatpush1.msra.mxu0 0.0
        %2971 = vmatprep.subr.mxu0 0.0
        %2972 = vmatpush1.msra.mxu0 0.0
        %2973 = vmatprep.subr.mxu0 0.0
        %2974 = vmatpush1.msra.mxu0 0.0
        %2975 = vmatprep.subr.mxu0 0.0
        %2976 = vmatpush1.msra.mxu0 0.0
        %2977 = vmatprep.subr.mxu0 0.0
        %2978 = vmatpush1.msra.mxu0 0.0
        %2979 = vmatprep.subr.mxu0 0.0
        %2980 = vmatpush1.msra.mxu0 0.0
        %2981 = vmatprep.subr.mxu0 0.0
        %2982 = vmatpush1.msra.mxu0 0.0
        %2983 = vmatprep.subr.mxu0 0.0
        %2984 = vmatpush1.msra.mxu0 0.0
        %2985 = vmatprep.subr.mxu0 0.0
        %2986 = vmatpush1.msra.mxu0 0.0
        %2987 = vmatprep.subr.mxu0 0.0
        %2988 = vmatpush1.msra.mxu0 0.0
        %2989 = vmatprep.subr.mxu0 0.0
        %2990 = vmatpush1.msra.mxu0 0.0
        %2991 = vmatprep.subr.mxu0 0.0
        %2992 = vmatpush1.msra.mxu0 0.0
        %2993 = vmatprep.subr.mxu0 0.0
        %2994 = vmatpush1.msra.mxu0 0.0
        %2995 = vmatprep.subr.mxu0 0.0
        %2996 = vmatpush1.msra.mxu0 0.0
        %2997 = vmatprep.subr.mxu0 0.0
        %2998 = vmatpush1.msra.mxu0 0.0
        %2999 = vmatprep.subr.mxu0 0.0
        %3000 = vmatpush1.msra.mxu0 0.0
        %3001 = vmatprep.subr.mxu0 0.0
        %3002 = vmatpush1.msra.mxu0 0.0
        %3003 = vmatprep.subr.mxu0 0.0
        %3004 = vmatpush1.msra.mxu0 0.0
        %3005 = vmatprep.subr.mxu0 0.0
        %3006 = vmatpush1.msra.mxu0 0.0
        %3007 = vmatprep.subr.mxu0 0.0
        %3008 = vmatpush1.msra.mxu0 0.0
        %3009 = vmatprep.subr.mxu0 0.0
        %3010 = vmatpush1.msra.mxu0 0.0
        %3011 = vmatprep.mubr.f32.mxu0 0.0
        %3012 = vmatmul.mubr.f32.gmra.mrb[0].mxu0 %v2945
        %v3013 = vpop.f32.mrb[0].mxu0
        %v3014 = vadd.f32 %v2937, %v3013
        %v3015 = vpop.f32.mrb[0].mxu0
        %3016 = vdwg.mxu0
        %v3017 = vadd.f32 %v3014, %v569
        %v3018 = vld [vmem:[%s882] sm:$0x3]
        %v3019 = vxor.u32 %v3017, 2147483648
        %v3020 = vmul.f32 %v3019, 1.442695
        %v3021 = vpow.pop %v3020
        %v3022 = vadd.f32 %v3021, 1.0
        %v3023 = vrcp.pop %v3022
        %v3024 = vmul.f32 1.0, %v3023
        %v3025 = vtanh.pop %v3017
        %3027 = vrot.lane.b32.xlu0 %v3018, 32
        %v3028 = vpop.permute.xlu0 %3027
        %v3030 = vmul.f32 %v3024, %v3028
        %3032 = vrot.lane.b32.xlu0 %v3025, 64
        %v3033 = vpop.permute.xlu0 %3032
        %v3035 = vmul.f32 %v3024, %v3033
        %3037 = vrot.lane.b32.xlu0 %v3035, 32
        %v3038 = vpop.permute.xlu0 %3037
        %v3040 = vadd.f32 %v3030, %v3038
        %v3041 = vtanh.pop %v3040
        %3043 = vrot.lane.b32.xlu0 %v3041, 64
        %v3044 = vpop.permute.xlu0 %3043
        %v3046 = vmul.f32 %v3024, %v3044
        %3048 = vrot.lane.b32.xlu0 %v3046, 32
        %v3049 = vpop.permute.xlu0 %3048
        %3051 = vst.msk [vmem:[%s734] sm:$0x3] %vm724, %v3049
        %3053 = vrot.lane.b32.xlu0 %v3040, 96
        %v3054 = vpop.permute.xlu0 %3053
        %3056 = vst.msk [vmem:[%s882] sm:$0x3] %vm724, %v3054
        %v3057 = vld [vmem:[%s922] sm:$0x3]
        %v3059 = vsel %vm458, %v3057, 0
        %3061 = vmatprep.subr.mxu0 0.0
        %3062 = vmatpush1.msra.mxu0 %v550
        %3063 = vmatprep.subr.mxu0 0.0
        %3064 = vmatpush1.msra.mxu0 %v551
        %3065 = vmatprep.subr.mxu0 0.0
        %3066 = vmatpush1.msra.mxu0 %v552
        %3067 = vmatprep.subr.mxu0 0.0
        %3068 = vmatpush1.msra.mxu0 %v553
        %3069 = vmatprep.subr.mxu0 0.0
        %3070 = vmatpush1.msra.mxu0 0.0
        %3071 = vmatprep.subr.mxu0 0.0
        %3072 = vmatpush1.msra.mxu0 0.0
        %3073 = vmatprep.subr.mxu0 0.0
        %3074 = vmatpush1.msra.mxu0 0.0
        %3075 = vmatprep.subr.mxu0 0.0
        %3076 = vmatpush1.msra.mxu0 0.0
        %3077 = vmatprep.subr.mxu0 0.0
        %3078 = vmatpush1.msra.mxu0 0.0
        %3079 = vmatprep.subr.mxu0 0.0
        %3080 = vmatpush1.msra.mxu0 0.0
        %3081 = vmatprep.subr.mxu0 0.0
        %3082 = vmatpush1.msra.mxu0 0.0
        %3083 = vmatprep.subr.mxu0 0.0
        %3084 = vmatpush1.msra.mxu0 0.0
        %3085 = vmatprep.subr.mxu0 0.0
        %3086 = vmatpush1.msra.mxu0 0.0
        %3087 = vmatprep.subr.mxu0 0.0
        %3088 = vmatpush1.msra.mxu0 0.0
        %3089 = vmatprep.subr.mxu0 0.0
        %3090 = vmatpush1.msra.mxu0 0.0
        %3091 = vmatprep.subr.mxu0 0.0
        %3092 = vmatpush1.msra.mxu0 0.0
        %3093 = vmatprep.subr.mxu0 0.0
        %3094 = vmatpush1.msra.mxu0 0.0
        %3095 = vmatprep.subr.mxu0 0.0
        %3096 = vmatpush1.msra.mxu0 0.0
        %3097 = vmatprep.subr.mxu0 0.0
        %3098 = vmatpush1.msra.mxu0 0.0
        %3099 = vmatprep.subr.mxu0 0.0
        %3100 = vmatpush1.msra.mxu0 0.0
        %3101 = vmatprep.subr.mxu0 0.0
        %3102 = vmatpush1.msra.mxu0 0.0
        %3103 = vmatprep.subr.mxu0 0.0
        %3104 = vmatpush1.msra.mxu0 0.0
        %3105 = vmatprep.subr.mxu0 0.0
        %3106 = vmatpush1.msra.mxu0 0.0
        %3107 = vmatprep.subr.mxu0 0.0
        %3108 = vmatpush1.msra.mxu0 0.0
        %3109 = vmatprep.subr.mxu0 0.0
        %3110 = vmatpush1.msra.mxu0 0.0
        %3111 = vmatprep.subr.mxu0 0.0
        %3112 = vmatpush1.msra.mxu0 0.0
        %3113 = vmatprep.subr.mxu0 0.0
        %3114 = vmatpush1.msra.mxu0 0.0
        %3115 = vmatprep.subr.mxu0 0.0
        %3116 = vmatpush1.msra.mxu0 0.0
        %3117 = vmatprep.subr.mxu0 0.0
        %3118 = vmatpush1.msra.mxu0 0.0
        %3119 = vmatprep.subr.mxu0 0.0
        %3120 = vmatpush1.msra.mxu0 0.0
        %3121 = vmatprep.subr.mxu0 0.0
        %3122 = vmatpush1.msra.mxu0 0.0
        %3123 = vmatprep.subr.mxu0 0.0
        %3124 = vmatpush1.msra.mxu0 0.0
        %3125 = vmatprep.mubr.f32.mxu0 0.0
        %3126 = vmatmul.mubr.f32.gmra.mrb[0].mxu0 %v3059
        %v3127 = vpop.f32.mrb[0].mxu0
        %v3128 = vadd.f32 0.0, %v3127
        %v3129 = vpop.f32.mrb[0].mxu0
        %3130 = vdwg.mxu0
        %v3131 = vsel %vm458, %v3049, 0
        %3133 = vmatprep.subr.mxu0 0.0
        %3134 = vmatpush1.msra.mxu0 %v559
        %3135 = vmatprep.subr.mxu0 0.0
        %3136 = vmatpush1.msra.mxu0 %v560
        %3137 = vmatprep.subr.mxu0 0.0
        %3138 = vmatpush1.msra.mxu0 %v561
        %3139 = vmatprep.subr.mxu0 0.0
        %3140 = vmatpush1.msra.mxu0 %v562
        %3141 = vmatprep.subr.mxu0 0.0
        %3142 = vmatpush1.msra.mxu0 0.0
        %3143 = vmatprep.subr.mxu0 0.0
        %3144 = vmatpush1.msra.mxu0 0.0
        %3145 = vmatprep.subr.mxu0 0.0
        %3146 = vmatpush1.msra.mxu0 0.0
        %3147 = vmatprep.subr.mxu0 0.0
        %3148 = vmatpush1.msra.mxu0 0.0
        %3149 = vmatprep.subr.mxu0 0.0
        %3150 = vmatpush1.msra.mxu0 0.0
        %3151 = vmatprep.subr.mxu0 0.0
        %3152 = vmatpush1.msra.mxu0 0.0
        %3153 = vmatprep.subr.mxu0 0.0
        %3154 = vmatpush1.msra.mxu0 0.0
        %3155 = vmatprep.subr.mxu0 0.0
        %3156 = vmatpush1.msra.mxu0 0.0
        %3157 = vmatprep.subr.mxu0 0.0
        %3158 = vmatpush1.msra.mxu0 0.0
        %3159 = vmatprep.subr.mxu0 0.0
        %3160 = vmatpush1.msra.mxu0 0.0
        %3161 = vmatprep.subr.mxu0 0.0
        %3162 = vmatpush1.msra.mxu0 0.0
        %3163 = vmatprep.subr.mxu0 0.0
        %3164 = vmatpush1.msra.mxu0 0.0
        %3165 = vmatprep.subr.mxu0 0.0
        %3166 = vmatpush1.msra.mxu0 0.0
        %3167 = vmatprep.subr.mxu0 0.0
        %3168 = vmatpush1.msra.mxu0 0.0
        %3169 = vmatprep.subr.mxu0 0.0
        %3170 = vmatpush1.msra.mxu0 0.0
        %3171 = vmatprep.subr.mxu0 0.0
        %3172 = vmatpush1.msra.mxu0 0.0
        %3173 = vmatprep.subr.mxu0 0.0
        %3174 = vmatpush1.msra.mxu0 0.0
        %3175 = vmatprep.subr.mxu0 0.0
        %3176 = vmatpush1.msra.mxu0 0.0
        %3177 = vmatprep.subr.mxu0 0.0
        %3178 = vmatpush1.msra.mxu0 0.0
        %3179 = vmatprep.subr.mxu0 0.0
        %3180 = vmatpush1.msra.mxu0 0.0
        %3181 = vmatprep.subr.mxu0 0.0
        %3182 = vmatpush1.msra.mxu0 0.0
        %3183 = vmatprep.subr.mxu0 0.0
        %3184 = vmatpush1.msra.mxu0 0.0
        %3185 = vmatprep.subr.mxu0 0.0
        %3186 = vmatpush1.msra.mxu0 0.0
        %3187 = vmatprep.subr.mxu0 0.0
        %3188 = vmatpush1.msra.mxu0 0.0
        %3189 = vmatprep.subr.mxu0 0.0
        %3190 = vmatpush1.msra.mxu0 0.0
        %3191 = vmatprep.subr.mxu0 0.0
        %3192 = vmatpush1.msra.mxu0 0.0
        %3193 = vmatprep.subr.mxu0 0.0
        %3194 = vmatpush1.msra.mxu0 0.0
        %3195 = vmatprep.subr.mxu0 0.0
        %3196 = vmatpush1.msra.mxu0 0.0
        %3197 = vmatprep.mubr.f32.mxu0 0.0
        %3198 = vmatmul.mubr.f32.gmra.mrb[0].mxu0 %v3131
        %v3199 = vpop.f32.mrb[0].mxu0
        %v3200 = vadd.f32 %v3128, %v3199
        %v3201 = vpop.f32.mrb[0].mxu0
        %3202 = vdwg.mxu0
        %v3203 = vadd.f32 %v3200, %v577
        %v3204 = vld [vmem:[%s1070] sm:$0x3]
        %v3205 = vxor.u32 %v3203, 2147483648
        %v3206 = vmul.f32 %v3205, 1.442695
        %v3207 = vpow.pop %v3206
        %v3208 = vadd.f32 %v3207, 1.0
        %v3209 = vrcp.pop %v3208
        %v3210 = vmul.f32 1.0, %v3209
        %v3211 = vtanh.pop %v3203
        %3213 = vrot.lane.b32.xlu0 %v3204, 32
        %v3214 = vpop.permute.xlu0 %3213
        %v3216 = vmul.f32 %v3210, %v3214
        %3218 = vrot.lane.b32.xlu0 %v3211, 64
        %v3219 = vpop.permute.xlu0 %3218
        %v3221 = vmul.f32 %v3210, %v3219
        %3223 = vrot.lane.b32.xlu0 %v3221, 32
        %v3224 = vpop.permute.xlu0 %3223
        %v3226 = vadd.f32 %v3216, %v3224
        %v3227 = vtanh.pop %v3226
        %3229 = vrot.lane.b32.xlu0 %v3227, 64
        %v3230 = vpop.permute.xlu0 %3229
        %v3232 = vmul.f32 %v3210, %v3230
        %3234 = vrot.lane.b32.xlu0 %v3232, 32
        %v3235 = vpop.permute.xlu0 %3234
        %3237 = vst.msk [vmem:[%s922] sm:$0x3] %vm724, %v3235
        %3239 = vrot.lane.b32.xlu0 %v3226, 96
        %v3240 = vpop.permute.xlu0 %3239
        %3242 = vst.msk [vmem:[%s1070] sm:$0x3] %vm724, %v3240
        %v3243 = vld [vmem:[#allocation2] sm:$0x3]
        %v3245 = vsel %vm458, %v3243, 0
        %3247 = vmatprep.subr.mxu0 0.0
        %3248 = vmatpush1.msra.mxu0 %v540
        %3249 = vmatprep.subr.mxu0 0.0
        %3250 = vmatpush1.msra.mxu0 %v541
        %3251 = vmatprep.subr.mxu0 0.0
        %3252 = vmatpush1.msra.mxu0 %v542
        %3253 = vmatprep.subr.mxu0 0.0
        %3254 = vmatpush1.msra.mxu0 %v543
        %3255 = vmatprep.subr.mxu0 0.0
        %3256 = vmatpush1.msra.mxu0 0.0
        %3257 = vmatprep.subr.mxu0 0.0
        %3258 = vmatpush1.msra.mxu0 0.0
        %3259 = vmatprep.subr.mxu0 0.0
        %3260 = vmatpush1.msra.mxu0 0.0
        %3261 = vmatprep.subr.mxu0 0.0
        %3262 = vmatpush1.msra.mxu0 0.0
        %3263 = vmatprep.subr.mxu0 0.0
        %3264 = vmatpush1.msra.mxu0 0.0
        %3265 = vmatprep.subr.mxu0 0.0
        %3266 = vmatpush1.msra.mxu0 0.0
        %3267 = vmatprep.subr.mxu0 0.0
        %3268 = vmatpush1.msra.mxu0 0.0
        %3269 = vmatprep.subr.mxu0 0.0
        %3270 = vmatpush1.msra.mxu0 0.0
        %3271 = vmatprep.subr.mxu0 0.0
        %3272 = vmatpush1.msra.mxu0 0.0
        %3273 = vmatprep.subr.mxu0 0.0
        %3274 = vmatpush1.msra.mxu0 0.0
        %3275 = vmatprep.subr.mxu0 0.0
        %3276 = vmatpush1.msra.mxu0 0.0
        %3277 = vmatprep.subr.mxu0 0.0
        %3278 = vmatpush1.msra.mxu0 0.0
        %3279 = vmatprep.subr.mxu0 0.0
        %3280 = vmatpush1.msra.mxu0 0.0
        %3281 = vmatprep.subr.mxu0 0.0
        %3282 = vmatpush1.msra.mxu0 0.0
        %3283 = vmatprep.subr.mxu0 0.0
        %3284 = vmatpush1.msra.mxu0 0.0
        %3285 = vmatprep.subr.mxu0 0.0
        %3286 = vmatpush1.msra.mxu0 0.0
        %3287 = vmatprep.subr.mxu0 0.0
        %3288 = vmatpush1.msra.mxu0 0.0
        %3289 = vmatprep.subr.mxu0 0.0
        %3290 = vmatpush1.msra.mxu0 0.0
        %3291 = vmatprep.subr.mxu0 0.0
        %3292 = vmatpush1.msra.mxu0 0.0
        %3293 = vmatprep.subr.mxu0 0.0
        %3294 = vmatpush1.msra.mxu0 0.0
        %3295 = vmatprep.subr.mxu0 0.0
        %3296 = vmatpush1.msra.mxu0 0.0
        %3297 = vmatprep.subr.mxu0 0.0
        %3298 = vmatpush1.msra.mxu0 0.0
        %3299 = vmatprep.subr.mxu0 0.0
        %3300 = vmatpush1.msra.mxu0 0.0
        %3301 = vmatprep.subr.mxu0 0.0
        %3302 = vmatpush1.msra.mxu0 0.0
        %3303 = vmatprep.subr.mxu0 0.0
        %3304 = vmatpush1.msra.mxu0 0.0
        %3305 = vmatprep.subr.mxu0 0.0
        %3306 = vmatpush1.msra.mxu0 0.0
        %3307 = vmatprep.subr.mxu0 0.0
        %3308 = vmatpush1.msra.mxu0 0.0
        %3309 = vmatprep.subr.mxu0 0.0
        %3310 = vmatpush1.msra.mxu0 0.0
        %3311 = vmatprep.mubr.f32.mxu0 0.0
        %3312 = vmatmul.mubr.f32.gmra.mrb[0].mxu0 %v3245
        %v3313 = vpop.f32.mrb[0].mxu0
        %v3314 = vadd.f32 0.0, %v3313
        %v3315 = vpop.f32.mrb[0].mxu0
        %3316 = vdwg.mxu0
        %v3318 = vrot.slane %v3314, 3
        %v3319 = vrot.slane %v3314, 4
        %v3322 = vadd.f32 %v532, %v3318
        %v3323 = vadd.f32 %v537, %v3319
        %v3324 = vld [vmem:[#allocation3] sm:$0x3]
        %v3325 = vxor.u32 %v3322, 2147483648
        %v3326 = vxor.u32 %v3323, 2147483648
        %v3327 = vmul.f32 %v3325, 1.442695
        %v3328 = vpow.pop %v3327
        %v3329 = vmul.f32 %v3326, 1.442695
        %v3330 = vpow.pop %v3329
        %v3331 = vadd.f32 %v3328, 1.0
        %v3332 = vadd.f32 %v3330, 1.0
        %v3333 = vrcp.pop %v3331
        %v3334 = vmul.f32 1.0, %v3333
        %v3335 = vrcp.pop %v3332
        %v3336 = vmul.f32 1.0, %v3335
        %v3337 = vtanh.pop %v3322
        %v3338 = vtanh.pop %v3323
        %v3340 = vrot.slane %v3324, 3
        %v3341 = vrot.slane %v3324, 4
        %3342 = vrot.lane.b32.xlu0 %v3340, 32
        %v3343 = vpop.permute.xlu0 %3342
        %3344 = vrot.lane.b32.xlu0 %v3341, 32
        %v3345 = vpop.permute.xlu0 %3344
        %v3348 = vmul.f32 %v3334, %v3343
        %v3349 = vmul.f32 %v3336, %v3345
        %3352 = vrot.lane.b32.xlu0 %v3337, 64
        %v3353 = vpop.permute.xlu0 %3352
        %3354 = vrot.lane.b32.xlu0 %v3338, 64
        %v3355 = vpop.permute.xlu0 %3354
        %v3358 = vmul.f32 %v3334, %v3353
        %v3359 = vmul.f32 %v3336, %v3355
        %3362 = vrot.lane.b32.xlu0 %v3358, 32
        %v3363 = vpop.permute.xlu0 %3362
        %3364 = vrot.lane.b32.xlu0 %v3359, 32
        %v3365 = vpop.permute.xlu0 %3364
        %v3368 = vadd.f32 %v3348, %v3363
        %v3369 = vadd.f32 %v3349, %v3365
        %v3370 = vtanh.pop %v3368
        %v3371 = vtanh.pop %v3369
        %3374 = vrot.lane.b32.xlu0 %v3370, 64
        %v3375 = vpop.permute.xlu0 %3374
        %3376 = vrot.lane.b32.xlu0 %v3371, 64
        %v3377 = vpop.permute.xlu0 %3376
        %v3380 = vmul.f32 %v3334, %v3375
        %v3381 = vmul.f32 %v3336, %v3377
        %v3384 = vrot.slane %v3381, 7
        %vm3385 = vcmask 1046534
        %v3386 = vsel %vm3385, %v3384, %v3380
        %3387 = vrot.lane.b32.xlu0 %v3386, 32
        %v3388 = vpop.permute.xlu0 %3387
        %vm3390 = vcmask 260101
        %3391 = vst.msk [vmem:[#allocation2 - $0x5] sm:$0x60] %vm3390, %v3388
        %v3394 = vrot.slane %v3369, 7
        %v3395 = vsel %vm3385, %v3394, %v3368
        %3396 = vrot.lane.b32.xlu0 %v3395, 96
        %v3397 = vpop.permute.xlu0 %3396
        %3399 = vst.msk [vmem:[#allocation3 - $0x5] sm:$0x60] %vm3390, %v3397
        %v3400 = vld [vmem:[%s734] sm:$0x3]
        %v3402 = vsel %vm458, %v3400, 0
        %3404 = vmatprep.subr.mxu0 0.0
        %3405 = vmatpush1.msra.mxu0 %v545
        %3406 = vmatprep.subr.mxu0 0.0
        %3407 = vmatpush1.msra.mxu0 %v546
        %3408 = vmatprep.subr.mxu0 0.0
        %3409 = vmatpush1.msra.mxu0 %v547
        %3410 = vmatprep.subr.mxu0 0.0
        %3411 = vmatpush1.msra.mxu0 %v548
        %3412 = vmatprep.subr.mxu0 0.0
        %3413 = vmatpush1.msra.mxu0 0.0
        %3414 = vmatprep.subr.mxu0 0.0
        %3415 = vmatpush1.msra.mxu0 0.0
        %3416 = vmatprep.subr.mxu0 0.0
        %3417 = vmatpush1.msra.mxu0 0.0
        %3418 = vmatprep.subr.mxu0 0.0
        %3419 = vmatpush1.msra.mxu0 0.0
        %3420 = vmatprep.subr.mxu0 0.0
        %3421 = vmatpush1.msra.mxu0 0.0
        %3422 = vmatprep.subr.mxu0 0.0
        %3423 = vmatpush1.msra.mxu0 0.0
        %3424 = vmatprep.subr.mxu0 0.0
        %3425 = vmatpush1.msra.mxu0 0.0
        %3426 = vmatprep.subr.mxu0 0.0
        %3427 = vmatpush1.msra.mxu0 0.0
        %3428 = vmatprep.subr.mxu0 0.0
        %3429 = vmatpush1.msra.mxu0 0.0
        %3430 = vmatprep.subr.mxu0 0.0
        %3431 = vmatpush1.msra.mxu0 0.0
        %3432 = vmatprep.subr.mxu0 0.0
        %3433 = vmatpush1.msra.mxu0 0.0
        %3434 = vmatprep.subr.mxu0 0.0
        %3435 = vmatpush1.msra.mxu0 0.0
        %3436 = vmatprep.subr.mxu0 0.0
        %3437 = vmatpush1.msra.mxu0 0.0
        %3438 = vmatprep.subr.mxu0 0.0
        %3439 = vmatpush1.msra.mxu0 0.0
        %3440 = vmatprep.subr.mxu0 0.0
        %3441 = vmatpush1.msra.mxu0 0.0
        %3442 = vmatprep.subr.mxu0 0.0
        %3443 = vmatpush1.msra.mxu0 0.0
        %3444 = vmatprep.subr.mxu0 0.0
        %3445 = vmatpush1.msra.mxu0 0.0
        %3446 = vmatprep.subr.mxu0 0.0
        %3447 = vmatpush1.msra.mxu0 0.0
        %3448 = vmatprep.subr.mxu0 0.0
        %3449 = vmatpush1.msra.mxu0 0.0
        %3450 = vmatprep.subr.mxu0 0.0
        %3451 = vmatpush1.msra.mxu0 0.0
        %3452 = vmatprep.subr.mxu0 0.0
        %3453 = vmatpush1.msra.mxu0 0.0
        %3454 = vmatprep.subr.mxu0 0.0
        %3455 = vmatpush1.msra.mxu0 0.0
        %3456 = vmatprep.subr.mxu0 0.0
        %3457 = vmatpush1.msra.mxu0 0.0
        %3458 = vmatprep.subr.mxu0 0.0
        %3459 = vmatpush1.msra.mxu0 0.0
        %3460 = vmatprep.subr.mxu0 0.0
        %3461 = vmatpush1.msra.mxu0 0.0
        %3462 = vmatprep.subr.mxu0 0.0
        %3463 = vmatpush1.msra.mxu0 0.0
        %3464 = vmatprep.subr.mxu0 0.0
        %3465 = vmatpush1.msra.mxu0 0.0
        %3466 = vmatprep.subr.mxu0 0.0
        %3467 = vmatpush1.msra.mxu0 0.0
        %3468 = vmatprep.mubr.f32.mxu0 0.0
        %3469 = vmatmul.mubr.f32.gmra.mrb[0].mxu0 %v3402
        %v3470 = vpop.f32.mrb[0].mxu0
        %v3471 = vadd.f32 0.0, %v3470
        %v3472 = vpop.f32.mrb[0].mxu0
        %3473 = vdwg.mxu0
        %v3474 = vrot.slane %v3380, 5
        %v3475 = vrot.slane %v3381, 4
        %v3476 = vsel %vm719, %v3475, %v3474
        %3477 = vrot.lane.b32.xlu0 %v3476, 32
        %v3478 = vpop.permute.xlu0 %3477
        %v3479 = vsel %vm458, %v3478, 0
        %3481 = vmatprep.subr.mxu0 0.0
        %3482 = vmatpush1.msra.mxu0 %v554
        %3483 = vmatprep.subr.mxu0 0.0
        %3484 = vmatpush1.msra.mxu0 %v555
        %3485 = vmatprep.subr.mxu0 0.0
        %3486 = vmatpush1.msra.mxu0 %v556
        %3487 = vmatprep.subr.mxu0 0.0
        %3488 = vmatpush1.msra.mxu0 %v557
        %3489 = vmatprep.subr.mxu0 0.0
        %3490 = vmatpush1.msra.mxu0 0.0
        %3491 = vmatprep.subr.mxu0 0.0
        %3492 = vmatpush1.msra.mxu0 0.0
        %3493 = vmatprep.subr.mxu0 0.0
        %3494 = vmatpush1.msra.mxu0 0.0
        %3495 = vmatprep.subr.mxu0 0.0
        %3496 = vmatpush1.msra.mxu0 0.0
        %3497 = vmatprep.subr.mxu0 0.0
        %3498 = vmatpush1.msra.mxu0 0.0
        %3499 = vmatprep.subr.mxu0 0.0
        %3500 = vmatpush1.msra.mxu0 0.0
        %3501 = vmatprep.subr.mxu0 0.0
        %3502 = vmatpush1.msra.mxu0 0.0
        %3503 = vmatprep.subr.mxu0 0.0
        %3504 = vmatpush1.msra.mxu0 0.0
        %3505 = vmatprep.subr.mxu0 0.0
        %3506 = vmatpush1.msra.mxu0 0.0
        %3507 = vmatprep.subr.mxu0 0.0
        %3508 = vmatpush1.msra.mxu0 0.0
        %3509 = vmatprep.subr.mxu0 0.0
        %3510 = vmatpush1.msra.mxu0 0.0
        %3511 = vmatprep.subr.mxu0 0.0
        %3512 = vmatpush1.msra.mxu0 0.0
        %3513 = vmatprep.subr.mxu0 0.0
        %3514 = vmatpush1.msra.mxu0 0.0
        %3515 = vmatprep.subr.mxu0 0.0
        %3516 = vmatpush1.msra.mxu0 0.0
        %3517 = vmatprep.subr.mxu0 0.0
        %3518 = vmatpush1.msra.mxu0 0.0
        %3519 = vmatprep.subr.mxu0 0.0
        %3520 = vmatpush1.msra.mxu0 0.0
        %3521 = vmatprep.subr.mxu0 0.0
        %3522 = vmatpush1.msra.mxu0 0.0
        %3523 = vmatprep.subr.mxu0 0.0
        %3524 = vmatpush1.msra.mxu0 0.0
        %3525 = vmatprep.subr.mxu0 0.0
        %3526 = vmatpush1.msra.mxu0 0.0
        %3527 = vmatprep.subr.mxu0 0.0
        %3528 = vmatpush1.msra.mxu0 0.0
        %3529 = vmatprep.subr.mxu0 0.0
        %3530 = vmatpush1.msra.mxu0 0.0
        %3531 = vmatprep.subr.mxu0 0.0
        %3532 = vmatpush1.msra.mxu0 0.0
        %3533 = vmatprep.subr.mxu0 0.0
        %3534 = vmatpush1.msra.mxu0 0.0
        %3535 = vmatprep.subr.mxu0 0.0
        %3536 = vmatpush1.msra.mxu0 0.0
        %3537 = vmatprep.subr.mxu0 0.0
        %3538 = vmatpush1.msra.mxu0 0.0
        %3539 = vmatprep.subr.mxu0 0.0
        %3540 = vmatpush1.msra.mxu0 0.0
        %3541 = vmatprep.subr.mxu0 0.0
        %3542 = vmatpush1.msra.mxu0 0.0
        %3543 = vmatprep.subr.mxu0 0.0
        %3544 = vmatpush1.msra.mxu0 0.0
        %3545 = vmatprep.mubr.f32.mxu0 0.0
        %3546 = vmatmul.mubr.f32.gmra.mrb[0].mxu0 %v3479
        %v3547 = vpop.f32.mrb[0].mxu0
        %v3548 = vadd.f32 %v3471, %v3547
        %v3549 = vpop.f32.mrb[0].mxu0
        %3550 = vdwg.mxu0
        %v3551 = vadd.f32 %v3548, %v569
        %v3552 = vld [vmem:[%s882] sm:$0x3]
        %v3553 = vxor.u32 %v3551, 2147483648
        %v3554 = vmul.f32 %v3553, 1.442695
        %v3555 = vpow.pop %v3554
        %v3556 = vadd.f32 %v3555, 1.0
        %v3557 = vrcp.pop %v3556
        %v3558 = vmul.f32 1.0, %v3557
        %v3559 = vtanh.pop %v3551
        %3561 = vrot.lane.b32.xlu0 %v3552, 32
        %v3562 = vpop.permute.xlu0 %3561
        %v3564 = vmul.f32 %v3558, %v3562
        %3566 = vrot.lane.b32.xlu0 %v3559, 64
        %v3567 = vpop.permute.xlu0 %3566
        %v3569 = vmul.f32 %v3558, %v3567
        %3571 = vrot.lane.b32.xlu0 %v3569, 32
        %v3572 = vpop.permute.xlu0 %3571
        %v3574 = vadd.f32 %v3564, %v3572
        %v3575 = vtanh.pop %v3574
        %3577 = vrot.lane.b32.xlu0 %v3575, 64
        %v3578 = vpop.permute.xlu0 %3577
        %v3580 = vmul.f32 %v3558, %v3578
        %3582 = vrot.lane.b32.xlu0 %v3580, 32
        %v3583 = vpop.permute.xlu0 %3582
        %3585 = vst.msk [vmem:[%s734] sm:$0x3] %vm724, %v3583
        %3587 = vrot.lane.b32.xlu0 %v3574, 96
        %v3588 = vpop.permute.xlu0 %3587
        %3590 = vst.msk [vmem:[%s882] sm:$0x3] %vm724, %v3588
        %v3591 = vld [vmem:[%s922] sm:$0x3]
        %v3593 = vsel %vm458, %v3591, 0
        %3595 = vmatprep.subr.mxu0 0.0
        %3596 = vmatpush1.msra.mxu0 %v550
        %3597 = vmatprep.subr.mxu0 0.0
        %3598 = vmatpush1.msra.mxu0 %v551
        %3599 = vmatprep.subr.mxu0 0.0
        %3600 = vmatpush1.msra.mxu0 %v552
        %3601 = vmatprep.subr.mxu0 0.0
        %3602 = vmatpush1.msra.mxu0 %v553
        %3603 = vmatprep.subr.mxu0 0.0
        %3604 = vmatpush1.msra.mxu0 0.0
        %3605 = vmatprep.subr.mxu0 0.0
        %3606 = vmatpush1.msra.mxu0 0.0
        %3607 = vmatprep.subr.mxu0 0.0
        %3608 = vmatpush1.msra.mxu0 0.0
        %3609 = vmatprep.subr.mxu0 0.0
        %3610 = vmatpush1.msra.mxu0 0.0
        %3611 = vmatprep.subr.mxu0 0.0
        %3612 = vmatpush1.msra.mxu0 0.0
        %3613 = vmatprep.subr.mxu0 0.0
        %3614 = vmatpush1.msra.mxu0 0.0
        %3615 = vmatprep.subr.mxu0 0.0
        %3616 = vmatpush1.msra.mxu0 0.0
        %3617 = vmatprep.subr.mxu0 0.0
        %3618 = vmatpush1.msra.mxu0 0.0
        %3619 = vmatprep.subr.mxu0 0.0
        %3620 = vmatpush1.msra.mxu0 0.0
        %3621 = vmatprep.subr.mxu0 0.0
        %3622 = vmatpush1.msra.mxu0 0.0
        %3623 = vmatprep.subr.mxu0 0.0
        %3624 = vmatpush1.msra.mxu0 0.0
        %3625 = vmatprep.subr.mxu0 0.0
        %3626 = vmatpush1.msra.mxu0 0.0
        %3627 = vmatprep.subr.mxu0 0.0
        %3628 = vmatpush1.msra.mxu0 0.0
        %3629 = vmatprep.subr.mxu0 0.0
        %3630 = vmatpush1.msra.mxu0 0.0
        %3631 = vmatprep.subr.mxu0 0.0
        %3632 = vmatpush1.msra.mxu0 0.0
        %3633 = vmatprep.subr.mxu0 0.0
        %3634 = vmatpush1.msra.mxu0 0.0
        %3635 = vmatprep.subr.mxu0 0.0
        %3636 = vmatpush1.msra.mxu0 0.0
        %3637 = vmatprep.subr.mxu0 0.0
        %3638 = vmatpush1.msra.mxu0 0.0
        %3639 = vmatprep.subr.mxu0 0.0
        %3640 = vmatpush1.msra.mxu0 0.0
        %3641 = vmatprep.subr.mxu0 0.0
        %3642 = vmatpush1.msra.mxu0 0.0
        %3643 = vmatprep.subr.mxu0 0.0
        %3644 = vmatpush1.msra.mxu0 0.0
        %3645 = vmatprep.subr.mxu0 0.0
        %3646 = vmatpush1.msra.mxu0 0.0
        %3647 = vmatprep.subr.mxu0 0.0
        %3648 = vmatpush1.msra.mxu0 0.0
        %3649 = vmatprep.subr.mxu0 0.0
        %3650 = vmatpush1.msra.mxu0 0.0
        %3651 = vmatprep.subr.mxu0 0.0
        %3652 = vmatpush1.msra.mxu0 0.0
        %3653 = vmatprep.subr.mxu0 0.0
        %3654 = vmatpush1.msra.mxu0 0.0
        %3655 = vmatprep.subr.mxu0 0.0
        %3656 = vmatpush1.msra.mxu0 0.0
        %3657 = vmatprep.subr.mxu0 0.0
        %3658 = vmatpush1.msra.mxu0 0.0
        %3659 = vmatprep.mubr.f32.mxu0 0.0
        %3660 = vmatmul.mubr.f32.gmra.mrb[0].mxu0 %v3593
        %v3661 = vpop.f32.mrb[0].mxu0
        %v3662 = vadd.f32 0.0, %v3661
        %v3663 = vpop.f32.mrb[0].mxu0
        %3664 = vdwg.mxu0
        %v3665 = vsel %vm458, %v3583, 0
        %3667 = vmatprep.subr.mxu0 0.0
        %3668 = vmatpush1.msra.mxu0 %v559
        %3669 = vmatprep.subr.mxu0 0.0
        %3670 = vmatpush1.msra.mxu0 %v560
        %3671 = vmatprep.subr.mxu0 0.0
        %3672 = vmatpush1.msra.mxu0 %v561
        %3673 = vmatprep.subr.mxu0 0.0
        %3674 = vmatpush1.msra.mxu0 %v562
        %3675 = vmatprep.subr.mxu0 0.0
        %3676 = vmatpush1.msra.mxu0 0.0
        %3677 = vmatprep.subr.mxu0 0.0
        %3678 = vmatpush1.msra.mxu0 0.0
        %3679 = vmatprep.subr.mxu0 0.0
        %3680 = vmatpush1.msra.mxu0 0.0
        %3681 = vmatprep.subr.mxu0 0.0
        %3682 = vmatpush1.msra.mxu0 0.0
        %3683 = vmatprep.subr.mxu0 0.0
        %3684 = vmatpush1.msra.mxu0 0.0
        %3685 = vmatprep.subr.mxu0 0.0
        %3686 = vmatpush1.msra.mxu0 0.0
        %3687 = vmatprep.subr.mxu0 0.0
        %3688 = vmatpush1.msra.mxu0 0.0
        %3689 = vmatprep.subr.mxu0 0.0
        %3690 = vmatpush1.msra.mxu0 0.0
        %3691 = vmatprep.subr.mxu0 0.0
        %3692 = vmatpush1.msra.mxu0 0.0
        %3693 = vmatprep.subr.mxu0 0.0
        %3694 = vmatpush1.msra.mxu0 0.0
        %3695 = vmatprep.subr.mxu0 0.0
        %3696 = vmatpush1.msra.mxu0 0.0
        %3697 = vmatprep.subr.mxu0 0.0
        %3698 = vmatpush1.msra.mxu0 0.0
        %3699 = vmatprep.subr.mxu0 0.0
        %3700 = vmatpush1.msra.mxu0 0.0
        %3701 = vmatprep.subr.mxu0 0.0
        %3702 = vmatpush1.msra.mxu0 0.0
        %3703 = vmatprep.subr.mxu0 0.0
        %3704 = vmatpush1.msra.mxu0 0.0
        %3705 = vmatprep.subr.mxu0 0.0
        %3706 = vmatpush1.msra.mxu0 0.0
        %3707 = vmatprep.subr.mxu0 0.0
        %3708 = vmatpush1.msra.mxu0 0.0
        %3709 = vmatprep.subr.mxu0 0.0
        %3710 = vmatpush1.msra.mxu0 0.0
        %3711 = vmatprep.subr.mxu0 0.0
        %3712 = vmatpush1.msra.mxu0 0.0
        %3713 = vmatprep.subr.mxu0 0.0
        %3714 = vmatpush1.msra.mxu0 0.0
        %3715 = vmatprep.subr.mxu0 0.0
        %3716 = vmatpush1.msra.mxu0 0.0
        %3717 = vmatprep.subr.mxu0 0.0
        %3718 = vmatpush1.msra.mxu0 0.0
        %3719 = vmatprep.subr.mxu0 0.0
        %3720 = vmatpush1.msra.mxu0 0.0
        %3721 = vmatprep.subr.mxu0 0.0
        %3722 = vmatpush1.msra.mxu0 0.0
        %3723 = vmatprep.subr.mxu0 0.0
        %3724 = vmatpush1.msra.mxu0 0.0
        %3725 = vmatprep.subr.mxu0 0.0
        %3726 = vmatpush1.msra.mxu0 0.0
        %3727 = vmatprep.subr.mxu0 0.0
        %3728 = vmatpush1.msra.mxu0 0.0
        %3729 = vmatprep.subr.mxu0 0.0
        %3730 = vmatpush1.msra.mxu0 0.0
        %3731 = vmatprep.mubr.f32.mxu0 0.0
        %3732 = vmatmul.mubr.f32.gmra.mrb[0].mxu0 %v3665
        %v3733 = vpop.f32.mrb[0].mxu0
        %v3734 = vadd.f32 %v3662, %v3733
        %v3735 = vpop.f32.mrb[0].mxu0
        %3736 = vdwg.mxu0
        %v3737 = vadd.f32 %v3734, %v577
        %v3738 = vld [vmem:[%s1070] sm:$0x3]
        %v3739 = vxor.u32 %v3737, 2147483648
        %v3740 = vmul.f32 %v3739, 1.442695
        %v3741 = vpow.pop %v3740
        %v3742 = vadd.f32 %v3741, 1.0
        %v3743 = vrcp.pop %v3742
        %v3744 = vmul.f32 1.0, %v3743
        %v3745 = vtanh.pop %v3737
        %3747 = vrot.lane.b32.xlu0 %v3738, 32
        %v3748 = vpop.permute.xlu0 %3747
        %v3750 = vmul.f32 %v3744, %v3748
        %3752 = vrot.lane.b32.xlu0 %v3745, 64
        %v3753 = vpop.permute.xlu0 %3752
        %v3755 = vmul.f32 %v3744, %v3753
        %3757 = vrot.lane.b32.xlu0 %v3755, 32
        %v3758 = vpop.permute.xlu0 %3757
        %v3760 = vadd.f32 %v3750, %v3758
        %v3761 = vtanh.pop %v3760
        %3763 = vrot.lane.b32.xlu0 %v3761, 64
        %v3764 = vpop.permute.xlu0 %3763
        %v3766 = vmul.f32 %v3744, %v3764
        %3768 = vrot.lane.b32.xlu0 %v3766, 32
        %v3769 = vpop.permute.xlu0 %3768
        %3771 = vst.msk [vmem:[%s922] sm:$0x3] %vm724, %v3769
        %3773 = vrot.lane.b32.xlu0 %v3760, 96
        %v3774 = vpop.permute.xlu0 %3773
        %3776 = vst.msk [vmem:[%s1070] sm:$0x3] %vm724, %v3774
        %v3777 = vld [vmem:[#allocation2] sm:$0x3]
        %v3779 = vsel %vm458, %v3777, 0
        %3781 = vmatprep.subr.mxu0 0.0
        %3782 = vmatpush1.msra.mxu0 %v540
        %3783 = vmatprep.subr.mxu0 0.0
        %3784 = vmatpush1.msra.mxu0 %v541
        %3785 = vmatprep.subr.mxu0 0.0
        %3786 = vmatpush1.msra.mxu0 %v542
        %3787 = vmatprep.subr.mxu0 0.0
        %3788 = vmatpush1.msra.mxu0 %v543
        %3789 = vmatprep.subr.mxu0 0.0
        %3790 = vmatpush1.msra.mxu0 0.0
        %3791 = vmatprep.subr.mxu0 0.0
        %3792 = vmatpush1.msra.mxu0 0.0
        %3793 = vmatprep.subr.mxu0 0.0
        %3794 = vmatpush1.msra.mxu0 0.0
        %3795 = vmatprep.subr.mxu0 0.0
        %3796 = vmatpush1.msra.mxu0 0.0
        %3797 = vmatprep.subr.mxu0 0.0
        %3798 = vmatpush1.msra.mxu0 0.0
        %3799 = vmatprep.subr.mxu0 0.0
        %3800 = vmatpush1.msra.mxu0 0.0
        %3801 = vmatprep.subr.mxu0 0.0
        %3802 = vmatpush1.msra.mxu0 0.0
        %3803 = vmatprep.subr.mxu0 0.0
        %3804 = vmatpush1.msra.mxu0 0.0
        %3805 = vmatprep.subr.mxu0 0.0
        %3806 = vmatpush1.msra.mxu0 0.0
        %3807 = vmatprep.subr.mxu0 0.0
        %3808 = vmatpush1.msra.mxu0 0.0
        %3809 = vmatprep.subr.mxu0 0.0
        %3810 = vmatpush1.msra.mxu0 0.0
        %3811 = vmatprep.subr.mxu0 0.0
        %3812 = vmatpush1.msra.mxu0 0.0
        %3813 = vmatprep.subr.mxu0 0.0
        %3814 = vmatpush1.msra.mxu0 0.0
        %3815 = vmatprep.subr.mxu0 0.0
        %3816 = vmatpush1.msra.mxu0 0.0
        %3817 = vmatprep.subr.mxu0 0.0
        %3818 = vmatpush1.msra.mxu0 0.0
        %3819 = vmatprep.subr.mxu0 0.0
        %3820 = vmatpush1.msra.mxu0 0.0
        %3821 = vmatprep.subr.mxu0 0.0
        %3822 = vmatpush1.msra.mxu0 0.0
        %3823 = vmatprep.subr.mxu0 0.0
        %3824 = vmatpush1.msra.mxu0 0.0
        %3825 = vmatprep.subr.mxu0 0.0
        %3826 = vmatpush1.msra.mxu0 0.0
        %3827 = vmatprep.subr.mxu0 0.0
        %3828 = vmatpush1.msra.mxu0 0.0
        %3829 = vmatprep.subr.mxu0 0.0
        %3830 = vmatpush1.msra.mxu0 0.0
        %3831 = vmatprep.subr.mxu0 0.0
        %3832 = vmatpush1.msra.mxu0 0.0
        %3833 = vmatprep.subr.mxu0 0.0
        %3834 = vmatpush1.msra.mxu0 0.0
        %3835 = vmatprep.subr.mxu0 0.0
        %3836 = vmatpush1.msra.mxu0 0.0
        %3837 = vmatprep.subr.mxu0 0.0
        %3838 = vmatpush1.msra.mxu0 0.0
        %3839 = vmatprep.subr.mxu0 0.0
        %3840 = vmatpush1.msra.mxu0 0.0
        %3841 = vmatprep.subr.mxu0 0.0
        %3842 = vmatpush1.msra.mxu0 0.0
        %3843 = vmatprep.subr.mxu0 0.0
        %3844 = vmatpush1.msra.mxu0 0.0
        %3845 = vmatprep.mubr.f32.mxu0 0.0
        %3846 = vmatmul.mubr.f32.gmra.mrb[0].mxu0 %v3779
        %v3847 = vpop.f32.mrb[0].mxu0
        %v3848 = vadd.f32 0.0, %v3847
        %v3849 = vpop.f32.mrb[0].mxu0
        %3850 = vdwg.mxu0
        %v3852 = vrot.slane %v3848, 2
        %v3853 = vrot.slane %v3848, 3
        %v3856 = vadd.f32 %v532, %v3852
        %v3857 = vadd.f32 %v537, %v3853
        %v3858 = vld [vmem:[#allocation3] sm:$0x3]
        %v3859 = vxor.u32 %v3856, 2147483648
        %v3860 = vxor.u32 %v3857, 2147483648
        %v3861 = vmul.f32 %v3859, 1.442695
        %v3862 = vpow.pop %v3861
        %v3863 = vmul.f32 %v3860, 1.442695
        %v3864 = vpow.pop %v3863
        %v3865 = vadd.f32 %v3862, 1.0
        %v3866 = vadd.f32 %v3864, 1.0
        %v3867 = vrcp.pop %v3865
        %v3868 = vmul.f32 1.0, %v3867
        %v3869 = vrcp.pop %v3866
        %v3870 = vmul.f32 1.0, %v3869
        %v3871 = vtanh.pop %v3856
        %v3872 = vtanh.pop %v3857
        %v3874 = vrot.slane %v3858, 2
        %v3875 = vrot.slane %v3858, 3
        %3876 = vrot.lane.b32.xlu0 %v3874, 32
        %v3877 = vpop.permute.xlu0 %3876
        %3878 = vrot.lane.b32.xlu0 %v3875, 32
        %v3879 = vpop.permute.xlu0 %3878
        %v3882 = vmul.f32 %v3868, %v3877
        %v3883 = vmul.f32 %v3870, %v3879
        %3886 = vrot.lane.b32.xlu0 %v3871, 64
        %v3887 = vpop.permute.xlu0 %3886
        %3888 = vrot.lane.b32.xlu0 %v3872, 64
        %v3889 = vpop.permute.xlu0 %3888
        %v3892 = vmul.f32 %v3868, %v3887
        %v3893 = vmul.f32 %v3870, %v3889
        %3896 = vrot.lane.b32.xlu0 %v3892, 32
        %v3897 = vpop.permute.xlu0 %3896
        %3898 = vrot.lane.b32.xlu0 %v3893, 32
        %v3899 = vpop.permute.xlu0 %3898
        %v3902 = vadd.f32 %v3882, %v3897
        %v3903 = vadd.f32 %v3883, %v3899
        %v3904 = vtanh.pop %v3902
        %v3905 = vtanh.pop %v3903
        %3908 = vrot.lane.b32.xlu0 %v3904, 64
        %v3909 = vpop.permute.xlu0 %3908
        %3910 = vrot.lane.b32.xlu0 %v3905, 64
        %v3911 = vpop.permute.xlu0 %3910
        %v3914 = vmul.f32 %v3868, %v3909
        %v3915 = vmul.f32 %v3870, %v3911
        %v3918 = vrot.slane %v3915, 7
        %vm3919 = vcmask 1047559
        %v3920 = vsel %vm3919, %v3918, %v3914
        %3921 = vrot.lane.b32.xlu0 %v3920, 32
        %v3922 = vpop.permute.xlu0 %3921
        %vm3924 = vcmask 261126
        %3925 = vst.msk [vmem:[#allocation2 - $0x6] sm:$0xc0] %vm3924, %v3922
        %v3928 = vrot.slane %v3903, 7
        %v3929 = vsel %vm3919, %v3928, %v3902
        %3930 = vrot.lane.b32.xlu0 %v3929, 96
        %v3931 = vpop.permute.xlu0 %3930
        %3933 = vst.msk [vmem:[#allocation3 - $0x6] sm:$0xc0] %vm3924, %v3931
        %v3934 = vld [vmem:[%s734] sm:$0x3]
        %v3936 = vsel %vm458, %v3934, 0
        %3938 = vmatprep.subr.mxu0 0.0
        %3939 = vmatpush1.msra.mxu0 %v545
        %3940 = vmatprep.subr.mxu0 0.0
        %3941 = vmatpush1.msra.mxu0 %v546
        %3942 = vmatprep.subr.mxu0 0.0
        %3943 = vmatpush1.msra.mxu0 %v547
        %3944 = vmatprep.subr.mxu0 0.0
        %3945 = vmatpush1.msra.mxu0 %v548
        %3946 = vmatprep.subr.mxu0 0.0
        %3947 = vmatpush1.msra.mxu0 0.0
        %3948 = vmatprep.subr.mxu0 0.0
        %3949 = vmatpush1.msra.mxu0 0.0
        %3950 = vmatprep.subr.mxu0 0.0
        %3951 = vmatpush1.msra.mxu0 0.0
        %3952 = vmatprep.subr.mxu0 0.0
        %3953 = vmatpush1.msra.mxu0 0.0
        %3954 = vmatprep.subr.mxu0 0.0
        %3955 = vmatpush1.msra.mxu0 0.0
        %3956 = vmatprep.subr.mxu0 0.0
        %3957 = vmatpush1.msra.mxu0 0.0
        %3958 = vmatprep.subr.mxu0 0.0
        %3959 = vmatpush1.msra.mxu0 0.0
        %3960 = vmatprep.subr.mxu0 0.0
        %3961 = vmatpush1.msra.mxu0 0.0
        %3962 = vmatprep.subr.mxu0 0.0
        %3963 = vmatpush1.msra.mxu0 0.0
        %3964 = vmatprep.subr.mxu0 0.0
        %3965 = vmatpush1.msra.mxu0 0.0
        %3966 = vmatprep.subr.mxu0 0.0
        %3967 = vmatpush1.msra.mxu0 0.0
        %3968 = vmatprep.subr.mxu0 0.0
        %3969 = vmatpush1.msra.mxu0 0.0
        %3970 = vmatprep.subr.mxu0 0.0
        %3971 = vmatpush1.msra.mxu0 0.0
        %3972 = vmatprep.subr.mxu0 0.0
        %3973 = vmatpush1.msra.mxu0 0.0
        %3974 = vmatprep.subr.mxu0 0.0
        %3975 = vmatpush1.msra.mxu0 0.0
        %3976 = vmatprep.subr.mxu0 0.0
        %3977 = vmatpush1.msra.mxu0 0.0
        %3978 = vmatprep.subr.mxu0 0.0
        %3979 = vmatpush1.msra.mxu0 0.0
        %3980 = vmatprep.subr.mxu0 0.0
        %3981 = vmatpush1.msra.mxu0 0.0
        %3982 = vmatprep.subr.mxu0 0.0
        %3983 = vmatpush1.msra.mxu0 0.0
        %3984 = vmatprep.subr.mxu0 0.0
        %3985 = vmatpush1.msra.mxu0 0.0
        %3986 = vmatprep.subr.mxu0 0.0
        %3987 = vmatpush1.msra.mxu0 0.0
        %3988 = vmatprep.subr.mxu0 0.0
        %3989 = vmatpush1.msra.mxu0 0.0
        %3990 = vmatprep.subr.mxu0 0.0
        %3991 = vmatpush1.msra.mxu0 0.0
        %3992 = vmatprep.subr.mxu0 0.0
        %3993 = vmatpush1.msra.mxu0 0.0
        %3994 = vmatprep.subr.mxu0 0.0
        %3995 = vmatpush1.msra.mxu0 0.0
        %3996 = vmatprep.subr.mxu0 0.0
        %3997 = vmatpush1.msra.mxu0 0.0
        %3998 = vmatprep.subr.mxu0 0.0
        %3999 = vmatpush1.msra.mxu0 0.0
        %4000 = vmatprep.subr.mxu0 0.0
        %4001 = vmatpush1.msra.mxu0 0.0
        %4002 = vmatprep.mubr.f32.mxu0 0.0
        %4003 = vmatmul.mubr.f32.gmra.mrb[0].mxu0 %v3936
        %v4004 = vpop.f32.mrb[0].mxu0
        %v4005 = vadd.f32 0.0, %v4004
        %v4006 = vpop.f32.mrb[0].mxu0
        %4007 = vdwg.mxu0
        %v4008 = vrot.slane %v3914, 6
        %v4009 = vrot.slane %v3915, 5
        %v4010 = vsel %vm719, %v4009, %v4008
        %4011 = vrot.lane.b32.xlu0 %v4010, 32
        %v4012 = vpop.permute.xlu0 %4011
        %v4013 = vsel %vm458, %v4012, 0
        %4015 = vmatprep.subr.mxu0 0.0
        %4016 = vmatpush1.msra.mxu0 %v554
        %4017 = vmatprep.subr.mxu0 0.0
        %4018 = vmatpush1.msra.mxu0 %v555
        %4019 = vmatprep.subr.mxu0 0.0
        %4020 = vmatpush1.msra.mxu0 %v556
        %4021 = vmatprep.subr.mxu0 0.0
        %4022 = vmatpush1.msra.mxu0 %v557
        %4023 = vmatprep.subr.mxu0 0.0
        %4024 = vmatpush1.msra.mxu0 0.0
        %4025 = vmatprep.subr.mxu0 0.0
        %4026 = vmatpush1.msra.mxu0 0.0
        %4027 = vmatprep.subr.mxu0 0.0
        %4028 = vmatpush1.msra.mxu0 0.0
        %4029 = vmatprep.subr.mxu0 0.0
        %4030 = vmatpush1.msra.mxu0 0.0
        %4031 = vmatprep.subr.mxu0 0.0
        %4032 = vmatpush1.msra.mxu0 0.0
        %4033 = vmatprep.subr.mxu0 0.0
        %4034 = vmatpush1.msra.mxu0 0.0
        %4035 = vmatprep.subr.mxu0 0.0
        %4036 = vmatpush1.msra.mxu0 0.0
        %4037 = vmatprep.subr.mxu0 0.0
        %4038 = vmatpush1.msra.mxu0 0.0
        %4039 = vmatprep.subr.mxu0 0.0
        %4040 = vmatpush1.msra.mxu0 0.0
        %4041 = vmatprep.subr.mxu0 0.0
        %4042 = vmatpush1.msra.mxu0 0.0
        %4043 = vmatprep.subr.mxu0 0.0
        %4044 = vmatpush1.msra.mxu0 0.0
        %4045 = vmatprep.subr.mxu0 0.0
        %4046 = vmatpush1.msra.mxu0 0.0
        %4047 = vmatprep.subr.mxu0 0.0
        %4048 = vmatpush1.msra.mxu0 0.0
        %4049 = vmatprep.subr.mxu0 0.0
        %4050 = vmatpush1.msra.mxu0 0.0
        %4051 = vmatprep.subr.mxu0 0.0
        %4052 = vmatpush1.msra.mxu0 0.0
        %4053 = vmatprep.subr.mxu0 0.0
        %4054 = vmatpush1.msra.mxu0 0.0
        %4055 = vmatprep.subr.mxu0 0.0
        %4056 = vmatpush1.msra.mxu0 0.0
        %4057 = vmatprep.subr.mxu0 0.0
        %4058 = vmatpush1.msra.mxu0 0.0
        %4059 = vmatprep.subr.mxu0 0.0
        %4060 = vmatpush1.msra.mxu0 0.0
        %4061 = vmatprep.subr.mxu0 0.0
        %4062 = vmatpush1.msra.mxu0 0.0
        %4063 = vmatprep.subr.mxu0 0.0
        %4064 = vmatpush1.msra.mxu0 0.0
        %4065 = vmatprep.subr.mxu0 0.0
        %4066 = vmatpush1.msra.mxu0 0.0
        %4067 = vmatprep.subr.mxu0 0.0
        %4068 = vmatpush1.msra.mxu0 0.0
        %4069 = vmatprep.subr.mxu0 0.0
        %4070 = vmatpush1.msra.mxu0 0.0
        %4071 = vmatprep.subr.mxu0 0.0
        %4072 = vmatpush1.msra.mxu0 0.0
        %4073 = vmatprep.subr.mxu0 0.0
        %4074 = vmatpush1.msra.mxu0 0.0
        %4075 = vmatprep.subr.mxu0 0.0
        %4076 = vmatpush1.msra.mxu0 0.0
        %4077 = vmatprep.subr.mxu0 0.0
        %4078 = vmatpush1.msra.mxu0 0.0
        %4079 = vmatprep.mubr.f32.mxu0 0.0
        %4080 = vmatmul.mubr.f32.gmra.mrb[0].mxu0 %v4013
        %v4081 = vpop.f32.mrb[0].mxu0
        %v4082 = vadd.f32 %v4005, %v4081
        %v4083 = vpop.f32.mrb[0].mxu0
        %4084 = vdwg.mxu0
        %v4085 = vadd.f32 %v4082, %v569
        %v4086 = vld [vmem:[%s882] sm:$0x3]
        %v4087 = vxor.u32 %v4085, 2147483648
        %v4088 = vmul.f32 %v4087, 1.442695
        %v4089 = vpow.pop %v4088
        %v4090 = vadd.f32 %v4089, 1.0
        %v4091 = vrcp.pop %v4090
        %v4092 = vmul.f32 1.0, %v4091
        %v4093 = vtanh.pop %v4085
        %4095 = vrot.lane.b32.xlu0 %v4086, 32
        %v4096 = vpop.permute.xlu0 %4095
        %v4098 = vmul.f32 %v4092, %v4096
        %4100 = vrot.lane.b32.xlu0 %v4093, 64
        %v4101 = vpop.permute.xlu0 %4100
        %v4103 = vmul.f32 %v4092, %v4101
        %4105 = vrot.lane.b32.xlu0 %v4103, 32
        %v4106 = vpop.permute.xlu0 %4105
        %v4108 = vadd.f32 %v4098, %v4106
        %v4109 = vtanh.pop %v4108
        %4111 = vrot.lane.b32.xlu0 %v4109, 64
        %v4112 = vpop.permute.xlu0 %4111
        %v4114 = vmul.f32 %v4092, %v4112
        %4116 = vrot.lane.b32.xlu0 %v4114, 32
        %v4117 = vpop.permute.xlu0 %4116
        %4119 = vst.msk [vmem:[%s734] sm:$0x3] %vm724, %v4117
        %4121 = vrot.lane.b32.xlu0 %v4108, 96
        %v4122 = vpop.permute.xlu0 %4121
        %4124 = vst.msk [vmem:[%s882] sm:$0x3] %vm724, %v4122
        %v4125 = vld [vmem:[%s922] sm:$0x3]
        %v4127 = vsel %vm458, %v4125, 0
        %4129 = vmatprep.subr.mxu0 0.0
        %4130 = vmatpush1.msra.mxu0 %v550
        %4131 = vmatprep.subr.mxu0 0.0
        %4132 = vmatpush1.msra.mxu0 %v551
        %4133 = vmatprep.subr.mxu0 0.0
        %4134 = vmatpush1.msra.mxu0 %v552
        %4135 = vmatprep.subr.mxu0 0.0
        %4136 = vmatpush1.msra.mxu0 %v553
        %4137 = vmatprep.subr.mxu0 0.0
        %4138 = vmatpush1.msra.mxu0 0.0
        %4139 = vmatprep.subr.mxu0 0.0
        %4140 = vmatpush1.msra.mxu0 0.0
        %4141 = vmatprep.subr.mxu0 0.0
        %4142 = vmatpush1.msra.mxu0 0.0
        %4143 = vmatprep.subr.mxu0 0.0
        %4144 = vmatpush1.msra.mxu0 0.0
        %4145 = vmatprep.subr.mxu0 0.0
        %4146 = vmatpush1.msra.mxu0 0.0
        %4147 = vmatprep.subr.mxu0 0.0
        %4148 = vmatpush1.msra.mxu0 0.0
        %4149 = vmatprep.subr.mxu0 0.0
        %4150 = vmatpush1.msra.mxu0 0.0
        %4151 = vmatprep.subr.mxu0 0.0
        %4152 = vmatpush1.msra.mxu0 0.0
        %4153 = vmatprep.subr.mxu0 0.0
        %4154 = vmatpush1.msra.mxu0 0.0
        %4155 = vmatprep.subr.mxu0 0.0
        %4156 = vmatpush1.msra.mxu0 0.0
        %4157 = vmatprep.subr.mxu0 0.0
        %4158 = vmatpush1.msra.mxu0 0.0
        %4159 = vmatprep.subr.mxu0 0.0
        %4160 = vmatpush1.msra.mxu0 0.0
        %4161 = vmatprep.subr.mxu0 0.0
        %4162 = vmatpush1.msra.mxu0 0.0
        %4163 = vmatprep.subr.mxu0 0.0
        %4164 = vmatpush1.msra.mxu0 0.0
        %4165 = vmatprep.subr.mxu0 0.0
        %4166 = vmatpush1.msra.mxu0 0.0
        %4167 = vmatprep.subr.mxu0 0.0
        %4168 = vmatpush1.msra.mxu0 0.0
        %4169 = vmatprep.subr.mxu0 0.0
        %4170 = vmatpush1.msra.mxu0 0.0
        %4171 = vmatprep.subr.mxu0 0.0
        %4172 = vmatpush1.msra.mxu0 0.0
        %4173 = vmatprep.subr.mxu0 0.0
        %4174 = vmatpush1.msra.mxu0 0.0
        %4175 = vmatprep.subr.mxu0 0.0
        %4176 = vmatpush1.msra.mxu0 0.0
        %4177 = vmatprep.subr.mxu0 0.0
        %4178 = vmatpush1.msra.mxu0 0.0
        %4179 = vmatprep.subr.mxu0 0.0
        %4180 = vmatpush1.msra.mxu0 0.0
        %4181 = vmatprep.subr.mxu0 0.0
        %4182 = vmatpush1.msra.mxu0 0.0
        %4183 = vmatprep.subr.mxu0 0.0
        %4184 = vmatpush1.msra.mxu0 0.0
        %4185 = vmatprep.subr.mxu0 0.0
        %4186 = vmatpush1.msra.mxu0 0.0
        %4187 = vmatprep.subr.mxu0 0.0
        %4188 = vmatpush1.msra.mxu0 0.0
        %4189 = vmatprep.subr.mxu0 0.0
        %4190 = vmatpush1.msra.mxu0 0.0
        %4191 = vmatprep.subr.mxu0 0.0
        %4192 = vmatpush1.msra.mxu0 0.0
        %4193 = vmatprep.mubr.f32.mxu0 0.0
        %4194 = vmatmul.mubr.f32.gmra.mrb[0].mxu0 %v4127
        %v4195 = vpop.f32.mrb[0].mxu0
        %v4196 = vadd.f32 0.0, %v4195
        %v4197 = vpop.f32.mrb[0].mxu0
        %4198 = vdwg.mxu0
        %v4199 = vsel %vm458, %v4117, 0
        %4201 = vmatprep.subr.mxu0 0.0
        %4202 = vmatpush1.msra.mxu0 %v559
        %4203 = vmatprep.subr.mxu0 0.0
        %4204 = vmatpush1.msra.mxu0 %v560
        %4205 = vmatprep.subr.mxu0 0.0
        %4206 = vmatpush1.msra.mxu0 %v561
        %4207 = vmatprep.subr.mxu0 0.0
        %4208 = vmatpush1.msra.mxu0 %v562
        %4209 = vmatprep.subr.mxu0 0.0
        %4210 = vmatpush1.msra.mxu0 0.0
        %4211 = vmatprep.subr.mxu0 0.0
        %4212 = vmatpush1.msra.mxu0 0.0
        %4213 = vmatprep.subr.mxu0 0.0
        %4214 = vmatpush1.msra.mxu0 0.0
        %4215 = vmatprep.subr.mxu0 0.0
        %4216 = vmatpush1.msra.mxu0 0.0
        %4217 = vmatprep.subr.mxu0 0.0
        %4218 = vmatpush1.msra.mxu0 0.0
        %4219 = vmatprep.subr.mxu0 0.0
        %4220 = vmatpush1.msra.mxu0 0.0
        %4221 = vmatprep.subr.mxu0 0.0
        %4222 = vmatpush1.msra.mxu0 0.0
        %4223 = vmatprep.subr.mxu0 0.0
        %4224 = vmatpush1.msra.mxu0 0.0
        %4225 = vmatprep.subr.mxu0 0.0
        %4226 = vmatpush1.msra.mxu0 0.0
        %4227 = vmatprep.subr.mxu0 0.0
        %4228 = vmatpush1.msra.mxu0 0.0
        %4229 = vmatprep.subr.mxu0 0.0
        %4230 = vmatpush1.msra.mxu0 0.0
        %4231 = vmatprep.subr.mxu0 0.0
        %4232 = vmatpush1.msra.mxu0 0.0
        %4233 = vmatprep.subr.mxu0 0.0
        %4234 = vmatpush1.msra.mxu0 0.0
        %4235 = vmatprep.subr.mxu0 0.0
        %4236 = vmatpush1.msra.mxu0 0.0
        %4237 = vmatprep.subr.mxu0 0.0
        %4238 = vmatpush1.msra.mxu0 0.0
        %4239 = vmatprep.subr.mxu0 0.0
        %4240 = vmatpush1.msra.mxu0 0.0
        %4241 = vmatprep.subr.mxu0 0.0
        %4242 = vmatpush1.msra.mxu0 0.0
        %4243 = vmatprep.subr.mxu0 0.0
        %4244 = vmatpush1.msra.mxu0 0.0
        %4245 = vmatprep.subr.mxu0 0.0
        %4246 = vmatpush1.msra.mxu0 0.0
        %4247 = vmatprep.subr.mxu0 0.0
        %4248 = vmatpush1.msra.mxu0 0.0
        %4249 = vmatprep.subr.mxu0 0.0
        %4250 = vmatpush1.msra.mxu0 0.0
        %4251 = vmatprep.subr.mxu0 0.0
        %4252 = vmatpush1.msra.mxu0 0.0
        %4253 = vmatprep.subr.mxu0 0.0
        %4254 = vmatpush1.msra.mxu0 0.0
        %4255 = vmatprep.subr.mxu0 0.0
        %4256 = vmatpush1.msra.mxu0 0.0
        %4257 = vmatprep.subr.mxu0 0.0
        %4258 = vmatpush1.msra.mxu0 0.0
        %4259 = vmatprep.subr.mxu0 0.0
        %4260 = vmatpush1.msra.mxu0 0.0
        %4261 = vmatprep.subr.mxu0 0.0
        %4262 = vmatpush1.msra.mxu0 0.0
        %4263 = vmatprep.subr.mxu0 0.0
        %4264 = vmatpush1.msra.mxu0 0.0
        %4265 = vmatprep.mubr.f32.mxu0 0.0
        %4266 = vmatmul.mubr.f32.gmra.mrb[0].mxu0 %v4199
        %v4267 = vpop.f32.mrb[0].mxu0
        %v4268 = vadd.f32 %v4196, %v4267
        %v4269 = vpop.f32.mrb[0].mxu0
        %4270 = vdwg.mxu0
        %v4271 = vadd.f32 %v4268, %v577
        %v4272 = vld [vmem:[%s1070] sm:$0x3]
        %v4273 = vxor.u32 %v4271, 2147483648
        %v4274 = vmul.f32 %v4273, 1.442695
        %v4275 = vpow.pop %v4274
        %v4276 = vadd.f32 %v4275, 1.0
        %v4277 = vrcp.pop %v4276
        %v4278 = vmul.f32 1.0, %v4277
        %v4279 = vtanh.pop %v4271
        %4281 = vrot.lane.b32.xlu0 %v4272, 32
        %v4282 = vpop.permute.xlu0 %4281
        %v4284 = vmul.f32 %v4278, %v4282
        %4286 = vrot.lane.b32.xlu0 %v4279, 64
        %v4287 = vpop.permute.xlu0 %4286
        %v4289 = vmul.f32 %v4278, %v4287
        %4291 = vrot.lane.b32.xlu0 %v4289, 32
        %v4292 = vpop.permute.xlu0 %4291
        %v4294 = vadd.f32 %v4284, %v4292
        %v4295 = vtanh.pop %v4294
        %4297 = vrot.lane.b32.xlu0 %v4295, 64
        %v4298 = vpop.permute.xlu0 %4297
        %v4300 = vmul.f32 %v4278, %v4298
        %4302 = vrot.lane.b32.xlu0 %v4300, 32
        %v4303 = vpop.permute.xlu0 %4302
        %4305 = vst.msk [vmem:[%s922] sm:$0x3] %vm724, %v4303
        %4307 = vrot.lane.b32.xlu0 %v4294, 96
        %v4308 = vpop.permute.xlu0 %4307
        %4310 = vst.msk [vmem:[%s1070] sm:$0x3] %vm724, %v4308
        %v4311 = vld [vmem:[#allocation2] sm:$0x3]
        %v4313 = vsel %vm458, %v4311, 0
        %4315 = vmatprep.subr.mxu0 0.0
        %4316 = vmatpush1.msra.mxu0 %v540
        %4317 = vmatprep.subr.mxu0 0.0
        %4318 = vmatpush1.msra.mxu0 %v541
        %4319 = vmatprep.subr.mxu0 0.0
        %4320 = vmatpush1.msra.mxu0 %v542
        %4321 = vmatprep.subr.mxu0 0.0
        %4322 = vmatpush1.msra.mxu0 %v543
        %4323 = vmatprep.subr.mxu0 0.0
        %4324 = vmatpush1.msra.mxu0 0.0
        %4325 = vmatprep.subr.mxu0 0.0
        %4326 = vmatpush1.msra.mxu0 0.0
        %4327 = vmatprep.subr.mxu0 0.0
        %4328 = vmatpush1.msra.mxu0 0.0
        %4329 = vmatprep.subr.mxu0 0.0
        %4330 = vmatpush1.msra.mxu0 0.0
        %4331 = vmatprep.subr.mxu0 0.0
        %4332 = vmatpush1.msra.mxu0 0.0
        %4333 = vmatprep.subr.mxu0 0.0
        %4334 = vmatpush1.msra.mxu0 0.0
        %4335 = vmatprep.subr.mxu0 0.0
        %4336 = vmatpush1.msra.mxu0 0.0
        %4337 = vmatprep.subr.mxu0 0.0
        %4338 = vmatpush1.msra.mxu0 0.0
        %4339 = vmatprep.subr.mxu0 0.0
        %4340 = vmatpush1.msra.mxu0 0.0
        %4341 = vmatprep.subr.mxu0 0.0
        %4342 = vmatpush1.msra.mxu0 0.0
        %4343 = vmatprep.subr.mxu0 0.0
        %4344 = vmatpush1.msra.mxu0 0.0
        %4345 = vmatprep.subr.mxu0 0.0
        %4346 = vmatpush1.msra.mxu0 0.0
        %4347 = vmatprep.subr.mxu0 0.0
        %4348 = vmatpush1.msra.mxu0 0.0
        %4349 = vmatprep.subr.mxu0 0.0
        %4350 = vmatpush1.msra.mxu0 0.0
        %4351 = vmatprep.subr.mxu0 0.0
        %4352 = vmatpush1.msra.mxu0 0.0
        %4353 = vmatprep.subr.mxu0 0.0
        %4354 = vmatpush1.msra.mxu0 0.0
        %4355 = vmatprep.subr.mxu0 0.0
        %4356 = vmatpush1.msra.mxu0 0.0
        %4357 = vmatprep.subr.mxu0 0.0
        %4358 = vmatpush1.msra.mxu0 0.0
        %4359 = vmatprep.subr.mxu0 0.0
        %4360 = vmatpush1.msra.mxu0 0.0
        %4361 = vmatprep.subr.mxu0 0.0
        %4362 = vmatpush1.msra.mxu0 0.0
        %4363 = vmatprep.subr.mxu0 0.0
        %4364 = vmatpush1.msra.mxu0 0.0
        %4365 = vmatprep.subr.mxu0 0.0
        %4366 = vmatpush1.msra.mxu0 0.0
        %4367 = vmatprep.subr.mxu0 0.0
        %4368 = vmatpush1.msra.mxu0 0.0
        %4369 = vmatprep.subr.mxu0 0.0
        %4370 = vmatpush1.msra.mxu0 0.0
        %4371 = vmatprep.subr.mxu0 0.0
        %4372 = vmatpush1.msra.mxu0 0.0
        %4373 = vmatprep.subr.mxu0 0.0
        %4374 = vmatpush1.msra.mxu0 0.0
        %4375 = vmatprep.subr.mxu0 0.0
        %4376 = vmatpush1.msra.mxu0 0.0
        %4377 = vmatprep.subr.mxu0 0.0
        %4378 = vmatpush1.msra.mxu0 0.0
        %4379 = vmatprep.mubr.f32.mxu0 0.0
        %4380 = vmatmul.mubr.f32.gmra.mrb[0].mxu0 %v4313
        %v4381 = vpop.f32.mrb[0].mxu0
        %v4382 = vadd.f32 0.0, %v4381
        %v4383 = vpop.f32.mrb[0].mxu0
        %4384 = vdwg.mxu0
        %v4386 = vrot.slane %v4382, 1
        %v4387 = vrot.slane %v4382, 2
        %v4390 = vadd.f32 %v532, %v4386
        %v4391 = vadd.f32 %v537, %v4387
        %v4392 = vld [vmem:[#allocation3] sm:$0x3]
        %v4393 = vxor.u32 %v4390, 2147483648
        %v4394 = vxor.u32 %v4391, 2147483648
        %v4395 = vmul.f32 %v4393, 1.442695
        %v4396 = vpow.pop %v4395
        %v4397 = vmul.f32 %v4394, 1.442695
        %v4398 = vpow.pop %v4397
        %v4399 = vadd.f32 %v4396, 1.0
        %v4400 = vadd.f32 %v4398, 1.0
        %v4401 = vrcp.pop %v4399
        %v4402 = vmul.f32 1.0, %v4401
        %v4403 = vrcp.pop %v4400
        %v4404 = vmul.f32 1.0, %v4403
        %v4405 = vtanh.pop %v4390
        %v4406 = vtanh.pop %v4391
        %v4408 = vrot.slane %v4392, 1
        %v4409 = vrot.slane %v4392, 2
        %4410 = vrot.lane.b32.xlu0 %v4408, 32
        %v4411 = vpop.permute.xlu0 %4410
        %4412 = vrot.lane.b32.xlu0 %v4409, 32
        %v4413 = vpop.permute.xlu0 %4412
        %v4416 = vmul.f32 %v4402, %v4411
        %v4417 = vmul.f32 %v4404, %v4413
        %4420 = vrot.lane.b32.xlu0 %v4405, 64
        %v4421 = vpop.permute.xlu0 %4420
        %4422 = vrot.lane.b32.xlu0 %v4406, 64
        %v4423 = vpop.permute.xlu0 %4422
        %v4426 = vmul.f32 %v4402, %v4421
        %v4427 = vmul.f32 %v4404, %v4423
        %4430 = vrot.lane.b32.xlu0 %v4426, 32
        %v4431 = vpop.permute.xlu0 %4430
        %4432 = vrot.lane.b32.xlu0 %v4427, 32
        %v4433 = vpop.permute.xlu0 %4432
        %v4436 = vadd.f32 %v4416, %v4431
        %v4437 = vadd.f32 %v4417, %v4433
        %v4438 = vtanh.pop %v4436
        %v4439 = vtanh.pop %v4437
        %4442 = vrot.lane.b32.xlu0 %v4438, 64
        %v4443 = vpop.permute.xlu0 %4442
        %4444 = vrot.lane.b32.xlu0 %v4439, 64
        %v4445 = vpop.permute.xlu0 %4444
        %v4448 = vmul.f32 %v4402, %v4443
        %v4449 = vmul.f32 %v4404, %v4445
        %v4452 = vrot.slane %v4449, 7
        %4453 = vrot.lane.b32.xlu0 %v4448, 32
        %v4454 = vpop.permute.xlu0 %4453
        %4455 = vrot.lane.b32.xlu0 %v4452, 32
        %v4456 = vpop.permute.xlu0 %4455
        %vm4459 = vcmask 261127
        %4460 = vst.msk [vmem:[#allocation2 - $0x7] sm:$0x80] %vm4459, %v4454
        %vm4461 = vcmask 253952
        %4462 = vst.msk [vmem:[#allocation2 + $0x1] sm:$0x1] %vm4461, %v4456
        %v4465 = vrot.slane %v4437, 7
        %4466 = vrot.lane.b32.xlu0 %v4436, 96
        %v4467 = vpop.permute.xlu0 %4466
        %4468 = vrot.lane.b32.xlu0 %v4465, 96
        %v4469 = vpop.permute.xlu0 %4468
        %4472 = vst.msk [vmem:[#allocation3 - $0x7] sm:$0x80] %vm4459, %v4467
        %4473 = vst.msk [vmem:[#allocation3 + $0x1] sm:$0x1] %vm4461, %v4469
        %v4474 = vld [vmem:[%s734] sm:$0x3]
        %v4476 = vsel %vm458, %v4474, 0
        %4478 = vmatprep.subr.mxu0 0.0
        %4479 = vmatpush1.msra.mxu0 %v545
        %4480 = vmatprep.subr.mxu0 0.0
        %4481 = vmatpush1.msra.mxu0 %v546
        %4482 = vmatprep.subr.mxu0 0.0
        %4483 = vmatpush1.msra.mxu0 %v547
        %4484 = vmatprep.subr.mxu0 0.0
        %4485 = vmatpush1.msra.mxu0 %v548
        %4486 = vmatprep.subr.mxu0 0.0
        %4487 = vmatpush1.msra.mxu0 0.0
        %4488 = vmatprep.subr.mxu0 0.0
        %4489 = vmatpush1.msra.mxu0 0.0
        %4490 = vmatprep.subr.mxu0 0.0
        %4491 = vmatpush1.msra.mxu0 0.0
        %4492 = vmatprep.subr.mxu0 0.0
        %4493 = vmatpush1.msra.mxu0 0.0
        %4494 = vmatprep.subr.mxu0 0.0
        %4495 = vmatpush1.msra.mxu0 0.0
        %4496 = vmatprep.subr.mxu0 0.0
        %4497 = vmatpush1.msra.mxu0 0.0
        %4498 = vmatprep.subr.mxu0 0.0
        %4499 = vmatpush1.msra.mxu0 0.0
        %4500 = vmatprep.subr.mxu0 0.0
        %4501 = vmatpush1.msra.mxu0 0.0
        %4502 = vmatprep.subr.mxu0 0.0
        %4503 = vmatpush1.msra.mxu0 0.0
        %4504 = vmatprep.subr.mxu0 0.0
        %4505 = vmatpush1.msra.mxu0 0.0
        %4506 = vmatprep.subr.mxu0 0.0
        %4507 = vmatpush1.msra.mxu0 0.0
        %4508 = vmatprep.subr.mxu0 0.0
        %4509 = vmatpush1.msra.mxu0 0.0
        %4510 = vmatprep.subr.mxu0 0.0
        %4511 = vmatpush1.msra.mxu0 0.0
        %4512 = vmatprep.subr.mxu0 0.0
        %4513 = vmatpush1.msra.mxu0 0.0
        %4514 = vmatprep.subr.mxu0 0.0
        %4515 = vmatpush1.msra.mxu0 0.0
        %4516 = vmatprep.subr.mxu0 0.0
        %4517 = vmatpush1.msra.mxu0 0.0
        %4518 = vmatprep.subr.mxu0 0.0
        %4519 = vmatpush1.msra.mxu0 0.0
        %4520 = vmatprep.subr.mxu0 0.0
        %4521 = vmatpush1.msra.mxu0 0.0
        %4522 = vmatprep.subr.mxu0 0.0
        %4523 = vmatpush1.msra.mxu0 0.0
        %4524 = vmatprep.subr.mxu0 0.0
        %4525 = vmatpush1.msra.mxu0 0.0
        %4526 = vmatprep.subr.mxu0 0.0
        %4527 = vmatpush1.msra.mxu0 0.0
        %4528 = vmatprep.subr.mxu0 0.0
        %4529 = vmatpush1.msra.mxu0 0.0
        %4530 = vmatprep.subr.mxu0 0.0
        %4531 = vmatpush1.msra.mxu0 0.0
        %4532 = vmatprep.subr.mxu0 0.0
        %4533 = vmatpush1.msra.mxu0 0.0
        %4534 = vmatprep.subr.mxu0 0.0
        %4535 = vmatpush1.msra.mxu0 0.0
        %4536 = vmatprep.subr.mxu0 0.0
        %4537 = vmatpush1.msra.mxu0 0.0
        %4538 = vmatprep.subr.mxu0 0.0
        %4539 = vmatpush1.msra.mxu0 0.0
        %4540 = vmatprep.subr.mxu0 0.0
        %4541 = vmatpush1.msra.mxu0 0.0
        %4542 = vmatprep.mubr.f32.mxu0 0.0
        %4543 = vmatmul.mubr.f32.gmra.mrb[0].mxu0 %v4476
        %v4544 = vpop.f32.mrb[0].mxu0
        %v4545 = vadd.f32 0.0, %v4544
        %v4546 = vpop.f32.mrb[0].mxu0
        %4547 = vdwg.mxu0
        %v4548 = vrot.slane %v4448, 7
        %v4549 = vrot.slane %v4449, 6
        %v4550 = vsel %vm719, %v4549, %v4548
        %4551 = vrot.lane.b32.xlu0 %v4550, 32
        %v4552 = vpop.permute.xlu0 %4551
        %v4553 = vsel %vm458, %v4552, 0
        %4555 = vmatprep.subr.mxu0 0.0
        %4556 = vmatpush1.msra.mxu0 %v554
        %4557 = vmatprep.subr.mxu0 0.0
        %4558 = vmatpush1.msra.mxu0 %v555
        %4559 = vmatprep.subr.mxu0 0.0
        %4560 = vmatpush1.msra.mxu0 %v556
        %4561 = vmatprep.subr.mxu0 0.0
        %4562 = vmatpush1.msra.mxu0 %v557
        %4563 = vmatprep.subr.mxu0 0.0
        %4564 = vmatpush1.msra.mxu0 0.0
        %4565 = vmatprep.subr.mxu0 0.0
        %4566 = vmatpush1.msra.mxu0 0.0
        %4567 = vmatprep.subr.mxu0 0.0
        %4568 = vmatpush1.msra.mxu0 0.0
        %4569 = vmatprep.subr.mxu0 0.0
        %4570 = vmatpush1.msra.mxu0 0.0
        %4571 = vmatprep.subr.mxu0 0.0
        %4572 = vmatpush1.msra.mxu0 0.0
        %4573 = vmatprep.subr.mxu0 0.0
        %4574 = vmatpush1.msra.mxu0 0.0
        %4575 = vmatprep.subr.mxu0 0.0
        %4576 = vmatpush1.msra.mxu0 0.0
        %4577 = vmatprep.subr.mxu0 0.0
        %4578 = vmatpush1.msra.mxu0 0.0
        %4579 = vmatprep.subr.mxu0 0.0
        %4580 = vmatpush1.msra.mxu0 0.0
        %4581 = vmatprep.subr.mxu0 0.0
        %4582 = vmatpush1.msra.mxu0 0.0
        %4583 = vmatprep.subr.mxu0 0.0
        %4584 = vmatpush1.msra.mxu0 0.0
        %4585 = vmatprep.subr.mxu0 0.0
        %4586 = vmatpush1.msra.mxu0 0.0
        %4587 = vmatprep.subr.mxu0 0.0
        %4588 = vmatpush1.msra.mxu0 0.0
        %4589 = vmatprep.subr.mxu0 0.0
        %4590 = vmatpush1.msra.mxu0 0.0
        %4591 = vmatprep.subr.mxu0 0.0
        %4592 = vmatpush1.msra.mxu0 0.0
        %4593 = vmatprep.subr.mxu0 0.0
        %4594 = vmatpush1.msra.mxu0 0.0
        %4595 = vmatprep.subr.mxu0 0.0
        %4596 = vmatpush1.msra.mxu0 0.0
        %4597 = vmatprep.subr.mxu0 0.0
        %4598 = vmatpush1.msra.mxu0 0.0
        %4599 = vmatprep.subr.mxu0 0.0
        %4600 = vmatpush1.msra.mxu0 0.0
        %4601 = vmatprep.subr.mxu0 0.0
        %4602 = vmatpush1.msra.mxu0 0.0
        %4603 = vmatprep.subr.mxu0 0.0
        %4604 = vmatpush1.msra.mxu0 0.0
        %4605 = vmatprep.subr.mxu0 0.0
        %4606 = vmatpush1.msra.mxu0 0.0
        %4607 = vmatprep.subr.mxu0 0.0
        %4608 = vmatpush1.msra.mxu0 0.0
        %4609 = vmatprep.subr.mxu0 0.0
        %4610 = vmatpush1.msra.mxu0 0.0
        %4611 = vmatprep.subr.mxu0 0.0
        %4612 = vmatpush1.msra.mxu0 0.0
        %4613 = vmatprep.subr.mxu0 0.0
        %4614 = vmatpush1.msra.mxu0 0.0
        %4615 = vmatprep.subr.mxu0 0.0
        %4616 = vmatpush1.msra.mxu0 0.0
        %4617 = vmatprep.subr.mxu0 0.0
        %4618 = vmatpush1.msra.mxu0 0.0
        %4619 = vmatprep.mubr.f32.mxu0 0.0
        %4620 = vmatmul.mubr.f32.gmra.mrb[0].mxu0 %v4553
        %v4621 = vpop.f32.mrb[0].mxu0
        %v4622 = vadd.f32 %v4545, %v4621
        %v4623 = vpop.f32.mrb[0].mxu0
        %4624 = vdwg.mxu0
        %v4625 = vadd.f32 %v4622, %v569
        %v4626 = vld [vmem:[%s882] sm:$0x3]
        %v4627 = vxor.u32 %v4625, 2147483648
        %v4628 = vmul.f32 %v4627, 1.442695
        %v4629 = vpow.pop %v4628
        %v4630 = vadd.f32 %v4629, 1.0
        %v4631 = vrcp.pop %v4630
        %v4632 = vmul.f32 1.0, %v4631
        %v4633 = vtanh.pop %v4625
        %4635 = vrot.lane.b32.xlu0 %v4626, 32
        %v4636 = vpop.permute.xlu0 %4635
        %v4638 = vmul.f32 %v4632, %v4636
        %4640 = vrot.lane.b32.xlu0 %v4633, 64
        %v4641 = vpop.permute.xlu0 %4640
        %v4643 = vmul.f32 %v4632, %v4641
        %4645 = vrot.lane.b32.xlu0 %v4643, 32
        %v4646 = vpop.permute.xlu0 %4645
        %v4648 = vadd.f32 %v4638, %v4646
        %v4649 = vtanh.pop %v4648
        %4651 = vrot.lane.b32.xlu0 %v4649, 64
        %v4652 = vpop.permute.xlu0 %4651
        %v4654 = vmul.f32 %v4632, %v4652
        %4656 = vrot.lane.b32.xlu0 %v4654, 32
        %v4657 = vpop.permute.xlu0 %4656
        %4659 = vst.msk [vmem:[%s734] sm:$0x3] %vm724, %v4657
        %4661 = vrot.lane.b32.xlu0 %v4648, 96
        %v4662 = vpop.permute.xlu0 %4661
        %4664 = vst.msk [vmem:[%s882] sm:$0x3] %vm724, %v4662
        %v4665 = vld [vmem:[%s922] sm:$0x3]
        %v4667 = vsel %vm458, %v4665, 0
        %4669 = vmatprep.subr.mxu0 0.0
        %4670 = vmatpush1.msra.mxu0 %v550
        %4671 = vmatprep.subr.mxu0 0.0
        %4672 = vmatpush1.msra.mxu0 %v551
        %4673 = vmatprep.subr.mxu0 0.0
        %4674 = vmatpush1.msra.mxu0 %v552
        %4675 = vmatprep.subr.mxu0 0.0
        %4676 = vmatpush1.msra.mxu0 %v553
        %4677 = vmatprep.subr.mxu0 0.0
        %4678 = vmatpush1.msra.mxu0 0.0
        %4679 = vmatprep.subr.mxu0 0.0
        %4680 = vmatpush1.msra.mxu0 0.0
        %4681 = vmatprep.subr.mxu0 0.0
        %4682 = vmatpush1.msra.mxu0 0.0
        %4683 = vmatprep.subr.mxu0 0.0
        %4684 = vmatpush1.msra.mxu0 0.0
        %4685 = vmatprep.subr.mxu0 0.0
        %4686 = vmatpush1.msra.mxu0 0.0
        %4687 = vmatprep.subr.mxu0 0.0
        %4688 = vmatpush1.msra.mxu0 0.0
        %4689 = vmatprep.subr.mxu0 0.0
        %4690 = vmatpush1.msra.mxu0 0.0
        %4691 = vmatprep.subr.mxu0 0.0
        %4692 = vmatpush1.msra.mxu0 0.0
        %4693 = vmatprep.subr.mxu0 0.0
        %4694 = vmatpush1.msra.mxu0 0.0
        %4695 = vmatprep.subr.mxu0 0.0
        %4696 = vmatpush1.msra.mxu0 0.0
        %4697 = vmatprep.subr.mxu0 0.0
        %4698 = vmatpush1.msra.mxu0 0.0
        %4699 = vmatprep.subr.mxu0 0.0
        %4700 = vmatpush1.msra.mxu0 0.0
        %4701 = vmatprep.subr.mxu0 0.0
        %4702 = vmatpush1.msra.mxu0 0.0
        %4703 = vmatprep.subr.mxu0 0.0
        %4704 = vmatpush1.msra.mxu0 0.0
        %4705 = vmatprep.subr.mxu0 0.0
        %4706 = vmatpush1.msra.mxu0 0.0
        %4707 = vmatprep.subr.mxu0 0.0
        %4708 = vmatpush1.msra.mxu0 0.0
        %4709 = vmatprep.subr.mxu0 0.0
        %4710 = vmatpush1.msra.mxu0 0.0
        %4711 = vmatprep.subr.mxu0 0.0
        %4712 = vmatpush1.msra.mxu0 0.0
        %4713 = vmatprep.subr.mxu0 0.0
        %4714 = vmatpush1.msra.mxu0 0.0
        %4715 = vmatprep.subr.mxu0 0.0
        %4716 = vmatpush1.msra.mxu0 0.0
        %4717 = vmatprep.subr.mxu0 0.0
        %4718 = vmatpush1.msra.mxu0 0.0
        %4719 = vmatprep.subr.mxu0 0.0
        %4720 = vmatpush1.msra.mxu0 0.0
        %4721 = vmatprep.subr.mxu0 0.0
        %4722 = vmatpush1.msra.mxu0 0.0
        %4723 = vmatprep.subr.mxu0 0.0
        %4724 = vmatpush1.msra.mxu0 0.0
        %4725 = vmatprep.subr.mxu0 0.0
        %4726 = vmatpush1.msra.mxu0 0.0
        %4727 = vmatprep.subr.mxu0 0.0
        %4728 = vmatpush1.msra.mxu0 0.0
        %4729 = vmatprep.subr.mxu0 0.0
        %4730 = vmatpush1.msra.mxu0 0.0
        %4731 = vmatprep.subr.mxu0 0.0
        %4732 = vmatpush1.msra.mxu0 0.0
        %4733 = vmatprep.mubr.f32.mxu0 0.0
        %4734 = vmatmul.mubr.f32.gmra.mrb[0].mxu0 %v4667
        %v4735 = vpop.f32.mrb[0].mxu0
        %v4736 = vadd.f32 0.0, %v4735
        %v4737 = vpop.f32.mrb[0].mxu0
        %4738 = vdwg.mxu0
        %v4739 = vsel %vm458, %v4657, 0
        %4741 = vmatprep.subr.mxu0 0.0
        %4742 = vmatpush1.msra.mxu0 %v559
        %4743 = vmatprep.subr.mxu0 0.0
        %4744 = vmatpush1.msra.mxu0 %v560
        %4745 = vmatprep.subr.mxu0 0.0
        %4746 = vmatpush1.msra.mxu0 %v561
        %4747 = vmatprep.subr.mxu0 0.0
        %4748 = vmatpush1.msra.mxu0 %v562
        %4749 = vmatprep.subr.mxu0 0.0
        %4750 = vmatpush1.msra.mxu0 0.0
        %4751 = vmatprep.subr.mxu0 0.0
        %4752 = vmatpush1.msra.mxu0 0.0
        %4753 = vmatprep.subr.mxu0 0.0
        %4754 = vmatpush1.msra.mxu0 0.0
        %4755 = vmatprep.subr.mxu0 0.0
        %4756 = vmatpush1.msra.mxu0 0.0
        %4757 = vmatprep.subr.mxu0 0.0
        %4758 = vmatpush1.msra.mxu0 0.0
        %4759 = vmatprep.subr.mxu0 0.0
        %4760 = vmatpush1.msra.mxu0 0.0
        %4761 = vmatprep.subr.mxu0 0.0
        %4762 = vmatpush1.msra.mxu0 0.0
        %4763 = vmatprep.subr.mxu0 0.0
        %4764 = vmatpush1.msra.mxu0 0.0
        %4765 = vmatprep.subr.mxu0 0.0
        %4766 = vmatpush1.msra.mxu0 0.0
        %4767 = vmatprep.subr.mxu0 0.0
        %4768 = vmatpush1.msra.mxu0 0.0
        %4769 = vmatprep.subr.mxu0 0.0
        %4770 = vmatpush1.msra.mxu0 0.0
        %4771 = vmatprep.subr.mxu0 0.0
        %4772 = vmatpush1.msra.mxu0 0.0
        %4773 = vmatprep.subr.mxu0 0.0
        %4774 = vmatpush1.msra.mxu0 0.0
        %4775 = vmatprep.subr.mxu0 0.0
        %4776 = vmatpush1.msra.mxu0 0.0
        %4777 = vmatprep.subr.mxu0 0.0
        %4778 = vmatpush1.msra.mxu0 0.0
        %4779 = vmatprep.subr.mxu0 0.0
        %4780 = vmatpush1.msra.mxu0 0.0
        %4781 = vmatprep.subr.mxu0 0.0
        %4782 = vmatpush1.msra.mxu0 0.0
        %4783 = vmatprep.subr.mxu0 0.0
        %4784 = vmatpush1.msra.mxu0 0.0
        %4785 = vmatprep.subr.mxu0 0.0
        %4786 = vmatpush1.msra.mxu0 0.0
        %4787 = vmatprep.subr.mxu0 0.0
        %4788 = vmatpush1.msra.mxu0 0.0
        %4789 = vmatprep.subr.mxu0 0.0
        %4790 = vmatpush1.msra.mxu0 0.0
        %4791 = vmatprep.subr.mxu0 0.0
        %4792 = vmatpush1.msra.mxu0 0.0
        %4793 = vmatprep.subr.mxu0 0.0
        %4794 = vmatpush1.msra.mxu0 0.0
        %4795 = vmatprep.subr.mxu0 0.0
        %4796 = vmatpush1.msra.mxu0 0.0
        %4797 = vmatprep.subr.mxu0 0.0
        %4798 = vmatpush1.msra.mxu0 0.0
        %4799 = vmatprep.subr.mxu0 0.0
        %4800 = vmatpush1.msra.mxu0 0.0
        %4801 = vmatprep.subr.mxu0 0.0
        %4802 = vmatpush1.msra.mxu0 0.0
        %4803 = vmatprep.subr.mxu0 0.0
        %4804 = vmatpush1.msra.mxu0 0.0
        %4805 = vmatprep.mubr.f32.mxu0 0.0
        %4806 = vmatmul.mubr.f32.gmra.mrb[0].mxu0 %v4739
        %v4807 = vpop.f32.mrb[0].mxu0
        %v4808 = vadd.f32 %v4736, %v4807
        %v4809 = vpop.f32.mrb[0].mxu0
        %4810 = vdwg.mxu0
        %v4811 = vadd.f32 %v4808, %v577
        %v4812 = vld [vmem:[%s1070] sm:$0x3]
        %v4813 = vxor.u32 %v4811, 2147483648
        %v4814 = vmul.f32 %v4813, 1.442695
        %v4815 = vpow.pop %v4814
        %v4816 = vadd.f32 %v4815, 1.0
        %v4817 = vrcp.pop %v4816
        %v4818 = vmul.f32 1.0, %v4817
        %v4819 = vtanh.pop %v4811
        %4821 = vrot.lane.b32.xlu0 %v4812, 32
        %v4822 = vpop.permute.xlu0 %4821
        %v4824 = vmul.f32 %v4818, %v4822
        %4826 = vrot.lane.b32.xlu0 %v4819, 64
        %v4827 = vpop.permute.xlu0 %4826
        %v4829 = vmul.f32 %v4818, %v4827
        %4831 = vrot.lane.b32.xlu0 %v4829, 32
        %v4832 = vpop.permute.xlu0 %4831
        %v4834 = vadd.f32 %v4824, %v4832
        %v4835 = vtanh.pop %v4834
        %4837 = vrot.lane.b32.xlu0 %v4835, 64
        %v4838 = vpop.permute.xlu0 %4837
        %v4840 = vmul.f32 %v4818, %v4838
        %4842 = vrot.lane.b32.xlu0 %v4840, 32
        %v4843 = vpop.permute.xlu0 %4842
        %4845 = vst.msk [vmem:[%s922] sm:$0x3] %vm724, %v4843
        %4847 = vrot.lane.b32.xlu0 %v4834, 96
        %v4848 = vpop.permute.xlu0 %4847
        %4850 = vst.msk [vmem:[%s1070] sm:$0x3] %vm724, %v4848
        %p4851 = scmp.eq.s32.totalorder %s32, 1
        // Predicated region
        $region85: #{tpu_custom_call.1} parent=55 // pred_check
          %p4852 = pneg %p4851
        $region86: #{tpu_custom_call.1} parent=55 // pred_check_branch
          %4854 = sbr.rel (%p4852) target = $region88
        $region87: #{tpu_custom_call.1} parent=55 // pred_region
          %v4855 = vld [vmem:[%s922] sm:$0x3]
          %v4856 = vld [vmem:[#allocation12] sm:$0xff]
          %v4857 = vld [vmem:[#allocation12 + $0x8] sm:$0xff]
          %v4858 = vld [vmem:[#allocation12 + $0x10] sm:$0xff]
          %v4859 = vld [vmem:[#allocation12 + $0x18] sm:$0xff]
          %v4860 = vld [vmem:[%s6] sm:$0x1]
          %v4862 = vlaneseq
          %v4863 = vshrl.u32 %v4862, 7
          %v4864 = vsub.s32 0, %v4863
          %v4865 = vrot.slane %v4860, %v4864
          %v4868 = vsel %vm458, %v4855, 0
          %4870 = vmatprep.subr.mxu0 0.0
          %4871 = vmatpush1.msra.mxu0 %v4856
          %4872 = vmatprep.subr.mxu0 0.0
          %4873 = vmatpush1.msra.mxu0 %v4857
          %4874 = vmatprep.subr.mxu0 0.0
          %4875 = vmatpush1.msra.mxu0 %v4858
          %4876 = vmatprep.subr.mxu0 0.0
          %4877 = vmatpush1.msra.mxu0 %v4859
          %4878 = vmatprep.subr.mxu0 0.0
          %4879 = vmatpush1.msra.mxu0 0.0
          %4880 = vmatprep.subr.mxu0 0.0
          %4881 = vmatpush1.msra.mxu0 0.0
          %4882 = vmatprep.subr.mxu0 0.0
          %4883 = vmatpush1.msra.mxu0 0.0
          %4884 = vmatprep.subr.mxu0 0.0
          %4885 = vmatpush1.msra.mxu0 0.0
          %4886 = vmatprep.subr.mxu0 0.0
          %4887 = vmatpush1.msra.mxu0 0.0
          %4888 = vmatprep.subr.mxu0 0.0
          %4889 = vmatpush1.msra.mxu0 0.0
          %4890 = vmatprep.subr.mxu0 0.0
          %4891 = vmatpush1.msra.mxu0 0.0
          %4892 = vmatprep.subr.mxu0 0.0
          %4893 = vmatpush1.msra.mxu0 0.0
          %4894 = vmatprep.subr.mxu0 0.0
          %4895 = vmatpush1.msra.mxu0 0.0
          %4896 = vmatprep.subr.mxu0 0.0
          %4897 = vmatpush1.msra.mxu0 0.0
          %4898 = vmatprep.subr.mxu0 0.0
          %4899 = vmatpush1.msra.mxu0 0.0
          %4900 = vmatprep.subr.mxu0 0.0
          %4901 = vmatpush1.msra.mxu0 0.0
          %4902 = vmatprep.subr.mxu0 0.0
          %4903 = vmatpush1.msra.mxu0 0.0
          %4904 = vmatprep.subr.mxu0 0.0
          %4905 = vmatpush1.msra.mxu0 0.0
          %4906 = vmatprep.subr.mxu0 0.0
          %4907 = vmatpush1.msra.mxu0 0.0
          %4908 = vmatprep.subr.mxu0 0.0
          %4909 = vmatpush1.msra.mxu0 0.0
          %4910 = vmatprep.subr.mxu0 0.0
          %4911 = vmatpush1.msra.mxu0 0.0
          %4912 = vmatprep.subr.mxu0 0.0
          %4913 = vmatpush1.msra.mxu0 0.0
          %4914 = vmatprep.subr.mxu0 0.0
          %4915 = vmatpush1.msra.mxu0 0.0
          %4916 = vmatprep.subr.mxu0 0.0
          %4917 = vmatpush1.msra.mxu0 0.0
          %4918 = vmatprep.subr.mxu0 0.0
          %4919 = vmatpush1.msra.mxu0 0.0
          %4920 = vmatprep.subr.mxu0 0.0
          %4921 = vmatpush1.msra.mxu0 0.0
          %4922 = vmatprep.subr.mxu0 0.0
          %4923 = vmatpush1.msra.mxu0 0.0
          %4924 = vmatprep.subr.mxu0 0.0
          %4925 = vmatpush1.msra.mxu0 0.0
          %4926 = vmatprep.subr.mxu0 0.0
          %4927 = vmatpush1.msra.mxu0 0.0
          %4928 = vmatprep.subr.mxu0 0.0
          %4929 = vmatpush1.msra.mxu0 0.0
          %4930 = vmatprep.subr.mxu0 0.0
          %4931 = vmatpush1.msra.mxu0 0.0
          %4932 = vmatprep.subr.mxu0 0.0
          %4933 = vmatpush1.msra.mxu0 0.0
          %4934 = vmatprep.mubr.f32.mxu0 0.0
          %4935 = vmatmul.mubr.f32.gmra.mrb[0].mxu0 %v4868
          %v4936 = vpop.f32.mrb[0].mxu0
          %v4937 = vadd.f32 %v4865, %v4936
          %v4938 = vpop.f32.mrb[0].mxu0
          %4939 = vdwg.mxu0
          %v4940 = vmax.f32 %v4937, 0.0
          %v4941 = vld [vmem:[#allocation13] sm:$0xff]
          %v4942 = vld [vmem:[#allocation13 + $0x8] sm:$0xff]
          %v4943 = vld [vmem:[#allocation13 + $0x10] sm:$0xff]
          %v4944 = vld [vmem:[#allocation13 + $0x18] sm:$0xff]
          %v4945 = vld [vmem:[#allocation13 + $0x20] sm:$0xff]
          %v4946 = vld [vmem:[#allocation13 + $0x28] sm:$0xff]
          %v4947 = vld [vmem:[#allocation13 + $0x30] sm:$0xff]
          %v4948 = vld [vmem:[#allocation13 + $0x38] sm:$0xff]
          %v4949 = vld [vmem:[#allocation13 + $0x40] sm:$0xff]
          %v4950 = vld [vmem:[#allocation13 + $0x48] sm:$0xff]
          %v4951 = vld [vmem:[#allocation13 + $0x50] sm:$0xff]
          %v4952 = vld [vmem:[#allocation13 + $0x58] sm:$0xff]
          %v4953 = vld [vmem:[#allocation13 + $0x60] sm:$0xff]
          %v4954 = vld [vmem:[#allocation13 + $0x68] sm:$0xff]
          %v4955 = vld [vmem:[#allocation13 + $0x70] sm:$0xff]
          %v4956 = vld [vmem:[#allocation13 + $0x78] sm:$0xff]
          %v4957 = vld [vmem:[%s8] sm:$0x1]
          %v4959 = vlaneseq
          %v4960 = vshrl.u32 %v4959, 7
          %v4961 = vsub.s32 0, %v4960
          %v4962 = vrot.slane %v4957, %v4961
          %4964 = vmatprep.subr.mxu0 0.0
          %4965 = vmatpush1.msra.mxu0 %v4941
          %4966 = vmatprep.subr.mxu0 0.0
          %4967 = vmatpush1.msra.mxu0 %v4942
          %4968 = vmatprep.subr.mxu0 0.0
          %4969 = vmatpush1.msra.mxu0 %v4943
          %4970 = vmatprep.subr.mxu0 0.0
          %4971 = vmatpush1.msra.mxu0 %v4944
          %4972 = vmatprep.subr.mxu0 0.0
          %4973 = vmatpush1.msra.mxu0 %v4945
          %4974 = vmatprep.subr.mxu0 0.0
          %4975 = vmatpush1.msra.mxu0 %v4946
          %4976 = vmatprep.subr.mxu0 0.0
          %4977 = vmatpush1.msra.mxu0 %v4947
          %4978 = vmatprep.subr.mxu0 0.0
          %4979 = vmatpush1.msra.mxu0 %v4948
          %4980 = vmatprep.subr.mxu0 0.0
          %4981 = vmatpush1.msra.mxu0 %v4949
          %4982 = vmatprep.subr.mxu0 0.0
          %4983 = vmatpush1.msra.mxu0 %v4950
          %4984 = vmatprep.subr.mxu0 0.0
          %4985 = vmatpush1.msra.mxu0 %v4951
          %4986 = vmatprep.subr.mxu0 0.0
          %4987 = vmatpush1.msra.mxu0 %v4952
          %4988 = vmatprep.subr.mxu0 0.0
          %4989 = vmatpush1.msra.mxu0 %v4953
          %4990 = vmatprep.subr.mxu0 0.0
          %4991 = vmatpush1.msra.mxu0 %v4954
          %4992 = vmatprep.subr.mxu0 0.0
          %4993 = vmatpush1.msra.mxu0 %v4955
          %4994 = vmatprep.subr.mxu0 0.0
          %4995 = vmatpush1.msra.mxu0 %v4956
          %4996 = vmatprep.subr.mxu0 0.0
          %4997 = vmatpush1.msra.mxu0 0.0
          %4998 = vmatprep.subr.mxu0 0.0
          %4999 = vmatpush1.msra.mxu0 0.0
          %5000 = vmatprep.subr.mxu0 0.0
          %5001 = vmatpush1.msra.mxu0 0.0
          %5002 = vmatprep.subr.mxu0 0.0
          %5003 = vmatpush1.msra.mxu0 0.0
          %5004 = vmatprep.subr.mxu0 0.0
          %5005 = vmatpush1.msra.mxu0 0.0
          %5006 = vmatprep.subr.mxu0 0.0
          %5007 = vmatpush1.msra.mxu0 0.0
          %5008 = vmatprep.subr.mxu0 0.0
          %5009 = vmatpush1.msra.mxu0 0.0
          %5010 = vmatprep.subr.mxu0 0.0
          %5011 = vmatpush1.msra.mxu0 0.0
          %5012 = vmatprep.subr.mxu0 0.0
          %5013 = vmatpush1.msra.mxu0 0.0
          %5014 = vmatprep.subr.mxu0 0.0
          %5015 = vmatpush1.msra.mxu0 0.0
          %5016 = vmatprep.subr.mxu0 0.0
          %5017 = vmatpush1.msra.mxu0 0.0
          %5018 = vmatprep.subr.mxu0 0.0
          %5019 = vmatpush1.msra.mxu0 0.0
          %5020 = vmatprep.subr.mxu0 0.0
          %5021 = vmatpush1.msra.mxu0 0.0
          %5022 = vmatprep.subr.mxu0 0.0
          %5023 = vmatpush1.msra.mxu0 0.0
          %5024 = vmatprep.subr.mxu0 0.0
          %5025 = vmatpush1.msra.mxu0 0.0
          %5026 = vmatprep.subr.mxu0 0.0
          %5027 = vmatpush1.msra.mxu0 0.0
          %5028 = vmatprep.mubr.f32.mxu0 0.0
          %5029 = vmatmul.mubr.f32.gmra.mrb[0].mxu0 %v4940
          %v5030 = vpop.f32.mrb[0].mxu0
          %v5031 = vadd.f32 %v4962, %v5030
          %v5032 = vpop.f32.mrb[0].mxu0
          %5033 = vdwg.mxu0
          %5034 = vst [vmem:[#allocation15] sm:$0x3] %v5031
        $region88: #{tpu_custom_call.1} parent=55 // pred_fallthru
          _
        // Predicated region
        $region89: #{tpu_custom_call.1} parent=55 // pred_check
          %p5035 = pneg %p253
        $region90: #{tpu_custom_call.1} parent=55 // pred_check_branch
          %5037 = sbr.rel (%p5035) target = $region92
        $region91: #{tpu_custom_call.1} parent=55 // pred_region
          %s5039 = ssub.s32 32, 32
          %5040 = vsyncadd [#allocation6], %s5039
          %s5041 = smul.addr %s31, 32
          %s5042 = scalar_lea.hbm %s9, %s5041
          %s5044 = sshll.u32 [#allocation15], 4
          %s5045 = int_to_ptr.vmem [resolvable:$true] %s5044
          %5047 = dma.vmem_to_hbm [thread:$0]  %s5045, 32, %s5042, [#allocation6]
        $region92: #{tpu_custom_call.1} parent=55 // pred_fallthru
          _
        // Predicated region
        $region93: #{tpu_custom_call.1} parent=55 // pred_check
          %p5048 = pneg %p253
        $region94: #{tpu_custom_call.1} parent=55 // pred_check_branch
          %5050 = sbr.rel (%p5048) target = $region96
        $region95: #{tpu_custom_call.1} parent=55 // pred_region
          %5051 = dma.done [#allocation6], 32
        $region96: #{tpu_custom_call.1} parent=55 // pred_fallthru
          _
      $region56: #{tpu_custom_call.1} parent=5 // pred_fallthru
        _
      %p5052 = scmp.le.s32.totalorder 2, %s22
      // Predicated region
      $region97: #{tpu_custom_call.1} parent=5 // pred_check
        %p5053 = pneg %p5052
      $region98: #{tpu_custom_call.1} parent=5 // pred_check_branch
        %5055 = sbr.rel (%p5053) target = $region100
      $region99: #{tpu_custom_call.1} parent=5 // pred_region
        %s5056 = ssub.s32 %s22, 2
      $region100: #{tpu_custom_call.1} parent=5 // pred_fallthru
        _
    $region6: #{tpu_custom_call.1} parent=1 // loop_footer
      %s26 = sadd.s32 1, %s22
    $region7: #{tpu_custom_call.1} parent=1 // loop_footer_branch
      %21 = sbr.rel target = $region3
    $region8: #{tpu_custom_call.1} parent=1 // loop_exit
      _
    %5057 = vsyncpa [#allocation5], 1
    %s5058 = scalar_lea.sflag [#allocation5], 1
    %5059 = vsyncpa %s5058, 1
    %5060 = vsyncpa [#allocation8], 1
    %5061 = vsyncpa [#allocation11], 1
    %5062 = vsyncpa [#allocation14], 1
    %5063 = vsyncpa [#allocation6], 1
    %s5064 = scalar_lea.sflag [#allocation6], 1
    %5065 = vsyncpa %s5064, 1

</llo_original>
